<compile_context>
chip_gen: v5e
topology: v5e:2x2
jax: 0.10.0
libtpu: 0.0.40
codegen_flags: <defaults>
</compile_context>

<pallas_src>
import functools

import jax
import jax.numpy as jnp
from jax import lax
from jax.experimental import pallas as pl
from jax.experimental.pallas import tpu as pltpu

_LANE = 128      # lane width: channel / class dims are padded to a multiple of this
_NEG = -1e30     # "minus infinity" logit for padded class lanes


def _round_up(v, m=_LANE):
    return ((v + m - 1) // m) * m


# ----------------------------------------------------------------------------
# Fused kernel factory.
# cfgs: tuple of (KH, KW, cin_pad, cout_pad, Ho, Wo, k_flat) per conv layer.
# Ref order: x, (w, b) per layer, fc_w, fc_b, out, then scratch
#            (patch_i, act_i) per layer.
# ----------------------------------------------------------------------------
def _make_fused_kernel(cfgs):
    n_layers = len(cfgs)

    def kernel(*refs):
        x_ref = refs[0]
        w_refs = [refs[1 + 2 * i] for i in range(n_layers)]
        b_refs = [refs[2 + 2 * i] for i in range(n_layers)]
        fcw_ref = refs[1 + 2 * n_layers]
        fcb_ref = refs[2 + 2 * n_layers]
        o_ref = refs[3 + 2 * n_layers]
        scr = refs[4 + 2 * n_layers:]
        patch_refs = [scr[2 * i] for i in range(n_layers)]
        act_refs = [scr[2 * i + 1] for i in range(n_layers)]

        for i, (KH, KW, cin, cout, ho, wo, k_flat) in enumerate(cfgs):
            p_ref = patch_refs[i]
            # -- im2col: place the KH*KW shifted windows side by side along the
            #    channel axis of the patch scratch (single flatten afterwards).
            for kh in range(KH):
                for kw in range(KW):
                    off = (kh * KW + kw) * cin
                    if i == 0:
                        tap = x_ref[0, kh:kh + ho, kw:kw + wo, :]
                    else:
                        tap = act_refs[i - 1][kh:kh + ho, kw:kw + wo, :]
                    p_ref[:, :, off:off + cin] = tap
            patches = p_ref[...].reshape(ho * wo, k_flat)          # bf16
            # -- one fat MXU matmul per layer (K = KH*KW*Cin), f32 accumulation.
            acc = jnp.dot(patches, w_refs[i][...],
                          preferred_element_type=jnp.float32)
            # -- f32 epilogue: BN scale already folded into W, so just +bias, ReLU.
            y = jnp.maximum(acc + b_refs[i][...], 0.0)
            act_refs[i][...] = y.reshape(ho, wo, cout).astype(jnp.bfloat16)

        # -- head: adaptive avg-pool(1,1) + Linear + log_softmax (all per sample).
        _, _, _, cout, ho, wo, _ = cfgs[-1]
        act = act_refs[-1][...].reshape(ho * wo, cout).astype(jnp.float32)
        pooled = jnp.mean(act, axis=0, keepdims=True)              # (1, C_pad) f32
        logits = jnp.dot(pooled.astype(jnp.bfloat16), fcw_ref[...],
                         preferred_element_type=jnp.float32) + fcb_ref[...]
        m = jnp.max(logits, axis=-1, keepdims=True)
        z = logits - m
        lse = jnp.log(jnp.sum(jnp.exp(z), axis=-1, keepdims=True))
        o_ref[...] = (z - lse).reshape(1, 1, -1)

    return kernel


# ----------------------------------------------------------------------------
# Forward pass wrapper: NCHW f32 in -> (N, classes) log-probs.
# ----------------------------------------------------------------------------
@functools.partial(jax.jit, static_argnames=("classes",))
def simnet_forward(params, x_nchw, *, classes):
    x = jnp.transpose(x_nchw, (0, 2, 3, 1)).astype(jnp.bfloat16)   # NHWC, bf16
    N, H, W, Cin = x.shape

    inputs = [x]
    in_specs = [pl.BlockSpec((1, H, W, Cin), lambda n: (n, 0, 0, 0))]
    scratch = []
    cfgs = []
    h, w, cin = H, W, Cin
    for layer in params["convs"]:
        KH, KW, cin_pad, cout_pad = layer["w"].shape
        assert cin_pad == cin
        ho, wo = h - KH + 1, w - KW + 1
        k_flat = KH * KW * cin_pad
        cfgs.append((KH, KW, cin_pad, cout_pad, ho, wo, k_flat))
        inputs.append(layer["w"].reshape(k_flat, cout_pad))         # (K, Cout) bf16
        inputs.append(layer["b"])                                   # (1, Cout) f32
        in_specs.append(pl.BlockSpec((k_flat, cout_pad), lambda n: (0, 0)))
        in_specs.append(pl.BlockSpec((1, cout_pad), lambda n: (0, 0)))
        # TODO(synk): for large spatial sizes, tile Ho into row blocks with a
        # (KH-1) halo instead of materializing the whole per-sample patch matrix.
        scratch.append(pltpu.VMEM((ho, wo, k_flat), jnp.bfloat16))   # im2col patches
        scratch.append(pltpu.VMEM((ho, wo, cout_pad), jnp.bfloat16))  # activation
        h, w, cin = ho, wo, cout_pad

    c_pad, classes_pad = params["fc_w"].shape
    inputs += [params["fc_w"], params["fc_b"]]
    in_specs += [pl.BlockSpec((c_pad, classes_pad), lambda n: (0, 0)),
                 pl.BlockSpec((1, classes_pad), lambda n: (0, 0))]

    out = pl.pallas_call(
        _make_fused_kernel(tuple(cfgs)),
        out_shape=jax.ShapeDtypeStruct((N, 1, classes_pad), jnp.float32),
        grid=(N,),
        in_specs=in_specs,
        out_specs=pl.BlockSpec((1, 1, classes_pad), lambda n: (n, 0, 0)),
        scratch_shapes=scratch,
        compiler_params=pltpu.CompilerParams(
            # batch axis shards across TensorCores on multi-TC chips (v7x);
            # harmless on single-TC v5e/v6e.
            dimension_semantics=("parallel",),
            # demo footprint is ~1.5 MiB; 32 MiB fits every generation's scoped
            # VMEM (incl. v7x's 64 MiB physical) while raising v5e's 16 MiB default.
            vmem_limit_bytes=32 * 1024 * 1024),
    )(*inputs)
    return out[:, 0, :classes]


# ----------------------------------------------------------------------------
# Parameter construction: synthetic PyTorch-style params, BN folded (eval mode),
# channels/classes zero-padded to 128 lanes, matmul weights cast to bf16.
# ----------------------------------------------------------------------------
def init_params(key, cnn_layer_num, input_channel, output_channel_list,
                kernel_size_list, classes):
    eps = 1e-5
    convs = []
    cin_real, cin_pad = input_channel, input_channel   # layer-1 input is not padded
    for i in range(cnn_layer_num):
        cout = output_channel_list[i]
        k = kernel_size_list[i]
        cout_pad = _round_up(cout)
        key, k1, k2, k3, k4, k5, k6 = jax.random.split(key, 7)
        # PyTorch conv weight layout (Cout, Cin, KH, KW).
        w_oihw = jax.random.normal(k1, (cout, cin_real, k, k), jnp.float32) * 0.1
        conv_b = jax.random.normal(k2, (cout,), jnp.float32) * 0.1
        gamma = 1.0 + 0.1 * jax.random.normal(k3, (cout,), jnp.float32)
        beta = 0.1 * jax.random.normal(k4, (cout,), jnp.float32)
        running_mean = 0.1 * jax.random.normal(k5, (cout,), jnp.float32)
        running_var = 1.0 + 0.1 * jax.random.uniform(k6, (cout,), jnp.float32)
        # Fold eval-mode BN: y = scale * conv(x) + bias.
        scale = gamma / jnp.sqrt(running_var + eps)                 # (cout,)
        bias = beta + (conv_b - running_mean) * scale               # (cout,)
        w_hwio = jnp.transpose(w_oihw, (2, 3, 1, 0)) * scale        # scale folded into W
        w_pad = jnp.zeros((k, k, cin_pad, cout_pad), jnp.float32)
        w_pad = w_pad.at[:, :, :cin_real, :cout].set(w_hwio)
        b_pad = jnp.zeros((1, cout_pad), jnp.float32).at[0, :cout].set(bias)
        convs.append({"w": w_pad.astype(jnp.bfloat16), "b": b_pad})
        cin_real, cin_pad = cout, cout_pad

    key, k7, k8 = jax.random.split(key, 3)
    classes_pad = _round_up(classes)
    fc_w = jax.random.normal(k7, (classes, cin_real), jnp.float32) * 0.1  # torch (classes, C)
    fc_b = jax.random.normal(k8, (classes,), jnp.float32) * 0.1
    fc_w_pad = jnp.zeros((cin_pad, classes_pad), jnp.float32)
    fc_w_pad = fc_w_pad.at[:cin_real, :classes].set(fc_w.T)
    fc_b_pad = jnp.full((1, classes_pad), _NEG, jnp.float32).at[0, :classes].set(fc_b)
    return {"convs": convs,
            "fc_w": fc_w_pad.astype(jnp.bfloat16),
            "fc_b": fc_b_pad}


# ----------------------------------------------------------------------------
# Pure-JAX reference with identical numerics (bf16 matmul inputs, f32 accum),
# used only as a correctness check.
# ----------------------------------------------------------------------------
def simnet_forward_ref(params, x_nchw, classes):
    x = jnp.transpose(x_nchw, (0, 2, 3, 1)).astype(jnp.bfloat16)
    for layer in params["convs"]:
        y = lax.conv_general_dilated(
            x, layer["w"], window_strides=(1, 1), padding="VALID",
            dimension_numbers=("NHWC", "HWIO", "NHWC"),
            preferred_element_type=jnp.float32)
        x = jnp.maximum(y + layer["b"].reshape(1, 1, 1, -1), 0.0).astype(jnp.bfloat16)
    pooled = jnp.mean(x.astype(jnp.float32), axis=(1, 2))            # (N, C_pad)
    logits = jnp.dot(pooled.astype(jnp.bfloat16), params["fc_w"],
                     preferred_element_type=jnp.float32) + params["fc_b"]
    return jax.nn.log_softmax(logits, axis=-1)[:, :classes]


if __name__ == "__main__":
    # Small config: 2 conv layers, input_channel=4, channels [8, 16],
    # kernels [3, 3], classes=5, input (N=2, C=4, H=16, W=16) in NCHW.
    cnn_layer_num = 2
    input_channel = 4
    output_channel_list = [8, 16]
    kernel_size_list = [3, 3]
    classes = 5

    key = jax.random.PRNGKey(0)
    key, pkey, xkey = jax.random.split(key, 3)
    params = init_params(pkey, cnn_layer_num, input_channel,
                         output_channel_list, kernel_size_list, classes)
    x = jax.random.normal(xkey, (2, input_channel, 16, 16), jnp.float32)

    out = jax.block_until_ready(simnet_forward(params, x, classes=classes))
    ref = jax.block_until_ready(simnet_forward_ref(params, x, classes))

    assert out.shape == (2, classes), out.shape
    max_err = jnp.max(jnp.abs(out - ref))
    assert jnp.allclose(out, ref, rtol=2e-2, atol=2e-2), f"max abs err {max_err}"

    print("KERNEL_OK")
</pallas_src>

<mosaic_0001>
module attributes {stable_mosaic.version = 11 : i64} {
  func.func @kernel(%arg0: i32, %arg1: memref<1x16x16x4xbf16, #tpu.memory_space<vmem>>, %arg2: memref<36x128xbf16, #tpu.memory_space<vmem>>, %arg3: memref<1x128xf32, #tpu.memory_space<vmem>>, %arg4: memref<1152x128xbf16, #tpu.memory_space<vmem>>, %arg5: memref<1x128xf32, #tpu.memory_space<vmem>>, %arg6: memref<128x128xbf16, #tpu.memory_space<vmem>>, %arg7: memref<1x128xf32, #tpu.memory_space<vmem>>, %arg8: memref<1x1x128xf32, #tpu.memory_space<vmem>>, %arg9: memref<14x14x36xbf16, #tpu.memory_space<vmem>>, %arg10: memref<14x14x128xbf16, #tpu.memory_space<vmem>>, %arg11: memref<12x12x1152xbf16, #tpu.memory_space<vmem>>, %arg12: memref<12x12x128xbf16, #tpu.memory_space<vmem>>) attributes {dimension_semantics = [#tpu.dimension_semantics<parallel>], iteration_bounds = array<i64: 2>, scalar_prefetch = 0 : i64, scratch_operands = 4 : i64, tpu.core_type = #tpu.core_type<tc>, window_params = [{transform_indices = @transform_0, window_bounds = array<i64: 1, 16, 16, 4>}, {pipeline_mode = #tpu.pipeline_mode<synchronous>, transform_indices = @transform_1, window_bounds = array<i64: 36, 128>}, {pipeline_mode = #tpu.pipeline_mode<synchronous>, transform_indices = @transform_2, window_bounds = array<i64: 1, 128>}, {pipeline_mode = #tpu.pipeline_mode<synchronous>, transform_indices = @transform_3, window_bounds = array<i64: 1152, 128>}, {pipeline_mode = #tpu.pipeline_mode<synchronous>, transform_indices = @transform_4, window_bounds = array<i64: 1, 128>}, {pipeline_mode = #tpu.pipeline_mode<synchronous>, transform_indices = @transform_5, window_bounds = array<i64: 128, 128>}, {pipeline_mode = #tpu.pipeline_mode<synchronous>, transform_indices = @transform_6, window_bounds = array<i64: 1, 128>}, {transform_indices = @transform_7, window_bounds = array<i64: 1, 1, 128>}]} {
    %c0 = arith.constant 0 : index
    %c0_0 = arith.constant 0 : index
    %c0_1 = arith.constant 0 : index
    %c0_2 = arith.constant 0 : index
    %0 = vector.load %arg1[%c0, %c0_0, %c0_1, %c0_2] : memref<1x16x16x4xbf16, #tpu.memory_space<vmem>>, vector<1x14x14x4xbf16>
    %1 = vector.shape_cast %0 : vector<1x14x14x4xbf16> to vector<14x14x4xbf16>
    %c0_3 = arith.constant 0 : index
    %c0_4 = arith.constant 0 : index
    %c0_5 = arith.constant 0 : index
    %2 = vector.load %arg9[%c0_3, %c0_4, %c0_5] : memref<14x14x36xbf16, #tpu.memory_space<vmem>>, vector<14x14x4xbf16>
    tpu.vector_store %arg9[%c0_3, %c0_4, %c0_5], %1 {strides = array<i32>} : memref<14x14x36xbf16, #tpu.memory_space<vmem>>, vector<14x14x4xbf16>,
    %c0_6 = arith.constant 0 : index
    %c0_7 = arith.constant 0 : index
    %c1 = arith.constant 1 : index
    %c0_8 = arith.constant 0 : index
    %3 = vector.load %arg1[%c0_6, %c0_7, %c1, %c0_8] : memref<1x16x16x4xbf16, #tpu.memory_space<vmem>>, vector<1x14x14x4xbf16>
    %4 = vector.shape_cast %3 : vector<1x14x14x4xbf16> to vector<14x14x4xbf16>
    %c0_9 = arith.constant 0 : index
    %c0_10 = arith.constant 0 : index
    %c4 = arith.constant 4 : index
    %5 = vector.load %arg9[%c0_9, %c0_10, %c4] : memref<14x14x36xbf16, #tpu.memory_space<vmem>>, vector<14x14x4xbf16>
    tpu.vector_store %arg9[%c0_9, %c0_10, %c4], %4 {strides = array<i32>} : memref<14x14x36xbf16, #tpu.memory_space<vmem>>, vector<14x14x4xbf16>,
    %c0_11 = arith.constant 0 : index
    %c0_12 = arith.constant 0 : index
    %c2 = arith.constant 2 : index
    %c0_13 = arith.constant 0 : index
    %6 = vector.load %arg1[%c0_11, %c0_12, %c2, %c0_13] : memref<1x16x16x4xbf16, #tpu.memory_space<vmem>>, vector<1x14x14x4xbf16>
    %7 = vector.shape_cast %6 : vector<1x14x14x4xbf16> to vector<14x14x4xbf16>
    %c0_14 = arith.constant 0 : index
    %c0_15 = arith.constant 0 : index
    %c8 = arith.constant 8 : index
    %8 = vector.load %arg9[%c0_14, %c0_15, %c8] : memref<14x14x36xbf16, #tpu.memory_space<vmem>>, vector<14x14x4xbf16>
    tpu.vector_store %arg9[%c0_14, %c0_15, %c8], %7 {strides = array<i32>} : memref<14x14x36xbf16, #tpu.memory_space<vmem>>, vector<14x14x4xbf16>,
    %c0_16 = arith.constant 0 : index
    %c1_17 = arith.constant 1 : index
    %c0_18 = arith.constant 0 : index
    %c0_19 = arith.constant 0 : index
    %9 = vector.load %arg1[%c0_16, %c1_17, %c0_18, %c0_19] : memref<1x16x16x4xbf16, #tpu.memory_space<vmem>>, vector<1x14x14x4xbf16>
    %10 = vector.shape_cast %9 : vector<1x14x14x4xbf16> to vector<14x14x4xbf16>
    %c0_20 = arith.constant 0 : index
    %c0_21 = arith.constant 0 : index
    %c12 = arith.constant 12 : index
    %11 = vector.load %arg9[%c0_20, %c0_21, %c12] : memref<14x14x36xbf16, #tpu.memory_space<vmem>>, vector<14x14x4xbf16>
    tpu.vector_store %arg9[%c0_20, %c0_21, %c12], %10 {strides = array<i32>} : memref<14x14x36xbf16, #tpu.memory_space<vmem>>, vector<14x14x4xbf16>,
    %c0_22 = arith.constant 0 : index
    %c1_23 = arith.constant 1 : index
    %c1_24 = arith.constant 1 : index
    %c0_25 = arith.constant 0 : index
    %12 = vector.load %arg1[%c0_22, %c1_23, %c1_24, %c0_25] : memref<1x16x16x4xbf16, #tpu.memory_space<vmem>>, vector<1x14x14x4xbf16>
    %13 = vector.shape_cast %12 : vector<1x14x14x4xbf16> to vector<14x14x4xbf16>
    %c0_26 = arith.constant 0 : index
    %c0_27 = arith.constant 0 : index
    %c16 = arith.constant 16 : index
    %14 = vector.load %arg9[%c0_26, %c0_27, %c16] : memref<14x14x36xbf16, #tpu.memory_space<vmem>>, vector<14x14x4xbf16>
    tpu.vector_store %arg9[%c0_26, %c0_27, %c16], %13 {strides = array<i32>} : memref<14x14x36xbf16, #tpu.memory_space<vmem>>, vector<14x14x4xbf16>,
    %c0_28 = arith.constant 0 : index
    %c1_29 = arith.constant 1 : index
    %c2_30 = arith.constant 2 : index
    %c0_31 = arith.constant 0 : index
    %15 = vector.load %arg1[%c0_28, %c1_29, %c2_30, %c0_31] : memref<1x16x16x4xbf16, #tpu.memory_space<vmem>>, vector<1x14x14x4xbf16>
    %16 = vector.shape_cast %15 : vector<1x14x14x4xbf16> to vector<14x14x4xbf16>
    %c0_32 = arith.constant 0 : index
    %c0_33 = arith.constant 0 : index
    %c20 = arith.constant 20 : index
    %17 = vector.load %arg9[%c0_32, %c0_33, %c20] : memref<14x14x36xbf16, #tpu.memory_space<vmem>>, vector<14x14x4xbf16>
    tpu.vector_store %arg9[%c0_32, %c0_33, %c20], %16 {strides = array<i32>} : memref<14x14x36xbf16, #tpu.memory_space<vmem>>, vector<14x14x4xbf16>,
    %c0_34 = arith.constant 0 : index
    %c2_35 = arith.constant 2 : index
    %c0_36 = arith.constant 0 : index
    %c0_37 = arith.constant 0 : index
    %18 = vector.load %arg1[%c0_34, %c2_35, %c0_36, %c0_37] : memref<1x16x16x4xbf16, #tpu.memory_space<vmem>>, vector<1x14x14x4xbf16>
    %19 = vector.shape_cast %18 : vector<1x14x14x4xbf16> to vector<14x14x4xbf16>
    %c0_38 = arith.constant 0 : index
    %c0_39 = arith.constant 0 : index
    %c24 = arith.constant 24 : index
    %20 = vector.load %arg9[%c0_38, %c0_39, %c24] : memref<14x14x36xbf16, #tpu.memory_space<vmem>>, vector<14x14x4xbf16>
    tpu.vector_store %arg9[%c0_38, %c0_39, %c24], %19 {strides = array<i32>} : memref<14x14x36xbf16, #tpu.memory_space<vmem>>, vector<14x14x4xbf16>,
    %c0_40 = arith.constant 0 : index
    %c2_41 = arith.constant 2 : index
    %c1_42 = arith.constant 1 : index
    %c0_43 = arith.constant 0 : index
    %21 = vector.load %arg1[%c0_40, %c2_41, %c1_42, %c0_43] : memref<1x16x16x4xbf16, #tpu.memory_space<vmem>>, vector<1x14x14x4xbf16>
    %22 = vector.shape_cast %21 : vector<1x14x14x4xbf16> to vector<14x14x4xbf16>
    %c0_44 = arith.constant 0 : index
    %c0_45 = arith.constant 0 : index
    %c28 = arith.constant 28 : index
    %23 = vector.load %arg9[%c0_44, %c0_45, %c28] : memref<14x14x36xbf16, #tpu.memory_space<vmem>>, vector<14x14x4xbf16>
    tpu.vector_store %arg9[%c0_44, %c0_45, %c28], %22 {strides = array<i32>} : memref<14x14x36xbf16, #tpu.memory_space<vmem>>, vector<14x14x4xbf16>,
    %c0_46 = arith.constant 0 : index
    %c2_47 = arith.constant 2 : index
    %c2_48 = arith.constant 2 : index
    %c0_49 = arith.constant 0 : index
    %24 = vector.load %arg1[%c0_46, %c2_47, %c2_48, %c0_49] : memref<1x16x16x4xbf16, #tpu.memory_space<vmem>>, vector<1x14x14x4xbf16>
    %25 = vector.shape_cast %24 : vector<1x14x14x4xbf16> to vector<14x14x4xbf16>
    %c0_50 = arith.constant 0 : index
    %c0_51 = arith.constant 0 : index
    %c32 = arith.constant 32 : index
    %26 = vector.load %arg9[%c0_50, %c0_51, %c32] : memref<14x14x36xbf16, #tpu.memory_space<vmem>>, vector<14x14x4xbf16>
    tpu.vector_store %arg9[%c0_50, %c0_51, %c32], %25 {strides = array<i32>} : memref<14x14x36xbf16, #tpu.memory_space<vmem>>, vector<14x14x4xbf16>,
    %c0_52 = arith.constant 0 : index
    %c0_53 = arith.constant 0 : index
    %c0_54 = arith.constant 0 : index
    %27 = vector.load %arg9[%c0_52, %c0_53, %c0_54] : memref<14x14x36xbf16, #tpu.memory_space<vmem>>, vector<14x14x36xbf16>
    %28 = vector.shape_cast %27 : vector<14x14x36xbf16> to vector<196x36xbf16>
    %c0_55 = arith.constant 0 : index
    %c0_56 = arith.constant 0 : index
    %29 = vector.load %arg2[%c0_55, %c0_56] : memref<36x128xbf16, #tpu.memory_space<vmem>>, vector<36x128xbf16>
    %cst = arith.constant dense<0.000000e+00> : vector<196x128xf32>
    %30 = tpu.matmul %28, %29, %cst {dimension_numbers = #tpu.dot_dimension_numbers<[1], [0], [0], [1], [0, 0, 1, 1], [], []>} : vector<196x36xbf16>, vector<36x128xbf16>, vector<196x128xf32> -> vector<196x128xf32>
    %c0_57 = arith.constant 0 : index
    %c0_58 = arith.constant 0 : index
    %31 = vector.load %arg3[%c0_57, %c0_58] : memref<1x128xf32, #tpu.memory_space<vmem>>, vector<1x128xf32>
    %32 = vector.broadcast %31 : vector<1x128xf32> to vector<196x128xf32>
    %33 = arith.addf %30, %32 : vector<196x128xf32>
    %cst_59 = arith.constant 0.000000e+00 : f32
    %34 = vector.broadcast %cst_59 : f32 to vector<196x128xf32>
    %35 = arith.maximumf %33, %34 : vector<196x128xf32>
    %36 = vector.shape_cast %35 : vector<196x128xf32> to vector<14x14x128xf32>
    %37 = arith.truncf %36 : vector<14x14x128xf32> to vector<14x14x128xbf16>
    %c0_60 = arith.constant 0 : index
    %c0_61 = arith.constant 0 : index
    %c0_62 = arith.constant 0 : index
    %38 = vector.load %arg10[%c0_60, %c0_61, %c0_62] : memref<14x14x128xbf16, #tpu.memory_space<vmem>>, vector<14x14x128xbf16>
    tpu.vector_store %arg10[%c0_60, %c0_61, %c0_62], %37 {strides = array<i32>} : memref<14x14x128xbf16, #tpu.memory_space<vmem>>, vector<14x14x128xbf16>,
    %c0_63 = arith.constant 0 : index
    %c0_64 = arith.constant 0 : index
    %c0_65 = arith.constant 0 : index
    %39 = vector.load %arg10[%c0_63, %c0_64, %c0_65] : memref<14x14x128xbf16, #tpu.memory_space<vmem>>, vector<12x12x128xbf16>
    %c0_66 = arith.constant 0 : index
    %c0_67 = arith.constant 0 : index
    %c0_68 = arith.constant 0 : index
    %40 = vector.load %arg11[%c0_66, %c0_67, %c0_68] : memref<12x12x1152xbf16, #tpu.memory_space<vmem>>, vector<12x12x128xbf16>
    tpu.vector_store %arg11[%c0_66, %c0_67, %c0_68], %39 {strides = array<i32>} : memref<12x12x1152xbf16, #tpu.memory_space<vmem>>, vector<12x12x128xbf16>,
    %c0_69 = arith.constant 0 : index
    %c1_70 = arith.constant 1 : index
    %c0_71 = arith.constant 0 : index
    %41 = vector.load %arg10[%c0_69, %c1_70, %c0_71] : memref<14x14x128xbf16, #tpu.memory_space<vmem>>, vector<12x12x128xbf16>
    %c0_72 = arith.constant 0 : index
    %c0_73 = arith.constant 0 : index
    %c128 = arith.constant 128 : index
    %42 = vector.load %arg11[%c0_72, %c0_73, %c128] : memref<12x12x1152xbf16, #tpu.memory_space<vmem>>, vector<12x12x128xbf16>
    tpu.vector_store %arg11[%c0_72, %c0_73, %c128], %41 {strides = array<i32>} : memref<12x12x1152xbf16, #tpu.memory_space<vmem>>, vector<12x12x128xbf16>,
    %c0_74 = arith.constant 0 : index
    %c2_75 = arith.constant 2 : index
    %c0_76 = arith.constant 0 : index
    %43 = vector.load %arg10[%c0_74, %c2_75, %c0_76] : memref<14x14x128xbf16, #tpu.memory_space<vmem>>, vector<12x12x128xbf16>
    %c0_77 = arith.constant 0 : index
    %c0_78 = arith.constant 0 : index
    %c256 = arith.constant 256 : index
    %44 = vector.load %arg11[%c0_77, %c0_78, %c256] : memref<12x12x1152xbf16, #tpu.memory_space<vmem>>, vector<12x12x128xbf16>
    tpu.vector_store %arg11[%c0_77, %c0_78, %c256], %43 {strides = array<i32>} : memref<12x12x1152xbf16, #tpu.memory_space<vmem>>, vector<12x12x128xbf16>,
    %c1_79 = arith.constant 1 : index
    %c0_80 = arith.constant 0 : index
    %c0_81 = arith.constant 0 : index
    %45 = vector.load %arg10[%c1_79, %c0_80, %c0_81] : memref<14x14x128xbf16, #tpu.memory_space<vmem>>, vector<12x12x128xbf16>
    %c0_82 = arith.constant 0 : index
    %c0_83 = arith.constant 0 : index
    %c384 = arith.constant 384 : index
    %46 = vector.load %arg11[%c0_82, %c0_83, %c384] : memref<12x12x1152xbf16, #tpu.memory_space<vmem>>, vector<12x12x128xbf16>
    tpu.vector_store %arg11[%c0_82, %c0_83, %c384], %45 {strides = array<i32>} : memref<12x12x1152xbf16, #tpu.memory_space<vmem>>, vector<12x12x128xbf16>,
    %c1_84 = arith.constant 1 : index
    %c1_85 = arith.constant 1 : index
    %c0_86 = arith.constant 0 : index
    %47 = vector.load %arg10[%c1_84, %c1_85, %c0_86] : memref<14x14x128xbf16, #tpu.memory_space<vmem>>, vector<12x12x128xbf16>
    %c0_87 = arith.constant 0 : index
    %c0_88 = arith.constant 0 : index
    %c512 = arith.constant 512 : index
    %48 = vector.load %arg11[%c0_87, %c0_88, %c512] : memref<12x12x1152xbf16, #tpu.memory_space<vmem>>, vector<12x12x128xbf16>
    tpu.vector_store %arg11[%c0_87, %c0_88, %c512], %47 {strides = array<i32>} : memref<12x12x1152xbf16, #tpu.memory_space<vmem>>, vector<12x12x128xbf16>,
    %c1_89 = arith.constant 1 : index
    %c2_90 = arith.constant 2 : index
    %c0_91 = arith.constant 0 : index
    %49 = vector.load %arg10[%c1_89, %c2_90, %c0_91] : memref<14x14x128xbf16, #tpu.memory_space<vmem>>, vector<12x12x128xbf16>
    %c0_92 = arith.constant 0 : index
    %c0_93 = arith.constant 0 : index
    %c640 = arith.constant 640 : index
    %50 = vector.load %arg11[%c0_92, %c0_93, %c640] : memref<12x12x1152xbf16, #tpu.memory_space<vmem>>, vector<12x12x128xbf16>
    tpu.vector_store %arg11[%c0_92, %c0_93, %c640], %49 {strides = array<i32>} : memref<12x12x1152xbf16, #tpu.memory_space<vmem>>, vector<12x12x128xbf16>,
    %c2_94 = arith.constant 2 : index
    %c0_95 = arith.constant 0 : index
    %c0_96 = arith.constant 0 : index
    %51 = vector.load %arg10[%c2_94, %c0_95, %c0_96] : memref<14x14x128xbf16, #tpu.memory_space<vmem>>, vector<12x12x128xbf16>
    %c0_97 = arith.constant 0 : index
    %c0_98 = arith.constant 0 : index
    %c768 = arith.constant 768 : index
    %52 = vector.load %arg11[%c0_97, %c0_98, %c768] : memref<12x12x1152xbf16, #tpu.memory_space<vmem>>, vector<12x12x128xbf16>
    tpu.vector_store %arg11[%c0_97, %c0_98, %c768], %51 {strides = array<i32>} : memref<12x12x1152xbf16, #tpu.memory_space<vmem>>, vector<12x12x128xbf16>,
    %c2_99 = arith.constant 2 : index
    %c1_100 = arith.constant 1 : index
    %c0_101 = arith.constant 0 : index
    %53 = vector.load %arg10[%c2_99, %c1_100, %c0_101] : memref<14x14x128xbf16, #tpu.memory_space<vmem>>, vector<12x12x128xbf16>
    %c0_102 = arith.constant 0 : index
    %c0_103 = arith.constant 0 : index
    %c896 = arith.constant 896 : index
    %54 = vector.load %arg11[%c0_102, %c0_103, %c896] : memref<12x12x1152xbf16, #tpu.memory_space<vmem>>, vector<12x12x128xbf16>
    tpu.vector_store %arg11[%c0_102, %c0_103, %c896], %53 {strides = array<i32>} : memref<12x12x1152xbf16, #tpu.memory_space<vmem>>, vector<12x12x128xbf16>,
    %c2_104 = arith.constant 2 : index
    %c2_105 = arith.constant 2 : index
    %c0_106 = arith.constant 0 : index
    %55 = vector.load %arg10[%c2_104, %c2_105, %c0_106] : memref<14x14x128xbf16, #tpu.memory_space<vmem>>, vector<12x12x128xbf16>
    %c0_107 = arith.constant 0 : index
    %c0_108 = arith.constant 0 : index
    %c1024 = arith.constant 1024 : index
    %56 = vector.load %arg11[%c0_107, %c0_108, %c1024] : memref<12x12x1152xbf16, #tpu.memory_space<vmem>>, vector<12x12x128xbf16>
    tpu.vector_store %arg11[%c0_107, %c0_108, %c1024], %55 {strides = array<i32>} : memref<12x12x1152xbf16, #tpu.memory_space<vmem>>, vector<12x12x128xbf16>,
    %c0_109 = arith.constant 0 : index
    %c0_110 = arith.constant 0 : index
    %c0_111 = arith.constant 0 : index
    %57 = vector.load %arg11[%c0_109, %c0_110, %c0_111] : memref<12x12x1152xbf16, #tpu.memory_space<vmem>>, vector<12x12x1152xbf16>
    %58 = vector.shape_cast %57 : vector<12x12x1152xbf16> to vector<144x1152xbf16>
    %c0_112 = arith.constant 0 : index
    %c0_113 = arith.constant 0 : index
    %59 = vector.load %arg4[%c0_112, %c0_113] : memref<1152x128xbf16, #tpu.memory_space<vmem>>, vector<1152x128xbf16>
    %cst_114 = arith.constant dense<0.000000e+00> : vector<144x128xf32>
    %60 = tpu.matmul %58, %59, %cst_114 {dimension_numbers = #tpu.dot_dimension_numbers<[1], [0], [0], [1], [0, 0, 1, 1], [], []>} : vector<144x1152xbf16>, vector<1152x128xbf16>, vector<144x128xf32> -> vector<144x128xf32>
    %c0_115 = arith.constant 0 : index
    %c0_116 = arith.constant 0 : index
    %61 = vector.load %arg5[%c0_115, %c0_116] : memref<1x128xf32, #tpu.memory_space<vmem>>, vector<1x128xf32>
    %62 = vector.broadcast %61 : vector<1x128xf32> to vector<144x128xf32>
    %63 = arith.addf %60, %62 : vector<144x128xf32>
    %cst_117 = arith.constant 0.000000e+00 : f32
    %64 = vector.broadcast %cst_117 : f32 to vector<144x128xf32>
    %65 = arith.maximumf %63, %64 : vector<144x128xf32>
    %66 = vector.shape_cast %65 : vector<144x128xf32> to vector<12x12x128xf32>
    %67 = arith.truncf %66 : vector<12x12x128xf32> to vector<12x12x128xbf16>
    %c0_118 = arith.constant 0 : index
    %c0_119 = arith.constant 0 : index
    %c0_120 = arith.constant 0 : index
    %68 = vector.load %arg12[%c0_118, %c0_119, %c0_120] : memref<12x12x128xbf16, #tpu.memory_space<vmem>>, vector<12x12x128xbf16>
    tpu.vector_store %arg12[%c0_118, %c0_119, %c0_120], %67 {strides = array<i32>} : memref<12x12x128xbf16, #tpu.memory_space<vmem>>, vector<12x12x128xbf16>,
    %c0_121 = arith.constant 0 : index
    %c0_122 = arith.constant 0 : index
    %c0_123 = arith.constant 0 : index
    %69 = vector.load %arg12[%c0_121, %c0_122, %c0_123] : memref<12x12x128xbf16, #tpu.memory_space<vmem>>, vector<12x12x128xbf16>
    %70 = vector.shape_cast %69 : vector<12x12x128xbf16> to vector<144x128xbf16>
    %71 = arith.extf %70 : vector<144x128xbf16> to vector<144x128xf32>
    %cst_124 = arith.constant dense<0.000000e+00> : vector<128xf32>
    %72 = vector.multi_reduction <add>, %71, %cst_124 [0] : vector<144x128xf32> to vector<128xf32>
    %73 = vector.shape_cast %72 : vector<128xf32> to vector<1x128xf32>
    %cst_125 = arith.constant 1.440000e+02 : f32
    %74 = vector.broadcast %cst_125 : f32 to vector<1x128xf32>
    %75 = arith.divf %73, %74 : vector<1x128xf32>
    %76 = arith.truncf %75 : vector<1x128xf32> to vector<1x128xbf16>
    %c0_126 = arith.constant 0 : index
    %c0_127 = arith.constant 0 : index
    %77 = vector.load %arg6[%c0_126, %c0_127] : memref<128x128xbf16, #tpu.memory_space<vmem>>, vector<128x128xbf16>
    %cst_128 = arith.constant dense<0.000000e+00> : vector<1x128xf32>
    %78 = tpu.matmul %76, %77, %cst_128 {dimension_numbers = #tpu.dot_dimension_numbers<[1], [0], [0], [1], [0, 0, 1, 1], [], []>} : vector<1x128xbf16>, vector<128x128xbf16>, vector<1x128xf32> -> vector<1x128xf32>
    %c0_129 = arith.constant 0 : index
    %c0_130 = arith.constant 0 : index
    %79 = vector.load %arg7[%c0_129, %c0_130] : memref<1x128xf32, #tpu.memory_space<vmem>>, vector<1x128xf32>
    %80 = arith.addf %78, %79 : vector<1x128xf32>
    %cst_131 = arith.constant dense<0xFF800000> : vector<1xf32>
    %81 = vector.multi_reduction <maximumf>, %80, %cst_131 [1] : vector<1x128xf32> to vector<1xf32>
    %82 = vector.shape_cast %81 : vector<1xf32> to vector<1x1xf32>
    %83 = vector.broadcast %82 : vector<1x1xf32> to vector<1x128xf32>
    %84 = arith.subf %80, %83 : vector<1x128xf32>
    %85 = math.exp %84 : vector<1x128xf32>
    %cst_132 = arith.constant dense<0.000000e+00> : vector<1xf32>
    %86 = vector.multi_reduction <add>, %85, %cst_132 [1] : vector<1x128xf32> to vector<1xf32>
    %87 = vector.shape_cast %86 : vector<1xf32> to vector<1x1xf32>
    %88 = math.log %87 : vector<1x1xf32>
    %89 = vector.broadcast %88 : vector<1x1xf32> to vector<1x128xf32>
    %90 = arith.subf %84, %89 : vector<1x128xf32>
    %91 = vector.shape_cast %90 : vector<1x128xf32> to vector<1x1x128xf32>
    %c0_133 = arith.constant 0 : index
    %c0_134 = arith.constant 0 : index
    %c0_135 = arith.constant 0 : index
    %92 = vector.load %arg8[%c0_133, %c0_134, %c0_135] : memref<1x1x128xf32, #tpu.memory_space<vmem>>, vector<1x1x128xf32>
    tpu.vector_store %arg8[%c0_133, %c0_134, %c0_135], %91 {strides = array<i32>} : memref<1x1x128xf32, #tpu.memory_space<vmem>>, vector<1x1x128xf32>,
    return
  }
  func.func @transform_0(%arg0: i32) -> (i32, i32, i32, i32) {
    %c0_i32 = arith.constant 0 : i32
    %c0_i32_0 = arith.constant 0 : i32
    %c0_i32_1 = arith.constant 0 : i32
    %c0_i32_2 = arith.constant 0 : i32
    return %arg0, %c0_i32, %c0_i32_0, %c0_i32_1 : i32, i32, i32, i32
  }
  func.func @transform_1(%arg0: i32) -> (i32, i32) {
    %c0_i32 = arith.constant 0 : i32
    %c0_i32_0 = arith.constant 0 : i32
    %c0_i32_1 = arith.constant 0 : i32
    return %c0_i32, %c0_i32_0 : i32, i32
  }
  func.func @transform_2(%arg0: i32) -> (i32, i32) {
    %c0_i32 = arith.constant 0 : i32
    %c0_i32_0 = arith.constant 0 : i32
    %c0_i32_1 = arith.constant 0 : i32
    return %c0_i32, %c0_i32_0 : i32, i32
  }
  func.func @transform_3(%arg0: i32) -> (i32, i32) {
    %c0_i32 = arith.constant 0 : i32
    %c0_i32_0 = arith.constant 0 : i32
    %c0_i32_1 = arith.constant 0 : i32
    return %c0_i32, %c0_i32_0 : i32, i32
  }
  func.func @transform_4(%arg0: i32) -> (i32, i32) {
    %c0_i32 = arith.constant 0 : i32
    %c0_i32_0 = arith.constant 0 : i32
    %c0_i32_1 = arith.constant 0 : i32
    return %c0_i32, %c0_i32_0 : i32, i32
  }
  func.func @transform_5(%arg0: i32) -> (i32, i32) {
    %c0_i32 = arith.constant 0 : i32
    %c0_i32_0 = arith.constant 0 : i32
    %c0_i32_1 = arith.constant 0 : i32
    return %c0_i32, %c0_i32_0 : i32, i32
  }
  func.func @transform_6(%arg0: i32) -> (i32, i32) {
    %c0_i32 = arith.constant 0 : i32
    %c0_i32_0 = arith.constant 0 : i32
    %c0_i32_1 = arith.constant 0 : i32
    return %c0_i32, %c0_i32_0 : i32, i32
  }
  func.func @transform_7(%arg0: i32) -> (i32, i32, i32) {
    %c0_i32 = arith.constant 0 : i32
    %c0_i32_0 = arith.constant 0 : i32
    %c0_i32_1 = arith.constant 0 : i32
    return %arg0, %c0_i32, %c0_i32_0 : i32, i32, i32
  }
}

</mosaic_0001>

<llo_original>
// kernel: simnet_forward.1
$region0: #{simnet_forward.1}
  #allocation0 [shape = 'u32[]', space=smem, size = 0x4, offset = 0x4, fixed_abs, tag = 'smem constant byte address 0x4 - core index']
  #allocation1 [shape = 'u32[72,128]{1,0:T(1,128)}', space=vmem, size = 0x9000, scoped, tag = 'internal scratch']
  #allocation2 [shape = 'bf16[14,14,36]{2,1,0:T(8,128)(2,1)}', space=vmem, size = 0xe000, scoped, tag = 'scratch operand']
  #allocation3 [shape = 'bf16[14,14,128]{2,1,0:T(8,128)(2,1)}', space=vmem, size = 0xe000, scoped, tag = 'scratch operand']
  #allocation4 [shape = 'bf16[12,12,1152]{2,1,0:T(8,128)(2,1)}', space=vmem, size = 0x6c000, scoped, tag = 'scratch operand']
  #allocation5 [shape = 'bf16[12,12,128]{2,1,0:T(8,128)(2,1)}', space=vmem, size = 0xc000, scoped, tag = 'scratch operand']
  %s0 = inlined_call_operand.vmem [shape: bf16[2,16,16,4], index: 0, kind: input, shape index: {}]
  %s1 = inlined_call_operand.vmem [shape: bf16[36,128], index: 1, kind: input, shape index: {}]
  %s2 = inlined_call_operand.vmem [shape: f32[1,128], index: 2, kind: input, shape index: {}]
  %s3 = inlined_call_operand.hbm [shape: bf16[1152,128], index: 3, kind: input, shape index: {}]
  %s4 = inlined_call_operand.vmem [shape: f32[1,128], index: 4, kind: input, shape index: {}]
  %s5 = inlined_call_operand.vmem [shape: bf16[128,128], index: 5, kind: input, shape index: {}]
  %s6 = inlined_call_operand.vmem [shape: f32[1,128], index: 6, kind: input, shape index: {}]
  %s7 = inlined_call_operand.hbm [shape: f32[2,1,128], index: 7, kind: output, shape index: {}]
  %s8 = sld [smem:[#allocation0]]
  $region65: #{simnet_forward.1} parent=0
    _
  %s10 = ssub.s32 1, %s8
  %s11 = scalar_select 0, %s10, %s8
  $region1: #{simnet_forward.1} parent=0
    #allocation6 [shape = 'u8[294912]{0}', space=vmem, size = 0x48000, scoped, tag = 'input window, operand 3, single buffered']
    #allocation7 [shape = 's32[2]{0}', space=sflag, size = 0x8, scoped, tag = 'scoped memory for simnet_forward.1']
    #allocation8 [shape = 's32[2]{0}', space=sflag, size = 0x8, scoped, tag = 'scoped memory for simnet_forward.1']
    #allocation9 [shape = 'u8[1024]{0}', space=vmem, size = 0x400, scoped, tag = 'output window, operand 0']
    %12 = vsyncpa [#allocation7], 0
    %13 = vsyncpa [#allocation8], 0
    %s14 = scalar_lea.sflag [#allocation8], 1
    %15 = vsyncpa %s14, 0
    loop: start=0, step=1, limit=4
    $region2: #{simnet_forward.1} parent=1 // loop_pre_header
      _
    $region3: #{simnet_forward.1} parent=1 // loop_header
      %s17 = sphi 0, %s21
      %p18 = scmp.ge.s32.totalorder %s17, 4
      %s27 = sphi 0, %s29
      %s30 = sphi 0, %s27
      %s31 = sphi 0, %s30
      %s47 = sphi 0, %s31
      %s51 = sphi 0, %s51
      %s53 = sphi 0, %s51
      %s54 = sphi 0, %s53
      %s68 = sphi 0, %s54
      %s72 = sphi 0, %s72
      %s74 = sphi 0, %s72
      %s75 = sphi 0, %s74
      %s89 = sphi 0, %s75
      %s93 = sphi 0, %s93
      %s95 = sphi 0, %s93
      %s96 = sphi 0, %s95
      %s110 = sphi 0, %s96
      %s114 = sphi 0, %s114
      %s116 = sphi 0, %s114
      %s117 = sphi 0, %s116
      %s131 = sphi 0, %s117
      %s135 = sphi 0, %s135
      %s137 = sphi 0, %s135
      %s138 = sphi 0, %s137
      %s152 = sphi 0, %s138
      %s156 = sphi 0, %s156
      %s158 = sphi 0, %s156
      %s159 = sphi 0, %s158
      %s173 = sphi 0, %s159
      %s179 = sphi 0, %s181
      %s182 = sphi 0, %s179
      %s183 = sphi 0, %s182
      %s199 = sphi 0, %s183
    $region4: #{simnet_forward.1} parent=1 // loop_header_branch
      %20 = sbr.rel (%p18) target = $region8
    $region5: #{simnet_forward.1} parent=1 // loop_body
      %s22 = ssub.s32 %s17, 1
      %s23 = ssub.s32 %s17, 2
      %s24 = sadd.s32 %s17, 1
      %s25 = ssub.s32 %s17, %s24
      %p26 = scmp.eq.s32.totalorder %s25, 0
      %s28 = sadd.s32 %s27, 1
      %s29 = scalar_select %p26, %s27, %s28
      %p32 = pneg %p26
      %p33 = scmp.eq.s32.totalorder %s17, 1
      %p34 = por %p32, %p33
      %p35 = scmp.ne.s32.totalorder %s27, %s30
      %p36 = scmp.eq.s32.totalorder %s17, 0
      %p37 = por %p35, %p36
      %p38 = scmp.ne.s32.totalorder %s27, %s30
      %p39 = scmp.eq.s32.totalorder %s22, 1
      %p40 = por %p38, %p39
      %p41 = scmp.ne.s32.totalorder %s30, %s31
      %p42 = scmp.eq.s32.totalorder %s22, 0
      %p43 = por %p41, %p42
      %p44 = scmp.ne.s32.totalorder %s30, %s31
      %p45 = scmp.eq.s32.totalorder %s23, 1
      %p46 = por %p44, %p45
      %p48 = scmp.ne.s32.totalorder %s31, %s47
      %p49 = scmp.eq.s32.totalorder %s23, 0
      %p50 = por %p48, %p49
      %s52 = sadd.s32 %s51, 1
      %p55 = scmp.eq.s32.totalorder %s17, 1
      %p56 = scmp.ne.s32.totalorder %s51, %s53
      %p57 = scmp.eq.s32.totalorder %s17, 0
      %p58 = por %p56, %p57
      %p59 = scmp.ne.s32.totalorder %s51, %s53
      %p60 = scmp.eq.s32.totalorder %s22, 1
      %p61 = por %p59, %p60
      %p62 = scmp.ne.s32.totalorder %s53, %s54
      %p63 = scmp.eq.s32.totalorder %s22, 0
      %p64 = por %p62, %p63
      %p65 = scmp.ne.s32.totalorder %s53, %s54
      %p66 = scmp.eq.s32.totalorder %s23, 1
      %p67 = por %p65, %p66
      %p69 = scmp.ne.s32.totalorder %s54, %s68
      %p70 = scmp.eq.s32.totalorder %s23, 0
      %p71 = por %p69, %p70
      %s73 = sadd.s32 %s72, 1
      %p76 = scmp.eq.s32.totalorder %s17, 1
      %p77 = scmp.ne.s32.totalorder %s72, %s74
      %p78 = scmp.eq.s32.totalorder %s17, 0
      %p79 = por %p77, %p78
      %p80 = scmp.ne.s32.totalorder %s72, %s74
      %p81 = scmp.eq.s32.totalorder %s22, 1
      %p82 = por %p80, %p81
      %p83 = scmp.ne.s32.totalorder %s74, %s75
      %p84 = scmp.eq.s32.totalorder %s22, 0
      %p85 = por %p83, %p84
      %p86 = scmp.ne.s32.totalorder %s74, %s75
      %p87 = scmp.eq.s32.totalorder %s23, 1
      %p88 = por %p86, %p87
      %p90 = scmp.ne.s32.totalorder %s75, %s89
      %p91 = scmp.eq.s32.totalorder %s23, 0
      %p92 = por %p90, %p91
      %s94 = sadd.s32 %s93, 1
      %p97 = scmp.eq.s32.totalorder %s17, 1
      %p98 = scmp.ne.s32.totalorder %s93, %s95
      %p99 = scmp.eq.s32.totalorder %s17, 0
      %p100 = por %p98, %p99
      %p101 = scmp.ne.s32.totalorder %s93, %s95
      %p102 = scmp.eq.s32.totalorder %s22, 1
      %p103 = por %p101, %p102
      %p104 = scmp.ne.s32.totalorder %s95, %s96
      %p105 = scmp.eq.s32.totalorder %s22, 0
      %p106 = por %p104, %p105
      %p107 = scmp.ne.s32.totalorder %s95, %s96
      %p108 = scmp.eq.s32.totalorder %s23, 1
      %p109 = por %p107, %p108
      %p111 = scmp.ne.s32.totalorder %s96, %s110
      %p112 = scmp.eq.s32.totalorder %s23, 0
      %p113 = por %p111, %p112
      %s115 = sadd.s32 %s114, 1
      %p118 = scmp.eq.s32.totalorder %s17, 1
      %p119 = scmp.ne.s32.totalorder %s114, %s116
      %p120 = scmp.eq.s32.totalorder %s17, 0
      %p121 = por %p119, %p120
      %p122 = scmp.ne.s32.totalorder %s114, %s116
      %p123 = scmp.eq.s32.totalorder %s22, 1
      %p124 = por %p122, %p123
      %p125 = scmp.ne.s32.totalorder %s116, %s117
      %p126 = scmp.eq.s32.totalorder %s22, 0
      %p127 = por %p125, %p126
      %p128 = scmp.ne.s32.totalorder %s116, %s117
      %p129 = scmp.eq.s32.totalorder %s23, 1
      %p130 = por %p128, %p129
      %p132 = scmp.ne.s32.totalorder %s117, %s131
      %p133 = scmp.eq.s32.totalorder %s23, 0
      %p134 = por %p132, %p133
      %s136 = sadd.s32 %s135, 1
      %p139 = scmp.eq.s32.totalorder %s17, 1
      %p140 = scmp.ne.s32.totalorder %s135, %s137
      %p141 = scmp.eq.s32.totalorder %s17, 0
      %p142 = por %p140, %p141
      %p143 = scmp.ne.s32.totalorder %s135, %s137
      %p144 = scmp.eq.s32.totalorder %s22, 1
      %p145 = por %p143, %p144
      %p146 = scmp.ne.s32.totalorder %s137, %s138
      %p147 = scmp.eq.s32.totalorder %s22, 0
      %p148 = por %p146, %p147
      %p149 = scmp.ne.s32.totalorder %s137, %s138
      %p150 = scmp.eq.s32.totalorder %s23, 1
      %p151 = por %p149, %p150
      %p153 = scmp.ne.s32.totalorder %s138, %s152
      %p154 = scmp.eq.s32.totalorder %s23, 0
      %p155 = por %p153, %p154
      %s157 = sadd.s32 %s156, 1
      %p160 = scmp.eq.s32.totalorder %s17, 1
      %p161 = scmp.ne.s32.totalorder %s156, %s158
      %p162 = scmp.eq.s32.totalorder %s17, 0
      %p163 = por %p161, %p162
      %p164 = scmp.ne.s32.totalorder %s156, %s158
      %p165 = scmp.eq.s32.totalorder %s22, 1
      %p166 = por %p164, %p165
      %p167 = scmp.ne.s32.totalorder %s158, %s159
      %p168 = scmp.eq.s32.totalorder %s22, 0
      %p169 = por %p167, %p168
      %p170 = scmp.ne.s32.totalorder %s158, %s159
      %p171 = scmp.eq.s32.totalorder %s23, 1
      %p172 = por %p170, %p171
      %p174 = scmp.ne.s32.totalorder %s159, %s173
      %p175 = scmp.eq.s32.totalorder %s23, 0
      %p176 = por %p174, %p175
      %s177 = ssub.s32 %s17, %s24
      %p178 = scmp.eq.s32.totalorder %s177, 0
      %s180 = sadd.s32 %s179, 1
      %s181 = scalar_select %p178, %s179, %s180
      %p184 = pneg %p178
      %p185 = scmp.eq.s32.totalorder %s17, 1
      %p186 = por %p184, %p185
      %p187 = scmp.ne.s32.totalorder %s179, %s182
      %p188 = scmp.eq.s32.totalorder %s17, 0
      %p189 = por %p187, %p188
      %p190 = scmp.ne.s32.totalorder %s179, %s182
      %p191 = scmp.eq.s32.totalorder %s22, 1
      %p192 = por %p190, %p191
      %p193 = scmp.ne.s32.totalorder %s182, %s183
      %p194 = scmp.eq.s32.totalorder %s22, 0
      %p195 = por %p193, %p194
      %p196 = scmp.ne.s32.totalorder %s182, %s183
      %p197 = scmp.eq.s32.totalorder %s23, 1
      %p198 = por %p196, %p197
      %p200 = scmp.ne.s32.totalorder %s183, %s199
      %p201 = scmp.eq.s32.totalorder %s23, 0
      %p202 = por %p200, %p201
      %p203 = scmp.le.s32.totalorder 1, %s17
      %p204 = scmp.lt.s32.totalorder %s17, 3
      %p205 = pnand %p203, %p204
      %p206 = pneg %p205
      // Predicated region
      $region9: #{simnet_forward.1} parent=5 // pred_check
        _
      $region10: #{simnet_forward.1} parent=5 // pred_check_branch
        %208 = sbr.rel (%p205) target = $region12
      $region11: #{simnet_forward.1} parent=5 // pred_region
        %s209 = ssub.s32 %s17, 1
        // Predicated region
        $region13: #{simnet_forward.1} parent=11 // pred_check
          %p210 = pneg %p64
        $region14: #{simnet_forward.1} parent=11 // pred_check_branch
          %212 = sbr.rel (%p210) target = $region16
        $region15: #{simnet_forward.1} parent=11 // pred_region
          _
        $region16: #{simnet_forward.1} parent=11 // pred_fallthru
          _
        // Predicated region
        $region17: #{simnet_forward.1} parent=11 // pred_check
          %p213 = pneg %p85
        $region18: #{simnet_forward.1} parent=11 // pred_check_branch
          %215 = sbr.rel (%p213) target = $region20
        $region19: #{simnet_forward.1} parent=11 // pred_region
          _
        $region20: #{simnet_forward.1} parent=11 // pred_fallthru
          _
        // Predicated region
        $region21: #{simnet_forward.1} parent=11 // pred_check
          %p216 = pneg %p106
        $region22: #{simnet_forward.1} parent=11 // pred_check_branch
          %218 = sbr.rel (%p216) target = $region24
        $region23: #{simnet_forward.1} parent=11 // pred_region
          %220 = vsyncadd [#allocation7], 0
          %s221 = sshll.u32 %s3, 4
          %s222 = int_to_ptr.hbm [resolvable:$true] %s221
          %s223 = sshll.u32 [#allocation6], 4
          %s224 = int_to_ptr.vmem [resolvable:$true] %s223
          %229 = dma.hbm_to_vmem [thread:$0]  %s222, 9216, %s224, [#allocation7], 64, 64, 4
        $region24: #{simnet_forward.1} parent=11 // pred_fallthru
          _
        // Predicated region
        $region25: #{simnet_forward.1} parent=11 // pred_check
          %p230 = pneg %p127
        $region26: #{simnet_forward.1} parent=11 // pred_check_branch
          %232 = sbr.rel (%p230) target = $region28
        $region27: #{simnet_forward.1} parent=11 // pred_region
          _
        $region28: #{simnet_forward.1} parent=11 // pred_fallthru
          _
        // Predicated region
        $region29: #{simnet_forward.1} parent=11 // pred_check
          %p233 = pneg %p148
        $region30: #{simnet_forward.1} parent=11 // pred_check_branch
          %235 = sbr.rel (%p233) target = $region32
        $region31: #{simnet_forward.1} parent=11 // pred_region
          _
        $region32: #{simnet_forward.1} parent=11 // pred_fallthru
          _
        // Predicated region
        $region33: #{simnet_forward.1} parent=11 // pred_check
          %p236 = pneg %p169
        $region34: #{simnet_forward.1} parent=11 // pred_check_branch
          %238 = sbr.rel (%p236) target = $region36
        $region35: #{simnet_forward.1} parent=11 // pred_region
          _
        $region36: #{simnet_forward.1} parent=11 // pred_fallthru
          _
      $region12: #{simnet_forward.1} parent=5 // pred_fallthru
        _
      %p239 = scmp.lt.s32.totalorder %s17, 2
      // Predicated region
      $region37: #{simnet_forward.1} parent=5 // pred_check
        %p240 = pneg %p239
      $region38: #{simnet_forward.1} parent=5 // pred_check_branch
        %242 = sbr.rel (%p240) target = $region40
      $region39: #{simnet_forward.1} parent=5 // pred_region
        // Predicated region
        $region41: #{simnet_forward.1} parent=39 // pred_check
          %p243 = pneg %p37
        $region42: #{simnet_forward.1} parent=39 // pred_check_branch
          %245 = sbr.rel (%p243) target = $region44
        $region43: #{simnet_forward.1} parent=39 // pred_region
          %p246 = scmp.lt.s32.totalorder %s17, 1
          %s247 = scalar_select %p246, %s17, 1
          %s248 = smul.addr %s247, 32
          %s249 = smul.addr %s248, 4
          %s250 = scalar_lea.vmem %s0, %s249
        $region44: #{simnet_forward.1} parent=39 // pred_fallthru
          _
      $region40: #{simnet_forward.1} parent=5 // pred_fallthru
        _
      %p251 = scmp.le.s32.totalorder 1, %s17
      %p252 = scmp.lt.s32.totalorder %s17, 3
      %p253 = pnand %p251, %p252
      %p254 = pneg %p253
      // Predicated region
      $region45: #{simnet_forward.1} parent=5 // pred_check
        _
      $region46: #{simnet_forward.1} parent=5 // pred_check_branch
        %256 = sbr.rel (%p253) target = $region48
      $region47: #{simnet_forward.1} parent=5 // pred_region
        %s257 = ssub.s32 %s17, 1
        // Predicated region
        $region49: #{simnet_forward.1} parent=47 // pred_check
          %p258 = pneg %p106
        $region50: #{simnet_forward.1} parent=47 // pred_check_branch
          %260 = sbr.rel (%p258) target = $region52
        $region51: #{simnet_forward.1} parent=47 // pred_region
          %262 = dma.done [#allocation7], 9216
        $region52: #{simnet_forward.1} parent=47 // pred_fallthru
          _
        %p263 = scmp.lt.s32.totalorder %s22, 1
        %s264 = scalar_select %p263, %s22, 1
        %s265 = smul.addr %s264, 32
        %s266 = smul.addr %s265, 4
        %s267 = scalar_lea.vmem %s0, %s266
        %p268 = pneg %p43
        %p269 = pneg %p40
        %p270 = pneg %p64
        %p271 = pneg %p61
        %p272 = pneg %p85
        %p273 = pneg %p82
        %p274 = pneg %p106
        %p275 = pneg %p103
        %p276 = pneg %p127
        %p277 = pneg %p124
        %p278 = pneg %p148
        %p279 = pneg %p145
        %p280 = pneg %p169
        %p281 = pneg %p166
        %p282 = pneg %p195
        %p283 = pneg %p192
        %s284 = sand.u32 %s182, 1
        %s285 = scalar_lea.sflag [#allocation8], %s284
        %s286 = sand.u32 %s182, 1
        %s287 = scalar_lea.vmem [#allocation9], %s286
        %p288 = scmp.lt.s32.totalorder %s22, 1
        %s289 = scalar_select %p288, %s22, 1
        %s290 = smul.addr %s289, 32
        %s291 = smul.addr %s290, 4
        %s292 = scalar_lea.vmem %s0, %s291
        %v294 = vld [vmem:[%s292] sm:$0xf]
        %v295 = vld [vmem:[%s292 + $0x4] sm:$0x7]
        %v296 = vld [vmem:[%s292 + $0x8] sm:$0xf]
        %v297 = vld [vmem:[%s292 + $0xc] sm:$0x7]
        %v298 = vld [vmem:[%s292 + $0x10] sm:$0xf]
        %v299 = vld [vmem:[%s292 + $0x14] sm:$0x7]
        %v300 = vld [vmem:[%s292 + $0x18] sm:$0xf]
        %v301 = vld [vmem:[%s292 + $0x1c] sm:$0x7]
        %v302 = vld [vmem:[%s292 + $0x20] sm:$0xf]
        %v303 = vld [vmem:[%s292 + $0x24] sm:$0x7]
        %v304 = vld [vmem:[%s292 + $0x28] sm:$0xf]
        %v305 = vld [vmem:[%s292 + $0x2c] sm:$0x7]
        %v306 = vld [vmem:[%s292 + $0x30] sm:$0xf]
        %v307 = vld [vmem:[%s292 + $0x34] sm:$0x7]
        %v308 = vld [vmem:[%s292 + $0x38] sm:$0xf]
        %v309 = vld [vmem:[%s292 + $0x3c] sm:$0x7]
        %v310 = vld [vmem:[%s292 + $0x40] sm:$0xf]
        %v311 = vld [vmem:[%s292 + $0x44] sm:$0x7]
        %v312 = vld [vmem:[%s292 + $0x48] sm:$0xf]
        %v313 = vld [vmem:[%s292 + $0x4c] sm:$0x7]
        %v314 = vld [vmem:[%s292 + $0x50] sm:$0xf]
        %v315 = vld [vmem:[%s292 + $0x54] sm:$0x7]
        %v316 = vld [vmem:[%s292 + $0x58] sm:$0xf]
        %v317 = vld [vmem:[%s292 + $0x5c] sm:$0x7]
        %v318 = vld [vmem:[%s292 + $0x60] sm:$0xf]
        %v319 = vld [vmem:[%s292 + $0x64] sm:$0x7]
        %v320 = vld [vmem:[%s292 + $0x68] sm:$0xf]
        %v321 = vld [vmem:[%s292 + $0x6c] sm:$0x7]
        %vm322 = vcmask 27648
        %323 = vst.msk [vmem:[#allocation2] sm:$0xf] %vm322, %v294
        %vm324 = vcmask 26624
        %325 = vst.msk [vmem:[#allocation2 + $0x4] sm:$0x7] %vm324, %v295
        %326 = vst.msk [vmem:[#allocation2 + $0x8] sm:$0xf] %vm322, %v296
        %327 = vst.msk [vmem:[#allocation2 + $0xc] sm:$0x7] %vm324, %v297
        %328 = vst.msk [vmem:[#allocation2 + $0x10] sm:$0xf] %vm322, %v298
        %329 = vst.msk [vmem:[#allocation2 + $0x14] sm:$0x7] %vm324, %v299
        %330 = vst.msk [vmem:[#allocation2 + $0x18] sm:$0xf] %vm322, %v300
        %331 = vst.msk [vmem:[#allocation2 + $0x1c] sm:$0x7] %vm324, %v301
        %332 = vst.msk [vmem:[#allocation2 + $0x20] sm:$0xf] %vm322, %v302
        %333 = vst.msk [vmem:[#allocation2 + $0x24] sm:$0x7] %vm324, %v303
        %334 = vst.msk [vmem:[#allocation2 + $0x28] sm:$0xf] %vm322, %v304
        %335 = vst.msk [vmem:[#allocation2 + $0x2c] sm:$0x7] %vm324, %v305
        %336 = vst.msk [vmem:[#allocation2 + $0x30] sm:$0xf] %vm322, %v306
        %337 = vst.msk [vmem:[#allocation2 + $0x34] sm:$0x7] %vm324, %v307
        %338 = vst.msk [vmem:[#allocation2 + $0x38] sm:$0xf] %vm322, %v308
        %339 = vst.msk [vmem:[#allocation2 + $0x3c] sm:$0x7] %vm324, %v309
        %340 = vst.msk [vmem:[#allocation2 + $0x40] sm:$0xf] %vm322, %v310
        %341 = vst.msk [vmem:[#allocation2 + $0x44] sm:$0x7] %vm324, %v311
        %342 = vst.msk [vmem:[#allocation2 + $0x48] sm:$0xf] %vm322, %v312
        %343 = vst.msk [vmem:[#allocation2 + $0x4c] sm:$0x7] %vm324, %v313
        %344 = vst.msk [vmem:[#allocation2 + $0x50] sm:$0xf] %vm322, %v314
        %345 = vst.msk [vmem:[#allocation2 + $0x54] sm:$0x7] %vm324, %v315
        %346 = vst.msk [vmem:[#allocation2 + $0x58] sm:$0xf] %vm322, %v316
        %347 = vst.msk [vmem:[#allocation2 + $0x5c] sm:$0x7] %vm324, %v317
        %348 = vst.msk [vmem:[#allocation2 + $0x60] sm:$0xf] %vm322, %v318
        %349 = vst.msk [vmem:[#allocation2 + $0x64] sm:$0x7] %vm324, %v319
        %350 = vst.msk [vmem:[#allocation2 + $0x68] sm:$0xf] %vm322, %v320
        %351 = vst.msk [vmem:[#allocation2 + $0x6c] sm:$0x7] %vm324, %v321
        %v352 = vld [vmem:[%s292] sm:$0xf]
        %v353 = vld [vmem:[%s292 + $0x4] sm:$0xf]
        %v354 = vld [vmem:[%s292 + $0x8] sm:$0xf]
        %v355 = vld [vmem:[%s292 + $0xc] sm:$0xf]
        %v356 = vld [vmem:[%s292 + $0x10] sm:$0xf]
        %v357 = vld [vmem:[%s292 + $0x14] sm:$0xf]
        %v358 = vld [vmem:[%s292 + $0x18] sm:$0xf]
        %v359 = vld [vmem:[%s292 + $0x1c] sm:$0xf]
        %v360 = vld [vmem:[%s292 + $0x20] sm:$0xf]
        %v361 = vld [vmem:[%s292 + $0x24] sm:$0xf]
        %v362 = vld [vmem:[%s292 + $0x28] sm:$0xf]
        %v363 = vld [vmem:[%s292 + $0x2c] sm:$0xf]
        %v364 = vld [vmem:[%s292 + $0x30] sm:$0xf]
        %v365 = vld [vmem:[%s292 + $0x34] sm:$0xf]
        %v366 = vld [vmem:[%s292 + $0x38] sm:$0xf]
        %v367 = vld [vmem:[%s292 + $0x3c] sm:$0xf]
        %v368 = vld [vmem:[%s292 + $0x40] sm:$0xf]
        %v369 = vld [vmem:[%s292 + $0x44] sm:$0xf]
        %v370 = vld [vmem:[%s292 + $0x48] sm:$0xf]
        %v371 = vld [vmem:[%s292 + $0x4c] sm:$0xf]
        %v372 = vld [vmem:[%s292 + $0x50] sm:$0xf]
        %v373 = vld [vmem:[%s292 + $0x54] sm:$0xf]
        %v374 = vld [vmem:[%s292 + $0x58] sm:$0xf]
        %v375 = vld [vmem:[%s292 + $0x5c] sm:$0xf]
        %v376 = vld [vmem:[%s292 + $0x60] sm:$0xf]
        %v377 = vld [vmem:[%s292 + $0x64] sm:$0xf]
        %v378 = vld [vmem:[%s292 + $0x68] sm:$0xf]
        %v379 = vld [vmem:[%s292 + $0x6c] sm:$0xf]
        %vm380 = vsmask.f32 3328
        %vm381 = vsmask.f32 7440
        %vm382 = vmor %vm380, %vm381
        %v384 = vshrl.u32 %v352, 16
        %v386 = vrot.slane %v384, 4
        %v387 = vshll.u32 %v352, 16
        %v389 = vrot.slane %v387, 5
        %v390 = vor.u32 %v386, %v389
        %v391 = vrot.slane %v390, 4
        %v393 = vshll.u32 %v353, 16
        %v395 = vrot.slane %v393, 5
        %v396 = vsel %vm382, %v391, %v395
        %v397 = vshrl.u32 %v353, 16
        %v399 = vrot.slane %v397, 4
        %v400 = vor.u32 %v399, %v395
        %v401 = vrot.slane %v400, 4
        %v403 = vshrl.u32 %v354, 16
        %v405 = vrot.slane %v403, 4
        %v406 = vshll.u32 %v354, 16
        %v408 = vrot.slane %v406, 5
        %v409 = vor.u32 %v405, %v408
        %v410 = vrot.slane %v409, 4
        %v412 = vshll.u32 %v355, 16
        %v414 = vrot.slane %v412, 5
        %v415 = vsel %vm382, %v410, %v414
        %v416 = vshrl.u32 %v355, 16
        %v418 = vrot.slane %v416, 4
        %v419 = vor.u32 %v418, %v414
        %v420 = vrot.slane %v419, 4
        %v422 = vshrl.u32 %v356, 16
        %v424 = vrot.slane %v422, 4
        %v425 = vshll.u32 %v356, 16
        %v427 = vrot.slane %v425, 5
        %v428 = vor.u32 %v424, %v427
        %v429 = vrot.slane %v428, 4
        %v431 = vshll.u32 %v357, 16
        %v433 = vrot.slane %v431, 5
        %v434 = vsel %vm382, %v429, %v433
        %v435 = vshrl.u32 %v357, 16
        %v437 = vrot.slane %v435, 4
        %v438 = vor.u32 %v437, %v433
        %v439 = vrot.slane %v438, 4
        %v441 = vshrl.u32 %v358, 16
        %v443 = vrot.slane %v441, 4
        %v444 = vshll.u32 %v358, 16
        %v446 = vrot.slane %v444, 5
        %v447 = vor.u32 %v443, %v446
        %v448 = vrot.slane %v447, 4
        %v450 = vshll.u32 %v359, 16
        %v452 = vrot.slane %v450, 5
        %v453 = vsel %vm382, %v448, %v452
        %v454 = vshrl.u32 %v359, 16
        %v456 = vrot.slane %v454, 4
        %v457 = vor.u32 %v456, %v452
        %v458 = vrot.slane %v457, 4
        %v460 = vshrl.u32 %v360, 16
        %v462 = vrot.slane %v460, 4
        %v463 = vshll.u32 %v360, 16
        %v465 = vrot.slane %v463, 5
        %v466 = vor.u32 %v462, %v465
        %v467 = vrot.slane %v466, 4
        %v469 = vshll.u32 %v361, 16
        %v471 = vrot.slane %v469, 5
        %v472 = vsel %vm382, %v467, %v471
        %v473 = vshrl.u32 %v361, 16
        %v475 = vrot.slane %v473, 4
        %v476 = vor.u32 %v475, %v471
        %v477 = vrot.slane %v476, 4
        %v479 = vshrl.u32 %v362, 16
        %v481 = vrot.slane %v479, 4
        %v482 = vshll.u32 %v362, 16
        %v484 = vrot.slane %v482, 5
        %v485 = vor.u32 %v481, %v484
        %v486 = vrot.slane %v485, 4
        %v488 = vshll.u32 %v363, 16
        %v490 = vrot.slane %v488, 5
        %v491 = vsel %vm382, %v486, %v490
        %v492 = vshrl.u32 %v363, 16
        %v494 = vrot.slane %v492, 4
        %v495 = vor.u32 %v494, %v490
        %v496 = vrot.slane %v495, 4
        %v498 = vshrl.u32 %v364, 16
        %v500 = vrot.slane %v498, 4
        %v501 = vshll.u32 %v364, 16
        %v503 = vrot.slane %v501, 5
        %v504 = vor.u32 %v500, %v503
        %v505 = vrot.slane %v504, 4
        %v507 = vshll.u32 %v365, 16
        %v509 = vrot.slane %v507, 5
        %v510 = vsel %vm382, %v505, %v509
        %v511 = vshrl.u32 %v365, 16
        %v513 = vrot.slane %v511, 4
        %v514 = vor.u32 %v513, %v509
        %v515 = vrot.slane %v514, 4
        %v517 = vshrl.u32 %v366, 16
        %v519 = vrot.slane %v517, 4
        %v520 = vshll.u32 %v366, 16
        %v522 = vrot.slane %v520, 5
        %v523 = vor.u32 %v519, %v522
        %v524 = vrot.slane %v523, 4
        %v526 = vshll.u32 %v367, 16
        %v528 = vrot.slane %v526, 5
        %v529 = vsel %vm382, %v524, %v528
        %v530 = vshrl.u32 %v367, 16
        %v532 = vrot.slane %v530, 4
        %v533 = vor.u32 %v532, %v528
        %v534 = vrot.slane %v533, 4
        %v536 = vshrl.u32 %v368, 16
        %v538 = vrot.slane %v536, 4
        %v539 = vshll.u32 %v368, 16
        %v541 = vrot.slane %v539, 5
        %v542 = vor.u32 %v538, %v541
        %v543 = vrot.slane %v542, 4
        %v545 = vshll.u32 %v369, 16
        %v547 = vrot.slane %v545, 5
        %v548 = vsel %vm382, %v543, %v547
        %v549 = vshrl.u32 %v369, 16
        %v551 = vrot.slane %v549, 4
        %v552 = vor.u32 %v551, %v547
        %v553 = vrot.slane %v552, 4
        %v555 = vshrl.u32 %v370, 16
        %v557 = vrot.slane %v555, 4
        %v558 = vshll.u32 %v370, 16
        %v560 = vrot.slane %v558, 5
        %v561 = vor.u32 %v557, %v560
        %v562 = vrot.slane %v561, 4
        %v564 = vshll.u32 %v371, 16
        %v566 = vrot.slane %v564, 5
        %v567 = vsel %vm382, %v562, %v566
        %v568 = vshrl.u32 %v371, 16
        %v570 = vrot.slane %v568, 4
        %v571 = vor.u32 %v570, %v566
        %v572 = vrot.slane %v571, 4
        %v574 = vshrl.u32 %v372, 16
        %v576 = vrot.slane %v574, 4
        %v577 = vshll.u32 %v372, 16
        %v579 = vrot.slane %v577, 5
        %v580 = vor.u32 %v576, %v579
        %v581 = vrot.slane %v580, 4
        %v583 = vshll.u32 %v373, 16
        %v585 = vrot.slane %v583, 5
        %v586 = vsel %vm382, %v581, %v585
        %v587 = vshrl.u32 %v373, 16
        %v589 = vrot.slane %v587, 4
        %v590 = vor.u32 %v589, %v585
        %v591 = vrot.slane %v590, 4
        %v593 = vshrl.u32 %v374, 16
        %v595 = vrot.slane %v593, 4
        %v596 = vshll.u32 %v374, 16
        %v598 = vrot.slane %v596, 5
        %v599 = vor.u32 %v595, %v598
        %v600 = vrot.slane %v599, 4
        %v602 = vshll.u32 %v375, 16
        %v604 = vrot.slane %v602, 5
        %v605 = vsel %vm382, %v600, %v604
        %v606 = vshrl.u32 %v375, 16
        %v608 = vrot.slane %v606, 4
        %v609 = vor.u32 %v608, %v604
        %v610 = vrot.slane %v609, 4
        %v612 = vshrl.u32 %v376, 16
        %v614 = vrot.slane %v612, 4
        %v615 = vshll.u32 %v376, 16
        %v617 = vrot.slane %v615, 5
        %v618 = vor.u32 %v614, %v617
        %v619 = vrot.slane %v618, 4
        %v621 = vshll.u32 %v377, 16
        %v623 = vrot.slane %v621, 5
        %v624 = vsel %vm382, %v619, %v623
        %v625 = vshrl.u32 %v377, 16
        %v627 = vrot.slane %v625, 4
        %v628 = vor.u32 %v627, %v623
        %v629 = vrot.slane %v628, 4
        %v631 = vshrl.u32 %v378, 16
        %v633 = vrot.slane %v631, 4
        %v634 = vshll.u32 %v378, 16
        %v636 = vrot.slane %v634, 5
        %v637 = vor.u32 %v633, %v636
        %v638 = vrot.slane %v637, 4
        %v640 = vshll.u32 %v379, 16
        %v642 = vrot.slane %v640, 5
        %v643 = vsel %vm382, %v638, %v642
        %v644 = vshrl.u32 %v379, 16
        %v646 = vrot.slane %v644, 4
        %v647 = vor.u32 %v646, %v642
        %v648 = vrot.slane %v647, 4
        %649 = vrot.lane.b32.xlu0 %v396, 4
        %v650 = vpop.permute.xlu0 %649
        %651 = vrot.lane.b32.xlu0 %v401, 4
        %v652 = vpop.permute.xlu0 %651
        %653 = vrot.lane.b32.xlu0 %v415, 4
        %v654 = vpop.permute.xlu0 %653
        %655 = vrot.lane.b32.xlu0 %v420, 4
        %v656 = vpop.permute.xlu0 %655
        %657 = vrot.lane.b32.xlu0 %v434, 4
        %v658 = vpop.permute.xlu0 %657
        %659 = vrot.lane.b32.xlu0 %v439, 4
        %v660 = vpop.permute.xlu0 %659
        %661 = vrot.lane.b32.xlu0 %v453, 4
        %v662 = vpop.permute.xlu0 %661
        %663 = vrot.lane.b32.xlu0 %v458, 4
        %v664 = vpop.permute.xlu0 %663
        %665 = vrot.lane.b32.xlu0 %v472, 4
        %v666 = vpop.permute.xlu0 %665
        %667 = vrot.lane.b32.xlu0 %v477, 4
        %v668 = vpop.permute.xlu0 %667
        %669 = vrot.lane.b32.xlu0 %v491, 4
        %v670 = vpop.permute.xlu0 %669
        %671 = vrot.lane.b32.xlu0 %v496, 4
        %v672 = vpop.permute.xlu0 %671
        %673 = vrot.lane.b32.xlu0 %v510, 4
        %v674 = vpop.permute.xlu0 %673
        %675 = vrot.lane.b32.xlu0 %v515, 4
        %v676 = vpop.permute.xlu0 %675
        %677 = vrot.lane.b32.xlu0 %v529, 4
        %v678 = vpop.permute.xlu0 %677
        %679 = vrot.lane.b32.xlu0 %v534, 4
        %v680 = vpop.permute.xlu0 %679
        %681 = vrot.lane.b32.xlu0 %v548, 4
        %v682 = vpop.permute.xlu0 %681
        %683 = vrot.lane.b32.xlu0 %v553, 4
        %v684 = vpop.permute.xlu0 %683
        %685 = vrot.lane.b32.xlu0 %v567, 4
        %v686 = vpop.permute.xlu0 %685
        %687 = vrot.lane.b32.xlu0 %v572, 4
        %v688 = vpop.permute.xlu0 %687
        %689 = vrot.lane.b32.xlu0 %v586, 4
        %v690 = vpop.permute.xlu0 %689
        %691 = vrot.lane.b32.xlu0 %v591, 4
        %v692 = vpop.permute.xlu0 %691
        %693 = vrot.lane.b32.xlu0 %v605, 4
        %v694 = vpop.permute.xlu0 %693
        %695 = vrot.lane.b32.xlu0 %v610, 4
        %v696 = vpop.permute.xlu0 %695
        %697 = vrot.lane.b32.xlu0 %v624, 4
        %v698 = vpop.permute.xlu0 %697
        %699 = vrot.lane.b32.xlu0 %v629, 4
        %v700 = vpop.permute.xlu0 %699
        %701 = vrot.lane.b32.xlu0 %v643, 4
        %v702 = vpop.permute.xlu0 %701
        %703 = vrot.lane.b32.xlu0 %v648, 4
        %v704 = vpop.permute.xlu0 %703
        %vm733 = vcmask 60448
        %734 = vst.msk [vmem:[#allocation2] sm:$0xf] %vm733, %v650
        %vm735 = vcmask 59424
        %736 = vst.msk [vmem:[#allocation2 + $0x4] sm:$0x7] %vm735, %v652
        %737 = vst.msk [vmem:[#allocation2 + $0x8] sm:$0xf] %vm733, %v654
        %738 = vst.msk [vmem:[#allocation2 + $0xc] sm:$0x7] %vm735, %v656
        %739 = vst.msk [vmem:[#allocation2 + $0x10] sm:$0xf] %vm733, %v658
        %740 = vst.msk [vmem:[#allocation2 + $0x14] sm:$0x7] %vm735, %v660
        %741 = vst.msk [vmem:[#allocation2 + $0x18] sm:$0xf] %vm733, %v662
        %742 = vst.msk [vmem:[#allocation2 + $0x1c] sm:$0x7] %vm735, %v664
        %743 = vst.msk [vmem:[#allocation2 + $0x20] sm:$0xf] %vm733, %v666
        %744 = vst.msk [vmem:[#allocation2 + $0x24] sm:$0x7] %vm735, %v668
        %745 = vst.msk [vmem:[#allocation2 + $0x28] sm:$0xf] %vm733, %v670
        %746 = vst.msk [vmem:[#allocation2 + $0x2c] sm:$0x7] %vm735, %v672
        %747 = vst.msk [vmem:[#allocation2 + $0x30] sm:$0xf] %vm733, %v674
        %748 = vst.msk [vmem:[#allocation2 + $0x34] sm:$0x7] %vm735, %v676
        %749 = vst.msk [vmem:[#allocation2 + $0x38] sm:$0xf] %vm733, %v678
        %750 = vst.msk [vmem:[#allocation2 + $0x3c] sm:$0x7] %vm735, %v680
        %751 = vst.msk [vmem:[#allocation2 + $0x40] sm:$0xf] %vm733, %v682
        %752 = vst.msk [vmem:[#allocation2 + $0x44] sm:$0x7] %vm735, %v684
        %753 = vst.msk [vmem:[#allocation2 + $0x48] sm:$0xf] %vm733, %v686
        %754 = vst.msk [vmem:[#allocation2 + $0x4c] sm:$0x7] %vm735, %v688
        %755 = vst.msk [vmem:[#allocation2 + $0x50] sm:$0xf] %vm733, %v690
        %756 = vst.msk [vmem:[#allocation2 + $0x54] sm:$0x7] %vm735, %v692
        %757 = vst.msk [vmem:[#allocation2 + $0x58] sm:$0xf] %vm733, %v694
        %758 = vst.msk [vmem:[#allocation2 + $0x5c] sm:$0x7] %vm735, %v696
        %759 = vst.msk [vmem:[#allocation2 + $0x60] sm:$0xf] %vm733, %v698
        %760 = vst.msk [vmem:[#allocation2 + $0x64] sm:$0x7] %vm735, %v700
        %761 = vst.msk [vmem:[#allocation2 + $0x68] sm:$0xf] %vm733, %v702
        %762 = vst.msk [vmem:[#allocation2 + $0x6c] sm:$0x7] %vm735, %v704
        %v763 = vld [vmem:[%s292] sm:$0xe]
        %v764 = vld [vmem:[%s292 + $0x4] sm:$0xf]
        %v765 = vld [vmem:[%s292 + $0x8] sm:$0xe]
        %v766 = vld [vmem:[%s292 + $0xc] sm:$0xf]
        %v767 = vld [vmem:[%s292 + $0x10] sm:$0xe]
        %v768 = vld [vmem:[%s292 + $0x14] sm:$0xf]
        %v769 = vld [vmem:[%s292 + $0x18] sm:$0xe]
        %v770 = vld [vmem:[%s292 + $0x1c] sm:$0xf]
        %v771 = vld [vmem:[%s292 + $0x20] sm:$0xe]
        %v772 = vld [vmem:[%s292 + $0x24] sm:$0xf]
        %v773 = vld [vmem:[%s292 + $0x28] sm:$0xe]
        %v774 = vld [vmem:[%s292 + $0x2c] sm:$0xf]
        %v775 = vld [vmem:[%s292 + $0x30] sm:$0xe]
        %v776 = vld [vmem:[%s292 + $0x34] sm:$0xf]
        %v777 = vld [vmem:[%s292 + $0x38] sm:$0xe]
        %v778 = vld [vmem:[%s292 + $0x3c] sm:$0xf]
        %v779 = vld [vmem:[%s292 + $0x40] sm:$0xe]
        %v780 = vld [vmem:[%s292 + $0x44] sm:$0xf]
        %v781 = vld [vmem:[%s292 + $0x48] sm:$0xe]
        %v782 = vld [vmem:[%s292 + $0x4c] sm:$0xf]
        %v783 = vld [vmem:[%s292 + $0x50] sm:$0xe]
        %v784 = vld [vmem:[%s292 + $0x54] sm:$0xf]
        %v785 = vld [vmem:[%s292 + $0x58] sm:$0xe]
        %v786 = vld [vmem:[%s292 + $0x5c] sm:$0xf]
        %v787 = vld [vmem:[%s292 + $0x60] sm:$0xe]
        %v788 = vld [vmem:[%s292 + $0x64] sm:$0xf]
        %v789 = vld [vmem:[%s292 + $0x68] sm:$0xe]
        %v790 = vld [vmem:[%s292 + $0x6c] sm:$0xf]
        %vm819 = vcmask 1042432
        %vm820 = vcmask 1046532
        %vm821 = vmor %vm819, %vm820
        %v822 = vrot.slane %v763, 5
        %v823 = vrot.slane %v822, 4
        %v824 = vrot.slane %v764, 5
        %v825 = vsel %vm821, %v823, %v824
        %v826 = vrot.slane %v824, 4
        %v827 = vrot.slane %v765, 5
        %v828 = vrot.slane %v827, 4
        %v829 = vrot.slane %v766, 5
        %v830 = vsel %vm821, %v828, %v829
        %v831 = vrot.slane %v829, 4
        %v832 = vrot.slane %v767, 5
        %v833 = vrot.slane %v832, 4
        %v834 = vrot.slane %v768, 5
        %v835 = vsel %vm821, %v833, %v834
        %v836 = vrot.slane %v834, 4
        %v837 = vrot.slane %v769, 5
        %v838 = vrot.slane %v837, 4
        %v839 = vrot.slane %v770, 5
        %v840 = vsel %vm821, %v838, %v839
        %v841 = vrot.slane %v839, 4
        %v842 = vrot.slane %v771, 5
        %v843 = vrot.slane %v842, 4
        %v844 = vrot.slane %v772, 5
        %v845 = vsel %vm821, %v843, %v844
        %v846 = vrot.slane %v844, 4
        %v847 = vrot.slane %v773, 5
        %v848 = vrot.slane %v847, 4
        %v849 = vrot.slane %v774, 5
        %v850 = vsel %vm821, %v848, %v849
        %v851 = vrot.slane %v849, 4
        %v852 = vrot.slane %v775, 5
        %v853 = vrot.slane %v852, 4
        %v854 = vrot.slane %v776, 5
        %v855 = vsel %vm821, %v853, %v854
        %v856 = vrot.slane %v854, 4
        %v857 = vrot.slane %v777, 5
        %v858 = vrot.slane %v857, 4
        %v859 = vrot.slane %v778, 5
        %v860 = vsel %vm821, %v858, %v859
        %v861 = vrot.slane %v859, 4
        %v862 = vrot.slane %v779, 5
        %v863 = vrot.slane %v862, 4
        %v864 = vrot.slane %v780, 5
        %v865 = vsel %vm821, %v863, %v864
        %v866 = vrot.slane %v864, 4
        %v867 = vrot.slane %v781, 5
        %v868 = vrot.slane %v867, 4
        %v869 = vrot.slane %v782, 5
        %v870 = vsel %vm821, %v868, %v869
        %v871 = vrot.slane %v869, 4
        %v872 = vrot.slane %v783, 5
        %v873 = vrot.slane %v872, 4
        %v874 = vrot.slane %v784, 5
        %v875 = vsel %vm821, %v873, %v874
        %v876 = vrot.slane %v874, 4
        %v877 = vrot.slane %v785, 5
        %v878 = vrot.slane %v877, 4
        %v879 = vrot.slane %v786, 5
        %v880 = vsel %vm821, %v878, %v879
        %v881 = vrot.slane %v879, 4
        %v882 = vrot.slane %v787, 5
        %v883 = vrot.slane %v882, 4
        %v884 = vrot.slane %v788, 5
        %v885 = vsel %vm821, %v883, %v884
        %v886 = vrot.slane %v884, 4
        %v887 = vrot.slane %v789, 5
        %v888 = vrot.slane %v887, 4
        %v889 = vrot.slane %v790, 5
        %v890 = vsel %vm821, %v888, %v889
        %v891 = vrot.slane %v889, 4
        %892 = vrot.lane.b32.xlu0 %v825, 8
        %v893 = vpop.permute.xlu0 %892
        %894 = vrot.lane.b32.xlu0 %v826, 8
        %v895 = vpop.permute.xlu0 %894
        %896 = vrot.lane.b32.xlu0 %v830, 8
        %v897 = vpop.permute.xlu0 %896
        %898 = vrot.lane.b32.xlu0 %v831, 8
        %v899 = vpop.permute.xlu0 %898
        %900 = vrot.lane.b32.xlu0 %v835, 8
        %v901 = vpop.permute.xlu0 %900
        %902 = vrot.lane.b32.xlu0 %v836, 8
        %v903 = vpop.permute.xlu0 %902
        %904 = vrot.lane.b32.xlu0 %v840, 8
        %v905 = vpop.permute.xlu0 %904
        %906 = vrot.lane.b32.xlu0 %v841, 8
        %v907 = vpop.permute.xlu0 %906
        %908 = vrot.lane.b32.xlu0 %v845, 8
        %v909 = vpop.permute.xlu0 %908
        %910 = vrot.lane.b32.xlu0 %v846, 8
        %v911 = vpop.permute.xlu0 %910
        %912 = vrot.lane.b32.xlu0 %v850, 8
        %v913 = vpop.permute.xlu0 %912
        %914 = vrot.lane.b32.xlu0 %v851, 8
        %v915 = vpop.permute.xlu0 %914
        %916 = vrot.lane.b32.xlu0 %v855, 8
        %v917 = vpop.permute.xlu0 %916
        %918 = vrot.lane.b32.xlu0 %v856, 8
        %v919 = vpop.permute.xlu0 %918
        %920 = vrot.lane.b32.xlu0 %v860, 8
        %v921 = vpop.permute.xlu0 %920
        %922 = vrot.lane.b32.xlu0 %v861, 8
        %v923 = vpop.permute.xlu0 %922
        %924 = vrot.lane.b32.xlu0 %v865, 8
        %v925 = vpop.permute.xlu0 %924
        %926 = vrot.lane.b32.xlu0 %v866, 8
        %v927 = vpop.permute.xlu0 %926
        %928 = vrot.lane.b32.xlu0 %v870, 8
        %v929 = vpop.permute.xlu0 %928
        %930 = vrot.lane.b32.xlu0 %v871, 8
        %v931 = vpop.permute.xlu0 %930
        %932 = vrot.lane.b32.xlu0 %v875, 8
        %v933 = vpop.permute.xlu0 %932
        %934 = vrot.lane.b32.xlu0 %v876, 8
        %v935 = vpop.permute.xlu0 %934
        %936 = vrot.lane.b32.xlu0 %v880, 8
        %v937 = vpop.permute.xlu0 %936
        %938 = vrot.lane.b32.xlu0 %v881, 8
        %v939 = vpop.permute.xlu0 %938
        %940 = vrot.lane.b32.xlu0 %v885, 8
        %v941 = vpop.permute.xlu0 %940
        %942 = vrot.lane.b32.xlu0 %v886, 8
        %v943 = vpop.permute.xlu0 %942
        %944 = vrot.lane.b32.xlu0 %v890, 8
        %v945 = vpop.permute.xlu0 %944
        %946 = vrot.lane.b32.xlu0 %v891, 8
        %v947 = vpop.permute.xlu0 %946
        %vm976 = vcmask 93248
        %977 = vst.msk [vmem:[#allocation2] sm:$0xf] %vm976, %v893
        %vm978 = vcmask 92224
        %979 = vst.msk [vmem:[#allocation2 + $0x4] sm:$0x7] %vm978, %v895
        %980 = vst.msk [vmem:[#allocation2 + $0x8] sm:$0xf] %vm976, %v897
        %981 = vst.msk [vmem:[#allocation2 + $0xc] sm:$0x7] %vm978, %v899
        %982 = vst.msk [vmem:[#allocation2 + $0x10] sm:$0xf] %vm976, %v901
        %983 = vst.msk [vmem:[#allocation2 + $0x14] sm:$0x7] %vm978, %v903
        %984 = vst.msk [vmem:[#allocation2 + $0x18] sm:$0xf] %vm976, %v905
        %985 = vst.msk [vmem:[#allocation2 + $0x1c] sm:$0x7] %vm978, %v907
        %986 = vst.msk [vmem:[#allocation2 + $0x20] sm:$0xf] %vm976, %v909
        %987 = vst.msk [vmem:[#allocation2 + $0x24] sm:$0x7] %vm978, %v911
        %988 = vst.msk [vmem:[#allocation2 + $0x28] sm:$0xf] %vm976, %v913
        %989 = vst.msk [vmem:[#allocation2 + $0x2c] sm:$0x7] %vm978, %v915
        %990 = vst.msk [vmem:[#allocation2 + $0x30] sm:$0xf] %vm976, %v917
        %991 = vst.msk [vmem:[#allocation2 + $0x34] sm:$0x7] %vm978, %v919
        %992 = vst.msk [vmem:[#allocation2 + $0x38] sm:$0xf] %vm976, %v921
        %993 = vst.msk [vmem:[#allocation2 + $0x3c] sm:$0x7] %vm978, %v923
        %994 = vst.msk [vmem:[#allocation2 + $0x40] sm:$0xf] %vm976, %v925
        %995 = vst.msk [vmem:[#allocation2 + $0x44] sm:$0x7] %vm978, %v927
        %996 = vst.msk [vmem:[#allocation2 + $0x48] sm:$0xf] %vm976, %v929
        %997 = vst.msk [vmem:[#allocation2 + $0x4c] sm:$0x7] %vm978, %v931
        %998 = vst.msk [vmem:[#allocation2 + $0x50] sm:$0xf] %vm976, %v933
        %999 = vst.msk [vmem:[#allocation2 + $0x54] sm:$0x7] %vm978, %v935
        %1000 = vst.msk [vmem:[#allocation2 + $0x58] sm:$0xf] %vm976, %v937
        %1001 = vst.msk [vmem:[#allocation2 + $0x5c] sm:$0x7] %vm978, %v939
        %1002 = vst.msk [vmem:[#allocation2 + $0x60] sm:$0xf] %vm976, %v941
        %1003 = vst.msk [vmem:[#allocation2 + $0x64] sm:$0x7] %vm978, %v943
        %1004 = vst.msk [vmem:[#allocation2 + $0x68] sm:$0xf] %vm976, %v945
        %1005 = vst.msk [vmem:[#allocation2 + $0x6c] sm:$0x7] %vm978, %v947
        %s1006 = scalar_lea.vmem %s292, 8
        %v1007 = vld [vmem:[%s1006] sm:$0xf]
        %v1008 = vld [vmem:[%s1006 + $0x4] sm:$0x7]
        %v1009 = vld [vmem:[%s1006 + $0x8] sm:$0xf]
        %v1010 = vld [vmem:[%s1006 + $0xc] sm:$0x7]
        %v1011 = vld [vmem:[%s1006 + $0x10] sm:$0xf]
        %v1012 = vld [vmem:[%s1006 + $0x14] sm:$0x7]
        %v1013 = vld [vmem:[%s1006 + $0x18] sm:$0xf]
        %v1014 = vld [vmem:[%s1006 + $0x1c] sm:$0x7]
        %v1015 = vld [vmem:[%s1006 + $0x20] sm:$0xf]
        %v1016 = vld [vmem:[%s1006 + $0x24] sm:$0x7]
        %v1017 = vld [vmem:[%s1006 + $0x28] sm:$0xf]
        %v1018 = vld [vmem:[%s1006 + $0x2c] sm:$0x7]
        %v1019 = vld [vmem:[%s1006 + $0x30] sm:$0xf]
        %v1020 = vld [vmem:[%s1006 + $0x34] sm:$0x7]
        %v1021 = vld [vmem:[%s1006 + $0x38] sm:$0xf]
        %v1022 = vld [vmem:[%s1006 + $0x3c] sm:$0x7]
        %v1023 = vld [vmem:[%s1006 + $0x40] sm:$0xf]
        %v1024 = vld [vmem:[%s1006 + $0x44] sm:$0x7]
        %v1025 = vld [vmem:[%s1006 + $0x48] sm:$0xf]
        %v1026 = vld [vmem:[%s1006 + $0x4c] sm:$0x7]
        %v1027 = vld [vmem:[%s1006 + $0x50] sm:$0xf]
        %v1028 = vld [vmem:[%s1006 + $0x54] sm:$0x7]
        %v1029 = vld [vmem:[%s1006 + $0x58] sm:$0xf]
        %v1030 = vld [vmem:[%s1006 + $0x5c] sm:$0x7]
        %v1031 = vld [vmem:[%s1006 + $0x60] sm:$0xf]
        %v1032 = vld [vmem:[%s1006 + $0x64] sm:$0x7]
        %v1033 = vld [vmem:[%s1006 + $0x68] sm:$0xf]
        %v1034 = vld [vmem:[%s1006 + $0x6c] sm:$0x7]
        %1063 = vrot.lane.b32.xlu0 %v1007, 12
        %v1064 = vpop.permute.xlu0 %1063
        %1065 = vrot.lane.b32.xlu0 %v1008, 12
        %v1066 = vpop.permute.xlu0 %1065
        %1067 = vrot.lane.b32.xlu0 %v1009, 12
        %v1068 = vpop.permute.xlu0 %1067
        %1069 = vrot.lane.b32.xlu0 %v1010, 12
        %v1070 = vpop.permute.xlu0 %1069
        %1071 = vrot.lane.b32.xlu0 %v1011, 12
        %v1072 = vpop.permute.xlu0 %1071
        %1073 = vrot.lane.b32.xlu0 %v1012, 12
        %v1074 = vpop.permute.xlu0 %1073
        %1075 = vrot.lane.b32.xlu0 %v1013, 12
        %v1076 = vpop.permute.xlu0 %1075
        %1077 = vrot.lane.b32.xlu0 %v1014, 12
        %v1078 = vpop.permute.xlu0 %1077
        %1079 = vrot.lane.b32.xlu0 %v1015, 12
        %v1080 = vpop.permute.xlu0 %1079
        %1081 = vrot.lane.b32.xlu0 %v1016, 12
        %v1082 = vpop.permute.xlu0 %1081
        %1083 = vrot.lane.b32.xlu0 %v1017, 12
        %v1084 = vpop.permute.xlu0 %1083
        %1085 = vrot.lane.b32.xlu0 %v1018, 12
        %v1086 = vpop.permute.xlu0 %1085
        %1087 = vrot.lane.b32.xlu0 %v1019, 12
        %v1088 = vpop.permute.xlu0 %1087
        %1089 = vrot.lane.b32.xlu0 %v1020, 12
        %v1090 = vpop.permute.xlu0 %1089
        %1091 = vrot.lane.b32.xlu0 %v1021, 12
        %v1092 = vpop.permute.xlu0 %1091
        %1093 = vrot.lane.b32.xlu0 %v1022, 12
        %v1094 = vpop.permute.xlu0 %1093
        %1095 = vrot.lane.b32.xlu0 %v1023, 12
        %v1096 = vpop.permute.xlu0 %1095
        %1097 = vrot.lane.b32.xlu0 %v1024, 12
        %v1098 = vpop.permute.xlu0 %1097
        %1099 = vrot.lane.b32.xlu0 %v1025, 12
        %v1100 = vpop.permute.xlu0 %1099
        %1101 = vrot.lane.b32.xlu0 %v1026, 12
        %v1102 = vpop.permute.xlu0 %1101
        %1103 = vrot.lane.b32.xlu0 %v1027, 12
        %v1104 = vpop.permute.xlu0 %1103
        %1105 = vrot.lane.b32.xlu0 %v1028, 12
        %v1106 = vpop.permute.xlu0 %1105
        %1107 = vrot.lane.b32.xlu0 %v1029, 12
        %v1108 = vpop.permute.xlu0 %1107
        %1109 = vrot.lane.b32.xlu0 %v1030, 12
        %v1110 = vpop.permute.xlu0 %1109
        %1111 = vrot.lane.b32.xlu0 %v1031, 12
        %v1112 = vpop.permute.xlu0 %1111
        %1113 = vrot.lane.b32.xlu0 %v1032, 12
        %v1114 = vpop.permute.xlu0 %1113
        %1115 = vrot.lane.b32.xlu0 %v1033, 12
        %v1116 = vpop.permute.xlu0 %1115
        %1117 = vrot.lane.b32.xlu0 %v1034, 12
        %v1118 = vpop.permute.xlu0 %1117
        %vm1147 = vcmask 126048
        %1148 = vst.msk [vmem:[#allocation2] sm:$0xf] %vm1147, %v1064
        %vm1149 = vcmask 125024
        %1150 = vst.msk [vmem:[#allocation2 + $0x4] sm:$0x7] %vm1149, %v1066
        %1151 = vst.msk [vmem:[#allocation2 + $0x8] sm:$0xf] %vm1147, %v1068
        %1152 = vst.msk [vmem:[#allocation2 + $0xc] sm:$0x7] %vm1149, %v1070
        %1153 = vst.msk [vmem:[#allocation2 + $0x10] sm:$0xf] %vm1147, %v1072
        %1154 = vst.msk [vmem:[#allocation2 + $0x14] sm:$0x7] %vm1149, %v1074
        %1155 = vst.msk [vmem:[#allocation2 + $0x18] sm:$0xf] %vm1147, %v1076
        %1156 = vst.msk [vmem:[#allocation2 + $0x1c] sm:$0x7] %vm1149, %v1078
        %1157 = vst.msk [vmem:[#allocation2 + $0x20] sm:$0xf] %vm1147, %v1080
        %1158 = vst.msk [vmem:[#allocation2 + $0x24] sm:$0x7] %vm1149, %v1082
        %1159 = vst.msk [vmem:[#allocation2 + $0x28] sm:$0xf] %vm1147, %v1084
        %1160 = vst.msk [vmem:[#allocation2 + $0x2c] sm:$0x7] %vm1149, %v1086
        %1161 = vst.msk [vmem:[#allocation2 + $0x30] sm:$0xf] %vm1147, %v1088
        %1162 = vst.msk [vmem:[#allocation2 + $0x34] sm:$0x7] %vm1149, %v1090
        %1163 = vst.msk [vmem:[#allocation2 + $0x38] sm:$0xf] %vm1147, %v1092
        %1164 = vst.msk [vmem:[#allocation2 + $0x3c] sm:$0x7] %vm1149, %v1094
        %1165 = vst.msk [vmem:[#allocation2 + $0x40] sm:$0xf] %vm1147, %v1096
        %1166 = vst.msk [vmem:[#allocation2 + $0x44] sm:$0x7] %vm1149, %v1098
        %1167 = vst.msk [vmem:[#allocation2 + $0x48] sm:$0xf] %vm1147, %v1100
        %1168 = vst.msk [vmem:[#allocation2 + $0x4c] sm:$0x7] %vm1149, %v1102
        %1169 = vst.msk [vmem:[#allocation2 + $0x50] sm:$0xf] %vm1147, %v1104
        %1170 = vst.msk [vmem:[#allocation2 + $0x54] sm:$0x7] %vm1149, %v1106
        %1171 = vst.msk [vmem:[#allocation2 + $0x58] sm:$0xf] %vm1147, %v1108
        %1172 = vst.msk [vmem:[#allocation2 + $0x5c] sm:$0x7] %vm1149, %v1110
        %1173 = vst.msk [vmem:[#allocation2 + $0x60] sm:$0xf] %vm1147, %v1112
        %1174 = vst.msk [vmem:[#allocation2 + $0x64] sm:$0x7] %vm1149, %v1114
        %1175 = vst.msk [vmem:[#allocation2 + $0x68] sm:$0xf] %vm1147, %v1116
        %1176 = vst.msk [vmem:[#allocation2 + $0x6c] sm:$0x7] %vm1149, %v1118
        %v1177 = vld [vmem:[%s1006] sm:$0xf]
        %v1178 = vld [vmem:[%s1006 + $0x4] sm:$0xf]
        %v1179 = vld [vmem:[%s1006 + $0x8] sm:$0xf]
        %v1180 = vld [vmem:[%s1006 + $0xc] sm:$0xf]
        %v1181 = vld [vmem:[%s1006 + $0x10] sm:$0xf]
        %v1182 = vld [vmem:[%s1006 + $0x14] sm:$0xf]
        %v1183 = vld [vmem:[%s1006 + $0x18] sm:$0xf]
        %v1184 = vld [vmem:[%s1006 + $0x1c] sm:$0xf]
        %v1185 = vld [vmem:[%s1006 + $0x20] sm:$0xf]
        %v1186 = vld [vmem:[%s1006 + $0x24] sm:$0xf]
        %v1187 = vld [vmem:[%s1006 + $0x28] sm:$0xf]
        %v1188 = vld [vmem:[%s1006 + $0x2c] sm:$0xf]
        %v1189 = vld [vmem:[%s1006 + $0x30] sm:$0xf]
        %v1190 = vld [vmem:[%s1006 + $0x34] sm:$0xf]
        %v1191 = vld [vmem:[%s1006 + $0x38] sm:$0xf]
        %v1192 = vld [vmem:[%s1006 + $0x3c] sm:$0xf]
        %v1193 = vld [vmem:[%s1006 + $0x40] sm:$0xf]
        %v1194 = vld [vmem:[%s1006 + $0x44] sm:$0xf]
        %v1195 = vld [vmem:[%s1006 + $0x48] sm:$0xf]
        %v1196 = vld [vmem:[%s1006 + $0x4c] sm:$0xf]
        %v1197 = vld [vmem:[%s1006 + $0x50] sm:$0xf]
        %v1198 = vld [vmem:[%s1006 + $0x54] sm:$0xf]
        %v1199 = vld [vmem:[%s1006 + $0x58] sm:$0xf]
        %v1200 = vld [vmem:[%s1006 + $0x5c] sm:$0xf]
        %v1201 = vld [vmem:[%s1006 + $0x60] sm:$0xf]
        %v1202 = vld [vmem:[%s1006 + $0x64] sm:$0xf]
        %v1203 = vld [vmem:[%s1006 + $0x68] sm:$0xf]
        %v1204 = vld [vmem:[%s1006 + $0x6c] sm:$0xf]
        %v1206 = vshrl.u32 %v1177, 16
        %v1208 = vrot.slane %v1206, 4
        %v1209 = vshll.u32 %v1177, 16
        %v1211 = vrot.slane %v1209, 5
        %v1212 = vor.u32 %v1208, %v1211
        %v1213 = vrot.slane %v1212, 4
        %v1215 = vshll.u32 %v1178, 16
        %v1217 = vrot.slane %v1215, 5
        %v1218 = vsel %vm382, %v1213, %v1217
        %v1219 = vshrl.u32 %v1178, 16
        %v1221 = vrot.slane %v1219, 4
        %v1222 = vor.u32 %v1221, %v1217
        %v1223 = vrot.slane %v1222, 4
        %v1225 = vshrl.u32 %v1179, 16
        %v1227 = vrot.slane %v1225, 4
        %v1228 = vshll.u32 %v1179, 16
        %v1230 = vrot.slane %v1228, 5
        %v1231 = vor.u32 %v1227, %v1230
        %v1232 = vrot.slane %v1231, 4
        %v1234 = vshll.u32 %v1180, 16
        %v1236 = vrot.slane %v1234, 5
        %v1237 = vsel %vm382, %v1232, %v1236
        %v1238 = vshrl.u32 %v1180, 16
        %v1240 = vrot.slane %v1238, 4
        %v1241 = vor.u32 %v1240, %v1236
        %v1242 = vrot.slane %v1241, 4
        %v1244 = vshrl.u32 %v1181, 16
        %v1246 = vrot.slane %v1244, 4
        %v1247 = vshll.u32 %v1181, 16
        %v1249 = vrot.slane %v1247, 5
        %v1250 = vor.u32 %v1246, %v1249
        %v1251 = vrot.slane %v1250, 4
        %v1253 = vshll.u32 %v1182, 16
        %v1255 = vrot.slane %v1253, 5
        %v1256 = vsel %vm382, %v1251, %v1255
        %v1257 = vshrl.u32 %v1182, 16
        %v1259 = vrot.slane %v1257, 4
        %v1260 = vor.u32 %v1259, %v1255
        %v1261 = vrot.slane %v1260, 4
        %v1263 = vshrl.u32 %v1183, 16
        %v1265 = vrot.slane %v1263, 4
        %v1266 = vshll.u32 %v1183, 16
        %v1268 = vrot.slane %v1266, 5
        %v1269 = vor.u32 %v1265, %v1268
        %v1270 = vrot.slane %v1269, 4
        %v1272 = vshll.u32 %v1184, 16
        %v1274 = vrot.slane %v1272, 5
        %v1275 = vsel %vm382, %v1270, %v1274
        %v1276 = vshrl.u32 %v1184, 16
        %v1278 = vrot.slane %v1276, 4
        %v1279 = vor.u32 %v1278, %v1274
        %v1280 = vrot.slane %v1279, 4
        %v1282 = vshrl.u32 %v1185, 16
        %v1284 = vrot.slane %v1282, 4
        %v1285 = vshll.u32 %v1185, 16
        %v1287 = vrot.slane %v1285, 5
        %v1288 = vor.u32 %v1284, %v1287
        %v1289 = vrot.slane %v1288, 4
        %v1291 = vshll.u32 %v1186, 16
        %v1293 = vrot.slane %v1291, 5
        %v1294 = vsel %vm382, %v1289, %v1293
        %v1295 = vshrl.u32 %v1186, 16
        %v1297 = vrot.slane %v1295, 4
        %v1298 = vor.u32 %v1297, %v1293
        %v1299 = vrot.slane %v1298, 4
        %v1301 = vshrl.u32 %v1187, 16
        %v1303 = vrot.slane %v1301, 4
        %v1304 = vshll.u32 %v1187, 16
        %v1306 = vrot.slane %v1304, 5
        %v1307 = vor.u32 %v1303, %v1306
        %v1308 = vrot.slane %v1307, 4
        %v1310 = vshll.u32 %v1188, 16
        %v1312 = vrot.slane %v1310, 5
        %v1313 = vsel %vm382, %v1308, %v1312
        %v1314 = vshrl.u32 %v1188, 16
        %v1316 = vrot.slane %v1314, 4
        %v1317 = vor.u32 %v1316, %v1312
        %v1318 = vrot.slane %v1317, 4
        %v1320 = vshrl.u32 %v1189, 16
        %v1322 = vrot.slane %v1320, 4
        %v1323 = vshll.u32 %v1189, 16
        %v1325 = vrot.slane %v1323, 5
        %v1326 = vor.u32 %v1322, %v1325
        %v1327 = vrot.slane %v1326, 4
        %v1329 = vshll.u32 %v1190, 16
        %v1331 = vrot.slane %v1329, 5
        %v1332 = vsel %vm382, %v1327, %v1331
        %v1333 = vshrl.u32 %v1190, 16
        %v1335 = vrot.slane %v1333, 4
        %v1336 = vor.u32 %v1335, %v1331
        %v1337 = vrot.slane %v1336, 4
        %v1339 = vshrl.u32 %v1191, 16
        %v1341 = vrot.slane %v1339, 4
        %v1342 = vshll.u32 %v1191, 16
        %v1344 = vrot.slane %v1342, 5
        %v1345 = vor.u32 %v1341, %v1344
        %v1346 = vrot.slane %v1345, 4
        %v1348 = vshll.u32 %v1192, 16
        %v1350 = vrot.slane %v1348, 5
        %v1351 = vsel %vm382, %v1346, %v1350
        %v1352 = vshrl.u32 %v1192, 16
        %v1354 = vrot.slane %v1352, 4
        %v1355 = vor.u32 %v1354, %v1350
        %v1356 = vrot.slane %v1355, 4
        %v1358 = vshrl.u32 %v1193, 16
        %v1360 = vrot.slane %v1358, 4
        %v1361 = vshll.u32 %v1193, 16
        %v1363 = vrot.slane %v1361, 5
        %v1364 = vor.u32 %v1360, %v1363
        %v1365 = vrot.slane %v1364, 4
        %v1367 = vshll.u32 %v1194, 16
        %v1369 = vrot.slane %v1367, 5
        %v1370 = vsel %vm382, %v1365, %v1369
        %v1371 = vshrl.u32 %v1194, 16
        %v1373 = vrot.slane %v1371, 4
        %v1374 = vor.u32 %v1373, %v1369
        %v1375 = vrot.slane %v1374, 4
        %v1377 = vshrl.u32 %v1195, 16
        %v1379 = vrot.slane %v1377, 4
        %v1380 = vshll.u32 %v1195, 16
        %v1382 = vrot.slane %v1380, 5
        %v1383 = vor.u32 %v1379, %v1382
        %v1384 = vrot.slane %v1383, 4
        %v1386 = vshll.u32 %v1196, 16
        %v1388 = vrot.slane %v1386, 5
        %v1389 = vsel %vm382, %v1384, %v1388
        %v1390 = vshrl.u32 %v1196, 16
        %v1392 = vrot.slane %v1390, 4
        %v1393 = vor.u32 %v1392, %v1388
        %v1394 = vrot.slane %v1393, 4
        %v1396 = vshrl.u32 %v1197, 16
        %v1398 = vrot.slane %v1396, 4
        %v1399 = vshll.u32 %v1197, 16
        %v1401 = vrot.slane %v1399, 5
        %v1402 = vor.u32 %v1398, %v1401
        %v1403 = vrot.slane %v1402, 4
        %v1405 = vshll.u32 %v1198, 16
        %v1407 = vrot.slane %v1405, 5
        %v1408 = vsel %vm382, %v1403, %v1407
        %v1409 = vshrl.u32 %v1198, 16
        %v1411 = vrot.slane %v1409, 4
        %v1412 = vor.u32 %v1411, %v1407
        %v1413 = vrot.slane %v1412, 4
        %v1415 = vshrl.u32 %v1199, 16
        %v1417 = vrot.slane %v1415, 4
        %v1418 = vshll.u32 %v1199, 16
        %v1420 = vrot.slane %v1418, 5
        %v1421 = vor.u32 %v1417, %v1420
        %v1422 = vrot.slane %v1421, 4
        %v1424 = vshll.u32 %v1200, 16
        %v1426 = vrot.slane %v1424, 5
        %v1427 = vsel %vm382, %v1422, %v1426
        %v1428 = vshrl.u32 %v1200, 16
        %v1430 = vrot.slane %v1428, 4
        %v1431 = vor.u32 %v1430, %v1426
        %v1432 = vrot.slane %v1431, 4
        %v1434 = vshrl.u32 %v1201, 16
        %v1436 = vrot.slane %v1434, 4
        %v1437 = vshll.u32 %v1201, 16
        %v1439 = vrot.slane %v1437, 5
        %v1440 = vor.u32 %v1436, %v1439
        %v1441 = vrot.slane %v1440, 4
        %v1443 = vshll.u32 %v1202, 16
        %v1445 = vrot.slane %v1443, 5
        %v1446 = vsel %vm382, %v1441, %v1445
        %v1447 = vshrl.u32 %v1202, 16
        %v1449 = vrot.slane %v1447, 4
        %v1450 = vor.u32 %v1449, %v1445
        %v1451 = vrot.slane %v1450, 4
        %v1453 = vshrl.u32 %v1203, 16
        %v1455 = vrot.slane %v1453, 4
        %v1456 = vshll.u32 %v1203, 16
        %v1458 = vrot.slane %v1456, 5
        %v1459 = vor.u32 %v1455, %v1458
        %v1460 = vrot.slane %v1459, 4
        %v1462 = vshll.u32 %v1204, 16
        %v1464 = vrot.slane %v1462, 5
        %v1465 = vsel %vm382, %v1460, %v1464
        %v1466 = vshrl.u32 %v1204, 16
        %v1468 = vrot.slane %v1466, 4
        %v1469 = vor.u32 %v1468, %v1464
        %v1470 = vrot.slane %v1469, 4
        %1471 = vrot.lane.b32.xlu0 %v1218, 16
        %v1472 = vpop.permute.xlu0 %1471
        %1473 = vrot.lane.b32.xlu0 %v1223, 16
        %v1474 = vpop.permute.xlu0 %1473
        %1475 = vrot.lane.b32.xlu0 %v1237, 16
        %v1476 = vpop.permute.xlu0 %1475
        %1477 = vrot.lane.b32.xlu0 %v1242, 16
        %v1478 = vpop.permute.xlu0 %1477
        %1479 = vrot.lane.b32.xlu0 %v1256, 16
        %v1480 = vpop.permute.xlu0 %1479
        %1481 = vrot.lane.b32.xlu0 %v1261, 16
        %v1482 = vpop.permute.xlu0 %1481
        %1483 = vrot.lane.b32.xlu0 %v1275, 16
        %v1484 = vpop.permute.xlu0 %1483
        %1485 = vrot.lane.b32.xlu0 %v1280, 16
        %v1486 = vpop.permute.xlu0 %1485
        %1487 = vrot.lane.b32.xlu0 %v1294, 16
        %v1488 = vpop.permute.xlu0 %1487
        %1489 = vrot.lane.b32.xlu0 %v1299, 16
        %v1490 = vpop.permute.xlu0 %1489
        %1491 = vrot.lane.b32.xlu0 %v1313, 16
        %v1492 = vpop.permute.xlu0 %1491
        %1493 = vrot.lane.b32.xlu0 %v1318, 16
        %v1494 = vpop.permute.xlu0 %1493
        %1495 = vrot.lane.b32.xlu0 %v1332, 16
        %v1496 = vpop.permute.xlu0 %1495
        %1497 = vrot.lane.b32.xlu0 %v1337, 16
        %v1498 = vpop.permute.xlu0 %1497
        %1499 = vrot.lane.b32.xlu0 %v1351, 16
        %v1500 = vpop.permute.xlu0 %1499
        %1501 = vrot.lane.b32.xlu0 %v1356, 16
        %v1502 = vpop.permute.xlu0 %1501
        %1503 = vrot.lane.b32.xlu0 %v1370, 16
        %v1504 = vpop.permute.xlu0 %1503
        %1505 = vrot.lane.b32.xlu0 %v1375, 16
        %v1506 = vpop.permute.xlu0 %1505
        %1507 = vrot.lane.b32.xlu0 %v1389, 16
        %v1508 = vpop.permute.xlu0 %1507
        %1509 = vrot.lane.b32.xlu0 %v1394, 16
        %v1510 = vpop.permute.xlu0 %1509
        %1511 = vrot.lane.b32.xlu0 %v1408, 16
        %v1512 = vpop.permute.xlu0 %1511
        %1513 = vrot.lane.b32.xlu0 %v1413, 16
        %v1514 = vpop.permute.xlu0 %1513
        %1515 = vrot.lane.b32.xlu0 %v1427, 16
        %v1516 = vpop.permute.xlu0 %1515
        %1517 = vrot.lane.b32.xlu0 %v1432, 16
        %v1518 = vpop.permute.xlu0 %1517
        %1519 = vrot.lane.b32.xlu0 %v1446, 16
        %v1520 = vpop.permute.xlu0 %1519
        %1521 = vrot.lane.b32.xlu0 %v1451, 16
        %v1522 = vpop.permute.xlu0 %1521
        %1523 = vrot.lane.b32.xlu0 %v1465, 16
        %v1524 = vpop.permute.xlu0 %1523
        %1525 = vrot.lane.b32.xlu0 %v1470, 16
        %v1526 = vpop.permute.xlu0 %1525
        %vm1555 = vcmask 158848
        %1556 = vst.msk [vmem:[#allocation2] sm:$0xf] %vm1555, %v1472
        %vm1557 = vcmask 157824
        %1558 = vst.msk [vmem:[#allocation2 + $0x4] sm:$0x7] %vm1557, %v1474
        %1559 = vst.msk [vmem:[#allocation2 + $0x8] sm:$0xf] %vm1555, %v1476
        %1560 = vst.msk [vmem:[#allocation2 + $0xc] sm:$0x7] %vm1557, %v1478
        %1561 = vst.msk [vmem:[#allocation2 + $0x10] sm:$0xf] %vm1555, %v1480
        %1562 = vst.msk [vmem:[#allocation2 + $0x14] sm:$0x7] %vm1557, %v1482
        %1563 = vst.msk [vmem:[#allocation2 + $0x18] sm:$0xf] %vm1555, %v1484
        %1564 = vst.msk [vmem:[#allocation2 + $0x1c] sm:$0x7] %vm1557, %v1486
        %1565 = vst.msk [vmem:[#allocation2 + $0x20] sm:$0xf] %vm1555, %v1488
        %1566 = vst.msk [vmem:[#allocation2 + $0x24] sm:$0x7] %vm1557, %v1490
        %1567 = vst.msk [vmem:[#allocation2 + $0x28] sm:$0xf] %vm1555, %v1492
        %1568 = vst.msk [vmem:[#allocation2 + $0x2c] sm:$0x7] %vm1557, %v1494
        %1569 = vst.msk [vmem:[#allocation2 + $0x30] sm:$0xf] %vm1555, %v1496
        %1570 = vst.msk [vmem:[#allocation2 + $0x34] sm:$0x7] %vm1557, %v1498
        %1571 = vst.msk [vmem:[#allocation2 + $0x38] sm:$0xf] %vm1555, %v1500
        %1572 = vst.msk [vmem:[#allocation2 + $0x3c] sm:$0x7] %vm1557, %v1502
        %1573 = vst.msk [vmem:[#allocation2 + $0x40] sm:$0xf] %vm1555, %v1504
        %1574 = vst.msk [vmem:[#allocation2 + $0x44] sm:$0x7] %vm1557, %v1506
        %1575 = vst.msk [vmem:[#allocation2 + $0x48] sm:$0xf] %vm1555, %v1508
        %1576 = vst.msk [vmem:[#allocation2 + $0x4c] sm:$0x7] %vm1557, %v1510
        %1577 = vst.msk [vmem:[#allocation2 + $0x50] sm:$0xf] %vm1555, %v1512
        %1578 = vst.msk [vmem:[#allocation2 + $0x54] sm:$0x7] %vm1557, %v1514
        %1579 = vst.msk [vmem:[#allocation2 + $0x58] sm:$0xf] %vm1555, %v1516
        %1580 = vst.msk [vmem:[#allocation2 + $0x5c] sm:$0x7] %vm1557, %v1518
        %1581 = vst.msk [vmem:[#allocation2 + $0x60] sm:$0xf] %vm1555, %v1520
        %1582 = vst.msk [vmem:[#allocation2 + $0x64] sm:$0x7] %vm1557, %v1522
        %1583 = vst.msk [vmem:[#allocation2 + $0x68] sm:$0xf] %vm1555, %v1524
        %1584 = vst.msk [vmem:[#allocation2 + $0x6c] sm:$0x7] %vm1557, %v1526
        %v1585 = vld [vmem:[%s1006] sm:$0xe]
        %v1586 = vld [vmem:[%s1006 + $0x4] sm:$0xf]
        %v1587 = vld [vmem:[%s1006 + $0x8] sm:$0xe]
        %v1588 = vld [vmem:[%s1006 + $0xc] sm:$0xf]
        %v1589 = vld [vmem:[%s1006 + $0x10] sm:$0xe]
        %v1590 = vld [vmem:[%s1006 + $0x14] sm:$0xf]
        %v1591 = vld [vmem:[%s1006 + $0x18] sm:$0xe]
        %v1592 = vld [vmem:[%s1006 + $0x1c] sm:$0xf]
        %v1593 = vld [vmem:[%s1006 + $0x20] sm:$0xe]
        %v1594 = vld [vmem:[%s1006 + $0x24] sm:$0xf]
        %v1595 = vld [vmem:[%s1006 + $0x28] sm:$0xe]
        %v1596 = vld [vmem:[%s1006 + $0x2c] sm:$0xf]
        %v1597 = vld [vmem:[%s1006 + $0x30] sm:$0xe]
        %v1598 = vld [vmem:[%s1006 + $0x34] sm:$0xf]
        %v1599 = vld [vmem:[%s1006 + $0x38] sm:$0xe]
        %v1600 = vld [vmem:[%s1006 + $0x3c] sm:$0xf]
        %v1601 = vld [vmem:[%s1006 + $0x40] sm:$0xe]
        %v1602 = vld [vmem:[%s1006 + $0x44] sm:$0xf]
        %v1603 = vld [vmem:[%s1006 + $0x48] sm:$0xe]
        %v1604 = vld [vmem:[%s1006 + $0x4c] sm:$0xf]
        %v1605 = vld [vmem:[%s1006 + $0x50] sm:$0xe]
        %v1606 = vld [vmem:[%s1006 + $0x54] sm:$0xf]
        %v1607 = vld [vmem:[%s1006 + $0x58] sm:$0xe]
        %v1608 = vld [vmem:[%s1006 + $0x5c] sm:$0xf]
        %v1609 = vld [vmem:[%s1006 + $0x60] sm:$0xe]
        %v1610 = vld [vmem:[%s1006 + $0x64] sm:$0xf]
        %v1611 = vld [vmem:[%s1006 + $0x68] sm:$0xe]
        %v1612 = vld [vmem:[%s1006 + $0x6c] sm:$0xf]
        %v1641 = vrot.slane %v1585, 5
        %v1642 = vrot.slane %v1641, 4
        %v1643 = vrot.slane %v1586, 5
        %v1644 = vsel %vm821, %v1642, %v1643
        %v1645 = vrot.slane %v1643, 4
        %v1646 = vrot.slane %v1587, 5
        %v1647 = vrot.slane %v1646, 4
        %v1648 = vrot.slane %v1588, 5
        %v1649 = vsel %vm821, %v1647, %v1648
        %v1650 = vrot.slane %v1648, 4
        %v1651 = vrot.slane %v1589, 5
        %v1652 = vrot.slane %v1651, 4
        %v1653 = vrot.slane %v1590, 5
        %v1654 = vsel %vm821, %v1652, %v1653
        %v1655 = vrot.slane %v1653, 4
        %v1656 = vrot.slane %v1591, 5
        %v1657 = vrot.slane %v1656, 4
        %v1658 = vrot.slane %v1592, 5
        %v1659 = vsel %vm821, %v1657, %v1658
        %v1660 = vrot.slane %v1658, 4
        %v1661 = vrot.slane %v1593, 5
        %v1662 = vrot.slane %v1661, 4
        %v1663 = vrot.slane %v1594, 5
        %v1664 = vsel %vm821, %v1662, %v1663
        %v1665 = vrot.slane %v1663, 4
        %v1666 = vrot.slane %v1595, 5
        %v1667 = vrot.slane %v1666, 4
        %v1668 = vrot.slane %v1596, 5
        %v1669 = vsel %vm821, %v1667, %v1668
        %v1670 = vrot.slane %v1668, 4
        %v1671 = vrot.slane %v1597, 5
        %v1672 = vrot.slane %v1671, 4
        %v1673 = vrot.slane %v1598, 5
        %v1674 = vsel %vm821, %v1672, %v1673
        %v1675 = vrot.slane %v1673, 4
        %v1676 = vrot.slane %v1599, 5
        %v1677 = vrot.slane %v1676, 4
        %v1678 = vrot.slane %v1600, 5
        %v1679 = vsel %vm821, %v1677, %v1678
        %v1680 = vrot.slane %v1678, 4
        %v1681 = vrot.slane %v1601, 5
        %v1682 = vrot.slane %v1681, 4
        %v1683 = vrot.slane %v1602, 5
        %v1684 = vsel %vm821, %v1682, %v1683
        %v1685 = vrot.slane %v1683, 4
        %v1686 = vrot.slane %v1603, 5
        %v1687 = vrot.slane %v1686, 4
        %v1688 = vrot.slane %v1604, 5
        %v1689 = vsel %vm821, %v1687, %v1688
        %v1690 = vrot.slane %v1688, 4
        %v1691 = vrot.slane %v1605, 5
        %v1692 = vrot.slane %v1691, 4
        %v1693 = vrot.slane %v1606, 5
        %v1694 = vsel %vm821, %v1692, %v1693
        %v1695 = vrot.slane %v1693, 4
        %v1696 = vrot.slane %v1607, 5
        %v1697 = vrot.slane %v1696, 4
        %v1698 = vrot.slane %v1608, 5
        %v1699 = vsel %vm821, %v1697, %v1698
        %v1700 = vrot.slane %v1698, 4
        %v1701 = vrot.slane %v1609, 5
        %v1702 = vrot.slane %v1701, 4
        %v1703 = vrot.slane %v1610, 5
        %v1704 = vsel %vm821, %v1702, %v1703
        %v1705 = vrot.slane %v1703, 4
        %v1706 = vrot.slane %v1611, 5
        %v1707 = vrot.slane %v1706, 4
        %v1708 = vrot.slane %v1612, 5
        %v1709 = vsel %vm821, %v1707, %v1708
        %v1710 = vrot.slane %v1708, 4
        %1711 = vrot.lane.b32.xlu0 %v1644, 20
        %v1712 = vpop.permute.xlu0 %1711
        %1713 = vrot.lane.b32.xlu0 %v1645, 20
        %v1714 = vpop.permute.xlu0 %1713
        %1715 = vrot.lane.b32.xlu0 %v1649, 20
        %v1716 = vpop.permute.xlu0 %1715
        %1717 = vrot.lane.b32.xlu0 %v1650, 20
        %v1718 = vpop.permute.xlu0 %1717
        %1719 = vrot.lane.b32.xlu0 %v1654, 20
        %v1720 = vpop.permute.xlu0 %1719
        %1721 = vrot.lane.b32.xlu0 %v1655, 20
        %v1722 = vpop.permute.xlu0 %1721
        %1723 = vrot.lane.b32.xlu0 %v1659, 20
        %v1724 = vpop.permute.xlu0 %1723
        %1725 = vrot.lane.b32.xlu0 %v1660, 20
        %v1726 = vpop.permute.xlu0 %1725
        %1727 = vrot.lane.b32.xlu0 %v1664, 20
        %v1728 = vpop.permute.xlu0 %1727
        %1729 = vrot.lane.b32.xlu0 %v1665, 20
        %v1730 = vpop.permute.xlu0 %1729
        %1731 = vrot.lane.b32.xlu0 %v1669, 20
        %v1732 = vpop.permute.xlu0 %1731
        %1733 = vrot.lane.b32.xlu0 %v1670, 20
        %v1734 = vpop.permute.xlu0 %1733
        %1735 = vrot.lane.b32.xlu0 %v1674, 20
        %v1736 = vpop.permute.xlu0 %1735
        %1737 = vrot.lane.b32.xlu0 %v1675, 20
        %v1738 = vpop.permute.xlu0 %1737
        %1739 = vrot.lane.b32.xlu0 %v1679, 20
        %v1740 = vpop.permute.xlu0 %1739
        %1741 = vrot.lane.b32.xlu0 %v1680, 20
        %v1742 = vpop.permute.xlu0 %1741
        %1743 = vrot.lane.b32.xlu0 %v1684, 20
        %v1744 = vpop.permute.xlu0 %1743
        %1745 = vrot.lane.b32.xlu0 %v1685, 20
        %v1746 = vpop.permute.xlu0 %1745
        %1747 = vrot.lane.b32.xlu0 %v1689, 20
        %v1748 = vpop.permute.xlu0 %1747
        %1749 = vrot.lane.b32.xlu0 %v1690, 20
        %v1750 = vpop.permute.xlu0 %1749
        %1751 = vrot.lane.b32.xlu0 %v1694, 20
        %v1752 = vpop.permute.xlu0 %1751
        %1753 = vrot.lane.b32.xlu0 %v1695, 20
        %v1754 = vpop.permute.xlu0 %1753
        %1755 = vrot.lane.b32.xlu0 %v1699, 20
        %v1756 = vpop.permute.xlu0 %1755
        %1757 = vrot.lane.b32.xlu0 %v1700, 20
        %v1758 = vpop.permute.xlu0 %1757
        %1759 = vrot.lane.b32.xlu0 %v1704, 20
        %v1760 = vpop.permute.xlu0 %1759
        %1761 = vrot.lane.b32.xlu0 %v1705, 20
        %v1762 = vpop.permute.xlu0 %1761
        %1763 = vrot.lane.b32.xlu0 %v1709, 20
        %v1764 = vpop.permute.xlu0 %1763
        %1765 = vrot.lane.b32.xlu0 %v1710, 20
        %v1766 = vpop.permute.xlu0 %1765
        %vm1795 = vcmask 191648
        %1796 = vst.msk [vmem:[#allocation2] sm:$0xf] %vm1795, %v1712
        %vm1797 = vcmask 190624
        %1798 = vst.msk [vmem:[#allocation2 + $0x4] sm:$0x7] %vm1797, %v1714
        %1799 = vst.msk [vmem:[#allocation2 + $0x8] sm:$0xf] %vm1795, %v1716
        %1800 = vst.msk [vmem:[#allocation2 + $0xc] sm:$0x7] %vm1797, %v1718
        %1801 = vst.msk [vmem:[#allocation2 + $0x10] sm:$0xf] %vm1795, %v1720
        %1802 = vst.msk [vmem:[#allocation2 + $0x14] sm:$0x7] %vm1797, %v1722
        %1803 = vst.msk [vmem:[#allocation2 + $0x18] sm:$0xf] %vm1795, %v1724
        %1804 = vst.msk [vmem:[#allocation2 + $0x1c] sm:$0x7] %vm1797, %v1726
        %1805 = vst.msk [vmem:[#allocation2 + $0x20] sm:$0xf] %vm1795, %v1728
        %1806 = vst.msk [vmem:[#allocation2 + $0x24] sm:$0x7] %vm1797, %v1730
        %1807 = vst.msk [vmem:[#allocation2 + $0x28] sm:$0xf] %vm1795, %v1732
        %1808 = vst.msk [vmem:[#allocation2 + $0x2c] sm:$0x7] %vm1797, %v1734
        %1809 = vst.msk [vmem:[#allocation2 + $0x30] sm:$0xf] %vm1795, %v1736
        %1810 = vst.msk [vmem:[#allocation2 + $0x34] sm:$0x7] %vm1797, %v1738
        %1811 = vst.msk [vmem:[#allocation2 + $0x38] sm:$0xf] %vm1795, %v1740
        %1812 = vst.msk [vmem:[#allocation2 + $0x3c] sm:$0x7] %vm1797, %v1742
        %1813 = vst.msk [vmem:[#allocation2 + $0x40] sm:$0xf] %vm1795, %v1744
        %1814 = vst.msk [vmem:[#allocation2 + $0x44] sm:$0x7] %vm1797, %v1746
        %1815 = vst.msk [vmem:[#allocation2 + $0x48] sm:$0xf] %vm1795, %v1748
        %1816 = vst.msk [vmem:[#allocation2 + $0x4c] sm:$0x7] %vm1797, %v1750
        %1817 = vst.msk [vmem:[#allocation2 + $0x50] sm:$0xf] %vm1795, %v1752
        %1818 = vst.msk [vmem:[#allocation2 + $0x54] sm:$0x7] %vm1797, %v1754
        %1819 = vst.msk [vmem:[#allocation2 + $0x58] sm:$0xf] %vm1795, %v1756
        %1820 = vst.msk [vmem:[#allocation2 + $0x5c] sm:$0x7] %vm1797, %v1758
        %1821 = vst.msk [vmem:[#allocation2 + $0x60] sm:$0xf] %vm1795, %v1760
        %1822 = vst.msk [vmem:[#allocation2 + $0x64] sm:$0x7] %vm1797, %v1762
        %1823 = vst.msk [vmem:[#allocation2 + $0x68] sm:$0xf] %vm1795, %v1764
        %1824 = vst.msk [vmem:[#allocation2 + $0x6c] sm:$0x7] %vm1797, %v1766
        %s1825 = scalar_lea.vmem %s292, 16
        %v1826 = vld [vmem:[%s1825] sm:$0xf]
        %v1827 = vld [vmem:[%s1825 + $0x4] sm:$0x7]
        %v1828 = vld [vmem:[%s1825 + $0x8] sm:$0xf]
        %v1829 = vld [vmem:[%s1825 + $0xc] sm:$0x7]
        %v1830 = vld [vmem:[%s1825 + $0x10] sm:$0xf]
        %v1831 = vld [vmem:[%s1825 + $0x14] sm:$0x7]
        %v1832 = vld [vmem:[%s1825 + $0x18] sm:$0xf]
        %v1833 = vld [vmem:[%s1825 + $0x1c] sm:$0x7]
        %v1834 = vld [vmem:[%s1825 + $0x20] sm:$0xf]
        %v1835 = vld [vmem:[%s1825 + $0x24] sm:$0x7]
        %v1836 = vld [vmem:[%s1825 + $0x28] sm:$0xf]
        %v1837 = vld [vmem:[%s1825 + $0x2c] sm:$0x7]
        %v1838 = vld [vmem:[%s1825 + $0x30] sm:$0xf]
        %v1839 = vld [vmem:[%s1825 + $0x34] sm:$0x7]
        %v1840 = vld [vmem:[%s1825 + $0x38] sm:$0xf]
        %v1841 = vld [vmem:[%s1825 + $0x3c] sm:$0x7]
        %v1842 = vld [vmem:[%s1825 + $0x40] sm:$0xf]
        %v1843 = vld [vmem:[%s1825 + $0x44] sm:$0x7]
        %v1844 = vld [vmem:[%s1825 + $0x48] sm:$0xf]
        %v1845 = vld [vmem:[%s1825 + $0x4c] sm:$0x7]
        %v1846 = vld [vmem:[%s1825 + $0x50] sm:$0xf]
        %v1847 = vld [vmem:[%s1825 + $0x54] sm:$0x7]
        %v1848 = vld [vmem:[%s1825 + $0x58] sm:$0xf]
        %v1849 = vld [vmem:[%s1825 + $0x5c] sm:$0x7]
        %v1850 = vld [vmem:[%s1825 + $0x60] sm:$0xf]
        %v1851 = vld [vmem:[%s1825 + $0x64] sm:$0x7]
        %v1852 = vld [vmem:[%s1825 + $0x68] sm:$0xf]
        %v1853 = vld [vmem:[%s1825 + $0x6c] sm:$0x7]
        %1882 = vrot.lane.b32.xlu0 %v1826, 24
        %v1883 = vpop.permute.xlu0 %1882
        %1884 = vrot.lane.b32.xlu0 %v1827, 24
        %v1885 = vpop.permute.xlu0 %1884
        %1886 = vrot.lane.b32.xlu0 %v1828, 24
        %v1887 = vpop.permute.xlu0 %1886
        %1888 = vrot.lane.b32.xlu0 %v1829, 24
        %v1889 = vpop.permute.xlu0 %1888
        %1890 = vrot.lane.b32.xlu0 %v1830, 24
        %v1891 = vpop.permute.xlu0 %1890
        %1892 = vrot.lane.b32.xlu0 %v1831, 24
        %v1893 = vpop.permute.xlu0 %1892
        %1894 = vrot.lane.b32.xlu0 %v1832, 24
        %v1895 = vpop.permute.xlu0 %1894
        %1896 = vrot.lane.b32.xlu0 %v1833, 24
        %v1897 = vpop.permute.xlu0 %1896
        %1898 = vrot.lane.b32.xlu0 %v1834, 24
        %v1899 = vpop.permute.xlu0 %1898
        %1900 = vrot.lane.b32.xlu0 %v1835, 24
        %v1901 = vpop.permute.xlu0 %1900
        %1902 = vrot.lane.b32.xlu0 %v1836, 24
        %v1903 = vpop.permute.xlu0 %1902
        %1904 = vrot.lane.b32.xlu0 %v1837, 24
        %v1905 = vpop.permute.xlu0 %1904
        %1906 = vrot.lane.b32.xlu0 %v1838, 24
        %v1907 = vpop.permute.xlu0 %1906
        %1908 = vrot.lane.b32.xlu0 %v1839, 24
        %v1909 = vpop.permute.xlu0 %1908
        %1910 = vrot.lane.b32.xlu0 %v1840, 24
        %v1911 = vpop.permute.xlu0 %1910
        %1912 = vrot.lane.b32.xlu0 %v1841, 24
        %v1913 = vpop.permute.xlu0 %1912
        %1914 = vrot.lane.b32.xlu0 %v1842, 24
        %v1915 = vpop.permute.xlu0 %1914
        %1916 = vrot.lane.b32.xlu0 %v1843, 24
        %v1917 = vpop.permute.xlu0 %1916
        %1918 = vrot.lane.b32.xlu0 %v1844, 24
        %v1919 = vpop.permute.xlu0 %1918
        %1920 = vrot.lane.b32.xlu0 %v1845, 24
        %v1921 = vpop.permute.xlu0 %1920
        %1922 = vrot.lane.b32.xlu0 %v1846, 24
        %v1923 = vpop.permute.xlu0 %1922
        %1924 = vrot.lane.b32.xlu0 %v1847, 24
        %v1925 = vpop.permute.xlu0 %1924
        %1926 = vrot.lane.b32.xlu0 %v1848, 24
        %v1927 = vpop.permute.xlu0 %1926
        %1928 = vrot.lane.b32.xlu0 %v1849, 24
        %v1929 = vpop.permute.xlu0 %1928
        %1930 = vrot.lane.b32.xlu0 %v1850, 24
        %v1931 = vpop.permute.xlu0 %1930
        %1932 = vrot.lane.b32.xlu0 %v1851, 24
        %v1933 = vpop.permute.xlu0 %1932
        %1934 = vrot.lane.b32.xlu0 %v1852, 24
        %v1935 = vpop.permute.xlu0 %1934
        %1936 = vrot.lane.b32.xlu0 %v1853, 24
        %v1937 = vpop.permute.xlu0 %1936
        %vm1966 = vcmask 224448
        %1967 = vst.msk [vmem:[#allocation2] sm:$0xf] %vm1966, %v1883
        %vm1968 = vcmask 223424
        %1969 = vst.msk [vmem:[#allocation2 + $0x4] sm:$0x7] %vm1968, %v1885
        %1970 = vst.msk [vmem:[#allocation2 + $0x8] sm:$0xf] %vm1966, %v1887
        %1971 = vst.msk [vmem:[#allocation2 + $0xc] sm:$0x7] %vm1968, %v1889
        %1972 = vst.msk [vmem:[#allocation2 + $0x10] sm:$0xf] %vm1966, %v1891
        %1973 = vst.msk [vmem:[#allocation2 + $0x14] sm:$0x7] %vm1968, %v1893
        %1974 = vst.msk [vmem:[#allocation2 + $0x18] sm:$0xf] %vm1966, %v1895
        %1975 = vst.msk [vmem:[#allocation2 + $0x1c] sm:$0x7] %vm1968, %v1897
        %1976 = vst.msk [vmem:[#allocation2 + $0x20] sm:$0xf] %vm1966, %v1899
        %1977 = vst.msk [vmem:[#allocation2 + $0x24] sm:$0x7] %vm1968, %v1901
        %1978 = vst.msk [vmem:[#allocation2 + $0x28] sm:$0xf] %vm1966, %v1903
        %1979 = vst.msk [vmem:[#allocation2 + $0x2c] sm:$0x7] %vm1968, %v1905
        %1980 = vst.msk [vmem:[#allocation2 + $0x30] sm:$0xf] %vm1966, %v1907
        %1981 = vst.msk [vmem:[#allocation2 + $0x34] sm:$0x7] %vm1968, %v1909
        %1982 = vst.msk [vmem:[#allocation2 + $0x38] sm:$0xf] %vm1966, %v1911
        %1983 = vst.msk [vmem:[#allocation2 + $0x3c] sm:$0x7] %vm1968, %v1913
        %1984 = vst.msk [vmem:[#allocation2 + $0x40] sm:$0xf] %vm1966, %v1915
        %1985 = vst.msk [vmem:[#allocation2 + $0x44] sm:$0x7] %vm1968, %v1917
        %1986 = vst.msk [vmem:[#allocation2 + $0x48] sm:$0xf] %vm1966, %v1919
        %1987 = vst.msk [vmem:[#allocation2 + $0x4c] sm:$0x7] %vm1968, %v1921
        %1988 = vst.msk [vmem:[#allocation2 + $0x50] sm:$0xf] %vm1966, %v1923
        %1989 = vst.msk [vmem:[#allocation2 + $0x54] sm:$0x7] %vm1968, %v1925
        %1990 = vst.msk [vmem:[#allocation2 + $0x58] sm:$0xf] %vm1966, %v1927
        %1991 = vst.msk [vmem:[#allocation2 + $0x5c] sm:$0x7] %vm1968, %v1929
        %1992 = vst.msk [vmem:[#allocation2 + $0x60] sm:$0xf] %vm1966, %v1931
        %1993 = vst.msk [vmem:[#allocation2 + $0x64] sm:$0x7] %vm1968, %v1933
        %1994 = vst.msk [vmem:[#allocation2 + $0x68] sm:$0xf] %vm1966, %v1935
        %1995 = vst.msk [vmem:[#allocation2 + $0x6c] sm:$0x7] %vm1968, %v1937
        %v1996 = vld [vmem:[%s1825] sm:$0xf]
        %v1997 = vld [vmem:[%s1825 + $0x4] sm:$0xf]
        %v1998 = vld [vmem:[%s1825 + $0x8] sm:$0xf]
        %v1999 = vld [vmem:[%s1825 + $0xc] sm:$0xf]
        %v2000 = vld [vmem:[%s1825 + $0x10] sm:$0xf]
        %v2001 = vld [vmem:[%s1825 + $0x14] sm:$0xf]
        %v2002 = vld [vmem:[%s1825 + $0x18] sm:$0xf]
        %v2003 = vld [vmem:[%s1825 + $0x1c] sm:$0xf]
        %v2004 = vld [vmem:[%s1825 + $0x20] sm:$0xf]
        %v2005 = vld [vmem:[%s1825 + $0x24] sm:$0xf]
        %v2006 = vld [vmem:[%s1825 + $0x28] sm:$0xf]
        %v2007 = vld [vmem:[%s1825 + $0x2c] sm:$0xf]
        %v2008 = vld [vmem:[%s1825 + $0x30] sm:$0xf]
        %v2009 = vld [vmem:[%s1825 + $0x34] sm:$0xf]
        %v2010 = vld [vmem:[%s1825 + $0x38] sm:$0xf]
        %v2011 = vld [vmem:[%s1825 + $0x3c] sm:$0xf]
        %v2012 = vld [vmem:[%s1825 + $0x40] sm:$0xf]
        %v2013 = vld [vmem:[%s1825 + $0x44] sm:$0xf]
        %v2014 = vld [vmem:[%s1825 + $0x48] sm:$0xf]
        %v2015 = vld [vmem:[%s1825 + $0x4c] sm:$0xf]
        %v2016 = vld [vmem:[%s1825 + $0x50] sm:$0xf]
        %v2017 = vld [vmem:[%s1825 + $0x54] sm:$0xf]
        %v2018 = vld [vmem:[%s1825 + $0x58] sm:$0xf]
        %v2019 = vld [vmem:[%s1825 + $0x5c] sm:$0xf]
        %v2020 = vld [vmem:[%s1825 + $0x60] sm:$0xf]
        %v2021 = vld [vmem:[%s1825 + $0x64] sm:$0xf]
        %v2022 = vld [vmem:[%s1825 + $0x68] sm:$0xf]
        %v2023 = vld [vmem:[%s1825 + $0x6c] sm:$0xf]
        %v2025 = vshrl.u32 %v1996, 16
        %v2027 = vrot.slane %v2025, 4
        %v2028 = vshll.u32 %v1996, 16
        %v2030 = vrot.slane %v2028, 5
        %v2031 = vor.u32 %v2027, %v2030
        %v2032 = vrot.slane %v2031, 4
        %v2034 = vshll.u32 %v1997, 16
        %v2036 = vrot.slane %v2034, 5
        %v2037 = vsel %vm382, %v2032, %v2036
        %v2038 = vshrl.u32 %v1997, 16
        %v2040 = vrot.slane %v2038, 4
        %v2041 = vor.u32 %v2040, %v2036
        %v2042 = vrot.slane %v2041, 4
        %v2044 = vshrl.u32 %v1998, 16
        %v2046 = vrot.slane %v2044, 4
        %v2047 = vshll.u32 %v1998, 16
        %v2049 = vrot.slane %v2047, 5
        %v2050 = vor.u32 %v2046, %v2049
        %v2051 = vrot.slane %v2050, 4
        %v2053 = vshll.u32 %v1999, 16
        %v2055 = vrot.slane %v2053, 5
        %v2056 = vsel %vm382, %v2051, %v2055
        %v2057 = vshrl.u32 %v1999, 16
        %v2059 = vrot.slane %v2057, 4
        %v2060 = vor.u32 %v2059, %v2055
        %v2061 = vrot.slane %v2060, 4
        %v2063 = vshrl.u32 %v2000, 16
        %v2065 = vrot.slane %v2063, 4
        %v2066 = vshll.u32 %v2000, 16
        %v2068 = vrot.slane %v2066, 5
        %v2069 = vor.u32 %v2065, %v2068
        %v2070 = vrot.slane %v2069, 4
        %v2072 = vshll.u32 %v2001, 16
        %v2074 = vrot.slane %v2072, 5
        %v2075 = vsel %vm382, %v2070, %v2074
        %v2076 = vshrl.u32 %v2001, 16
        %v2078 = vrot.slane %v2076, 4
        %v2079 = vor.u32 %v2078, %v2074
        %v2080 = vrot.slane %v2079, 4
        %v2082 = vshrl.u32 %v2002, 16
        %v2084 = vrot.slane %v2082, 4
        %v2085 = vshll.u32 %v2002, 16
        %v2087 = vrot.slane %v2085, 5
        %v2088 = vor.u32 %v2084, %v2087
        %v2089 = vrot.slane %v2088, 4
        %v2091 = vshll.u32 %v2003, 16
        %v2093 = vrot.slane %v2091, 5
        %v2094 = vsel %vm382, %v2089, %v2093
        %v2095 = vshrl.u32 %v2003, 16
        %v2097 = vrot.slane %v2095, 4
        %v2098 = vor.u32 %v2097, %v2093
        %v2099 = vrot.slane %v2098, 4
        %v2101 = vshrl.u32 %v2004, 16
        %v2103 = vrot.slane %v2101, 4
        %v2104 = vshll.u32 %v2004, 16
        %v2106 = vrot.slane %v2104, 5
        %v2107 = vor.u32 %v2103, %v2106
        %v2108 = vrot.slane %v2107, 4
        %v2110 = vshll.u32 %v2005, 16
        %v2112 = vrot.slane %v2110, 5
        %v2113 = vsel %vm382, %v2108, %v2112
        %v2114 = vshrl.u32 %v2005, 16
        %v2116 = vrot.slane %v2114, 4
        %v2117 = vor.u32 %v2116, %v2112
        %v2118 = vrot.slane %v2117, 4
        %v2120 = vshrl.u32 %v2006, 16
        %v2122 = vrot.slane %v2120, 4
        %v2123 = vshll.u32 %v2006, 16
        %v2125 = vrot.slane %v2123, 5
        %v2126 = vor.u32 %v2122, %v2125
        %v2127 = vrot.slane %v2126, 4
        %v2129 = vshll.u32 %v2007, 16
        %v2131 = vrot.slane %v2129, 5
        %v2132 = vsel %vm382, %v2127, %v2131
        %v2133 = vshrl.u32 %v2007, 16
        %v2135 = vrot.slane %v2133, 4
        %v2136 = vor.u32 %v2135, %v2131
        %v2137 = vrot.slane %v2136, 4
        %v2139 = vshrl.u32 %v2008, 16
        %v2141 = vrot.slane %v2139, 4
        %v2142 = vshll.u32 %v2008, 16
        %v2144 = vrot.slane %v2142, 5
        %v2145 = vor.u32 %v2141, %v2144
        %v2146 = vrot.slane %v2145, 4
        %v2148 = vshll.u32 %v2009, 16
        %v2150 = vrot.slane %v2148, 5
        %v2151 = vsel %vm382, %v2146, %v2150
        %v2152 = vshrl.u32 %v2009, 16
        %v2154 = vrot.slane %v2152, 4
        %v2155 = vor.u32 %v2154, %v2150
        %v2156 = vrot.slane %v2155, 4
        %v2158 = vshrl.u32 %v2010, 16
        %v2160 = vrot.slane %v2158, 4
        %v2161 = vshll.u32 %v2010, 16
        %v2163 = vrot.slane %v2161, 5
        %v2164 = vor.u32 %v2160, %v2163
        %v2165 = vrot.slane %v2164, 4
        %v2167 = vshll.u32 %v2011, 16
        %v2169 = vrot.slane %v2167, 5
        %v2170 = vsel %vm382, %v2165, %v2169
        %v2171 = vshrl.u32 %v2011, 16
        %v2173 = vrot.slane %v2171, 4
        %v2174 = vor.u32 %v2173, %v2169
        %v2175 = vrot.slane %v2174, 4
        %v2177 = vshrl.u32 %v2012, 16
        %v2179 = vrot.slane %v2177, 4
        %v2180 = vshll.u32 %v2012, 16
        %v2182 = vrot.slane %v2180, 5
        %v2183 = vor.u32 %v2179, %v2182
        %v2184 = vrot.slane %v2183, 4
        %v2186 = vshll.u32 %v2013, 16
        %v2188 = vrot.slane %v2186, 5
        %v2189 = vsel %vm382, %v2184, %v2188
        %v2190 = vshrl.u32 %v2013, 16
        %v2192 = vrot.slane %v2190, 4
        %v2193 = vor.u32 %v2192, %v2188
        %v2194 = vrot.slane %v2193, 4
        %v2196 = vshrl.u32 %v2014, 16
        %v2198 = vrot.slane %v2196, 4
        %v2199 = vshll.u32 %v2014, 16
        %v2201 = vrot.slane %v2199, 5
        %v2202 = vor.u32 %v2198, %v2201
        %v2203 = vrot.slane %v2202, 4
        %v2205 = vshll.u32 %v2015, 16
        %v2207 = vrot.slane %v2205, 5
        %v2208 = vsel %vm382, %v2203, %v2207
        %v2209 = vshrl.u32 %v2015, 16
        %v2211 = vrot.slane %v2209, 4
        %v2212 = vor.u32 %v2211, %v2207
        %v2213 = vrot.slane %v2212, 4
        %v2215 = vshrl.u32 %v2016, 16
        %v2217 = vrot.slane %v2215, 4
        %v2218 = vshll.u32 %v2016, 16
        %v2220 = vrot.slane %v2218, 5
        %v2221 = vor.u32 %v2217, %v2220
        %v2222 = vrot.slane %v2221, 4
        %v2224 = vshll.u32 %v2017, 16
        %v2226 = vrot.slane %v2224, 5
        %v2227 = vsel %vm382, %v2222, %v2226
        %v2228 = vshrl.u32 %v2017, 16
        %v2230 = vrot.slane %v2228, 4
        %v2231 = vor.u32 %v2230, %v2226
        %v2232 = vrot.slane %v2231, 4
        %v2234 = vshrl.u32 %v2018, 16
        %v2236 = vrot.slane %v2234, 4
        %v2237 = vshll.u32 %v2018, 16
        %v2239 = vrot.slane %v2237, 5
        %v2240 = vor.u32 %v2236, %v2239
        %v2241 = vrot.slane %v2240, 4
        %v2243 = vshll.u32 %v2019, 16
        %v2245 = vrot.slane %v2243, 5
        %v2246 = vsel %vm382, %v2241, %v2245
        %v2247 = vshrl.u32 %v2019, 16
        %v2249 = vrot.slane %v2247, 4
        %v2250 = vor.u32 %v2249, %v2245
        %v2251 = vrot.slane %v2250, 4
        %v2253 = vshrl.u32 %v2020, 16
        %v2255 = vrot.slane %v2253, 4
        %v2256 = vshll.u32 %v2020, 16
        %v2258 = vrot.slane %v2256, 5
        %v2259 = vor.u32 %v2255, %v2258
        %v2260 = vrot.slane %v2259, 4
        %v2262 = vshll.u32 %v2021, 16
        %v2264 = vrot.slane %v2262, 5
        %v2265 = vsel %vm382, %v2260, %v2264
        %v2266 = vshrl.u32 %v2021, 16
        %v2268 = vrot.slane %v2266, 4
        %v2269 = vor.u32 %v2268, %v2264
        %v2270 = vrot.slane %v2269, 4
        %v2272 = vshrl.u32 %v2022, 16
        %v2274 = vrot.slane %v2272, 4
        %v2275 = vshll.u32 %v2022, 16
        %v2277 = vrot.slane %v2275, 5
        %v2278 = vor.u32 %v2274, %v2277
        %v2279 = vrot.slane %v2278, 4
        %v2281 = vshll.u32 %v2023, 16
        %v2283 = vrot.slane %v2281, 5
        %v2284 = vsel %vm382, %v2279, %v2283
        %v2285 = vshrl.u32 %v2023, 16
        %v2287 = vrot.slane %v2285, 4
        %v2288 = vor.u32 %v2287, %v2283
        %v2289 = vrot.slane %v2288, 4
        %2290 = vrot.lane.b32.xlu0 %v2037, 28
        %v2291 = vpop.permute.xlu0 %2290
        %2292 = vrot.lane.b32.xlu0 %v2042, 28
        %v2293 = vpop.permute.xlu0 %2292
        %2294 = vrot.lane.b32.xlu0 %v2056, 28
        %v2295 = vpop.permute.xlu0 %2294
        %2296 = vrot.lane.b32.xlu0 %v2061, 28
        %v2297 = vpop.permute.xlu0 %2296
        %2298 = vrot.lane.b32.xlu0 %v2075, 28
        %v2299 = vpop.permute.xlu0 %2298
        %2300 = vrot.lane.b32.xlu0 %v2080, 28
        %v2301 = vpop.permute.xlu0 %2300
        %2302 = vrot.lane.b32.xlu0 %v2094, 28
        %v2303 = vpop.permute.xlu0 %2302
        %2304 = vrot.lane.b32.xlu0 %v2099, 28
        %v2305 = vpop.permute.xlu0 %2304
        %2306 = vrot.lane.b32.xlu0 %v2113, 28
        %v2307 = vpop.permute.xlu0 %2306
        %2308 = vrot.lane.b32.xlu0 %v2118, 28
        %v2309 = vpop.permute.xlu0 %2308
        %2310 = vrot.lane.b32.xlu0 %v2132, 28
        %v2311 = vpop.permute.xlu0 %2310
        %2312 = vrot.lane.b32.xlu0 %v2137, 28
        %v2313 = vpop.permute.xlu0 %2312
        %2314 = vrot.lane.b32.xlu0 %v2151, 28
        %v2315 = vpop.permute.xlu0 %2314
        %2316 = vrot.lane.b32.xlu0 %v2156, 28
        %v2317 = vpop.permute.xlu0 %2316
        %2318 = vrot.lane.b32.xlu0 %v2170, 28
        %v2319 = vpop.permute.xlu0 %2318
        %2320 = vrot.lane.b32.xlu0 %v2175, 28
        %v2321 = vpop.permute.xlu0 %2320
        %2322 = vrot.lane.b32.xlu0 %v2189, 28
        %v2323 = vpop.permute.xlu0 %2322
        %2324 = vrot.lane.b32.xlu0 %v2194, 28
        %v2325 = vpop.permute.xlu0 %2324
        %2326 = vrot.lane.b32.xlu0 %v2208, 28
        %v2327 = vpop.permute.xlu0 %2326
        %2328 = vrot.lane.b32.xlu0 %v2213, 28
        %v2329 = vpop.permute.xlu0 %2328
        %2330 = vrot.lane.b32.xlu0 %v2227, 28
        %v2331 = vpop.permute.xlu0 %2330
        %2332 = vrot.lane.b32.xlu0 %v2232, 28
        %v2333 = vpop.permute.xlu0 %2332
        %2334 = vrot.lane.b32.xlu0 %v2246, 28
        %v2335 = vpop.permute.xlu0 %2334
        %2336 = vrot.lane.b32.xlu0 %v2251, 28
        %v2337 = vpop.permute.xlu0 %2336
        %2338 = vrot.lane.b32.xlu0 %v2265, 28
        %v2339 = vpop.permute.xlu0 %2338
        %2340 = vrot.lane.b32.xlu0 %v2270, 28
        %v2341 = vpop.permute.xlu0 %2340
        %2342 = vrot.lane.b32.xlu0 %v2284, 28
        %v2343 = vpop.permute.xlu0 %2342
        %2344 = vrot.lane.b32.xlu0 %v2289, 28
        %v2345 = vpop.permute.xlu0 %2344
        %vm2374 = vcmask 257248
        %2375 = vst.msk [vmem:[#allocation2] sm:$0xf] %vm2374, %v2291
        %vm2376 = vcmask 256224
        %2377 = vst.msk [vmem:[#allocation2 + $0x4] sm:$0x7] %vm2376, %v2293
        %2378 = vst.msk [vmem:[#allocation2 + $0x8] sm:$0xf] %vm2374, %v2295
        %2379 = vst.msk [vmem:[#allocation2 + $0xc] sm:$0x7] %vm2376, %v2297
        %2380 = vst.msk [vmem:[#allocation2 + $0x10] sm:$0xf] %vm2374, %v2299
        %2381 = vst.msk [vmem:[#allocation2 + $0x14] sm:$0x7] %vm2376, %v2301
        %2382 = vst.msk [vmem:[#allocation2 + $0x18] sm:$0xf] %vm2374, %v2303
        %2383 = vst.msk [vmem:[#allocation2 + $0x1c] sm:$0x7] %vm2376, %v2305
        %2384 = vst.msk [vmem:[#allocation2 + $0x20] sm:$0xf] %vm2374, %v2307
        %2385 = vst.msk [vmem:[#allocation2 + $0x24] sm:$0x7] %vm2376, %v2309
        %2386 = vst.msk [vmem:[#allocation2 + $0x28] sm:$0xf] %vm2374, %v2311
        %2387 = vst.msk [vmem:[#allocation2 + $0x2c] sm:$0x7] %vm2376, %v2313
        %2388 = vst.msk [vmem:[#allocation2 + $0x30] sm:$0xf] %vm2374, %v2315
        %2389 = vst.msk [vmem:[#allocation2 + $0x34] sm:$0x7] %vm2376, %v2317
        %2390 = vst.msk [vmem:[#allocation2 + $0x38] sm:$0xf] %vm2374, %v2319
        %2391 = vst.msk [vmem:[#allocation2 + $0x3c] sm:$0x7] %vm2376, %v2321
        %2392 = vst.msk [vmem:[#allocation2 + $0x40] sm:$0xf] %vm2374, %v2323
        %2393 = vst.msk [vmem:[#allocation2 + $0x44] sm:$0x7] %vm2376, %v2325
        %2394 = vst.msk [vmem:[#allocation2 + $0x48] sm:$0xf] %vm2374, %v2327
        %2395 = vst.msk [vmem:[#allocation2 + $0x4c] sm:$0x7] %vm2376, %v2329
        %2396 = vst.msk [vmem:[#allocation2 + $0x50] sm:$0xf] %vm2374, %v2331
        %2397 = vst.msk [vmem:[#allocation2 + $0x54] sm:$0x7] %vm2376, %v2333
        %2398 = vst.msk [vmem:[#allocation2 + $0x58] sm:$0xf] %vm2374, %v2335
        %2399 = vst.msk [vmem:[#allocation2 + $0x5c] sm:$0x7] %vm2376, %v2337
        %2400 = vst.msk [vmem:[#allocation2 + $0x60] sm:$0xf] %vm2374, %v2339
        %2401 = vst.msk [vmem:[#allocation2 + $0x64] sm:$0x7] %vm2376, %v2341
        %2402 = vst.msk [vmem:[#allocation2 + $0x68] sm:$0xf] %vm2374, %v2343
        %2403 = vst.msk [vmem:[#allocation2 + $0x6c] sm:$0x7] %vm2376, %v2345
        %v2404 = vld [vmem:[%s1825] sm:$0xe]
        %v2405 = vld [vmem:[%s1825 + $0x4] sm:$0xf]
        %v2406 = vld [vmem:[%s1825 + $0x8] sm:$0xe]
        %v2407 = vld [vmem:[%s1825 + $0xc] sm:$0xf]
        %v2408 = vld [vmem:[%s1825 + $0x10] sm:$0xe]
        %v2409 = vld [vmem:[%s1825 + $0x14] sm:$0xf]
        %v2410 = vld [vmem:[%s1825 + $0x18] sm:$0xe]
        %v2411 = vld [vmem:[%s1825 + $0x1c] sm:$0xf]
        %v2412 = vld [vmem:[%s1825 + $0x20] sm:$0xe]
        %v2413 = vld [vmem:[%s1825 + $0x24] sm:$0xf]
        %v2414 = vld [vmem:[%s1825 + $0x28] sm:$0xe]
        %v2415 = vld [vmem:[%s1825 + $0x2c] sm:$0xf]
        %v2416 = vld [vmem:[%s1825 + $0x30] sm:$0xe]
        %v2417 = vld [vmem:[%s1825 + $0x34] sm:$0xf]
        %v2418 = vld [vmem:[%s1825 + $0x38] sm:$0xe]
        %v2419 = vld [vmem:[%s1825 + $0x3c] sm:$0xf]
        %v2420 = vld [vmem:[%s1825 + $0x40] sm:$0xe]
        %v2421 = vld [vmem:[%s1825 + $0x44] sm:$0xf]
        %v2422 = vld [vmem:[%s1825 + $0x48] sm:$0xe]
        %v2423 = vld [vmem:[%s1825 + $0x4c] sm:$0xf]
        %v2424 = vld [vmem:[%s1825 + $0x50] sm:$0xe]
        %v2425 = vld [vmem:[%s1825 + $0x54] sm:$0xf]
        %v2426 = vld [vmem:[%s1825 + $0x58] sm:$0xe]
        %v2427 = vld [vmem:[%s1825 + $0x5c] sm:$0xf]
        %v2428 = vld [vmem:[%s1825 + $0x60] sm:$0xe]
        %v2429 = vld [vmem:[%s1825 + $0x64] sm:$0xf]
        %v2430 = vld [vmem:[%s1825 + $0x68] sm:$0xe]
        %v2431 = vld [vmem:[%s1825 + $0x6c] sm:$0xf]
        %v2460 = vrot.slane %v2404, 5
        %v2461 = vrot.slane %v2460, 4
        %v2462 = vrot.slane %v2405, 5
        %v2463 = vsel %vm821, %v2461, %v2462
        %v2464 = vrot.slane %v2462, 4
        %v2465 = vrot.slane %v2406, 5
        %v2466 = vrot.slane %v2465, 4
        %v2467 = vrot.slane %v2407, 5
        %v2468 = vsel %vm821, %v2466, %v2467
        %v2469 = vrot.slane %v2467, 4
        %v2470 = vrot.slane %v2408, 5
        %v2471 = vrot.slane %v2470, 4
        %v2472 = vrot.slane %v2409, 5
        %v2473 = vsel %vm821, %v2471, %v2472
        %v2474 = vrot.slane %v2472, 4
        %v2475 = vrot.slane %v2410, 5
        %v2476 = vrot.slane %v2475, 4
        %v2477 = vrot.slane %v2411, 5
        %v2478 = vsel %vm821, %v2476, %v2477
        %v2479 = vrot.slane %v2477, 4
        %v2480 = vrot.slane %v2412, 5
        %v2481 = vrot.slane %v2480, 4
        %v2482 = vrot.slane %v2413, 5
        %v2483 = vsel %vm821, %v2481, %v2482
        %v2484 = vrot.slane %v2482, 4
        %v2485 = vrot.slane %v2414, 5
        %v2486 = vrot.slane %v2485, 4
        %v2487 = vrot.slane %v2415, 5
        %v2488 = vsel %vm821, %v2486, %v2487
        %v2489 = vrot.slane %v2487, 4
        %v2490 = vrot.slane %v2416, 5
        %v2491 = vrot.slane %v2490, 4
        %v2492 = vrot.slane %v2417, 5
        %v2493 = vsel %vm821, %v2491, %v2492
        %v2494 = vrot.slane %v2492, 4
        %v2495 = vrot.slane %v2418, 5
        %v2496 = vrot.slane %v2495, 4
        %v2497 = vrot.slane %v2419, 5
        %v2498 = vsel %vm821, %v2496, %v2497
        %v2499 = vrot.slane %v2497, 4
        %v2500 = vrot.slane %v2420, 5
        %v2501 = vrot.slane %v2500, 4
        %v2502 = vrot.slane %v2421, 5
        %v2503 = vsel %vm821, %v2501, %v2502
        %v2504 = vrot.slane %v2502, 4
        %v2505 = vrot.slane %v2422, 5
        %v2506 = vrot.slane %v2505, 4
        %v2507 = vrot.slane %v2423, 5
        %v2508 = vsel %vm821, %v2506, %v2507
        %v2509 = vrot.slane %v2507, 4
        %v2510 = vrot.slane %v2424, 5
        %v2511 = vrot.slane %v2510, 4
        %v2512 = vrot.slane %v2425, 5
        %v2513 = vsel %vm821, %v2511, %v2512
        %v2514 = vrot.slane %v2512, 4
        %v2515 = vrot.slane %v2426, 5
        %v2516 = vrot.slane %v2515, 4
        %v2517 = vrot.slane %v2427, 5
        %v2518 = vsel %vm821, %v2516, %v2517
        %v2519 = vrot.slane %v2517, 4
        %v2520 = vrot.slane %v2428, 5
        %v2521 = vrot.slane %v2520, 4
        %v2522 = vrot.slane %v2429, 5
        %v2523 = vsel %vm821, %v2521, %v2522
        %v2524 = vrot.slane %v2522, 4
        %v2525 = vrot.slane %v2430, 5
        %v2526 = vrot.slane %v2525, 4
        %v2527 = vrot.slane %v2431, 5
        %v2528 = vsel %vm821, %v2526, %v2527
        %v2529 = vrot.slane %v2527, 4
        %2530 = vrot.lane.b32.xlu0 %v2463, 32
        %v2531 = vpop.permute.xlu0 %2530
        %2532 = vrot.lane.b32.xlu0 %v2464, 32
        %v2533 = vpop.permute.xlu0 %2532
        %2534 = vrot.lane.b32.xlu0 %v2468, 32
        %v2535 = vpop.permute.xlu0 %2534
        %2536 = vrot.lane.b32.xlu0 %v2469, 32
        %v2537 = vpop.permute.xlu0 %2536
        %2538 = vrot.lane.b32.xlu0 %v2473, 32
        %v2539 = vpop.permute.xlu0 %2538
        %2540 = vrot.lane.b32.xlu0 %v2474, 32
        %v2541 = vpop.permute.xlu0 %2540
        %2542 = vrot.lane.b32.xlu0 %v2478, 32
        %v2543 = vpop.permute.xlu0 %2542
        %2544 = vrot.lane.b32.xlu0 %v2479, 32
        %v2545 = vpop.permute.xlu0 %2544
        %2546 = vrot.lane.b32.xlu0 %v2483, 32
        %v2547 = vpop.permute.xlu0 %2546
        %2548 = vrot.lane.b32.xlu0 %v2484, 32
        %v2549 = vpop.permute.xlu0 %2548
        %2550 = vrot.lane.b32.xlu0 %v2488, 32
        %v2551 = vpop.permute.xlu0 %2550
        %2552 = vrot.lane.b32.xlu0 %v2489, 32
        %v2553 = vpop.permute.xlu0 %2552
        %2554 = vrot.lane.b32.xlu0 %v2493, 32
        %v2555 = vpop.permute.xlu0 %2554
        %2556 = vrot.lane.b32.xlu0 %v2494, 32
        %v2557 = vpop.permute.xlu0 %2556
        %2558 = vrot.lane.b32.xlu0 %v2498, 32
        %v2559 = vpop.permute.xlu0 %2558
        %2560 = vrot.lane.b32.xlu0 %v2499, 32
        %v2561 = vpop.permute.xlu0 %2560
        %2562 = vrot.lane.b32.xlu0 %v2503, 32
        %v2563 = vpop.permute.xlu0 %2562
        %2564 = vrot.lane.b32.xlu0 %v2504, 32
        %v2565 = vpop.permute.xlu0 %2564
        %2566 = vrot.lane.b32.xlu0 %v2508, 32
        %v2567 = vpop.permute.xlu0 %2566
        %2568 = vrot.lane.b32.xlu0 %v2509, 32
        %v2569 = vpop.permute.xlu0 %2568
        %2570 = vrot.lane.b32.xlu0 %v2513, 32
        %v2571 = vpop.permute.xlu0 %2570
        %2572 = vrot.lane.b32.xlu0 %v2514, 32
        %v2573 = vpop.permute.xlu0 %2572
        %2574 = vrot.lane.b32.xlu0 %v2518, 32
        %v2575 = vpop.permute.xlu0 %2574
        %2576 = vrot.lane.b32.xlu0 %v2519, 32
        %v2577 = vpop.permute.xlu0 %2576
        %2578 = vrot.lane.b32.xlu0 %v2523, 32
        %v2579 = vpop.permute.xlu0 %2578
        %2580 = vrot.lane.b32.xlu0 %v2524, 32
        %v2581 = vpop.permute.xlu0 %2580
        %2582 = vrot.lane.b32.xlu0 %v2528, 32
        %v2583 = vpop.permute.xlu0 %2582
        %2584 = vrot.lane.b32.xlu0 %v2529, 32
        %v2585 = vpop.permute.xlu0 %2584
        %vm2614 = vcmask 290048
        %2615 = vst.msk [vmem:[#allocation2] sm:$0xf] %vm2614, %v2531
        %vm2616 = vcmask 289024
        %2617 = vst.msk [vmem:[#allocation2 + $0x4] sm:$0x7] %vm2616, %v2533
        %2618 = vst.msk [vmem:[#allocation2 + $0x8] sm:$0xf] %vm2614, %v2535
        %2619 = vst.msk [vmem:[#allocation2 + $0xc] sm:$0x7] %vm2616, %v2537
        %2620 = vst.msk [vmem:[#allocation2 + $0x10] sm:$0xf] %vm2614, %v2539
        %2621 = vst.msk [vmem:[#allocation2 + $0x14] sm:$0x7] %vm2616, %v2541
        %2622 = vst.msk [vmem:[#allocation2 + $0x18] sm:$0xf] %vm2614, %v2543
        %2623 = vst.msk [vmem:[#allocation2 + $0x1c] sm:$0x7] %vm2616, %v2545
        %2624 = vst.msk [vmem:[#allocation2 + $0x20] sm:$0xf] %vm2614, %v2547
        %2625 = vst.msk [vmem:[#allocation2 + $0x24] sm:$0x7] %vm2616, %v2549
        %2626 = vst.msk [vmem:[#allocation2 + $0x28] sm:$0xf] %vm2614, %v2551
        %2627 = vst.msk [vmem:[#allocation2 + $0x2c] sm:$0x7] %vm2616, %v2553
        %2628 = vst.msk [vmem:[#allocation2 + $0x30] sm:$0xf] %vm2614, %v2555
        %2629 = vst.msk [vmem:[#allocation2 + $0x34] sm:$0x7] %vm2616, %v2557
        %2630 = vst.msk [vmem:[#allocation2 + $0x38] sm:$0xf] %vm2614, %v2559
        %2631 = vst.msk [vmem:[#allocation2 + $0x3c] sm:$0x7] %vm2616, %v2561
        %2632 = vst.msk [vmem:[#allocation2 + $0x40] sm:$0xf] %vm2614, %v2563
        %2633 = vst.msk [vmem:[#allocation2 + $0x44] sm:$0x7] %vm2616, %v2565
        %2634 = vst.msk [vmem:[#allocation2 + $0x48] sm:$0xf] %vm2614, %v2567
        %2635 = vst.msk [vmem:[#allocation2 + $0x4c] sm:$0x7] %vm2616, %v2569
        %2636 = vst.msk [vmem:[#allocation2 + $0x50] sm:$0xf] %vm2614, %v2571
        %2637 = vst.msk [vmem:[#allocation2 + $0x54] sm:$0x7] %vm2616, %v2573
        %2638 = vst.msk [vmem:[#allocation2 + $0x58] sm:$0xf] %vm2614, %v2575
        %2639 = vst.msk [vmem:[#allocation2 + $0x5c] sm:$0x7] %vm2616, %v2577
        %2640 = vst.msk [vmem:[#allocation2 + $0x60] sm:$0xf] %vm2614, %v2579
        %2641 = vst.msk [vmem:[#allocation2 + $0x64] sm:$0x7] %vm2616, %v2581
        %2642 = vst.msk [vmem:[#allocation2 + $0x68] sm:$0xf] %vm2614, %v2583
        %2643 = vst.msk [vmem:[#allocation2 + $0x6c] sm:$0x7] %vm2616, %v2585
        %v2644 = vld [vmem:[#allocation2] sm:$0xf]
        %v2645 = vld [vmem:[#allocation2 + $0x4] sm:$0x7]
        %v2646 = vld [vmem:[#allocation2 + $0x8] sm:$0xf]
        %v2647 = vld [vmem:[#allocation2 + $0xc] sm:$0x7]
        %v2648 = vld [vmem:[#allocation2 + $0x10] sm:$0xf]
        %v2649 = vld [vmem:[#allocation2 + $0x14] sm:$0x7]
        %v2650 = vld [vmem:[#allocation2 + $0x18] sm:$0xf]
        %v2651 = vld [vmem:[#allocation2 + $0x1c] sm:$0x7]
        %v2652 = vld [vmem:[#allocation2 + $0x20] sm:$0xf]
        %v2653 = vld [vmem:[#allocation2 + $0x24] sm:$0x7]
        %v2654 = vld [vmem:[#allocation2 + $0x28] sm:$0xf]
        %v2655 = vld [vmem:[#allocation2 + $0x2c] sm:$0x7]
        %v2656 = vld [vmem:[#allocation2 + $0x30] sm:$0xf]
        %v2657 = vld [vmem:[#allocation2 + $0x34] sm:$0x7]
        %v2658 = vld [vmem:[#allocation2 + $0x38] sm:$0xf]
        %v2659 = vld [vmem:[#allocation2 + $0x3c] sm:$0x7]
        %v2660 = vld [vmem:[#allocation2 + $0x40] sm:$0xf]
        %v2661 = vld [vmem:[#allocation2 + $0x44] sm:$0x7]
        %v2662 = vld [vmem:[#allocation2 + $0x48] sm:$0xf]
        %v2663 = vld [vmem:[#allocation2 + $0x4c] sm:$0x7]
        %v2664 = vld [vmem:[#allocation2 + $0x50] sm:$0xf]
        %v2665 = vld [vmem:[#allocation2 + $0x54] sm:$0x7]
        %v2666 = vld [vmem:[#allocation2 + $0x58] sm:$0xf]
        %v2667 = vld [vmem:[#allocation2 + $0x5c] sm:$0x7]
        %v2668 = vld [vmem:[#allocation2 + $0x60] sm:$0xf]
        %v2669 = vld [vmem:[#allocation2 + $0x64] sm:$0x7]
        %v2670 = vld [vmem:[#allocation2 + $0x68] sm:$0xf]
        %v2671 = vld [vmem:[#allocation2 + $0x6c] sm:$0x7]
        %v2700 = vrot.slane %v2644, 3
        %v2701 = vrot.slane %v2645, 3
        %v2702 = vrot.slane %v2646, 3
        %v2703 = vrot.slane %v2647, 3
        %v2704 = vrot.slane %v2648, 3
        %v2705 = vrot.slane %v2649, 3
        %v2706 = vrot.slane %v2650, 3
        %v2707 = vrot.slane %v2651, 3
        %v2708 = vrot.slane %v2652, 3
        %v2709 = vrot.slane %v2653, 3
        %v2710 = vrot.slane %v2654, 3
        %v2711 = vrot.slane %v2655, 3
        %v2712 = vrot.slane %v2656, 3
        %v2713 = vrot.slane %v2657, 3
        %v2714 = vrot.slane %v2658, 3
        %v2715 = vrot.slane %v2659, 3
        %v2716 = vrot.slane %v2660, 3
        %v2717 = vrot.slane %v2661, 3
        %v2718 = vrot.slane %v2662, 3
        %v2719 = vrot.slane %v2663, 3
        %v2720 = vrot.slane %v2664, 3
        %v2721 = vrot.slane %v2665, 3
        %v2722 = vrot.slane %v2666, 3
        %v2723 = vrot.slane %v2667, 3
        %v2724 = vrot.slane %v2668, 3
        %v2725 = vrot.slane %v2669, 3
        %v2726 = vrot.slane %v2670, 3
        %v2727 = vrot.slane %v2671, 3
        %vm2728 = vcmask 1040384
        %v2731 = vsel %vm2728, %v2644, %v2700
        %vm2732 = vcmask 1041409
        %v2733 = vsel %vm2732, %v2644, %v2700
        %v2735 = vrot.slane %v2733, 1
        %vm2736 = vcmask 1042434
        %v2737 = vsel %vm2736, %v2644, %v2700
        %v2739 = vrot.slane %v2737, 2
        %vm2740 = vcmask 1043459
        %v2741 = vsel %vm2740, %v2644, %v2700
        %v2743 = vrot.slane %v2741, 3
        %v2746 = vsel %vm2728, %v2645, %v2701
        %v2747 = vsel %vm2732, %v2645, %v2701
        %v2749 = vrot.slane %v2747, 1
        %v2750 = vsel %vm2736, %v2645, %v2701
        %v2752 = vrot.slane %v2750, 2
        %v2755 = vsel %vm2728, %v2646, %v2702
        %v2756 = vsel %vm2732, %v2646, %v2702
        %v2758 = vrot.slane %v2756, 1
        %v2759 = vsel %vm2736, %v2646, %v2702
        %v2761 = vrot.slane %v2759, 2
        %v2762 = vsel %vm2740, %v2646, %v2702
        %v2764 = vrot.slane %v2762, 3
        %v2767 = vsel %vm2728, %v2647, %v2703
        %v2768 = vsel %vm2732, %v2647, %v2703
        %v2770 = vrot.slane %v2768, 1
        %v2771 = vsel %vm2736, %v2647, %v2703
        %v2773 = vrot.slane %v2771, 2
        %v2776 = vsel %vm2728, %v2648, %v2704
        %v2777 = vsel %vm2732, %v2648, %v2704
        %v2779 = vrot.slane %v2777, 1
        %v2780 = vsel %vm2736, %v2648, %v2704
        %v2782 = vrot.slane %v2780, 2
        %v2783 = vsel %vm2740, %v2648, %v2704
        %v2785 = vrot.slane %v2783, 3
        %v2788 = vsel %vm2728, %v2649, %v2705
        %v2789 = vsel %vm2732, %v2649, %v2705
        %v2791 = vrot.slane %v2789, 1
        %v2792 = vsel %vm2736, %v2649, %v2705
        %v2794 = vrot.slane %v2792, 2
        %v2797 = vsel %vm2728, %v2650, %v2706
        %v2798 = vsel %vm2732, %v2650, %v2706
        %v2800 = vrot.slane %v2798, 1
        %v2801 = vsel %vm2736, %v2650, %v2706
        %v2803 = vrot.slane %v2801, 2
        %v2804 = vsel %vm2740, %v2650, %v2706
        %v2806 = vrot.slane %v2804, 3
        %v2809 = vsel %vm2728, %v2651, %v2707
        %v2810 = vsel %vm2732, %v2651, %v2707
        %v2812 = vrot.slane %v2810, 1
        %v2813 = vsel %vm2736, %v2651, %v2707
        %v2815 = vrot.slane %v2813, 2
        %v2818 = vsel %vm2728, %v2652, %v2708
        %v2819 = vsel %vm2732, %v2652, %v2708
        %v2821 = vrot.slane %v2819, 1
        %v2822 = vsel %vm2736, %v2652, %v2708
        %v2824 = vrot.slane %v2822, 2
        %v2825 = vsel %vm2740, %v2652, %v2708
        %v2827 = vrot.slane %v2825, 3
        %v2830 = vsel %vm2728, %v2653, %v2709
        %v2831 = vsel %vm2732, %v2653, %v2709
        %v2833 = vrot.slane %v2831, 1
        %v2834 = vsel %vm2736, %v2653, %v2709
        %v2836 = vrot.slane %v2834, 2
        %v2839 = vsel %vm2728, %v2654, %v2710
        %v2840 = vsel %vm2732, %v2654, %v2710
        %v2842 = vrot.slane %v2840, 1
        %v2843 = vsel %vm2736, %v2654, %v2710
        %v2845 = vrot.slane %v2843, 2
        %v2846 = vsel %vm2740, %v2654, %v2710
        %v2848 = vrot.slane %v2846, 3
        %v2851 = vsel %vm2728, %v2655, %v2711
        %v2852 = vsel %vm2732, %v2655, %v2711
        %v2854 = vrot.slane %v2852, 1
        %v2855 = vsel %vm2736, %v2655, %v2711
        %v2857 = vrot.slane %v2855, 2
        %v2860 = vsel %vm2728, %v2656, %v2712
        %v2861 = vsel %vm2732, %v2656, %v2712
        %v2863 = vrot.slane %v2861, 1
        %v2864 = vsel %vm2736, %v2656, %v2712
        %v2866 = vrot.slane %v2864, 2
        %v2867 = vsel %vm2740, %v2656, %v2712
        %v2869 = vrot.slane %v2867, 3
        %v2872 = vsel %vm2728, %v2657, %v2713
        %v2873 = vsel %vm2732, %v2657, %v2713
        %v2875 = vrot.slane %v2873, 1
        %v2876 = vsel %vm2736, %v2657, %v2713
        %v2878 = vrot.slane %v2876, 2
        %v2881 = vsel %vm2728, %v2658, %v2714
        %v2882 = vsel %vm2732, %v2658, %v2714
        %v2884 = vrot.slane %v2882, 1
        %v2885 = vsel %vm2736, %v2658, %v2714
        %v2887 = vrot.slane %v2885, 2
        %v2888 = vsel %vm2740, %v2658, %v2714
        %v2890 = vrot.slane %v2888, 3
        %v2893 = vsel %vm2728, %v2659, %v2715
        %v2894 = vsel %vm2732, %v2659, %v2715
        %v2896 = vrot.slane %v2894, 1
        %v2897 = vsel %vm2736, %v2659, %v2715
        %v2899 = vrot.slane %v2897, 2
        %v2902 = vsel %vm2728, %v2660, %v2716
        %v2903 = vsel %vm2732, %v2660, %v2716
        %v2905 = vrot.slane %v2903, 1
        %v2906 = vsel %vm2736, %v2660, %v2716
        %v2908 = vrot.slane %v2906, 2
        %v2909 = vsel %vm2740, %v2660, %v2716
        %v2911 = vrot.slane %v2909, 3
        %v2914 = vsel %vm2728, %v2661, %v2717
        %v2915 = vsel %vm2732, %v2661, %v2717
        %v2917 = vrot.slane %v2915, 1
        %v2918 = vsel %vm2736, %v2661, %v2717
        %v2920 = vrot.slane %v2918, 2
        %v2923 = vsel %vm2728, %v2662, %v2718
        %v2924 = vsel %vm2732, %v2662, %v2718
        %v2926 = vrot.slane %v2924, 1
        %v2927 = vsel %vm2736, %v2662, %v2718
        %v2929 = vrot.slane %v2927, 2
        %v2930 = vsel %vm2740, %v2662, %v2718
        %v2932 = vrot.slane %v2930, 3
        %v2935 = vsel %vm2728, %v2663, %v2719
        %v2936 = vsel %vm2732, %v2663, %v2719
        %v2938 = vrot.slane %v2936, 1
        %v2939 = vsel %vm2736, %v2663, %v2719
        %v2941 = vrot.slane %v2939, 2
        %v2944 = vsel %vm2728, %v2664, %v2720
        %v2945 = vsel %vm2732, %v2664, %v2720
        %v2947 = vrot.slane %v2945, 1
        %v2948 = vsel %vm2736, %v2664, %v2720
        %v2950 = vrot.slane %v2948, 2
        %v2951 = vsel %vm2740, %v2664, %v2720
        %v2953 = vrot.slane %v2951, 3
        %v2956 = vsel %vm2728, %v2665, %v2721
        %v2957 = vsel %vm2732, %v2665, %v2721
        %v2959 = vrot.slane %v2957, 1
        %v2960 = vsel %vm2736, %v2665, %v2721
        %v2962 = vrot.slane %v2960, 2
        %v2965 = vsel %vm2728, %v2666, %v2722
        %v2966 = vsel %vm2732, %v2666, %v2722
        %v2968 = vrot.slane %v2966, 1
        %v2969 = vsel %vm2736, %v2666, %v2722
        %v2971 = vrot.slane %v2969, 2
        %v2972 = vsel %vm2740, %v2666, %v2722
        %v2974 = vrot.slane %v2972, 3
        %v2977 = vsel %vm2728, %v2667, %v2723
        %v2978 = vsel %vm2732, %v2667, %v2723
        %v2980 = vrot.slane %v2978, 1
        %v2981 = vsel %vm2736, %v2667, %v2723
        %v2983 = vrot.slane %v2981, 2
        %v2986 = vsel %vm2728, %v2668, %v2724
        %v2987 = vsel %vm2732, %v2668, %v2724
        %v2989 = vrot.slane %v2987, 1
        %v2990 = vsel %vm2736, %v2668, %v2724
        %v2992 = vrot.slane %v2990, 2
        %v2993 = vsel %vm2740, %v2668, %v2724
        %v2995 = vrot.slane %v2993, 3
        %v2998 = vsel %vm2728, %v2669, %v2725
        %v2999 = vsel %vm2732, %v2669, %v2725
        %v3001 = vrot.slane %v2999, 1
        %v3002 = vsel %vm2736, %v2669, %v2725
        %v3004 = vrot.slane %v3002, 2
        %v3007 = vsel %vm2728, %v2670, %v2726
        %v3008 = vsel %vm2732, %v2670, %v2726
        %v3010 = vrot.slane %v3008, 1
        %v3011 = vsel %vm2736, %v2670, %v2726
        %v3013 = vrot.slane %v3011, 2
        %v3014 = vsel %vm2740, %v2670, %v2726
        %v3016 = vrot.slane %v3014, 3
        %v3019 = vsel %vm2728, %v2671, %v2727
        %v3020 = vsel %vm2732, %v2671, %v2727
        %v3022 = vrot.slane %v3020, 1
        %v3023 = vsel %vm2736, %v2671, %v2727
        %v3025 = vrot.slane %v3023, 2
        %v3026 = vld [vmem:[%s1] sm:$0xf]
        %v3027 = vld [vmem:[%s1 + $0x4] sm:$0xf]
        %v3028 = vld [vmem:[%s1 + $0x8] sm:$0xf]
        %v3029 = vld [vmem:[%s1 + $0xc] sm:$0xf]
        %v3030 = vld [vmem:[%s1 + $0x10] sm:$0x3]
        %v3031 = vld [vmem:[%s2] sm:$0x1]
        %v3033 = vperm.slane %v3031, 0
        %3035 = vst [vmem:[#allocation1] ss:$9 sm:$0xff] %v2731
        %s3037 = scalar_lea.vmem [#allocation1], 1
        %3038 = vst [vmem:[%s3037] ss:$9 sm:$0xff] %v2735
        %s3040 = scalar_lea.vmem [#allocation1], 2
        %3041 = vst [vmem:[%s3040] ss:$9 sm:$0xff] %v2739
        %s3043 = scalar_lea.vmem [#allocation1], 3
        %3044 = vst [vmem:[%s3043] ss:$9 sm:$0xff] %v2743
        %s3045 = scalar_lea.vmem [#allocation1], 4
        %3046 = vst [vmem:[%s3045] ss:$9 sm:$0xff] %v2746
        %s3048 = scalar_lea.vmem [#allocation1], 5
        %3049 = vst [vmem:[%s3048] ss:$9 sm:$0xff] %v2749
        %s3051 = scalar_lea.vmem [#allocation1], 6
        %3052 = vst [vmem:[%s3051] ss:$9 sm:$0xff] %v2752
        %s3053 = scalar_lea.vmem [#allocation1], 7
        %3054 = vst [vmem:[%s3053] ss:$9 sm:$0xff] %v2755
        %v3055 = vld [vmem:[#allocation1] sm:$0xff]
        %3057 = vst [vmem:[#allocation1] ss:$9 sm:$0xff] %v2758
        %3059 = vst [vmem:[%s3037] ss:$9 sm:$0xff] %v2761
        %3061 = vst [vmem:[%s3040] ss:$9 sm:$0xff] %v2764
        %3062 = vst [vmem:[%s3043] ss:$9 sm:$0xff] %v2767
        %3064 = vst [vmem:[%s3045] ss:$9 sm:$0xff] %v2770
        %3066 = vst [vmem:[%s3048] ss:$9 sm:$0xff] %v2773
        %3067 = vst [vmem:[%s3051] ss:$9 sm:$0xff] %v2776
        %3069 = vst [vmem:[%s3053] ss:$9 sm:$0xff] %v2779
        %v3070 = vld [vmem:[#allocation1] sm:$0xff]
        %3072 = vst [vmem:[#allocation1] ss:$9 sm:$0xff] %v2782
        %3074 = vst [vmem:[%s3037] ss:$9 sm:$0xff] %v2785
        %3075 = vst [vmem:[%s3040] ss:$9 sm:$0xff] %v2788
        %3077 = vst [vmem:[%s3043] ss:$9 sm:$0xff] %v2791
        %3079 = vst [vmem:[%s3045] ss:$9 sm:$0xff] %v2794
        %3080 = vst [vmem:[%s3048] ss:$9 sm:$0xff] %v2797
        %3082 = vst [vmem:[%s3051] ss:$9 sm:$0xff] %v2800
        %3084 = vst [vmem:[%s3053] ss:$9 sm:$0xff] %v2803
        %v3085 = vld [vmem:[#allocation1] sm:$0xff]
        %3087 = vst [vmem:[#allocation1] ss:$9 sm:$0xff] %v2806
        %3088 = vst [vmem:[%s3037] ss:$9 sm:$0xff] %v2809
        %3090 = vst [vmem:[%s3040] ss:$9 sm:$0xff] %v2812
        %3092 = vst [vmem:[%s3043] ss:$9 sm:$0xff] %v2815
        %3093 = vst [vmem:[%s3045] ss:$9 sm:$0xff] %v2818
        %3095 = vst [vmem:[%s3048] ss:$9 sm:$0xff] %v2821
        %3097 = vst [vmem:[%s3051] ss:$9 sm:$0xff] %v2824
        %3099 = vst [vmem:[%s3053] ss:$9 sm:$0xff] %v2827
        %v3100 = vld [vmem:[#allocation1] sm:$0xff]
        %3101 = vst [vmem:[#allocation1] ss:$9 sm:$0xff] %v2830
        %3103 = vst [vmem:[%s3037] ss:$9 sm:$0xff] %v2833
        %3105 = vst [vmem:[%s3040] ss:$9 sm:$0xff] %v2836
        %3106 = vst [vmem:[%s3043] ss:$9 sm:$0xff] %v2839
        %3108 = vst [vmem:[%s3045] ss:$9 sm:$0xff] %v2842
        %3110 = vst [vmem:[%s3048] ss:$9 sm:$0xff] %v2845
        %3112 = vst [vmem:[%s3051] ss:$9 sm:$0xff] %v2848
        %3113 = vst [vmem:[%s3053] ss:$9 sm:$0xff] %v2851
        %v3114 = vld [vmem:[#allocation1] sm:$0xff]
        %3116 = vst [vmem:[#allocation1] ss:$9 sm:$0xff] %v2854
        %3118 = vst [vmem:[%s3037] ss:$9 sm:$0xff] %v2857
        %3119 = vst [vmem:[%s3040] ss:$9 sm:$0xff] %v2860
        %3121 = vst [vmem:[%s3043] ss:$9 sm:$0xff] %v2863
        %3123 = vst [vmem:[%s3045] ss:$9 sm:$0xff] %v2866
        %3125 = vst [vmem:[%s3048] ss:$9 sm:$0xff] %v2869
        %3126 = vst [vmem:[%s3051] ss:$9 sm:$0xff] %v2872
        %3128 = vst [vmem:[%s3053] ss:$9 sm:$0xff] %v2875
        %v3129 = vld [vmem:[#allocation1] sm:$0xff]
        %3131 = vst [vmem:[#allocation1] ss:$9 sm:$0xff] %v2878
        %3132 = vst [vmem:[%s3037] ss:$9 sm:$0xff] %v2881
        %3134 = vst [vmem:[%s3040] ss:$9 sm:$0xff] %v2884
        %3136 = vst [vmem:[%s3043] ss:$9 sm:$0xff] %v2887
        %3138 = vst [vmem:[%s3045] ss:$9 sm:$0xff] %v2890
        %3139 = vst [vmem:[%s3048] ss:$9 sm:$0xff] %v2893
        %3141 = vst [vmem:[%s3051] ss:$9 sm:$0xff] %v2896
        %3143 = vst [vmem:[%s3053] ss:$9 sm:$0xff] %v2899
        %v3144 = vld [vmem:[#allocation1] sm:$0xff]
        %3145 = vst [vmem:[#allocation1] ss:$9 sm:$0xff] %v2902
        %3147 = vst [vmem:[%s3037] ss:$9 sm:$0xff] %v2905
        %3149 = vst [vmem:[%s3040] ss:$9 sm:$0xff] %v2908
        %3151 = vst [vmem:[%s3043] ss:$9 sm:$0xff] %v2911
        %3152 = vst [vmem:[%s3045] ss:$9 sm:$0xff] %v2914
        %3154 = vst [vmem:[%s3048] ss:$9 sm:$0xff] %v2917
        %3156 = vst [vmem:[%s3051] ss:$9 sm:$0xff] %v2920
        %3157 = vst [vmem:[%s3053] ss:$9 sm:$0xff] %v2923
        %v3158 = vld [vmem:[#allocation1] sm:$0xff]
        %3160 = vst [vmem:[#allocation1] ss:$9 sm:$0xff] %v2926
        %3162 = vst [vmem:[%s3037] ss:$9 sm:$0xff] %v2929
        %3164 = vst [vmem:[%s3040] ss:$9 sm:$0xff] %v2932
        %3165 = vst [vmem:[%s3043] ss:$9 sm:$0xff] %v2935
        %3167 = vst [vmem:[%s3045] ss:$9 sm:$0xff] %v2938
        %3169 = vst [vmem:[%s3048] ss:$9 sm:$0xff] %v2941
        %3170 = vst [vmem:[%s3051] ss:$9 sm:$0xff] %v2944
        %3172 = vst [vmem:[%s3053] ss:$9 sm:$0xff] %v2947
        %v3173 = vld [vmem:[#allocation1] sm:$0xff]
        %3175 = vst [vmem:[#allocation1] ss:$9 sm:$0xff] %v2950
        %3177 = vst [vmem:[%s3037] ss:$9 sm:$0xff] %v2953
        %3178 = vst [vmem:[%s3040] ss:$9 sm:$0xff] %v2956
        %3180 = vst [vmem:[%s3043] ss:$9 sm:$0xff] %v2959
        %3182 = vst [vmem:[%s3045] ss:$9 sm:$0xff] %v2962
        %3183 = vst [vmem:[%s3048] ss:$9 sm:$0xff] %v2965
        %3185 = vst [vmem:[%s3051] ss:$9 sm:$0xff] %v2968
        %3187 = vst [vmem:[%s3053] ss:$9 sm:$0xff] %v2971
        %v3188 = vld [vmem:[#allocation1] sm:$0xff]
        %3190 = vst [vmem:[#allocation1] ss:$9 sm:$0xff] %v2974
        %3191 = vst [vmem:[%s3037] ss:$9 sm:$0xff] %v2977
        %3193 = vst [vmem:[%s3040] ss:$9 sm:$0xff] %v2980
        %3195 = vst [vmem:[%s3043] ss:$9 sm:$0xff] %v2983
        %3196 = vst [vmem:[%s3045] ss:$9 sm:$0xff] %v2986
        %3198 = vst [vmem:[%s3048] ss:$9 sm:$0xff] %v2989
        %3200 = vst [vmem:[%s3051] ss:$9 sm:$0xff] %v2992
        %3202 = vst [vmem:[%s3053] ss:$9 sm:$0xff] %v2995
        %v3203 = vld [vmem:[#allocation1] sm:$0xff]
        %3204 = vst [vmem:[#allocation1] ss:$9 sm:$0xff] %v2998
        %3206 = vst [vmem:[%s3037] ss:$9 sm:$0xff] %v3001
        %3208 = vst [vmem:[%s3040] ss:$9 sm:$0xff] %v3004
        %3209 = vst [vmem:[%s3043] ss:$9 sm:$0xff] %v3007
        %3211 = vst [vmem:[%s3045] ss:$9 sm:$0xff] %v3010
        %3213 = vst [vmem:[%s3048] ss:$9 sm:$0xff] %v3013
        %3215 = vst [vmem:[%s3051] ss:$9 sm:$0xff] %v3016
        %3216 = vst [vmem:[%s3053] ss:$9 sm:$0xff] %v3019
        %v3217 = vld [vmem:[#allocation1] sm:$0xff]
        %3219 = vst [vmem:[#allocation1] ss:$9 sm:$0xff] %v3022
        %3221 = vst [vmem:[%s3037] ss:$9 sm:$0xff] %v3025
        %v3222 = vld [vmem:[#allocation1] sm:$0xff]
        %v3228 = vunpack.c.l.b16 %v3026
        %v3229 = vunpack.c.l.b16 %v3027
        %v3230 = vunpack.c.l.b16 %v3028
        %v3231 = vunpack.c.l.b16 %v3029
        %v3232 = vunpack.c.l.b16 %v3030
        %v3233 = vpack.c.b16 %v3229, %v3228
        %v3234 = vpack.c.b16 %v3231, %v3230
        %v3235 = vpack.c.b16 %v3232, %v3232
        %vm3238 = vcmask 293888
        %v3239 = vsel %vm3238, %v3055, 0
        %v3241 = vsel %vm3238, %v3070, 0
        %v3243 = vsel %vm3238, %v3085, 0
        %v3245 = vsel %vm3238, %v3100, 0
        %v3247 = vsel %vm3238, %v3114, 0
        %v3249 = vsel %vm3238, %v3129, 0
        %v3251 = vsel %vm3238, %v3144, 0
        %v3253 = vsel %vm3238, %v3158, 0
        %v3255 = vsel %vm3238, %v3173, 0
        %v3257 = vsel %vm3238, %v3188, 0
        %v3259 = vsel %vm3238, %v3203, 0
        %v3261 = vsel %vm3238, %v3217, 0
        %v3263 = vsel %vm3238, %v3222, 0
        %vm3265 = vcmask 1041408
        %v3267 = vsel %vm3265, %v3235, 0
        %3269 = vmatpush.bf16.msra.mxu0 0
        %3270 = vmatpush.bf16.msra.mxu0 0
        %3271 = vmatpush.bf16.msra.mxu0 0
        %3272 = vmatpush.bf16.msra.mxu0 0
        %3273 = vmatpush.bf16.msra.mxu0 0
        %3274 = vmatpush.bf16.msra.mxu0 %v3267
        %3275 = vmatpush.bf16.msra.mxu0 %v3234
        %3276 = vmatpush.bf16.msra.mxu0 %v3233
        %3277 = vmatmul.bf16.gmra.mxu0 %v3239
        %v3278 = vpop.f32.mrf.mxu0
        %v3279 = vadd.f32 %v3033, %v3278
        %v3280 = vpop.f32.mrf.mxu0
        %v3281 = vadd.f32 %v3033, %v3280
        %3282 = vmatmul.bf16.gmra.mxu0 %v3241
        %v3283 = vpop.f32.mrf.mxu0
        %v3284 = vadd.f32 %v3033, %v3283
        %v3285 = vpop.f32.mrf.mxu0
        %v3286 = vadd.f32 %v3033, %v3285
        %3287 = vmatmul.bf16.gmra.mxu0 %v3243
        %v3288 = vpop.f32.mrf.mxu0
        %v3289 = vadd.f32 %v3033, %v3288
        %v3290 = vpop.f32.mrf.mxu0
        %v3291 = vadd.f32 %v3033, %v3290
        %3292 = vmatmul.bf16.gmra.mxu0 %v3245
        %v3293 = vpop.f32.mrf.mxu0
        %v3294 = vadd.f32 %v3033, %v3293
        %v3295 = vpop.f32.mrf.mxu0
        %v3296 = vadd.f32 %v3033, %v3295
        %3297 = vmatmul.bf16.gmra.mxu0 %v3247
        %v3298 = vpop.f32.mrf.mxu0
        %v3299 = vadd.f32 %v3033, %v3298
        %v3300 = vpop.f32.mrf.mxu0
        %v3301 = vadd.f32 %v3033, %v3300
        %3302 = vmatmul.bf16.gmra.mxu0 %v3249
        %v3303 = vpop.f32.mrf.mxu0
        %v3304 = vadd.f32 %v3033, %v3303
        %v3305 = vpop.f32.mrf.mxu0
        %v3306 = vadd.f32 %v3033, %v3305
        %3307 = vmatmul.bf16.gmra.mxu0 %v3251
        %v3308 = vpop.f32.mrf.mxu0
        %v3309 = vadd.f32 %v3033, %v3308
        %v3310 = vpop.f32.mrf.mxu0
        %v3311 = vadd.f32 %v3033, %v3310
        %3312 = vmatmul.bf16.gmra.mxu0 %v3253
        %v3313 = vpop.f32.mrf.mxu0
        %v3314 = vadd.f32 %v3033, %v3313
        %v3315 = vpop.f32.mrf.mxu0
        %v3316 = vadd.f32 %v3033, %v3315
        %3317 = vmatmul.bf16.gmra.mxu0 %v3255
        %v3318 = vpop.f32.mrf.mxu0
        %v3319 = vadd.f32 %v3033, %v3318
        %v3320 = vpop.f32.mrf.mxu0
        %v3321 = vadd.f32 %v3033, %v3320
        %3322 = vmatmul.bf16.gmra.mxu0 %v3257
        %v3323 = vpop.f32.mrf.mxu0
        %v3324 = vadd.f32 %v3033, %v3323
        %v3325 = vpop.f32.mrf.mxu0
        %v3326 = vadd.f32 %v3033, %v3325
        %3327 = vmatmul.bf16.gmra.mxu0 %v3259
        %v3328 = vpop.f32.mrf.mxu0
        %v3329 = vadd.f32 %v3033, %v3328
        %v3330 = vpop.f32.mrf.mxu0
        %v3331 = vadd.f32 %v3033, %v3330
        %3332 = vmatmul.bf16.gmra.mxu0 %v3261
        %v3333 = vpop.f32.mrf.mxu0
        %v3334 = vadd.f32 %v3033, %v3333
        %v3335 = vpop.f32.mrf.mxu0
        %v3336 = vadd.f32 %v3033, %v3335
        %3337 = vmatmul.bf16.gmra.mxu0 %v3263
        %v3338 = vpop.f32.mrf.mxu0
        %v3339 = vadd.f32 %v3033, %v3338
        %v3340 = vpop.f32.mrf.mxu0
        %3341 = vdwg.mxu0
        %v3342 = vmax.f32 %v3279, 0.0
        %v3343 = vmax.f32 %v3281, 0.0
        %v3344 = vmax.f32 %v3284, 0.0
        %v3345 = vmax.f32 %v3286, 0.0
        %v3346 = vmax.f32 %v3289, 0.0
        %v3347 = vmax.f32 %v3291, 0.0
        %v3348 = vmax.f32 %v3294, 0.0
        %v3349 = vmax.f32 %v3296, 0.0
        %v3350 = vmax.f32 %v3299, 0.0
        %v3351 = vmax.f32 %v3301, 0.0
        %v3352 = vmax.f32 %v3304, 0.0
        %v3353 = vmax.f32 %v3306, 0.0
        %v3354 = vmax.f32 %v3309, 0.0
        %v3355 = vmax.f32 %v3311, 0.0
        %v3356 = vmax.f32 %v3314, 0.0
        %v3357 = vmax.f32 %v3316, 0.0
        %v3358 = vmax.f32 %v3319, 0.0
        %v3359 = vmax.f32 %v3321, 0.0
        %v3360 = vmax.f32 %v3324, 0.0
        %v3361 = vmax.f32 %v3326, 0.0
        %v3362 = vmax.f32 %v3329, 0.0
        %v3363 = vmax.f32 %v3331, 0.0
        %v3364 = vmax.f32 %v3334, 0.0
        %v3365 = vmax.f32 %v3336, 0.0
        %v3366 = vmax.f32 %v3339, 0.0
        %v3392 = vrot.slane %v3342, 2
        %v3393 = vrot.slane %v3342, 4
        %v3394 = vrot.slane %v3342, 6
        %v3395 = vrot.slane %v3343, 2
        %v3396 = vrot.slane %v3343, 4
        %v3397 = vrot.slane %v3343, 6
        %v3398 = vrot.slane %v3344, 2
        %v3399 = vrot.slane %v3344, 4
        %v3400 = vrot.slane %v3344, 6
        %v3401 = vrot.slane %v3345, 2
        %v3402 = vrot.slane %v3345, 4
        %v3403 = vrot.slane %v3345, 6
        %v3404 = vrot.slane %v3346, 2
        %v3405 = vrot.slane %v3346, 4
        %v3406 = vrot.slane %v3346, 6
        %v3407 = vrot.slane %v3347, 2
        %v3408 = vrot.slane %v3347, 4
        %v3409 = vrot.slane %v3347, 6
        %v3410 = vrot.slane %v3348, 2
        %v3411 = vrot.slane %v3348, 4
        %v3412 = vrot.slane %v3348, 6
        %v3413 = vrot.slane %v3349, 2
        %v3414 = vrot.slane %v3349, 4
        %v3415 = vrot.slane %v3349, 6
        %v3416 = vrot.slane %v3350, 2
        %v3417 = vrot.slane %v3350, 4
        %v3418 = vrot.slane %v3350, 6
        %v3419 = vrot.slane %v3351, 2
        %v3420 = vrot.slane %v3351, 4
        %v3421 = vrot.slane %v3351, 6
        %v3422 = vrot.slane %v3352, 2
        %v3423 = vrot.slane %v3352, 4
        %v3424 = vrot.slane %v3352, 6
        %v3425 = vrot.slane %v3353, 2
        %v3426 = vrot.slane %v3353, 4
        %v3427 = vrot.slane %v3353, 6
        %v3428 = vrot.slane %v3354, 2
        %v3429 = vrot.slane %v3354, 4
        %v3430 = vrot.slane %v3354, 6
        %v3431 = vrot.slane %v3355, 2
        %v3432 = vrot.slane %v3355, 4
        %v3433 = vrot.slane %v3355, 6
        %v3434 = vrot.slane %v3356, 2
        %v3435 = vrot.slane %v3356, 4
        %v3436 = vrot.slane %v3356, 6
        %v3437 = vrot.slane %v3357, 2
        %v3438 = vrot.slane %v3357, 4
        %v3439 = vrot.slane %v3357, 6
        %v3440 = vrot.slane %v3358, 2
        %v3441 = vrot.slane %v3358, 4
        %v3442 = vrot.slane %v3358, 6
        %v3443 = vrot.slane %v3359, 2
        %v3444 = vrot.slane %v3359, 4
        %v3445 = vrot.slane %v3359, 6
        %v3446 = vrot.slane %v3360, 2
        %v3447 = vrot.slane %v3360, 4
        %v3448 = vrot.slane %v3360, 6
        %v3449 = vrot.slane %v3361, 2
        %v3450 = vrot.slane %v3361, 4
        %v3451 = vrot.slane %v3361, 6
        %v3452 = vrot.slane %v3362, 2
        %v3453 = vrot.slane %v3362, 4
        %v3454 = vrot.slane %v3362, 6
        %v3455 = vrot.slane %v3363, 2
        %v3456 = vrot.slane %v3363, 4
        %v3457 = vrot.slane %v3363, 6
        %v3458 = vrot.slane %v3364, 2
        %v3459 = vrot.slane %v3364, 4
        %v3460 = vrot.slane %v3364, 6
        %v3461 = vrot.slane %v3365, 2
        %v3462 = vrot.slane %v3365, 4
        %v3463 = vrot.slane %v3365, 6
        %v3464 = vrot.slane %v3366, 2
        %3465 = vst [vmem:[#allocation1] ss:$4 sm:$0xff] %v3342
        %s3466 = scalar_lea.vmem [#allocation1], 1
        %3467 = vst [vmem:[%s3466] ss:$4 sm:$0xff] %v3392
        %s3468 = scalar_lea.vmem [#allocation1], 2
        %3469 = vst [vmem:[%s3468] ss:$4 sm:$0xff] %v3393
        %s3470 = scalar_lea.vmem [#allocation1], 3
        %3471 = vst [vmem:[%s3470] ss:$4 sm:$0xff] %v3394
        %s3472 = scalar_lea.vmem [#allocation1], 32
        %3473 = vst [vmem:[%s3472] ss:$4 sm:$0xff] %v3343
        %s3474 = scalar_lea.vmem [#allocation1], 33
        %3475 = vst [vmem:[%s3474] ss:$4 sm:$0xff] %v3395
        %s3476 = scalar_lea.vmem [#allocation1], 34
        %3477 = vst [vmem:[%s3476] ss:$4 sm:$0xff] %v3396
        %v3478 = vld.sshfl [vmem:[#allocation1] sm:$0xff pattern:$0x73625140]
        %v3479 = vld.sshfl [vmem:[#allocation1 + $0x20] sm:$0xff pattern:$0x73625140]
        %3480 = vst [vmem:[#allocation1] ss:$4 sm:$0xff] %v3397
        %3481 = vst [vmem:[%s3466] ss:$4 sm:$0xff] %v3344
        %3482 = vst [vmem:[%s3468] ss:$4 sm:$0xff] %v3398
        %3483 = vst [vmem:[%s3470] ss:$4 sm:$0xff] %v3399
        %3484 = vst [vmem:[%s3472] ss:$4 sm:$0xff] %v3400
        %3485 = vst [vmem:[%s3474] ss:$4 sm:$0xff] %v3345
        %3486 = vst [vmem:[%s3476] ss:$4 sm:$0xff] %v3401
        %v3487 = vld.sshfl [vmem:[#allocation1] sm:$0xff pattern:$0x73625140]
        %v3488 = vld.sshfl [vmem:[#allocation1 + $0x20] sm:$0xff pattern:$0x73625140]
        %3489 = vst [vmem:[#allocation1] ss:$4 sm:$0xff] %v3402
        %3490 = vst [vmem:[%s3466] ss:$4 sm:$0xff] %v3403
        %3491 = vst [vmem:[%s3468] ss:$4 sm:$0xff] %v3346
        %3492 = vst [vmem:[%s3470] ss:$4 sm:$0xff] %v3404
        %3493 = vst [vmem:[%s3472] ss:$4 sm:$0xff] %v3405
        %3494 = vst [vmem:[%s3474] ss:$4 sm:$0xff] %v3406
        %3495 = vst [vmem:[%s3476] ss:$4 sm:$0xff] %v3347
        %v3496 = vld.sshfl [vmem:[#allocation1] sm:$0xff pattern:$0x73625140]
        %v3497 = vld.sshfl [vmem:[#allocation1 + $0x20] sm:$0xff pattern:$0x73625140]
        %3498 = vst [vmem:[#allocation1] ss:$4 sm:$0xff] %v3407
        %3499 = vst [vmem:[%s3466] ss:$4 sm:$0xff] %v3408
        %3500 = vst [vmem:[%s3468] ss:$4 sm:$0xff] %v3409
        %3501 = vst [vmem:[%s3470] ss:$4 sm:$0xff] %v3348
        %3502 = vst [vmem:[%s3472] ss:$4 sm:$0xff] %v3410
        %3503 = vst [vmem:[%s3474] ss:$4 sm:$0xff] %v3411
        %3504 = vst [vmem:[%s3476] ss:$4 sm:$0xff] %v3412
        %v3505 = vld.sshfl [vmem:[#allocation1] sm:$0xff pattern:$0x73625140]
        %v3506 = vld.sshfl [vmem:[#allocation1 + $0x20] sm:$0xff pattern:$0x73625140]
        %3507 = vst [vmem:[#allocation1] ss:$4 sm:$0xff] %v3349
        %3508 = vst [vmem:[%s3466] ss:$4 sm:$0xff] %v3413
        %3509 = vst [vmem:[%s3468] ss:$4 sm:$0xff] %v3414
        %3510 = vst [vmem:[%s3470] ss:$4 sm:$0xff] %v3415
        %3511 = vst [vmem:[%s3472] ss:$4 sm:$0xff] %v3350
        %3512 = vst [vmem:[%s3474] ss:$4 sm:$0xff] %v3416
        %3513 = vst [vmem:[%s3476] ss:$4 sm:$0xff] %v3417
        %v3514 = vld.sshfl [vmem:[#allocation1] sm:$0xff pattern:$0x73625140]
        %v3515 = vld.sshfl [vmem:[#allocation1 + $0x20] sm:$0xff pattern:$0x73625140]
        %3516 = vst [vmem:[#allocation1] ss:$4 sm:$0xff] %v3418
        %3517 = vst [vmem:[%s3466] ss:$4 sm:$0xff] %v3351
        %3518 = vst [vmem:[%s3468] ss:$4 sm:$0xff] %v3419
        %3519 = vst [vmem:[%s3470] ss:$4 sm:$0xff] %v3420
        %3520 = vst [vmem:[%s3472] ss:$4 sm:$0xff] %v3421
        %3521 = vst [vmem:[%s3474] ss:$4 sm:$0xff] %v3352
        %3522 = vst [vmem:[%s3476] ss:$4 sm:$0xff] %v3422
        %v3523 = vld.sshfl [vmem:[#allocation1] sm:$0xff pattern:$0x73625140]
        %v3524 = vld.sshfl [vmem:[#allocation1 + $0x20] sm:$0xff pattern:$0x73625140]
        %3525 = vst [vmem:[#allocation1] ss:$4 sm:$0xff] %v3423
        %3526 = vst [vmem:[%s3466] ss:$4 sm:$0xff] %v3424
        %3527 = vst [vmem:[%s3468] ss:$4 sm:$0xff] %v3353
        %3528 = vst [vmem:[%s3470] ss:$4 sm:$0xff] %v3425
        %3529 = vst [vmem:[%s3472] ss:$4 sm:$0xff] %v3426
        %3530 = vst [vmem:[%s3474] ss:$4 sm:$0xff] %v3427
        %3531 = vst [vmem:[%s3476] ss:$4 sm:$0xff] %v3354
        %v3532 = vld.sshfl [vmem:[#allocation1] sm:$0xff pattern:$0x73625140]
        %v3533 = vld.sshfl [vmem:[#allocation1 + $0x20] sm:$0xff pattern:$0x73625140]
        %3534 = vst [vmem:[#allocation1] ss:$4 sm:$0xff] %v3428
        %3535 = vst [vmem:[%s3466] ss:$4 sm:$0xff] %v3429
        %3536 = vst [vmem:[%s3468] ss:$4 sm:$0xff] %v3430
        %3537 = vst [vmem:[%s3470] ss:$4 sm:$0xff] %v3355
        %3538 = vst [vmem:[%s3472] ss:$4 sm:$0xff] %v3431
        %3539 = vst [vmem:[%s3474] ss:$4 sm:$0xff] %v3432
        %3540 = vst [vmem:[%s3476] ss:$4 sm:$0xff] %v3433
        %v3541 = vld.sshfl [vmem:[#allocation1] sm:$0xff pattern:$0x73625140]
        %v3542 = vld.sshfl [vmem:[#allocation1 + $0x20] sm:$0xff pattern:$0x73625140]
        %3543 = vst [vmem:[#allocation1] ss:$4 sm:$0xff] %v3356
        %3544 = vst [vmem:[%s3466] ss:$4 sm:$0xff] %v3434
        %3545 = vst [vmem:[%s3468] ss:$4 sm:$0xff] %v3435
        %3546 = vst [vmem:[%s3470] ss:$4 sm:$0xff] %v3436
        %3547 = vst [vmem:[%s3472] ss:$4 sm:$0xff] %v3357
        %3548 = vst [vmem:[%s3474] ss:$4 sm:$0xff] %v3437
        %3549 = vst [vmem:[%s3476] ss:$4 sm:$0xff] %v3438
        %v3550 = vld.sshfl [vmem:[#allocation1] sm:$0xff pattern:$0x73625140]
        %v3551 = vld.sshfl [vmem:[#allocation1 + $0x20] sm:$0xff pattern:$0x73625140]
        %3552 = vst [vmem:[#allocation1] ss:$4 sm:$0xff] %v3439
        %3553 = vst [vmem:[%s3466] ss:$4 sm:$0xff] %v3358
        %3554 = vst [vmem:[%s3468] ss:$4 sm:$0xff] %v3440
        %3555 = vst [vmem:[%s3470] ss:$4 sm:$0xff] %v3441
        %3556 = vst [vmem:[%s3472] ss:$4 sm:$0xff] %v3442
        %3557 = vst [vmem:[%s3474] ss:$4 sm:$0xff] %v3359
        %3558 = vst [vmem:[%s3476] ss:$4 sm:$0xff] %v3443
        %v3559 = vld.sshfl [vmem:[#allocation1] sm:$0xff pattern:$0x73625140]
        %v3560 = vld.sshfl [vmem:[#allocation1 + $0x20] sm:$0xff pattern:$0x73625140]
        %3561 = vst [vmem:[#allocation1] ss:$4 sm:$0xff] %v3444
        %3562 = vst [vmem:[%s3466] ss:$4 sm:$0xff] %v3445
        %3563 = vst [vmem:[%s3468] ss:$4 sm:$0xff] %v3360
        %3564 = vst [vmem:[%s3470] ss:$4 sm:$0xff] %v3446
        %3565 = vst [vmem:[%s3472] ss:$4 sm:$0xff] %v3447
        %3566 = vst [vmem:[%s3474] ss:$4 sm:$0xff] %v3448
        %3567 = vst [vmem:[%s3476] ss:$4 sm:$0xff] %v3361
        %v3568 = vld.sshfl [vmem:[#allocation1] sm:$0xff pattern:$0x73625140]
        %v3569 = vld.sshfl [vmem:[#allocation1 + $0x20] sm:$0xff pattern:$0x73625140]
        %3570 = vst [vmem:[#allocation1] ss:$4 sm:$0xff] %v3449
        %3571 = vst [vmem:[%s3466] ss:$4 sm:$0xff] %v3450
        %3572 = vst [vmem:[%s3468] ss:$4 sm:$0xff] %v3451
        %3573 = vst [vmem:[%s3470] ss:$4 sm:$0xff] %v3362
        %3574 = vst [vmem:[%s3472] ss:$4 sm:$0xff] %v3452
        %3575 = vst [vmem:[%s3474] ss:$4 sm:$0xff] %v3453
        %3576 = vst [vmem:[%s3476] ss:$4 sm:$0xff] %v3454
        %v3577 = vld.sshfl [vmem:[#allocation1] sm:$0xff pattern:$0x73625140]
        %v3578 = vld.sshfl [vmem:[#allocation1 + $0x20] sm:$0xff pattern:$0x73625140]
        %3579 = vst [vmem:[#allocation1] ss:$4 sm:$0xff] %v3363
        %3580 = vst [vmem:[%s3466] ss:$4 sm:$0xff] %v3455
        %3581 = vst [vmem:[%s3468] ss:$4 sm:$0xff] %v3456
        %3582 = vst [vmem:[%s3470] ss:$4 sm:$0xff] %v3457
        %3583 = vst [vmem:[%s3472] ss:$4 sm:$0xff] %v3364
        %3584 = vst [vmem:[%s3474] ss:$4 sm:$0xff] %v3458
        %3585 = vst [vmem:[%s3476] ss:$4 sm:$0xff] %v3459
        %v3586 = vld.sshfl [vmem:[#allocation1] sm:$0xff pattern:$0x73625140]
        %v3587 = vld.sshfl [vmem:[#allocation1 + $0x20] sm:$0xff pattern:$0x73625140]
        %3588 = vst [vmem:[#allocation1] ss:$4 sm:$0xff] %v3460
        %3589 = vst [vmem:[%s3466] ss:$4 sm:$0xff] %v3365
        %3590 = vst [vmem:[%s3468] ss:$4 sm:$0xff] %v3461
        %3591 = vst [vmem:[%s3470] ss:$4 sm:$0xff] %v3462
        %3592 = vst [vmem:[%s3472] ss:$4 sm:$0xff] %v3463
        %3593 = vst [vmem:[%s3474] ss:$4 sm:$0xff] %v3366
        %3594 = vst [vmem:[%s3476] ss:$4 sm:$0xff] %v3464
        %v3595 = vld.sshfl [vmem:[#allocation1] sm:$0xff pattern:$0x73625140]
        %v3596 = vld.sshfl [vmem:[#allocation1 + $0x20] sm:$0xff pattern:$0x73625140]
        %v3625 = vpack.c.bf16 %v3478, %v3478
        %v3626 = vpack.c.bf16 %v3479, %v3479
        %v3627 = vpack.c.bf16 %v3487, %v3487
        %v3628 = vpack.c.bf16 %v3488, %v3488
        %v3629 = vpack.c.bf16 %v3496, %v3496
        %v3630 = vpack.c.bf16 %v3497, %v3497
        %v3631 = vpack.c.bf16 %v3505, %v3505
        %v3632 = vpack.c.bf16 %v3506, %v3506
        %v3633 = vpack.c.bf16 %v3514, %v3514
        %v3634 = vpack.c.bf16 %v3515, %v3515
        %v3635 = vpack.c.bf16 %v3523, %v3523
        %v3636 = vpack.c.bf16 %v3524, %v3524
        %v3637 = vpack.c.bf16 %v3532, %v3532
        %v3638 = vpack.c.bf16 %v3533, %v3533
        %v3639 = vpack.c.bf16 %v3541, %v3541
        %v3640 = vpack.c.bf16 %v3542, %v3542
        %v3641 = vpack.c.bf16 %v3550, %v3550
        %v3642 = vpack.c.bf16 %v3551, %v3551
        %v3643 = vpack.c.bf16 %v3559, %v3559
        %v3644 = vpack.c.bf16 %v3560, %v3560
        %v3645 = vpack.c.bf16 %v3568, %v3568
        %v3646 = vpack.c.bf16 %v3569, %v3569
        %v3647 = vpack.c.bf16 %v3577, %v3577
        %v3648 = vpack.c.bf16 %v3578, %v3578
        %v3649 = vpack.c.bf16 %v3586, %v3586
        %v3650 = vpack.c.bf16 %v3587, %v3587
        %v3651 = vpack.c.bf16 %v3595, %v3595
        %v3652 = vpack.c.bf16 %v3596, %v3596
        %3653 = vst [vmem:[#allocation3] sm:$0xf] %v3625
        %3654 = vst [vmem:[#allocation3 + $0x4] sm:$0x7] %v3626
        %3655 = vst [vmem:[#allocation3 + $0x8] sm:$0xf] %v3627
        %3656 = vst [vmem:[#allocation3 + $0xc] sm:$0x7] %v3628
        %3657 = vst [vmem:[#allocation3 + $0x10] sm:$0xf] %v3629
        %3658 = vst [vmem:[#allocation3 + $0x14] sm:$0x7] %v3630
        %3659 = vst [vmem:[#allocation3 + $0x18] sm:$0xf] %v3631
        %3660 = vst [vmem:[#allocation3 + $0x1c] sm:$0x7] %v3632
        %3661 = vst [vmem:[#allocation3 + $0x20] sm:$0xf] %v3633
        %3662 = vst [vmem:[#allocation3 + $0x24] sm:$0x7] %v3634
        %3663 = vst [vmem:[#allocation3 + $0x28] sm:$0xf] %v3635
        %3664 = vst [vmem:[#allocation3 + $0x2c] sm:$0x7] %v3636
        %3665 = vst [vmem:[#allocation3 + $0x30] sm:$0xf] %v3637
        %3666 = vst [vmem:[#allocation3 + $0x34] sm:$0x7] %v3638
        %3667 = vst [vmem:[#allocation3 + $0x38] sm:$0xf] %v3639
        %3668 = vst [vmem:[#allocation3 + $0x3c] sm:$0x7] %v3640
        %3669 = vst [vmem:[#allocation3 + $0x40] sm:$0xf] %v3641
        %3670 = vst [vmem:[#allocation3 + $0x44] sm:$0x7] %v3642
        %3671 = vst [vmem:[#allocation3 + $0x48] sm:$0xf] %v3643
        %3672 = vst [vmem:[#allocation3 + $0x4c] sm:$0x7] %v3644
        %3673 = vst [vmem:[#allocation3 + $0x50] sm:$0xf] %v3645
        %3674 = vst [vmem:[#allocation3 + $0x54] sm:$0x7] %v3646
        %3675 = vst [vmem:[#allocation3 + $0x58] sm:$0xf] %v3647
        %3676 = vst [vmem:[#allocation3 + $0x5c] sm:$0x7] %v3648
        %3677 = vst [vmem:[#allocation3 + $0x60] sm:$0xf] %v3649
        %3678 = vst [vmem:[#allocation3 + $0x64] sm:$0x7] %v3650
        %3679 = vst [vmem:[#allocation3 + $0x68] sm:$0xf] %v3651
        %3680 = vst [vmem:[#allocation3 + $0x6c] sm:$0x7] %v3652
        %v3681 = vld [vmem:[#allocation3] sm:$0xf]
        %v3682 = vld [vmem:[#allocation3 + $0x4] sm:$0x3]
        %v3683 = vld [vmem:[#allocation3 + $0x8] sm:$0xf]
        %v3684 = vld [vmem:[#allocation3 + $0xc] sm:$0x3]
        %v3685 = vld [vmem:[#allocation3 + $0x10] sm:$0xf]
        %v3686 = vld [vmem:[#allocation3 + $0x14] sm:$0x3]
        %v3687 = vld [vmem:[#allocation3 + $0x18] sm:$0xf]
        %v3688 = vld [vmem:[#allocation3 + $0x1c] sm:$0x3]
        %v3689 = vld [vmem:[#allocation3 + $0x20] sm:$0xf]
        %v3690 = vld [vmem:[#allocation3 + $0x24] sm:$0x3]
        %v3691 = vld [vmem:[#allocation3 + $0x28] sm:$0xf]
        %v3692 = vld [vmem:[#allocation3 + $0x2c] sm:$0x3]
        %v3693 = vld [vmem:[#allocation3 + $0x30] sm:$0xf]
        %v3694 = vld [vmem:[#allocation3 + $0x34] sm:$0x3]
        %v3695 = vld [vmem:[#allocation3 + $0x38] sm:$0xf]
        %v3696 = vld [vmem:[#allocation3 + $0x3c] sm:$0x3]
        %v3697 = vld [vmem:[#allocation3 + $0x40] sm:$0xf]
        %v3698 = vld [vmem:[#allocation3 + $0x44] sm:$0x3]
        %v3699 = vld [vmem:[#allocation3 + $0x48] sm:$0xf]
        %v3700 = vld [vmem:[#allocation3 + $0x4c] sm:$0x3]
        %v3701 = vld [vmem:[#allocation3 + $0x50] sm:$0xf]
        %v3702 = vld [vmem:[#allocation3 + $0x54] sm:$0x3]
        %v3703 = vld [vmem:[#allocation3 + $0x58] sm:$0xf]
        %v3704 = vld [vmem:[#allocation3 + $0x5c] sm:$0x3]
        %3705 = vst [vmem:[#allocation4] sm:$0xf] %v3681
        %3706 = vst [vmem:[#allocation4 + $0x24] sm:$0x3] %v3682
        %3707 = vst [vmem:[#allocation4 + $0x48] sm:$0xf] %v3683
        %3708 = vst [vmem:[#allocation4 + $0x6c] sm:$0x3] %v3684
        %3709 = vst [vmem:[#allocation4 + $0x90] sm:$0xf] %v3685
        %3710 = vst [vmem:[#allocation4 + $0xb4] sm:$0x3] %v3686
        %3711 = vst [vmem:[#allocation4 + $0xd8] sm:$0xf] %v3687
        %3712 = vst [vmem:[#allocation4 + $0xfc] sm:$0x3] %v3688
        %3713 = vst [vmem:[#allocation4 + $0x120] sm:$0xf] %v3689
        %3714 = vst [vmem:[#allocation4 + $0x144] sm:$0x3] %v3690
        %3715 = vst [vmem:[#allocation4 + $0x168] sm:$0xf] %v3691
        %3716 = vst [vmem:[#allocation4 + $0x18c] sm:$0x3] %v3692
        %3717 = vst [vmem:[#allocation4 + $0x1b0] sm:$0xf] %v3693
        %3718 = vst [vmem:[#allocation4 + $0x1d4] sm:$0x3] %v3694
        %3719 = vst [vmem:[#allocation4 + $0x1f8] sm:$0xf] %v3695
        %3720 = vst [vmem:[#allocation4 + $0x21c] sm:$0x3] %v3696
        %3721 = vst [vmem:[#allocation4 + $0x240] sm:$0xf] %v3697
        %3722 = vst [vmem:[#allocation4 + $0x264] sm:$0x3] %v3698
        %3723 = vst [vmem:[#allocation4 + $0x288] sm:$0xf] %v3699
        %3724 = vst [vmem:[#allocation4 + $0x2ac] sm:$0x3] %v3700
        %3725 = vst [vmem:[#allocation4 + $0x2d0] sm:$0xf] %v3701
        %3726 = vst [vmem:[#allocation4 + $0x2f4] sm:$0x3] %v3702
        %3727 = vst [vmem:[#allocation4 + $0x318] sm:$0xf] %v3703
        %3728 = vst [vmem:[#allocation4 + $0x33c] sm:$0x3] %v3704
        %v3729 = vld [vmem:[#allocation3] sm:$0xf]
        %v3730 = vld [vmem:[#allocation3 + $0x4] sm:$0x7]
        %v3731 = vld [vmem:[#allocation3 + $0x8] sm:$0xf]
        %v3732 = vld [vmem:[#allocation3 + $0xc] sm:$0x7]
        %v3733 = vld [vmem:[#allocation3 + $0x10] sm:$0xf]
        %v3734 = vld [vmem:[#allocation3 + $0x14] sm:$0x7]
        %v3735 = vld [vmem:[#allocation3 + $0x18] sm:$0xf]
        %v3736 = vld [vmem:[#allocation3 + $0x1c] sm:$0x7]
        %v3737 = vld [vmem:[#allocation3 + $0x20] sm:$0xf]
        %v3738 = vld [vmem:[#allocation3 + $0x24] sm:$0x7]
        %v3739 = vld [vmem:[#allocation3 + $0x28] sm:$0xf]
        %v3740 = vld [vmem:[#allocation3 + $0x2c] sm:$0x7]
        %v3741 = vld [vmem:[#allocation3 + $0x30] sm:$0xf]
        %v3742 = vld [vmem:[#allocation3 + $0x34] sm:$0x7]
        %v3743 = vld [vmem:[#allocation3 + $0x38] sm:$0xf]
        %v3744 = vld [vmem:[#allocation3 + $0x3c] sm:$0x7]
        %v3745 = vld [vmem:[#allocation3 + $0x40] sm:$0xf]
        %v3746 = vld [vmem:[#allocation3 + $0x44] sm:$0x7]
        %v3747 = vld [vmem:[#allocation3 + $0x48] sm:$0xf]
        %v3748 = vld [vmem:[#allocation3 + $0x4c] sm:$0x7]
        %v3749 = vld [vmem:[#allocation3 + $0x50] sm:$0xf]
        %v3750 = vld [vmem:[#allocation3 + $0x54] sm:$0x7]
        %v3751 = vld [vmem:[#allocation3 + $0x58] sm:$0xf]
        %v3752 = vld [vmem:[#allocation3 + $0x5c] sm:$0x7]
        %v3754 = vshrl.u32 %v3729, 16
        %v3756 = vrot.slane %v3754, 4
        %v3757 = vshll.u32 %v3729, 16
        %v3759 = vrot.slane %v3757, 5
        %v3760 = vor.u32 %v3756, %v3759
        %v3761 = vrot.slane %v3760, 4
        %v3763 = vshll.u32 %v3730, 16
        %v3765 = vrot.slane %v3763, 5
        %v3766 = vsel %vm382, %v3761, %v3765
        %v3767 = vshrl.u32 %v3730, 16
        %v3769 = vrot.slane %v3767, 4
        %v3770 = vor.u32 %v3769, %v3765
        %v3771 = vrot.slane %v3770, 4
        %v3773 = vshrl.u32 %v3731, 16
        %v3775 = vrot.slane %v3773, 4
        %v3776 = vshll.u32 %v3731, 16
        %v3778 = vrot.slane %v3776, 5
        %v3779 = vor.u32 %v3775, %v3778
        %v3780 = vrot.slane %v3779, 4
        %v3782 = vshll.u32 %v3732, 16
        %v3784 = vrot.slane %v3782, 5
        %v3785 = vsel %vm382, %v3780, %v3784
        %v3786 = vshrl.u32 %v3732, 16
        %v3788 = vrot.slane %v3786, 4
        %v3789 = vor.u32 %v3788, %v3784
        %v3790 = vrot.slane %v3789, 4
        %v3792 = vshrl.u32 %v3733, 16
        %v3794 = vrot.slane %v3792, 4
        %v3795 = vshll.u32 %v3733, 16
        %v3797 = vrot.slane %v3795, 5
        %v3798 = vor.u32 %v3794, %v3797
        %v3799 = vrot.slane %v3798, 4
        %v3801 = vshll.u32 %v3734, 16
        %v3803 = vrot.slane %v3801, 5
        %v3804 = vsel %vm382, %v3799, %v3803
        %v3805 = vshrl.u32 %v3734, 16
        %v3807 = vrot.slane %v3805, 4
        %v3808 = vor.u32 %v3807, %v3803
        %v3809 = vrot.slane %v3808, 4
        %v3811 = vshrl.u32 %v3735, 16
        %v3813 = vrot.slane %v3811, 4
        %v3814 = vshll.u32 %v3735, 16
        %v3816 = vrot.slane %v3814, 5
        %v3817 = vor.u32 %v3813, %v3816
        %v3818 = vrot.slane %v3817, 4
        %v3820 = vshll.u32 %v3736, 16
        %v3822 = vrot.slane %v3820, 5
        %v3823 = vsel %vm382, %v3818, %v3822
        %v3824 = vshrl.u32 %v3736, 16
        %v3826 = vrot.slane %v3824, 4
        %v3827 = vor.u32 %v3826, %v3822
        %v3828 = vrot.slane %v3827, 4
        %v3830 = vshrl.u32 %v3737, 16
        %v3832 = vrot.slane %v3830, 4
        %v3833 = vshll.u32 %v3737, 16
        %v3835 = vrot.slane %v3833, 5
        %v3836 = vor.u32 %v3832, %v3835
        %v3837 = vrot.slane %v3836, 4
        %v3839 = vshll.u32 %v3738, 16
        %v3841 = vrot.slane %v3839, 5
        %v3842 = vsel %vm382, %v3837, %v3841
        %v3843 = vshrl.u32 %v3738, 16
        %v3845 = vrot.slane %v3843, 4
        %v3846 = vor.u32 %v3845, %v3841
        %v3847 = vrot.slane %v3846, 4
        %v3849 = vshrl.u32 %v3739, 16
        %v3851 = vrot.slane %v3849, 4
        %v3852 = vshll.u32 %v3739, 16
        %v3854 = vrot.slane %v3852, 5
        %v3855 = vor.u32 %v3851, %v3854
        %v3856 = vrot.slane %v3855, 4
        %v3858 = vshll.u32 %v3740, 16
        %v3860 = vrot.slane %v3858, 5
        %v3861 = vsel %vm382, %v3856, %v3860
        %v3862 = vshrl.u32 %v3740, 16
        %v3864 = vrot.slane %v3862, 4
        %v3865 = vor.u32 %v3864, %v3860
        %v3866 = vrot.slane %v3865, 4
        %v3868 = vshrl.u32 %v3741, 16
        %v3870 = vrot.slane %v3868, 4
        %v3871 = vshll.u32 %v3741, 16
        %v3873 = vrot.slane %v3871, 5
        %v3874 = vor.u32 %v3870, %v3873
        %v3875 = vrot.slane %v3874, 4
        %v3877 = vshll.u32 %v3742, 16
        %v3879 = vrot.slane %v3877, 5
        %v3880 = vsel %vm382, %v3875, %v3879
        %v3881 = vshrl.u32 %v3742, 16
        %v3883 = vrot.slane %v3881, 4
        %v3884 = vor.u32 %v3883, %v3879
        %v3885 = vrot.slane %v3884, 4
        %v3887 = vshrl.u32 %v3743, 16
        %v3889 = vrot.slane %v3887, 4
        %v3890 = vshll.u32 %v3743, 16
        %v3892 = vrot.slane %v3890, 5
        %v3893 = vor.u32 %v3889, %v3892
        %v3894 = vrot.slane %v3893, 4
        %v3896 = vshll.u32 %v3744, 16
        %v3898 = vrot.slane %v3896, 5
        %v3899 = vsel %vm382, %v3894, %v3898
        %v3900 = vshrl.u32 %v3744, 16
        %v3902 = vrot.slane %v3900, 4
        %v3903 = vor.u32 %v3902, %v3898
        %v3904 = vrot.slane %v3903, 4
        %v3906 = vshrl.u32 %v3745, 16
        %v3908 = vrot.slane %v3906, 4
        %v3909 = vshll.u32 %v3745, 16
        %v3911 = vrot.slane %v3909, 5
        %v3912 = vor.u32 %v3908, %v3911
        %v3913 = vrot.slane %v3912, 4
        %v3915 = vshll.u32 %v3746, 16
        %v3917 = vrot.slane %v3915, 5
        %v3918 = vsel %vm382, %v3913, %v3917
        %v3919 = vshrl.u32 %v3746, 16
        %v3921 = vrot.slane %v3919, 4
        %v3922 = vor.u32 %v3921, %v3917
        %v3923 = vrot.slane %v3922, 4
        %v3925 = vshrl.u32 %v3747, 16
        %v3927 = vrot.slane %v3925, 4
        %v3928 = vshll.u32 %v3747, 16
        %v3930 = vrot.slane %v3928, 5
        %v3931 = vor.u32 %v3927, %v3930
        %v3932 = vrot.slane %v3931, 4
        %v3934 = vshll.u32 %v3748, 16
        %v3936 = vrot.slane %v3934, 5
        %v3937 = vsel %vm382, %v3932, %v3936
        %v3938 = vshrl.u32 %v3748, 16
        %v3940 = vrot.slane %v3938, 4
        %v3941 = vor.u32 %v3940, %v3936
        %v3942 = vrot.slane %v3941, 4
        %v3944 = vshrl.u32 %v3749, 16
        %v3946 = vrot.slane %v3944, 4
        %v3947 = vshll.u32 %v3749, 16
        %v3949 = vrot.slane %v3947, 5
        %v3950 = vor.u32 %v3946, %v3949
        %v3951 = vrot.slane %v3950, 4
        %v3953 = vshll.u32 %v3750, 16
        %v3955 = vrot.slane %v3953, 5
        %v3956 = vsel %vm382, %v3951, %v3955
        %v3957 = vshrl.u32 %v3750, 16
        %v3959 = vrot.slane %v3957, 4
        %v3960 = vor.u32 %v3959, %v3955
        %v3961 = vrot.slane %v3960, 4
        %v3963 = vshrl.u32 %v3751, 16
        %v3965 = vrot.slane %v3963, 4
        %v3966 = vshll.u32 %v3751, 16
        %v3968 = vrot.slane %v3966, 5
        %v3969 = vor.u32 %v3965, %v3968
        %v3970 = vrot.slane %v3969, 4
        %v3972 = vshll.u32 %v3752, 16
        %v3974 = vrot.slane %v3972, 5
        %v3975 = vsel %vm382, %v3970, %v3974
        %v3976 = vshrl.u32 %v3752, 16
        %v3978 = vrot.slane %v3976, 4
        %v3979 = vor.u32 %v3978, %v3974
        %v3980 = vrot.slane %v3979, 4
        %4005 = vst [vmem:[#allocation4 + $0x4] sm:$0xf] %v3766
        %4006 = vst [vmem:[#allocation4 + $0x28] sm:$0x3] %v3771
        %4007 = vst [vmem:[#allocation4 + $0x4c] sm:$0xf] %v3785
        %4008 = vst [vmem:[#allocation4 + $0x70] sm:$0x3] %v3790
        %4009 = vst [vmem:[#allocation4 + $0x94] sm:$0xf] %v3804
        %4010 = vst [vmem:[#allocation4 + $0xb8] sm:$0x3] %v3809
        %4011 = vst [vmem:[#allocation4 + $0xdc] sm:$0xf] %v3823
        %4012 = vst [vmem:[#allocation4 + $0x100] sm:$0x3] %v3828
        %4013 = vst [vmem:[#allocation4 + $0x124] sm:$0xf] %v3842
        %4014 = vst [vmem:[#allocation4 + $0x148] sm:$0x3] %v3847
        %4015 = vst [vmem:[#allocation4 + $0x16c] sm:$0xf] %v3861
        %4016 = vst [vmem:[#allocation4 + $0x190] sm:$0x3] %v3866
        %4017 = vst [vmem:[#allocation4 + $0x1b4] sm:$0xf] %v3880
        %4018 = vst [vmem:[#allocation4 + $0x1d8] sm:$0x3] %v3885
        %4019 = vst [vmem:[#allocation4 + $0x1fc] sm:$0xf] %v3899
        %4020 = vst [vmem:[#allocation4 + $0x220] sm:$0x3] %v3904
        %4021 = vst [vmem:[#allocation4 + $0x244] sm:$0xf] %v3918
        %4022 = vst [vmem:[#allocation4 + $0x268] sm:$0x3] %v3923
        %4023 = vst [vmem:[#allocation4 + $0x28c] sm:$0xf] %v3937
        %4024 = vst [vmem:[#allocation4 + $0x2b0] sm:$0x3] %v3942
        %4025 = vst [vmem:[#allocation4 + $0x2d4] sm:$0xf] %v3956
        %4026 = vst [vmem:[#allocation4 + $0x2f8] sm:$0x3] %v3961
        %4027 = vst [vmem:[#allocation4 + $0x31c] sm:$0xf] %v3975
        %4028 = vst [vmem:[#allocation4 + $0x340] sm:$0x3] %v3980
        %v4029 = vld [vmem:[#allocation3] sm:$0xe]
        %v4030 = vld [vmem:[#allocation3 + $0x4] sm:$0x7]
        %v4031 = vld [vmem:[#allocation3 + $0x8] sm:$0xe]
        %v4032 = vld [vmem:[#allocation3 + $0xc] sm:$0x7]
        %v4033 = vld [vmem:[#allocation3 + $0x10] sm:$0xe]
        %v4034 = vld [vmem:[#allocation3 + $0x14] sm:$0x7]
        %v4035 = vld [vmem:[#allocation3 + $0x18] sm:$0xe]
        %v4036 = vld [vmem:[#allocation3 + $0x1c] sm:$0x7]
        %v4037 = vld [vmem:[#allocation3 + $0x20] sm:$0xe]
        %v4038 = vld [vmem:[#allocation3 + $0x24] sm:$0x7]
        %v4039 = vld [vmem:[#allocation3 + $0x28] sm:$0xe]
        %v4040 = vld [vmem:[#allocation3 + $0x2c] sm:$0x7]
        %v4041 = vld [vmem:[#allocation3 + $0x30] sm:$0xe]
        %v4042 = vld [vmem:[#allocation3 + $0x34] sm:$0x7]
        %v4043 = vld [vmem:[#allocation3 + $0x38] sm:$0xe]
        %v4044 = vld [vmem:[#allocation3 + $0x3c] sm:$0x7]
        %v4045 = vld [vmem:[#allocation3 + $0x40] sm:$0xe]
        %v4046 = vld [vmem:[#allocation3 + $0x44] sm:$0x7]
        %v4047 = vld [vmem:[#allocation3 + $0x48] sm:$0xe]
        %v4048 = vld [vmem:[#allocation3 + $0x4c] sm:$0x7]
        %v4049 = vld [vmem:[#allocation3 + $0x50] sm:$0xe]
        %v4050 = vld [vmem:[#allocation3 + $0x54] sm:$0x7]
        %v4051 = vld [vmem:[#allocation3 + $0x58] sm:$0xe]
        %v4052 = vld [vmem:[#allocation3 + $0x5c] sm:$0x7]
        %v4077 = vrot.slane %v4029, 5
        %v4078 = vrot.slane %v4077, 4
        %v4079 = vrot.slane %v4030, 5
        %v4080 = vsel %vm821, %v4078, %v4079
        %v4081 = vrot.slane %v4079, 4
        %v4082 = vrot.slane %v4031, 5
        %v4083 = vrot.slane %v4082, 4
        %v4084 = vrot.slane %v4032, 5
        %v4085 = vsel %vm821, %v4083, %v4084
        %v4086 = vrot.slane %v4084, 4
        %v4087 = vrot.slane %v4033, 5
        %v4088 = vrot.slane %v4087, 4
        %v4089 = vrot.slane %v4034, 5
        %v4090 = vsel %vm821, %v4088, %v4089
        %v4091 = vrot.slane %v4089, 4
        %v4092 = vrot.slane %v4035, 5
        %v4093 = vrot.slane %v4092, 4
        %v4094 = vrot.slane %v4036, 5
        %v4095 = vsel %vm821, %v4093, %v4094
        %v4096 = vrot.slane %v4094, 4
        %v4097 = vrot.slane %v4037, 5
        %v4098 = vrot.slane %v4097, 4
        %v4099 = vrot.slane %v4038, 5
        %v4100 = vsel %vm821, %v4098, %v4099
        %v4101 = vrot.slane %v4099, 4
        %v4102 = vrot.slane %v4039, 5
        %v4103 = vrot.slane %v4102, 4
        %v4104 = vrot.slane %v4040, 5
        %v4105 = vsel %vm821, %v4103, %v4104
        %v4106 = vrot.slane %v4104, 4
        %v4107 = vrot.slane %v4041, 5
        %v4108 = vrot.slane %v4107, 4
        %v4109 = vrot.slane %v4042, 5
        %v4110 = vsel %vm821, %v4108, %v4109
        %v4111 = vrot.slane %v4109, 4
        %v4112 = vrot.slane %v4043, 5
        %v4113 = vrot.slane %v4112, 4
        %v4114 = vrot.slane %v4044, 5
        %v4115 = vsel %vm821, %v4113, %v4114
        %v4116 = vrot.slane %v4114, 4
        %v4117 = vrot.slane %v4045, 5
        %v4118 = vrot.slane %v4117, 4
        %v4119 = vrot.slane %v4046, 5
        %v4120 = vsel %vm821, %v4118, %v4119
        %v4121 = vrot.slane %v4119, 4
        %v4122 = vrot.slane %v4047, 5
        %v4123 = vrot.slane %v4122, 4
        %v4124 = vrot.slane %v4048, 5
        %v4125 = vsel %vm821, %v4123, %v4124
        %v4126 = vrot.slane %v4124, 4
        %v4127 = vrot.slane %v4049, 5
        %v4128 = vrot.slane %v4127, 4
        %v4129 = vrot.slane %v4050, 5
        %v4130 = vsel %vm821, %v4128, %v4129
        %v4131 = vrot.slane %v4129, 4
        %v4132 = vrot.slane %v4051, 5
        %v4133 = vrot.slane %v4132, 4
        %v4134 = vrot.slane %v4052, 5
        %v4135 = vsel %vm821, %v4133, %v4134
        %v4136 = vrot.slane %v4134, 4
        %4161 = vst [vmem:[#allocation4 + $0x8] sm:$0xf] %v4080
        %4162 = vst [vmem:[#allocation4 + $0x2c] sm:$0x3] %v4081
        %4163 = vst [vmem:[#allocation4 + $0x50] sm:$0xf] %v4085
        %4164 = vst [vmem:[#allocation4 + $0x74] sm:$0x3] %v4086
        %4165 = vst [vmem:[#allocation4 + $0x98] sm:$0xf] %v4090
        %4166 = vst [vmem:[#allocation4 + $0xbc] sm:$0x3] %v4091
        %4167 = vst [vmem:[#allocation4 + $0xe0] sm:$0xf] %v4095
        %4168 = vst [vmem:[#allocation4 + $0x104] sm:$0x3] %v4096
        %4169 = vst [vmem:[#allocation4 + $0x128] sm:$0xf] %v4100
        %4170 = vst [vmem:[#allocation4 + $0x14c] sm:$0x3] %v4101
        %4171 = vst [vmem:[#allocation4 + $0x170] sm:$0xf] %v4105
        %4172 = vst [vmem:[#allocation4 + $0x194] sm:$0x3] %v4106
        %4173 = vst [vmem:[#allocation4 + $0x1b8] sm:$0xf] %v4110
        %4174 = vst [vmem:[#allocation4 + $0x1dc] sm:$0x3] %v4111
        %4175 = vst [vmem:[#allocation4 + $0x200] sm:$0xf] %v4115
        %4176 = vst [vmem:[#allocation4 + $0x224] sm:$0x3] %v4116
        %4177 = vst [vmem:[#allocation4 + $0x248] sm:$0xf] %v4120
        %4178 = vst [vmem:[#allocation4 + $0x26c] sm:$0x3] %v4121
        %4179 = vst [vmem:[#allocation4 + $0x290] sm:$0xf] %v4125
        %4180 = vst [vmem:[#allocation4 + $0x2b4] sm:$0x3] %v4126
        %4181 = vst [vmem:[#allocation4 + $0x2d8] sm:$0xf] %v4130
        %4182 = vst [vmem:[#allocation4 + $0x2fc] sm:$0x3] %v4131
        %4183 = vst [vmem:[#allocation4 + $0x320] sm:$0xf] %v4135
        %4184 = vst [vmem:[#allocation4 + $0x344] sm:$0x3] %v4136
        %s4185 = scalar_lea.vmem [#allocation3], 8
        %v4186 = vld [vmem:[%s4185] sm:$0xf]
        %v4187 = vld [vmem:[%s4185 + $0x4] sm:$0x3]
        %v4188 = vld [vmem:[%s4185 + $0x8] sm:$0xf]
        %v4189 = vld [vmem:[%s4185 + $0xc] sm:$0x3]
        %v4190 = vld [vmem:[%s4185 + $0x10] sm:$0xf]
        %v4191 = vld [vmem:[%s4185 + $0x14] sm:$0x3]
        %v4192 = vld [vmem:[%s4185 + $0x18] sm:$0xf]
        %v4193 = vld [vmem:[%s4185 + $0x1c] sm:$0x3]
        %v4194 = vld [vmem:[%s4185 + $0x20] sm:$0xf]
        %v4195 = vld [vmem:[%s4185 + $0x24] sm:$0x3]
        %v4196 = vld [vmem:[%s4185 + $0x28] sm:$0xf]
        %v4197 = vld [vmem:[%s4185 + $0x2c] sm:$0x3]
        %v4198 = vld [vmem:[%s4185 + $0x30] sm:$0xf]
        %v4199 = vld [vmem:[%s4185 + $0x34] sm:$0x3]
        %v4200 = vld [vmem:[%s4185 + $0x38] sm:$0xf]
        %v4201 = vld [vmem:[%s4185 + $0x3c] sm:$0x3]
        %v4202 = vld [vmem:[%s4185 + $0x40] sm:$0xf]
        %v4203 = vld [vmem:[%s4185 + $0x44] sm:$0x3]
        %v4204 = vld [vmem:[%s4185 + $0x48] sm:$0xf]
        %v4205 = vld [vmem:[%s4185 + $0x4c] sm:$0x3]
        %v4206 = vld [vmem:[%s4185 + $0x50] sm:$0xf]
        %v4207 = vld [vmem:[%s4185 + $0x54] sm:$0x3]
        %v4208 = vld [vmem:[%s4185 + $0x58] sm:$0xf]
        %v4209 = vld [vmem:[%s4185 + $0x5c] sm:$0x3]
        %4210 = vst [vmem:[#allocation4 + $0xc] sm:$0xf] %v4186
        %4211 = vst [vmem:[#allocation4 + $0x30] sm:$0x3] %v4187
        %4212 = vst [vmem:[#allocation4 + $0x54] sm:$0xf] %v4188
        %4213 = vst [vmem:[#allocation4 + $0x78] sm:$0x3] %v4189
        %4214 = vst [vmem:[#allocation4 + $0x9c] sm:$0xf] %v4190
        %4215 = vst [vmem:[#allocation4 + $0xc0] sm:$0x3] %v4191
        %4216 = vst [vmem:[#allocation4 + $0xe4] sm:$0xf] %v4192
        %4217 = vst [vmem:[#allocation4 + $0x108] sm:$0x3] %v4193
        %4218 = vst [vmem:[#allocation4 + $0x12c] sm:$0xf] %v4194
        %4219 = vst [vmem:[#allocation4 + $0x150] sm:$0x3] %v4195
        %4220 = vst [vmem:[#allocation4 + $0x174] sm:$0xf] %v4196
        %4221 = vst [vmem:[#allocation4 + $0x198] sm:$0x3] %v4197
        %4222 = vst [vmem:[#allocation4 + $0x1bc] sm:$0xf] %v4198
        %4223 = vst [vmem:[#allocation4 + $0x1e0] sm:$0x3] %v4199
        %4224 = vst [vmem:[#allocation4 + $0x204] sm:$0xf] %v4200
        %4225 = vst [vmem:[#allocation4 + $0x228] sm:$0x3] %v4201
        %4226 = vst [vmem:[#allocation4 + $0x24c] sm:$0xf] %v4202
        %4227 = vst [vmem:[#allocation4 + $0x270] sm:$0x3] %v4203
        %4228 = vst [vmem:[#allocation4 + $0x294] sm:$0xf] %v4204
        %4229 = vst [vmem:[#allocation4 + $0x2b8] sm:$0x3] %v4205
        %4230 = vst [vmem:[#allocation4 + $0x2dc] sm:$0xf] %v4206
        %4231 = vst [vmem:[#allocation4 + $0x300] sm:$0x3] %v4207
        %4232 = vst [vmem:[#allocation4 + $0x324] sm:$0xf] %v4208
        %4233 = vst [vmem:[#allocation4 + $0x348] sm:$0x3] %v4209
        %v4234 = vld [vmem:[%s4185] sm:$0xf]
        %v4235 = vld [vmem:[%s4185 + $0x4] sm:$0x7]
        %v4236 = vld [vmem:[%s4185 + $0x8] sm:$0xf]
        %v4237 = vld [vmem:[%s4185 + $0xc] sm:$0x7]
        %v4238 = vld [vmem:[%s4185 + $0x10] sm:$0xf]
        %v4239 = vld [vmem:[%s4185 + $0x14] sm:$0x7]
        %v4240 = vld [vmem:[%s4185 + $0x18] sm:$0xf]
        %v4241 = vld [vmem:[%s4185 + $0x1c] sm:$0x7]
        %v4242 = vld [vmem:[%s4185 + $0x20] sm:$0xf]
        %v4243 = vld [vmem:[%s4185 + $0x24] sm:$0x7]
        %v4244 = vld [vmem:[%s4185 + $0x28] sm:$0xf]
        %v4245 = vld [vmem:[%s4185 + $0x2c] sm:$0x7]
        %v4246 = vld [vmem:[%s4185 + $0x30] sm:$0xf]
        %v4247 = vld [vmem:[%s4185 + $0x34] sm:$0x7]
        %v4248 = vld [vmem:[%s4185 + $0x38] sm:$0xf]
        %v4249 = vld [vmem:[%s4185 + $0x3c] sm:$0x7]
        %v4250 = vld [vmem:[%s4185 + $0x40] sm:$0xf]
        %v4251 = vld [vmem:[%s4185 + $0x44] sm:$0x7]
        %v4252 = vld [vmem:[%s4185 + $0x48] sm:$0xf]
        %v4253 = vld [vmem:[%s4185 + $0x4c] sm:$0x7]
        %v4254 = vld [vmem:[%s4185 + $0x50] sm:$0xf]
        %v4255 = vld [vmem:[%s4185 + $0x54] sm:$0x7]
        %v4256 = vld [vmem:[%s4185 + $0x58] sm:$0xf]
        %v4257 = vld [vmem:[%s4185 + $0x5c] sm:$0x7]
        %v4259 = vshrl.u32 %v4234, 16
        %v4261 = vrot.slane %v4259, 4
        %v4262 = vshll.u32 %v4234, 16
        %v4264 = vrot.slane %v4262, 5
        %v4265 = vor.u32 %v4261, %v4264
        %v4266 = vrot.slane %v4265, 4
        %v4268 = vshll.u32 %v4235, 16
        %v4270 = vrot.slane %v4268, 5
        %v4271 = vsel %vm382, %v4266, %v4270
        %v4272 = vshrl.u32 %v4235, 16
        %v4274 = vrot.slane %v4272, 4
        %v4275 = vor.u32 %v4274, %v4270
        %v4276 = vrot.slane %v4275, 4
        %v4278 = vshrl.u32 %v4236, 16
        %v4280 = vrot.slane %v4278, 4
        %v4281 = vshll.u32 %v4236, 16
        %v4283 = vrot.slane %v4281, 5
        %v4284 = vor.u32 %v4280, %v4283
        %v4285 = vrot.slane %v4284, 4
        %v4287 = vshll.u32 %v4237, 16
        %v4289 = vrot.slane %v4287, 5
        %v4290 = vsel %vm382, %v4285, %v4289
        %v4291 = vshrl.u32 %v4237, 16
        %v4293 = vrot.slane %v4291, 4
        %v4294 = vor.u32 %v4293, %v4289
        %v4295 = vrot.slane %v4294, 4
        %v4297 = vshrl.u32 %v4238, 16
        %v4299 = vrot.slane %v4297, 4
        %v4300 = vshll.u32 %v4238, 16
        %v4302 = vrot.slane %v4300, 5
        %v4303 = vor.u32 %v4299, %v4302
        %v4304 = vrot.slane %v4303, 4
        %v4306 = vshll.u32 %v4239, 16
        %v4308 = vrot.slane %v4306, 5
        %v4309 = vsel %vm382, %v4304, %v4308
        %v4310 = vshrl.u32 %v4239, 16
        %v4312 = vrot.slane %v4310, 4
        %v4313 = vor.u32 %v4312, %v4308
        %v4314 = vrot.slane %v4313, 4
        %v4316 = vshrl.u32 %v4240, 16
        %v4318 = vrot.slane %v4316, 4
        %v4319 = vshll.u32 %v4240, 16
        %v4321 = vrot.slane %v4319, 5
        %v4322 = vor.u32 %v4318, %v4321
        %v4323 = vrot.slane %v4322, 4
        %v4325 = vshll.u32 %v4241, 16
        %v4327 = vrot.slane %v4325, 5
        %v4328 = vsel %vm382, %v4323, %v4327
        %v4329 = vshrl.u32 %v4241, 16
        %v4331 = vrot.slane %v4329, 4
        %v4332 = vor.u32 %v4331, %v4327
        %v4333 = vrot.slane %v4332, 4
        %v4335 = vshrl.u32 %v4242, 16
        %v4337 = vrot.slane %v4335, 4
        %v4338 = vshll.u32 %v4242, 16
        %v4340 = vrot.slane %v4338, 5
        %v4341 = vor.u32 %v4337, %v4340
        %v4342 = vrot.slane %v4341, 4
        %v4344 = vshll.u32 %v4243, 16
        %v4346 = vrot.slane %v4344, 5
        %v4347 = vsel %vm382, %v4342, %v4346
        %v4348 = vshrl.u32 %v4243, 16
        %v4350 = vrot.slane %v4348, 4
        %v4351 = vor.u32 %v4350, %v4346
        %v4352 = vrot.slane %v4351, 4
        %v4354 = vshrl.u32 %v4244, 16
        %v4356 = vrot.slane %v4354, 4
        %v4357 = vshll.u32 %v4244, 16
        %v4359 = vrot.slane %v4357, 5
        %v4360 = vor.u32 %v4356, %v4359
        %v4361 = vrot.slane %v4360, 4
        %v4363 = vshll.u32 %v4245, 16
        %v4365 = vrot.slane %v4363, 5
        %v4366 = vsel %vm382, %v4361, %v4365
        %v4367 = vshrl.u32 %v4245, 16
        %v4369 = vrot.slane %v4367, 4
        %v4370 = vor.u32 %v4369, %v4365
        %v4371 = vrot.slane %v4370, 4
        %v4373 = vshrl.u32 %v4246, 16
        %v4375 = vrot.slane %v4373, 4
        %v4376 = vshll.u32 %v4246, 16
        %v4378 = vrot.slane %v4376, 5
        %v4379 = vor.u32 %v4375, %v4378
        %v4380 = vrot.slane %v4379, 4
        %v4382 = vshll.u32 %v4247, 16
        %v4384 = vrot.slane %v4382, 5
        %v4385 = vsel %vm382, %v4380, %v4384
        %v4386 = vshrl.u32 %v4247, 16
        %v4388 = vrot.slane %v4386, 4
        %v4389 = vor.u32 %v4388, %v4384
        %v4390 = vrot.slane %v4389, 4
        %v4392 = vshrl.u32 %v4248, 16
        %v4394 = vrot.slane %v4392, 4
        %v4395 = vshll.u32 %v4248, 16
        %v4397 = vrot.slane %v4395, 5
        %v4398 = vor.u32 %v4394, %v4397
        %v4399 = vrot.slane %v4398, 4
        %v4401 = vshll.u32 %v4249, 16
        %v4403 = vrot.slane %v4401, 5
        %v4404 = vsel %vm382, %v4399, %v4403
        %v4405 = vshrl.u32 %v4249, 16
        %v4407 = vrot.slane %v4405, 4
        %v4408 = vor.u32 %v4407, %v4403
        %v4409 = vrot.slane %v4408, 4
        %v4411 = vshrl.u32 %v4250, 16
        %v4413 = vrot.slane %v4411, 4
        %v4414 = vshll.u32 %v4250, 16
        %v4416 = vrot.slane %v4414, 5
        %v4417 = vor.u32 %v4413, %v4416
        %v4418 = vrot.slane %v4417, 4
        %v4420 = vshll.u32 %v4251, 16
        %v4422 = vrot.slane %v4420, 5
        %v4423 = vsel %vm382, %v4418, %v4422
        %v4424 = vshrl.u32 %v4251, 16
        %v4426 = vrot.slane %v4424, 4
        %v4427 = vor.u32 %v4426, %v4422
        %v4428 = vrot.slane %v4427, 4
        %v4430 = vshrl.u32 %v4252, 16
        %v4432 = vrot.slane %v4430, 4
        %v4433 = vshll.u32 %v4252, 16
        %v4435 = vrot.slane %v4433, 5
        %v4436 = vor.u32 %v4432, %v4435
        %v4437 = vrot.slane %v4436, 4
        %v4439 = vshll.u32 %v4253, 16
        %v4441 = vrot.slane %v4439, 5
        %v4442 = vsel %vm382, %v4437, %v4441
        %v4443 = vshrl.u32 %v4253, 16
        %v4445 = vrot.slane %v4443, 4
        %v4446 = vor.u32 %v4445, %v4441
        %v4447 = vrot.slane %v4446, 4
        %v4449 = vshrl.u32 %v4254, 16
        %v4451 = vrot.slane %v4449, 4
        %v4452 = vshll.u32 %v4254, 16
        %v4454 = vrot.slane %v4452, 5
        %v4455 = vor.u32 %v4451, %v4454
        %v4456 = vrot.slane %v4455, 4
        %v4458 = vshll.u32 %v4255, 16
        %v4460 = vrot.slane %v4458, 5
        %v4461 = vsel %vm382, %v4456, %v4460
        %v4462 = vshrl.u32 %v4255, 16
        %v4464 = vrot.slane %v4462, 4
        %v4465 = vor.u32 %v4464, %v4460
        %v4466 = vrot.slane %v4465, 4
        %v4468 = vshrl.u32 %v4256, 16
        %v4470 = vrot.slane %v4468, 4
        %v4471 = vshll.u32 %v4256, 16
        %v4473 = vrot.slane %v4471, 5
        %v4474 = vor.u32 %v4470, %v4473
        %v4475 = vrot.slane %v4474, 4
        %v4477 = vshll.u32 %v4257, 16
        %v4479 = vrot.slane %v4477, 5
        %v4480 = vsel %vm382, %v4475, %v4479
        %v4481 = vshrl.u32 %v4257, 16
        %v4483 = vrot.slane %v4481, 4
        %v4484 = vor.u32 %v4483, %v4479
        %v4485 = vrot.slane %v4484, 4
        %4510 = vst [vmem:[#allocation4 + $0x10] sm:$0xf] %v4271
        %4511 = vst [vmem:[#allocation4 + $0x34] sm:$0x3] %v4276
        %4512 = vst [vmem:[#allocation4 + $0x58] sm:$0xf] %v4290
        %4513 = vst [vmem:[#allocation4 + $0x7c] sm:$0x3] %v4295
        %4514 = vst [vmem:[#allocation4 + $0xa0] sm:$0xf] %v4309
        %4515 = vst [vmem:[#allocation4 + $0xc4] sm:$0x3] %v4314
        %4516 = vst [vmem:[#allocation4 + $0xe8] sm:$0xf] %v4328
        %4517 = vst [vmem:[#allocation4 + $0x10c] sm:$0x3] %v4333
        %4518 = vst [vmem:[#allocation4 + $0x130] sm:$0xf] %v4347
        %4519 = vst [vmem:[#allocation4 + $0x154] sm:$0x3] %v4352
        %4520 = vst [vmem:[#allocation4 + $0x178] sm:$0xf] %v4366
        %4521 = vst [vmem:[#allocation4 + $0x19c] sm:$0x3] %v4371
        %4522 = vst [vmem:[#allocation4 + $0x1c0] sm:$0xf] %v4385
        %4523 = vst [vmem:[#allocation4 + $0x1e4] sm:$0x3] %v4390
        %4524 = vst [vmem:[#allocation4 + $0x208] sm:$0xf] %v4404
        %4525 = vst [vmem:[#allocation4 + $0x22c] sm:$0x3] %v4409
        %4526 = vst [vmem:[#allocation4 + $0x250] sm:$0xf] %v4423
        %4527 = vst [vmem:[#allocation4 + $0x274] sm:$0x3] %v4428
        %4528 = vst [vmem:[#allocation4 + $0x298] sm:$0xf] %v4442
        %4529 = vst [vmem:[#allocation4 + $0x2bc] sm:$0x3] %v4447
        %4530 = vst [vmem:[#allocation4 + $0x2e0] sm:$0xf] %v4461
        %4531 = vst [vmem:[#allocation4 + $0x304] sm:$0x3] %v4466
        %4532 = vst [vmem:[#allocation4 + $0x328] sm:$0xf] %v4480
        %4533 = vst [vmem:[#allocation4 + $0x34c] sm:$0x3] %v4485
        %v4534 = vld [vmem:[%s4185] sm:$0xe]
        %v4535 = vld [vmem:[%s4185 + $0x4] sm:$0x7]
        %v4536 = vld [vmem:[%s4185 + $0x8] sm:$0xe]
        %v4537 = vld [vmem:[%s4185 + $0xc] sm:$0x7]
        %v4538 = vld [vmem:[%s4185 + $0x10] sm:$0xe]
        %v4539 = vld [vmem:[%s4185 + $0x14] sm:$0x7]
        %v4540 = vld [vmem:[%s4185 + $0x18] sm:$0xe]
        %v4541 = vld [vmem:[%s4185 + $0x1c] sm:$0x7]
        %v4542 = vld [vmem:[%s4185 + $0x20] sm:$0xe]
        %v4543 = vld [vmem:[%s4185 + $0x24] sm:$0x7]
        %v4544 = vld [vmem:[%s4185 + $0x28] sm:$0xe]
        %v4545 = vld [vmem:[%s4185 + $0x2c] sm:$0x7]
        %v4546 = vld [vmem:[%s4185 + $0x30] sm:$0xe]
        %v4547 = vld [vmem:[%s4185 + $0x34] sm:$0x7]
        %v4548 = vld [vmem:[%s4185 + $0x38] sm:$0xe]
        %v4549 = vld [vmem:[%s4185 + $0x3c] sm:$0x7]
        %v4550 = vld [vmem:[%s4185 + $0x40] sm:$0xe]
        %v4551 = vld [vmem:[%s4185 + $0x44] sm:$0x7]
        %v4552 = vld [vmem:[%s4185 + $0x48] sm:$0xe]
        %v4553 = vld [vmem:[%s4185 + $0x4c] sm:$0x7]
        %v4554 = vld [vmem:[%s4185 + $0x50] sm:$0xe]
        %v4555 = vld [vmem:[%s4185 + $0x54] sm:$0x7]
        %v4556 = vld [vmem:[%s4185 + $0x58] sm:$0xe]
        %v4557 = vld [vmem:[%s4185 + $0x5c] sm:$0x7]
        %v4582 = vrot.slane %v4534, 5
        %v4583 = vrot.slane %v4582, 4
        %v4584 = vrot.slane %v4535, 5
        %v4585 = vsel %vm821, %v4583, %v4584
        %v4586 = vrot.slane %v4584, 4
        %v4587 = vrot.slane %v4536, 5
        %v4588 = vrot.slane %v4587, 4
        %v4589 = vrot.slane %v4537, 5
        %v4590 = vsel %vm821, %v4588, %v4589
        %v4591 = vrot.slane %v4589, 4
        %v4592 = vrot.slane %v4538, 5
        %v4593 = vrot.slane %v4592, 4
        %v4594 = vrot.slane %v4539, 5
        %v4595 = vsel %vm821, %v4593, %v4594
        %v4596 = vrot.slane %v4594, 4
        %v4597 = vrot.slane %v4540, 5
        %v4598 = vrot.slane %v4597, 4
        %v4599 = vrot.slane %v4541, 5
        %v4600 = vsel %vm821, %v4598, %v4599
        %v4601 = vrot.slane %v4599, 4
        %v4602 = vrot.slane %v4542, 5
        %v4603 = vrot.slane %v4602, 4
        %v4604 = vrot.slane %v4543, 5
        %v4605 = vsel %vm821, %v4603, %v4604
        %v4606 = vrot.slane %v4604, 4
        %v4607 = vrot.slane %v4544, 5
        %v4608 = vrot.slane %v4607, 4
        %v4609 = vrot.slane %v4545, 5
        %v4610 = vsel %vm821, %v4608, %v4609
        %v4611 = vrot.slane %v4609, 4
        %v4612 = vrot.slane %v4546, 5
        %v4613 = vrot.slane %v4612, 4
        %v4614 = vrot.slane %v4547, 5
        %v4615 = vsel %vm821, %v4613, %v4614
        %v4616 = vrot.slane %v4614, 4
        %v4617 = vrot.slane %v4548, 5
        %v4618 = vrot.slane %v4617, 4
        %v4619 = vrot.slane %v4549, 5
        %v4620 = vsel %vm821, %v4618, %v4619
        %v4621 = vrot.slane %v4619, 4
        %v4622 = vrot.slane %v4550, 5
        %v4623 = vrot.slane %v4622, 4
        %v4624 = vrot.slane %v4551, 5
        %v4625 = vsel %vm821, %v4623, %v4624
        %v4626 = vrot.slane %v4624, 4
        %v4627 = vrot.slane %v4552, 5
        %v4628 = vrot.slane %v4627, 4
        %v4629 = vrot.slane %v4553, 5
        %v4630 = vsel %vm821, %v4628, %v4629
        %v4631 = vrot.slane %v4629, 4
        %v4632 = vrot.slane %v4554, 5
        %v4633 = vrot.slane %v4632, 4
        %v4634 = vrot.slane %v4555, 5
        %v4635 = vsel %vm821, %v4633, %v4634
        %v4636 = vrot.slane %v4634, 4
        %v4637 = vrot.slane %v4556, 5
        %v4638 = vrot.slane %v4637, 4
        %v4639 = vrot.slane %v4557, 5
        %v4640 = vsel %vm821, %v4638, %v4639
        %v4641 = vrot.slane %v4639, 4
        %4666 = vst [vmem:[#allocation4 + $0x14] sm:$0xf] %v4585
        %4667 = vst [vmem:[#allocation4 + $0x38] sm:$0x3] %v4586
        %4668 = vst [vmem:[#allocation4 + $0x5c] sm:$0xf] %v4590
        %4669 = vst [vmem:[#allocation4 + $0x80] sm:$0x3] %v4591
        %4670 = vst [vmem:[#allocation4 + $0xa4] sm:$0xf] %v4595
        %4671 = vst [vmem:[#allocation4 + $0xc8] sm:$0x3] %v4596
        %4672 = vst [vmem:[#allocation4 + $0xec] sm:$0xf] %v4600
        %4673 = vst [vmem:[#allocation4 + $0x110] sm:$0x3] %v4601
        %4674 = vst [vmem:[#allocation4 + $0x134] sm:$0xf] %v4605
        %4675 = vst [vmem:[#allocation4 + $0x158] sm:$0x3] %v4606
        %4676 = vst [vmem:[#allocation4 + $0x17c] sm:$0xf] %v4610
        %4677 = vst [vmem:[#allocation4 + $0x1a0] sm:$0x3] %v4611
        %4678 = vst [vmem:[#allocation4 + $0x1c4] sm:$0xf] %v4615
        %4679 = vst [vmem:[#allocation4 + $0x1e8] sm:$0x3] %v4616
        %4680 = vst [vmem:[#allocation4 + $0x20c] sm:$0xf] %v4620
        %4681 = vst [vmem:[#allocation4 + $0x230] sm:$0x3] %v4621
        %4682 = vst [vmem:[#allocation4 + $0x254] sm:$0xf] %v4625
        %4683 = vst [vmem:[#allocation4 + $0x278] sm:$0x3] %v4626
        %4684 = vst [vmem:[#allocation4 + $0x29c] sm:$0xf] %v4630
        %4685 = vst [vmem:[#allocation4 + $0x2c0] sm:$0x3] %v4631
        %4686 = vst [vmem:[#allocation4 + $0x2e4] sm:$0xf] %v4635
        %4687 = vst [vmem:[#allocation4 + $0x308] sm:$0x3] %v4636
        %4688 = vst [vmem:[#allocation4 + $0x32c] sm:$0xf] %v4640
        %4689 = vst [vmem:[#allocation4 + $0x350] sm:$0x3] %v4641
        %s4690 = scalar_lea.vmem [#allocation3], 16
        %v4691 = vld [vmem:[%s4690] sm:$0xf]
        %v4692 = vld [vmem:[%s4690 + $0x4] sm:$0x3]
        %v4693 = vld [vmem:[%s4690 + $0x8] sm:$0xf]
        %v4694 = vld [vmem:[%s4690 + $0xc] sm:$0x3]
        %v4695 = vld [vmem:[%s4690 + $0x10] sm:$0xf]
        %v4696 = vld [vmem:[%s4690 + $0x14] sm:$0x3]
        %v4697 = vld [vmem:[%s4690 + $0x18] sm:$0xf]
        %v4698 = vld [vmem:[%s4690 + $0x1c] sm:$0x3]
        %v4699 = vld [vmem:[%s4690 + $0x20] sm:$0xf]
        %v4700 = vld [vmem:[%s4690 + $0x24] sm:$0x3]
        %v4701 = vld [vmem:[%s4690 + $0x28] sm:$0xf]
        %v4702 = vld [vmem:[%s4690 + $0x2c] sm:$0x3]
        %v4703 = vld [vmem:[%s4690 + $0x30] sm:$0xf]
        %v4704 = vld [vmem:[%s4690 + $0x34] sm:$0x3]
        %v4705 = vld [vmem:[%s4690 + $0x38] sm:$0xf]
        %v4706 = vld [vmem:[%s4690 + $0x3c] sm:$0x3]
        %v4707 = vld [vmem:[%s4690 + $0x40] sm:$0xf]
        %v4708 = vld [vmem:[%s4690 + $0x44] sm:$0x3]
        %v4709 = vld [vmem:[%s4690 + $0x48] sm:$0xf]
        %v4710 = vld [vmem:[%s4690 + $0x4c] sm:$0x3]
        %v4711 = vld [vmem:[%s4690 + $0x50] sm:$0xf]
        %v4712 = vld [vmem:[%s4690 + $0x54] sm:$0x3]
        %v4713 = vld [vmem:[%s4690 + $0x58] sm:$0xf]
        %v4714 = vld [vmem:[%s4690 + $0x5c] sm:$0x3]
        %4715 = vst [vmem:[#allocation4 + $0x18] sm:$0xf] %v4691
        %4716 = vst [vmem:[#allocation4 + $0x3c] sm:$0x3] %v4692
        %4717 = vst [vmem:[#allocation4 + $0x60] sm:$0xf] %v4693
        %4718 = vst [vmem:[#allocation4 + $0x84] sm:$0x3] %v4694
        %4719 = vst [vmem:[#allocation4 + $0xa8] sm:$0xf] %v4695
        %4720 = vst [vmem:[#allocation4 + $0xcc] sm:$0x3] %v4696
        %4721 = vst [vmem:[#allocation4 + $0xf0] sm:$0xf] %v4697
        %4722 = vst [vmem:[#allocation4 + $0x114] sm:$0x3] %v4698
        %4723 = vst [vmem:[#allocation4 + $0x138] sm:$0xf] %v4699
        %4724 = vst [vmem:[#allocation4 + $0x15c] sm:$0x3] %v4700
        %4725 = vst [vmem:[#allocation4 + $0x180] sm:$0xf] %v4701
        %4726 = vst [vmem:[#allocation4 + $0x1a4] sm:$0x3] %v4702
        %4727 = vst [vmem:[#allocation4 + $0x1c8] sm:$0xf] %v4703
        %4728 = vst [vmem:[#allocation4 + $0x1ec] sm:$0x3] %v4704
        %4729 = vst [vmem:[#allocation4 + $0x210] sm:$0xf] %v4705
        %4730 = vst [vmem:[#allocation4 + $0x234] sm:$0x3] %v4706
        %4731 = vst [vmem:[#allocation4 + $0x258] sm:$0xf] %v4707
        %4732 = vst [vmem:[#allocation4 + $0x27c] sm:$0x3] %v4708
        %4733 = vst [vmem:[#allocation4 + $0x2a0] sm:$0xf] %v4709
        %4734 = vst [vmem:[#allocation4 + $0x2c4] sm:$0x3] %v4710
        %4735 = vst [vmem:[#allocation4 + $0x2e8] sm:$0xf] %v4711
        %4736 = vst [vmem:[#allocation4 + $0x30c] sm:$0x3] %v4712
        %4737 = vst [vmem:[#allocation4 + $0x330] sm:$0xf] %v4713
        %4738 = vst [vmem:[#allocation4 + $0x354] sm:$0x3] %v4714
        %v4739 = vld [vmem:[%s4690] sm:$0xf]
        %v4740 = vld [vmem:[%s4690 + $0x4] sm:$0x7]
        %v4741 = vld [vmem:[%s4690 + $0x8] sm:$0xf]
        %v4742 = vld [vmem:[%s4690 + $0xc] sm:$0x7]
        %v4743 = vld [vmem:[%s4690 + $0x10] sm:$0xf]
        %v4744 = vld [vmem:[%s4690 + $0x14] sm:$0x7]
        %v4745 = vld [vmem:[%s4690 + $0x18] sm:$0xf]
        %v4746 = vld [vmem:[%s4690 + $0x1c] sm:$0x7]
        %v4747 = vld [vmem:[%s4690 + $0x20] sm:$0xf]
        %v4748 = vld [vmem:[%s4690 + $0x24] sm:$0x7]
        %v4749 = vld [vmem:[%s4690 + $0x28] sm:$0xf]
        %v4750 = vld [vmem:[%s4690 + $0x2c] sm:$0x7]
        %v4751 = vld [vmem:[%s4690 + $0x30] sm:$0xf]
        %v4752 = vld [vmem:[%s4690 + $0x34] sm:$0x7]
        %v4753 = vld [vmem:[%s4690 + $0x38] sm:$0xf]
        %v4754 = vld [vmem:[%s4690 + $0x3c] sm:$0x7]
        %v4755 = vld [vmem:[%s4690 + $0x40] sm:$0xf]
        %v4756 = vld [vmem:[%s4690 + $0x44] sm:$0x7]
        %v4757 = vld [vmem:[%s4690 + $0x48] sm:$0xf]
        %v4758 = vld [vmem:[%s4690 + $0x4c] sm:$0x7]
        %v4759 = vld [vmem:[%s4690 + $0x50] sm:$0xf]
        %v4760 = vld [vmem:[%s4690 + $0x54] sm:$0x7]
        %v4761 = vld [vmem:[%s4690 + $0x58] sm:$0xf]
        %v4762 = vld [vmem:[%s4690 + $0x5c] sm:$0x7]
        %v4764 = vshrl.u32 %v4739, 16
        %v4766 = vrot.slane %v4764, 4
        %v4767 = vshll.u32 %v4739, 16
        %v4769 = vrot.slane %v4767, 5
        %v4770 = vor.u32 %v4766, %v4769
        %v4771 = vrot.slane %v4770, 4
        %v4773 = vshll.u32 %v4740, 16
        %v4775 = vrot.slane %v4773, 5
        %v4776 = vsel %vm382, %v4771, %v4775
        %v4777 = vshrl.u32 %v4740, 16
        %v4779 = vrot.slane %v4777, 4
        %v4780 = vor.u32 %v4779, %v4775
        %v4781 = vrot.slane %v4780, 4
        %v4783 = vshrl.u32 %v4741, 16
        %v4785 = vrot.slane %v4783, 4
        %v4786 = vshll.u32 %v4741, 16
        %v4788 = vrot.slane %v4786, 5
        %v4789 = vor.u32 %v4785, %v4788
        %v4790 = vrot.slane %v4789, 4
        %v4792 = vshll.u32 %v4742, 16
        %v4794 = vrot.slane %v4792, 5
        %v4795 = vsel %vm382, %v4790, %v4794
        %v4796 = vshrl.u32 %v4742, 16
        %v4798 = vrot.slane %v4796, 4
        %v4799 = vor.u32 %v4798, %v4794
        %v4800 = vrot.slane %v4799, 4
        %v4802 = vshrl.u32 %v4743, 16
        %v4804 = vrot.slane %v4802, 4
        %v4805 = vshll.u32 %v4743, 16
        %v4807 = vrot.slane %v4805, 5
        %v4808 = vor.u32 %v4804, %v4807
        %v4809 = vrot.slane %v4808, 4
        %v4811 = vshll.u32 %v4744, 16
        %v4813 = vrot.slane %v4811, 5
        %v4814 = vsel %vm382, %v4809, %v4813
        %v4815 = vshrl.u32 %v4744, 16
        %v4817 = vrot.slane %v4815, 4
        %v4818 = vor.u32 %v4817, %v4813
        %v4819 = vrot.slane %v4818, 4
        %v4821 = vshrl.u32 %v4745, 16
        %v4823 = vrot.slane %v4821, 4
        %v4824 = vshll.u32 %v4745, 16
        %v4826 = vrot.slane %v4824, 5
        %v4827 = vor.u32 %v4823, %v4826
        %v4828 = vrot.slane %v4827, 4
        %v4830 = vshll.u32 %v4746, 16
        %v4832 = vrot.slane %v4830, 5
        %v4833 = vsel %vm382, %v4828, %v4832
        %v4834 = vshrl.u32 %v4746, 16
        %v4836 = vrot.slane %v4834, 4
        %v4837 = vor.u32 %v4836, %v4832
        %v4838 = vrot.slane %v4837, 4
        %v4840 = vshrl.u32 %v4747, 16
        %v4842 = vrot.slane %v4840, 4
        %v4843 = vshll.u32 %v4747, 16
        %v4845 = vrot.slane %v4843, 5
        %v4846 = vor.u32 %v4842, %v4845
        %v4847 = vrot.slane %v4846, 4
        %v4849 = vshll.u32 %v4748, 16
        %v4851 = vrot.slane %v4849, 5
        %v4852 = vsel %vm382, %v4847, %v4851
        %v4853 = vshrl.u32 %v4748, 16
        %v4855 = vrot.slane %v4853, 4
        %v4856 = vor.u32 %v4855, %v4851
        %v4857 = vrot.slane %v4856, 4
        %v4859 = vshrl.u32 %v4749, 16
        %v4861 = vrot.slane %v4859, 4
        %v4862 = vshll.u32 %v4749, 16
        %v4864 = vrot.slane %v4862, 5
        %v4865 = vor.u32 %v4861, %v4864
        %v4866 = vrot.slane %v4865, 4
        %v4868 = vshll.u32 %v4750, 16
        %v4870 = vrot.slane %v4868, 5
        %v4871 = vsel %vm382, %v4866, %v4870
        %v4872 = vshrl.u32 %v4750, 16
        %v4874 = vrot.slane %v4872, 4
        %v4875 = vor.u32 %v4874, %v4870
        %v4876 = vrot.slane %v4875, 4
        %v4878 = vshrl.u32 %v4751, 16
        %v4880 = vrot.slane %v4878, 4
        %v4881 = vshll.u32 %v4751, 16
        %v4883 = vrot.slane %v4881, 5
        %v4884 = vor.u32 %v4880, %v4883
        %v4885 = vrot.slane %v4884, 4
        %v4887 = vshll.u32 %v4752, 16
        %v4889 = vrot.slane %v4887, 5
        %v4890 = vsel %vm382, %v4885, %v4889
        %v4891 = vshrl.u32 %v4752, 16
        %v4893 = vrot.slane %v4891, 4
        %v4894 = vor.u32 %v4893, %v4889
        %v4895 = vrot.slane %v4894, 4
        %v4897 = vshrl.u32 %v4753, 16
        %v4899 = vrot.slane %v4897, 4
        %v4900 = vshll.u32 %v4753, 16
        %v4902 = vrot.slane %v4900, 5
        %v4903 = vor.u32 %v4899, %v4902
        %v4904 = vrot.slane %v4903, 4
        %v4906 = vshll.u32 %v4754, 16
        %v4908 = vrot.slane %v4906, 5
        %v4909 = vsel %vm382, %v4904, %v4908
        %v4910 = vshrl.u32 %v4754, 16
        %v4912 = vrot.slane %v4910, 4
        %v4913 = vor.u32 %v4912, %v4908
        %v4914 = vrot.slane %v4913, 4
        %v4916 = vshrl.u32 %v4755, 16
        %v4918 = vrot.slane %v4916, 4
        %v4919 = vshll.u32 %v4755, 16
        %v4921 = vrot.slane %v4919, 5
        %v4922 = vor.u32 %v4918, %v4921
        %v4923 = vrot.slane %v4922, 4
        %v4925 = vshll.u32 %v4756, 16
        %v4927 = vrot.slane %v4925, 5
        %v4928 = vsel %vm382, %v4923, %v4927
        %v4929 = vshrl.u32 %v4756, 16
        %v4931 = vrot.slane %v4929, 4
        %v4932 = vor.u32 %v4931, %v4927
        %v4933 = vrot.slane %v4932, 4
        %v4935 = vshrl.u32 %v4757, 16
        %v4937 = vrot.slane %v4935, 4
        %v4938 = vshll.u32 %v4757, 16
        %v4940 = vrot.slane %v4938, 5
        %v4941 = vor.u32 %v4937, %v4940
        %v4942 = vrot.slane %v4941, 4
        %v4944 = vshll.u32 %v4758, 16
        %v4946 = vrot.slane %v4944, 5
        %v4947 = vsel %vm382, %v4942, %v4946
        %v4948 = vshrl.u32 %v4758, 16
        %v4950 = vrot.slane %v4948, 4
        %v4951 = vor.u32 %v4950, %v4946
        %v4952 = vrot.slane %v4951, 4
        %v4954 = vshrl.u32 %v4759, 16
        %v4956 = vrot.slane %v4954, 4
        %v4957 = vshll.u32 %v4759, 16
        %v4959 = vrot.slane %v4957, 5
        %v4960 = vor.u32 %v4956, %v4959
        %v4961 = vrot.slane %v4960, 4
        %v4963 = vshll.u32 %v4760, 16
        %v4965 = vrot.slane %v4963, 5
        %v4966 = vsel %vm382, %v4961, %v4965
        %v4967 = vshrl.u32 %v4760, 16
        %v4969 = vrot.slane %v4967, 4
        %v4970 = vor.u32 %v4969, %v4965
        %v4971 = vrot.slane %v4970, 4
        %v4973 = vshrl.u32 %v4761, 16
        %v4975 = vrot.slane %v4973, 4
        %v4976 = vshll.u32 %v4761, 16
        %v4978 = vrot.slane %v4976, 5
        %v4979 = vor.u32 %v4975, %v4978
        %v4980 = vrot.slane %v4979, 4
        %v4982 = vshll.u32 %v4762, 16
        %v4984 = vrot.slane %v4982, 5
        %v4985 = vsel %vm382, %v4980, %v4984
        %v4986 = vshrl.u32 %v4762, 16
        %v4988 = vrot.slane %v4986, 4
        %v4989 = vor.u32 %v4988, %v4984
        %v4990 = vrot.slane %v4989, 4
        %5015 = vst [vmem:[#allocation4 + $0x1c] sm:$0xf] %v4776
        %5016 = vst [vmem:[#allocation4 + $0x40] sm:$0x3] %v4781
        %5017 = vst [vmem:[#allocation4 + $0x64] sm:$0xf] %v4795
        %5018 = vst [vmem:[#allocation4 + $0x88] sm:$0x3] %v4800
        %5019 = vst [vmem:[#allocation4 + $0xac] sm:$0xf] %v4814
        %5020 = vst [vmem:[#allocation4 + $0xd0] sm:$0x3] %v4819
        %5021 = vst [vmem:[#allocation4 + $0xf4] sm:$0xf] %v4833
        %5022 = vst [vmem:[#allocation4 + $0x118] sm:$0x3] %v4838
        %5023 = vst [vmem:[#allocation4 + $0x13c] sm:$0xf] %v4852
        %5024 = vst [vmem:[#allocation4 + $0x160] sm:$0x3] %v4857
        %5025 = vst [vmem:[#allocation4 + $0x184] sm:$0xf] %v4871
        %5026 = vst [vmem:[#allocation4 + $0x1a8] sm:$0x3] %v4876
        %5027 = vst [vmem:[#allocation4 + $0x1cc] sm:$0xf] %v4890
        %5028 = vst [vmem:[#allocation4 + $0x1f0] sm:$0x3] %v4895
        %5029 = vst [vmem:[#allocation4 + $0x214] sm:$0xf] %v4909
        %5030 = vst [vmem:[#allocation4 + $0x238] sm:$0x3] %v4914
        %5031 = vst [vmem:[#allocation4 + $0x25c] sm:$0xf] %v4928
        %5032 = vst [vmem:[#allocation4 + $0x280] sm:$0x3] %v4933
        %5033 = vst [vmem:[#allocation4 + $0x2a4] sm:$0xf] %v4947
        %5034 = vst [vmem:[#allocation4 + $0x2c8] sm:$0x3] %v4952
        %5035 = vst [vmem:[#allocation4 + $0x2ec] sm:$0xf] %v4966
        %5036 = vst [vmem:[#allocation4 + $0x310] sm:$0x3] %v4971
        %5037 = vst [vmem:[#allocation4 + $0x334] sm:$0xf] %v4985
        %5038 = vst [vmem:[#allocation4 + $0x358] sm:$0x3] %v4990
        %v5039 = vld [vmem:[%s4690] sm:$0xe]
        %v5040 = vld [vmem:[%s4690 + $0x4] sm:$0x7]
        %v5041 = vld [vmem:[%s4690 + $0x8] sm:$0xe]
        %v5042 = vld [vmem:[%s4690 + $0xc] sm:$0x7]
        %v5043 = vld [vmem:[%s4690 + $0x10] sm:$0xe]
        %v5044 = vld [vmem:[%s4690 + $0x14] sm:$0x7]
        %v5045 = vld [vmem:[%s4690 + $0x18] sm:$0xe]
        %v5046 = vld [vmem:[%s4690 + $0x1c] sm:$0x7]
        %v5047 = vld [vmem:[%s4690 + $0x20] sm:$0xe]
        %v5048 = vld [vmem:[%s4690 + $0x24] sm:$0x7]
        %v5049 = vld [vmem:[%s4690 + $0x28] sm:$0xe]
        %v5050 = vld [vmem:[%s4690 + $0x2c] sm:$0x7]
        %v5051 = vld [vmem:[%s4690 + $0x30] sm:$0xe]
        %v5052 = vld [vmem:[%s4690 + $0x34] sm:$0x7]
        %v5053 = vld [vmem:[%s4690 + $0x38] sm:$0xe]
        %v5054 = vld [vmem:[%s4690 + $0x3c] sm:$0x7]
        %v5055 = vld [vmem:[%s4690 + $0x40] sm:$0xe]
        %v5056 = vld [vmem:[%s4690 + $0x44] sm:$0x7]
        %v5057 = vld [vmem:[%s4690 + $0x48] sm:$0xe]
        %v5058 = vld [vmem:[%s4690 + $0x4c] sm:$0x7]
        %v5059 = vld [vmem:[%s4690 + $0x50] sm:$0xe]
        %v5060 = vld [vmem:[%s4690 + $0x54] sm:$0x7]
        %v5061 = vld [vmem:[%s4690 + $0x58] sm:$0xe]
        %v5062 = vld [vmem:[%s4690 + $0x5c] sm:$0x7]
        %v5087 = vrot.slane %v5039, 5
        %v5088 = vrot.slane %v5087, 4
        %v5089 = vrot.slane %v5040, 5
        %v5090 = vsel %vm821, %v5088, %v5089
        %v5091 = vrot.slane %v5089, 4
        %v5092 = vrot.slane %v5041, 5
        %v5093 = vrot.slane %v5092, 4
        %v5094 = vrot.slane %v5042, 5
        %v5095 = vsel %vm821, %v5093, %v5094
        %v5096 = vrot.slane %v5094, 4
        %v5097 = vrot.slane %v5043, 5
        %v5098 = vrot.slane %v5097, 4
        %v5099 = vrot.slane %v5044, 5
        %v5100 = vsel %vm821, %v5098, %v5099
        %v5101 = vrot.slane %v5099, 4
        %v5102 = vrot.slane %v5045, 5
        %v5103 = vrot.slane %v5102, 4
        %v5104 = vrot.slane %v5046, 5
        %v5105 = vsel %vm821, %v5103, %v5104
        %v5106 = vrot.slane %v5104, 4
        %v5107 = vrot.slane %v5047, 5
        %v5108 = vrot.slane %v5107, 4
        %v5109 = vrot.slane %v5048, 5
        %v5110 = vsel %vm821, %v5108, %v5109
        %v5111 = vrot.slane %v5109, 4
        %v5112 = vrot.slane %v5049, 5
        %v5113 = vrot.slane %v5112, 4
        %v5114 = vrot.slane %v5050, 5
        %v5115 = vsel %vm821, %v5113, %v5114
        %v5116 = vrot.slane %v5114, 4
        %v5117 = vrot.slane %v5051, 5
        %v5118 = vrot.slane %v5117, 4
        %v5119 = vrot.slane %v5052, 5
        %v5120 = vsel %vm821, %v5118, %v5119
        %v5121 = vrot.slane %v5119, 4
        %v5122 = vrot.slane %v5053, 5
        %v5123 = vrot.slane %v5122, 4
        %v5124 = vrot.slane %v5054, 5
        %v5125 = vsel %vm821, %v5123, %v5124
        %v5126 = vrot.slane %v5124, 4
        %v5127 = vrot.slane %v5055, 5
        %v5128 = vrot.slane %v5127, 4
        %v5129 = vrot.slane %v5056, 5
        %v5130 = vsel %vm821, %v5128, %v5129
        %v5131 = vrot.slane %v5129, 4
        %v5132 = vrot.slane %v5057, 5
        %v5133 = vrot.slane %v5132, 4
        %v5134 = vrot.slane %v5058, 5
        %v5135 = vsel %vm821, %v5133, %v5134
        %v5136 = vrot.slane %v5134, 4
        %v5137 = vrot.slane %v5059, 5
        %v5138 = vrot.slane %v5137, 4
        %v5139 = vrot.slane %v5060, 5
        %v5140 = vsel %vm821, %v5138, %v5139
        %v5141 = vrot.slane %v5139, 4
        %v5142 = vrot.slane %v5061, 5
        %v5143 = vrot.slane %v5142, 4
        %v5144 = vrot.slane %v5062, 5
        %v5145 = vsel %vm821, %v5143, %v5144
        %v5146 = vrot.slane %v5144, 4
        %5171 = vst [vmem:[#allocation4 + $0x20] sm:$0xf] %v5090
        %5172 = vst [vmem:[#allocation4 + $0x44] sm:$0x3] %v5091
        %5173 = vst [vmem:[#allocation4 + $0x68] sm:$0xf] %v5095
        %5174 = vst [vmem:[#allocation4 + $0x8c] sm:$0x3] %v5096
        %5175 = vst [vmem:[#allocation4 + $0xb0] sm:$0xf] %v5100
        %5176 = vst [vmem:[#allocation4 + $0xd4] sm:$0x3] %v5101
        %5177 = vst [vmem:[#allocation4 + $0xf8] sm:$0xf] %v5105
        %5178 = vst [vmem:[#allocation4 + $0x11c] sm:$0x3] %v5106
        %5179 = vst [vmem:[#allocation4 + $0x140] sm:$0xf] %v5110
        %5180 = vst [vmem:[#allocation4 + $0x164] sm:$0x3] %v5111
        %5181 = vst [vmem:[#allocation4 + $0x188] sm:$0xf] %v5115
        %5182 = vst [vmem:[#allocation4 + $0x1ac] sm:$0x3] %v5116
        %5183 = vst [vmem:[#allocation4 + $0x1d0] sm:$0xf] %v5120
        %5184 = vst [vmem:[#allocation4 + $0x1f4] sm:$0x3] %v5121
        %5185 = vst [vmem:[#allocation4 + $0x218] sm:$0xf] %v5125
        %5186 = vst [vmem:[#allocation4 + $0x23c] sm:$0x3] %v5126
        %5187 = vst [vmem:[#allocation4 + $0x260] sm:$0xf] %v5130
        %5188 = vst [vmem:[#allocation4 + $0x284] sm:$0x3] %v5131
        %5189 = vst [vmem:[#allocation4 + $0x2a8] sm:$0xf] %v5135
        %5190 = vst [vmem:[#allocation4 + $0x2cc] sm:$0x3] %v5136
        %5191 = vst [vmem:[#allocation4 + $0x2f0] sm:$0xf] %v5140
        %5192 = vst [vmem:[#allocation4 + $0x314] sm:$0x3] %v5141
        %5193 = vst [vmem:[#allocation4 + $0x338] sm:$0xf] %v5145
        %5194 = vst [vmem:[#allocation4 + $0x35c] sm:$0x3] %v5146
        %v5195 = vld [vmem:[#allocation4] sm:$0xff]
        %v5196 = vld [vmem:[#allocation4 + $0x8] sm:$0xff]
        %v5197 = vld [vmem:[#allocation4 + $0x10] sm:$0xff]
        %v5198 = vld [vmem:[#allocation4 + $0x18] sm:$0xff]
        %v5199 = vld [vmem:[#allocation4 + $0x20] sm:$0xf]
        %v5200 = vld [vmem:[#allocation4 + $0x24] sm:$0x33]
        %v5201 = vld [vmem:[#allocation4 + $0x2c] sm:$0x33]
        %v5202 = vld [vmem:[#allocation4 + $0x34] sm:$0x33]
        %v5203 = vld [vmem:[#allocation4 + $0x3c] sm:$0x33]
        %v5204 = vld [vmem:[#allocation4 + $0x44] sm:$0x3]
        %v5205 = vld [vmem:[#allocation4 + $0x48] sm:$0xff]
        %v5206 = vld [vmem:[#allocation4 + $0x50] sm:$0xff]
        %v5207 = vld [vmem:[#allocation4 + $0x58] sm:$0xff]
        %v5208 = vld [vmem:[#allocation4 + $0x60] sm:$0xff]
        %v5209 = vld [vmem:[#allocation4 + $0x68] sm:$0xf]
        %v5210 = vld [vmem:[#allocation4 + $0x6c] sm:$0x33]
        %v5211 = vld [vmem:[#allocation4 + $0x74] sm:$0x33]
        %v5212 = vld [vmem:[#allocation4 + $0x7c] sm:$0x33]
        %v5213 = vld [vmem:[#allocation4 + $0x84] sm:$0x33]
        %v5214 = vld [vmem:[#allocation4 + $0x8c] sm:$0x3]
        %v5215 = vld [vmem:[#allocation4 + $0x90] sm:$0xff]
        %v5216 = vld [vmem:[#allocation4 + $0x98] sm:$0xff]
        %v5217 = vld [vmem:[#allocation4 + $0xa0] sm:$0xff]
        %v5218 = vld [vmem:[#allocation4 + $0xa8] sm:$0xff]
        %v5219 = vld [vmem:[#allocation4 + $0xb0] sm:$0xf]
        %v5220 = vld [vmem:[#allocation4 + $0xb4] sm:$0x33]
        %v5221 = vld [vmem:[#allocation4 + $0xbc] sm:$0x33]
        %v5222 = vld [vmem:[#allocation4 + $0xc4] sm:$0x33]
        %v5223 = vld [vmem:[#allocation4 + $0xcc] sm:$0x33]
        %v5224 = vld [vmem:[#allocation4 + $0xd4] sm:$0x3]
        %v5225 = vld [vmem:[#allocation4 + $0xd8] sm:$0xff]
        %v5226 = vld [vmem:[#allocation4 + $0xe0] sm:$0xff]
        %v5227 = vld [vmem:[#allocation4 + $0xe8] sm:$0xff]
        %v5228 = vld [vmem:[#allocation4 + $0xf0] sm:$0xff]
        %v5229 = vld [vmem:[#allocation4 + $0xf8] sm:$0xf]
        %v5230 = vld [vmem:[#allocation4 + $0xfc] sm:$0x33]
        %v5231 = vld [vmem:[#allocation4 + $0x104] sm:$0x33]
        %v5232 = vld [vmem:[#allocation4 + $0x10c] sm:$0x33]
        %v5233 = vld [vmem:[#allocation4 + $0x114] sm:$0x33]
        %v5234 = vld [vmem:[#allocation4 + $0x11c] sm:$0x3]
        %v5235 = vld [vmem:[#allocation4 + $0x120] sm:$0xff]
        %v5236 = vld [vmem:[#allocation4 + $0x128] sm:$0xff]
        %v5237 = vld [vmem:[#allocation4 + $0x130] sm:$0xff]
        %v5238 = vld [vmem:[#allocation4 + $0x138] sm:$0xff]
        %v5239 = vld [vmem:[#allocation4 + $0x140] sm:$0xf]
        %v5240 = vld [vmem:[#allocation4 + $0x144] sm:$0x33]
        %v5241 = vld [vmem:[#allocation4 + $0x14c] sm:$0x33]
        %v5242 = vld [vmem:[#allocation4 + $0x154] sm:$0x33]
        %v5243 = vld [vmem:[#allocation4 + $0x15c] sm:$0x33]
        %v5244 = vld [vmem:[#allocation4 + $0x164] sm:$0x3]
        %v5245 = vld [vmem:[#allocation4 + $0x168] sm:$0xff]
        %v5246 = vld [vmem:[#allocation4 + $0x170] sm:$0xff]
        %v5247 = vld [vmem:[#allocation4 + $0x178] sm:$0xff]
        %v5248 = vld [vmem:[#allocation4 + $0x180] sm:$0xff]
        %v5249 = vld [vmem:[#allocation4 + $0x188] sm:$0xf]
        %v5250 = vld [vmem:[#allocation4 + $0x18c] sm:$0x33]
        %v5251 = vld [vmem:[#allocation4 + $0x194] sm:$0x33]
        %v5252 = vld [vmem:[#allocation4 + $0x19c] sm:$0x33]
        %v5253 = vld [vmem:[#allocation4 + $0x1a4] sm:$0x33]
        %v5254 = vld [vmem:[#allocation4 + $0x1ac] sm:$0x3]
        %v5255 = vld [vmem:[#allocation4 + $0x1b0] sm:$0xff]
        %v5256 = vld [vmem:[#allocation4 + $0x1b8] sm:$0xff]
        %v5257 = vld [vmem:[#allocation4 + $0x1c0] sm:$0xff]
        %v5258 = vld [vmem:[#allocation4 + $0x1c8] sm:$0xff]
        %v5259 = vld [vmem:[#allocation4 + $0x1d0] sm:$0xf]
        %v5260 = vld [vmem:[#allocation4 + $0x1d4] sm:$0x33]
        %v5261 = vld [vmem:[#allocation4 + $0x1dc] sm:$0x33]
        %v5262 = vld [vmem:[#allocation4 + $0x1e4] sm:$0x33]
        %v5263 = vld [vmem:[#allocation4 + $0x1ec] sm:$0x33]
        %v5264 = vld [vmem:[#allocation4 + $0x1f4] sm:$0x3]
        %v5265 = vld [vmem:[#allocation4 + $0x1f8] sm:$0xff]
        %v5266 = vld [vmem:[#allocation4 + $0x200] sm:$0xff]
        %v5267 = vld [vmem:[#allocation4 + $0x208] sm:$0xff]
        %v5268 = vld [vmem:[#allocation4 + $0x210] sm:$0xff]
        %v5269 = vld [vmem:[#allocation4 + $0x218] sm:$0xf]
        %v5270 = vld [vmem:[#allocation4 + $0x21c] sm:$0x33]
        %v5271 = vld [vmem:[#allocation4 + $0x224] sm:$0x33]
        %v5272 = vld [vmem:[#allocation4 + $0x22c] sm:$0x33]
        %v5273 = vld [vmem:[#allocation4 + $0x234] sm:$0x33]
        %v5274 = vld [vmem:[#allocation4 + $0x23c] sm:$0x3]
        %v5275 = vld [vmem:[#allocation4 + $0x240] sm:$0xff]
        %v5276 = vld [vmem:[#allocation4 + $0x248] sm:$0xff]
        %v5277 = vld [vmem:[#allocation4 + $0x250] sm:$0xff]
        %v5278 = vld [vmem:[#allocation4 + $0x258] sm:$0xff]
        %v5279 = vld [vmem:[#allocation4 + $0x260] sm:$0xf]
        %v5280 = vld [vmem:[#allocation4 + $0x264] sm:$0x33]
        %v5281 = vld [vmem:[#allocation4 + $0x26c] sm:$0x33]
        %v5282 = vld [vmem:[#allocation4 + $0x274] sm:$0x33]
        %v5283 = vld [vmem:[#allocation4 + $0x27c] sm:$0x33]
        %v5284 = vld [vmem:[#allocation4 + $0x284] sm:$0x3]
        %v5285 = vld [vmem:[#allocation4 + $0x288] sm:$0xff]
        %v5286 = vld [vmem:[#allocation4 + $0x290] sm:$0xff]
        %v5287 = vld [vmem:[#allocation4 + $0x298] sm:$0xff]
        %v5288 = vld [vmem:[#allocation4 + $0x2a0] sm:$0xff]
        %v5289 = vld [vmem:[#allocation4 + $0x2a8] sm:$0xf]
        %v5290 = vld [vmem:[#allocation4 + $0x2ac] sm:$0x33]
        %v5291 = vld [vmem:[#allocation4 + $0x2b4] sm:$0x33]
        %v5292 = vld [vmem:[#allocation4 + $0x2bc] sm:$0x33]
        %v5293 = vld [vmem:[#allocation4 + $0x2c4] sm:$0x33]
        %v5294 = vld [vmem:[#allocation4 + $0x2cc] sm:$0x3]
        %v5295 = vld [vmem:[#allocation4 + $0x2d0] sm:$0xff]
        %v5296 = vld [vmem:[#allocation4 + $0x2d8] sm:$0xff]
        %v5297 = vld [vmem:[#allocation4 + $0x2e0] sm:$0xff]
        %v5298 = vld [vmem:[#allocation4 + $0x2e8] sm:$0xff]
        %v5299 = vld [vmem:[#allocation4 + $0x2f0] sm:$0xf]
        %v5300 = vld [vmem:[#allocation4 + $0x2f4] sm:$0x33]
        %v5301 = vld [vmem:[#allocation4 + $0x2fc] sm:$0x33]
        %v5302 = vld [vmem:[#allocation4 + $0x304] sm:$0x33]
        %v5303 = vld [vmem:[#allocation4 + $0x30c] sm:$0x33]
        %v5304 = vld [vmem:[#allocation4 + $0x314] sm:$0x3]
        %v5305 = vld [vmem:[#allocation4 + $0x318] sm:$0xff]
        %v5306 = vld [vmem:[#allocation4 + $0x320] sm:$0xff]
        %v5307 = vld [vmem:[#allocation4 + $0x328] sm:$0xff]
        %v5308 = vld [vmem:[#allocation4 + $0x330] sm:$0xff]
        %v5309 = vld [vmem:[#allocation4 + $0x338] sm:$0xf]
        %v5310 = vld [vmem:[#allocation4 + $0x33c] sm:$0x33]
        %v5311 = vld [vmem:[#allocation4 + $0x344] sm:$0x33]
        %v5312 = vld [vmem:[#allocation4 + $0x34c] sm:$0x33]
        %v5313 = vld [vmem:[#allocation4 + $0x354] sm:$0x33]
        %v5314 = vld [vmem:[#allocation4 + $0x35c] sm:$0x3]
        %v5435 = vrot.slane %v5195, 2
        %v5436 = vrot.slane %v5196, 4
        %v5437 = vrot.slane %v5196, 6
        %v5438 = vrot.slane %v5197, 2
        %v5439 = vrot.slane %v5198, 4
        %v5440 = vrot.slane %v5198, 6
        %v5441 = vrot.slane %v5199, 2
        %v5442 = vrot.slane %v5200, 2
        %v5443 = vrot.slane %v5201, 4
        %v5444 = vrot.slane %v5201, 6
        %v5445 = vrot.slane %v5202, 2
        %v5446 = vrot.slane %v5203, 4
        %v5447 = vrot.slane %v5203, 6
        %v5448 = vrot.slane %v5204, 2
        %v5449 = vrot.slane %v5205, 2
        %v5450 = vrot.slane %v5206, 4
        %v5451 = vrot.slane %v5206, 6
        %v5452 = vrot.slane %v5207, 2
        %v5453 = vrot.slane %v5208, 4
        %v5454 = vrot.slane %v5208, 6
        %v5455 = vrot.slane %v5209, 2
        %v5456 = vrot.slane %v5210, 2
        %v5457 = vrot.slane %v5211, 4
        %v5458 = vrot.slane %v5211, 6
        %v5459 = vrot.slane %v5212, 2
        %v5460 = vrot.slane %v5213, 4
        %v5461 = vrot.slane %v5213, 6
        %v5462 = vrot.slane %v5214, 2
        %v5463 = vrot.slane %v5215, 2
        %v5464 = vrot.slane %v5216, 4
        %v5465 = vrot.slane %v5216, 6
        %v5466 = vrot.slane %v5217, 2
        %v5467 = vrot.slane %v5218, 4
        %v5468 = vrot.slane %v5218, 6
        %v5469 = vrot.slane %v5219, 2
        %v5470 = vrot.slane %v5220, 2
        %v5471 = vrot.slane %v5221, 4
        %v5472 = vrot.slane %v5221, 6
        %v5473 = vrot.slane %v5222, 2
        %v5474 = vrot.slane %v5223, 4
        %v5475 = vrot.slane %v5223, 6
        %v5476 = vrot.slane %v5224, 2
        %v5477 = vrot.slane %v5225, 2
        %v5478 = vrot.slane %v5226, 4
        %v5479 = vrot.slane %v5226, 6
        %v5480 = vrot.slane %v5227, 2
        %v5481 = vrot.slane %v5228, 4
        %v5482 = vrot.slane %v5228, 6
        %v5483 = vrot.slane %v5229, 2
        %v5484 = vrot.slane %v5230, 2
        %v5485 = vrot.slane %v5231, 4
        %v5486 = vrot.slane %v5231, 6
        %v5487 = vrot.slane %v5232, 2
        %v5488 = vrot.slane %v5233, 4
        %v5489 = vrot.slane %v5233, 6
        %v5490 = vrot.slane %v5234, 2
        %v5491 = vrot.slane %v5235, 2
        %v5492 = vrot.slane %v5236, 4
        %v5493 = vrot.slane %v5236, 6
        %v5494 = vrot.slane %v5237, 2
        %v5495 = vrot.slane %v5238, 4
        %v5496 = vrot.slane %v5238, 6
        %v5497 = vrot.slane %v5239, 2
        %v5498 = vrot.slane %v5240, 2
        %v5499 = vrot.slane %v5241, 4
        %v5500 = vrot.slane %v5241, 6
        %v5501 = vrot.slane %v5242, 2
        %v5502 = vrot.slane %v5243, 4
        %v5503 = vrot.slane %v5243, 6
        %v5504 = vrot.slane %v5244, 2
        %v5505 = vrot.slane %v5245, 2
        %v5506 = vrot.slane %v5246, 4
        %v5507 = vrot.slane %v5246, 6
        %v5508 = vrot.slane %v5247, 2
        %v5509 = vrot.slane %v5248, 4
        %v5510 = vrot.slane %v5248, 6
        %v5511 = vrot.slane %v5249, 2
        %v5512 = vrot.slane %v5250, 2
        %v5513 = vrot.slane %v5251, 4
        %v5514 = vrot.slane %v5251, 6
        %v5515 = vrot.slane %v5252, 2
        %v5516 = vrot.slane %v5253, 4
        %v5517 = vrot.slane %v5253, 6
        %v5518 = vrot.slane %v5254, 2
        %v5519 = vrot.slane %v5255, 2
        %v5520 = vrot.slane %v5256, 4
        %v5521 = vrot.slane %v5256, 6
        %v5522 = vrot.slane %v5257, 2
        %v5523 = vrot.slane %v5258, 4
        %v5524 = vrot.slane %v5258, 6
        %v5525 = vrot.slane %v5259, 2
        %v5526 = vrot.slane %v5260, 2
        %v5527 = vrot.slane %v5261, 4
        %v5528 = vrot.slane %v5261, 6
        %v5529 = vrot.slane %v5262, 2
        %v5530 = vrot.slane %v5263, 4
        %v5531 = vrot.slane %v5263, 6
        %v5532 = vrot.slane %v5264, 2
        %v5533 = vrot.slane %v5265, 2
        %v5534 = vrot.slane %v5266, 4
        %v5535 = vrot.slane %v5266, 6
        %v5536 = vrot.slane %v5267, 2
        %v5537 = vrot.slane %v5268, 4
        %v5538 = vrot.slane %v5268, 6
        %v5539 = vrot.slane %v5269, 2
        %v5540 = vrot.slane %v5270, 2
        %v5541 = vrot.slane %v5271, 4
        %v5542 = vrot.slane %v5271, 6
        %v5543 = vrot.slane %v5272, 2
        %v5544 = vrot.slane %v5273, 4
        %v5545 = vrot.slane %v5273, 6
        %v5546 = vrot.slane %v5274, 2
        %v5547 = vrot.slane %v5275, 2
        %v5548 = vrot.slane %v5276, 4
        %v5549 = vrot.slane %v5276, 6
        %v5550 = vrot.slane %v5277, 2
        %v5551 = vrot.slane %v5278, 4
        %v5552 = vrot.slane %v5278, 6
        %v5553 = vrot.slane %v5279, 2
        %v5554 = vrot.slane %v5280, 2
        %v5555 = vrot.slane %v5281, 4
        %v5556 = vrot.slane %v5281, 6
        %v5557 = vrot.slane %v5282, 2
        %v5558 = vrot.slane %v5283, 4
        %v5559 = vrot.slane %v5283, 6
        %v5560 = vrot.slane %v5284, 2
        %v5561 = vrot.slane %v5285, 2
        %v5562 = vrot.slane %v5286, 4
        %v5563 = vrot.slane %v5286, 6
        %v5564 = vrot.slane %v5287, 2
        %v5565 = vrot.slane %v5288, 4
        %v5566 = vrot.slane %v5288, 6
        %v5567 = vrot.slane %v5289, 2
        %v5568 = vrot.slane %v5290, 2
        %v5569 = vrot.slane %v5291, 4
        %v5570 = vrot.slane %v5291, 6
        %v5571 = vrot.slane %v5292, 2
        %v5572 = vrot.slane %v5293, 4
        %v5573 = vrot.slane %v5293, 6
        %v5574 = vrot.slane %v5294, 2
        %v5575 = vrot.slane %v5295, 2
        %v5576 = vrot.slane %v5296, 4
        %v5577 = vrot.slane %v5296, 6
        %v5578 = vrot.slane %v5297, 2
        %v5579 = vrot.slane %v5298, 4
        %v5580 = vrot.slane %v5298, 6
        %v5581 = vrot.slane %v5299, 2
        %v5582 = vrot.slane %v5300, 2
        %v5583 = vrot.slane %v5301, 4
        %v5584 = vrot.slane %v5301, 6
        %v5585 = vrot.slane %v5302, 2
        %v5586 = vrot.slane %v5303, 4
        %v5587 = vrot.slane %v5303, 6
        %v5588 = vrot.slane %v5304, 2
        %v5589 = vrot.slane %v5305, 2
        %v5590 = vrot.slane %v5306, 4
        %v5591 = vrot.slane %v5306, 6
        %v5592 = vrot.slane %v5307, 2
        %v5593 = vrot.slane %v5308, 4
        %v5594 = vrot.slane %v5308, 6
        %v5595 = vrot.slane %v5309, 2
        %v5596 = vrot.slane %v5310, 2
        %v5597 = vrot.slane %v5311, 4
        %v5598 = vrot.slane %v5311, 6
        %v5599 = vrot.slane %v5312, 2
        %v5600 = vrot.slane %v5313, 4
        %v5601 = vrot.slane %v5313, 6
        %v5602 = vrot.slane %v5314, 2
        %v5605 = vsel %vm3265, %v5195, %v5435
        %vm5606 = vcmask 1045508
        %v5609 = vsel %vm5606, %v5436, %v5437
        %vm5610 = vcmask 1043456
        %v5611 = vsel %vm5610, %v5605, %v5609
        %v5614 = vsel %vm3265, %v5197, %v5438
        %v5617 = vsel %vm5606, %v5439, %v5440
        %v5618 = vsel %vm5610, %v5614, %v5617
        %v5621 = vsel %vm3265, %v5199, %v5441
        %vm5622 = vcmask 1043458
        %v5623 = vsel %vm5622, %v5195, %v5435
        %vm5624 = vcmask 1045504
        %v5625 = vsel %vm5624, %v5437, %v5436
        %vm5626 = vcmask 1045506
        %v5627 = vsel %vm5626, %v5623, %v5625
        %v5629 = vrot.slane %v5627, 2
        %v5630 = vsel %vm5622, %v5197, %v5438
        %v5631 = vsel %vm5624, %v5440, %v5439
        %v5632 = vsel %vm5626, %v5630, %v5631
        %v5634 = vrot.slane %v5632, 2
        %v5635 = vsel %vm5622, %v5199, %v5441
        %v5637 = vrot.slane %v5635, 2
        %v5640 = vsel %vm3265, %v5200, %v5442
        %v5643 = vsel %vm5606, %v5443, %v5444
        %v5644 = vsel %vm5610, %v5640, %v5643
        %v5647 = vsel %vm3265, %v5202, %v5445
        %v5650 = vsel %vm5606, %v5446, %v5447
        %v5651 = vsel %vm5610, %v5647, %v5650
        %v5654 = vsel %vm3265, %v5204, %v5448
        %v5657 = vsel %vm3265, %v5205, %v5449
        %v5660 = vsel %vm5606, %v5450, %v5451
        %v5661 = vsel %vm5610, %v5657, %v5660
        %v5664 = vsel %vm3265, %v5207, %v5452
        %v5667 = vsel %vm5606, %v5453, %v5454
        %v5668 = vsel %vm5610, %v5664, %v5667
        %v5671 = vsel %vm3265, %v5209, %v5455
        %v5672 = vsel %vm5622, %v5205, %v5449
        %v5673 = vsel %vm5624, %v5451, %v5450
        %v5674 = vsel %vm5626, %v5672, %v5673
        %v5676 = vrot.slane %v5674, 2
        %v5677 = vsel %vm5622, %v5207, %v5452
        %v5678 = vsel %vm5624, %v5454, %v5453
        %v5679 = vsel %vm5626, %v5677, %v5678
        %v5681 = vrot.slane %v5679, 2
        %v5682 = vsel %vm5622, %v5209, %v5455
        %v5684 = vrot.slane %v5682, 2
        %v5687 = vsel %vm3265, %v5210, %v5456
        %v5690 = vsel %vm5606, %v5457, %v5458
        %v5691 = vsel %vm5610, %v5687, %v5690
        %v5694 = vsel %vm3265, %v5212, %v5459
        %v5697 = vsel %vm5606, %v5460, %v5461
        %v5698 = vsel %vm5610, %v5694, %v5697
        %v5701 = vsel %vm3265, %v5214, %v5462
        %v5704 = vsel %vm3265, %v5215, %v5463
        %v5707 = vsel %vm5606, %v5464, %v5465
        %v5708 = vsel %vm5610, %v5704, %v5707
        %v5711 = vsel %vm3265, %v5217, %v5466
        %v5714 = vsel %vm5606, %v5467, %v5468
        %v5715 = vsel %vm5610, %v5711, %v5714
        %v5718 = vsel %vm3265, %v5219, %v5469
        %v5719 = vsel %vm5622, %v5215, %v5463
        %v5720 = vsel %vm5624, %v5465, %v5464
        %v5721 = vsel %vm5626, %v5719, %v5720
        %v5723 = vrot.slane %v5721, 2
        %v5724 = vsel %vm5622, %v5217, %v5466
        %v5725 = vsel %vm5624, %v5468, %v5467
        %v5726 = vsel %vm5626, %v5724, %v5725
        %v5728 = vrot.slane %v5726, 2
        %v5729 = vsel %vm5622, %v5219, %v5469
        %v5731 = vrot.slane %v5729, 2
        %v5734 = vsel %vm3265, %v5220, %v5470
        %v5737 = vsel %vm5606, %v5471, %v5472
        %v5738 = vsel %vm5610, %v5734, %v5737
        %v5741 = vsel %vm3265, %v5222, %v5473
        %v5744 = vsel %vm5606, %v5474, %v5475
        %v5745 = vsel %vm5610, %v5741, %v5744
        %v5748 = vsel %vm3265, %v5224, %v5476
        %v5751 = vsel %vm3265, %v5225, %v5477
        %v5754 = vsel %vm5606, %v5478, %v5479
        %v5755 = vsel %vm5610, %v5751, %v5754
        %v5758 = vsel %vm3265, %v5227, %v5480
        %v5761 = vsel %vm5606, %v5481, %v5482
        %v5762 = vsel %vm5610, %v5758, %v5761
        %v5765 = vsel %vm3265, %v5229, %v5483
        %v5766 = vsel %vm5622, %v5225, %v5477
        %v5767 = vsel %vm5624, %v5479, %v5478
        %v5768 = vsel %vm5626, %v5766, %v5767
        %v5770 = vrot.slane %v5768, 2
        %v5771 = vsel %vm5622, %v5227, %v5480
        %v5772 = vsel %vm5624, %v5482, %v5481
        %v5773 = vsel %vm5626, %v5771, %v5772
        %v5775 = vrot.slane %v5773, 2
        %v5776 = vsel %vm5622, %v5229, %v5483
        %v5778 = vrot.slane %v5776, 2
        %v5781 = vsel %vm3265, %v5230, %v5484
        %v5784 = vsel %vm5606, %v5485, %v5486
        %v5785 = vsel %vm5610, %v5781, %v5784
        %v5788 = vsel %vm3265, %v5232, %v5487
        %v5791 = vsel %vm5606, %v5488, %v5489
        %v5792 = vsel %vm5610, %v5788, %v5791
        %v5795 = vsel %vm3265, %v5234, %v5490
        %v5798 = vsel %vm3265, %v5235, %v5491
        %v5801 = vsel %vm5606, %v5492, %v5493
        %v5802 = vsel %vm5610, %v5798, %v5801
        %v5805 = vsel %vm3265, %v5237, %v5494
        %v5808 = vsel %vm5606, %v5495, %v5496
        %v5809 = vsel %vm5610, %v5805, %v5808
        %v5812 = vsel %vm3265, %v5239, %v5497
        %v5813 = vsel %vm5622, %v5235, %v5491
        %v5814 = vsel %vm5624, %v5493, %v5492
        %v5815 = vsel %vm5626, %v5813, %v5814
        %v5817 = vrot.slane %v5815, 2
        %v5818 = vsel %vm5622, %v5237, %v5494
        %v5819 = vsel %vm5624, %v5496, %v5495
        %v5820 = vsel %vm5626, %v5818, %v5819
        %v5822 = vrot.slane %v5820, 2
        %v5823 = vsel %vm5622, %v5239, %v5497
        %v5825 = vrot.slane %v5823, 2
        %v5828 = vsel %vm3265, %v5240, %v5498
        %v5831 = vsel %vm5606, %v5499, %v5500
        %v5832 = vsel %vm5610, %v5828, %v5831
        %v5835 = vsel %vm3265, %v5242, %v5501
        %v5838 = vsel %vm5606, %v5502, %v5503
        %v5839 = vsel %vm5610, %v5835, %v5838
        %v5842 = vsel %vm3265, %v5244, %v5504
        %v5845 = vsel %vm3265, %v5245, %v5505
        %v5848 = vsel %vm5606, %v5506, %v5507
        %v5849 = vsel %vm5610, %v5845, %v5848
        %v5852 = vsel %vm3265, %v5247, %v5508
        %v5855 = vsel %vm5606, %v5509, %v5510
        %v5856 = vsel %vm5610, %v5852, %v5855
        %v5859 = vsel %vm3265, %v5249, %v5511
        %v5860 = vsel %vm5622, %v5245, %v5505
        %v5861 = vsel %vm5624, %v5507, %v5506
        %v5862 = vsel %vm5626, %v5860, %v5861
        %v5864 = vrot.slane %v5862, 2
        %v5865 = vsel %vm5622, %v5247, %v5508
        %v5866 = vsel %vm5624, %v5510, %v5509
        %v5867 = vsel %vm5626, %v5865, %v5866
        %v5869 = vrot.slane %v5867, 2
        %v5870 = vsel %vm5622, %v5249, %v5511
        %v5872 = vrot.slane %v5870, 2
        %v5875 = vsel %vm3265, %v5250, %v5512
        %v5878 = vsel %vm5606, %v5513, %v5514
        %v5879 = vsel %vm5610, %v5875, %v5878
        %v5882 = vsel %vm3265, %v5252, %v5515
        %v5885 = vsel %vm5606, %v5516, %v5517
        %v5886 = vsel %vm5610, %v5882, %v5885
        %v5889 = vsel %vm3265, %v5254, %v5518
        %v5892 = vsel %vm3265, %v5255, %v5519
        %v5895 = vsel %vm5606, %v5520, %v5521
        %v5896 = vsel %vm5610, %v5892, %v5895
        %v5899 = vsel %vm3265, %v5257, %v5522
        %v5902 = vsel %vm5606, %v5523, %v5524
        %v5903 = vsel %vm5610, %v5899, %v5902
        %v5906 = vsel %vm3265, %v5259, %v5525
        %v5907 = vsel %vm5622, %v5255, %v5519
        %v5908 = vsel %vm5624, %v5521, %v5520
        %v5909 = vsel %vm5626, %v5907, %v5908
        %v5911 = vrot.slane %v5909, 2
        %v5912 = vsel %vm5622, %v5257, %v5522
        %v5913 = vsel %vm5624, %v5524, %v5523
        %v5914 = vsel %vm5626, %v5912, %v5913
        %v5916 = vrot.slane %v5914, 2
        %v5917 = vsel %vm5622, %v5259, %v5525
        %v5919 = vrot.slane %v5917, 2
        %v5922 = vsel %vm3265, %v5260, %v5526
        %v5925 = vsel %vm5606, %v5527, %v5528
        %v5926 = vsel %vm5610, %v5922, %v5925
        %v5929 = vsel %vm3265, %v5262, %v5529
        %v5932 = vsel %vm5606, %v5530, %v5531
        %v5933 = vsel %vm5610, %v5929, %v5932
        %v5936 = vsel %vm3265, %v5264, %v5532
        %v5939 = vsel %vm3265, %v5265, %v5533
        %v5942 = vsel %vm5606, %v5534, %v5535
        %v5943 = vsel %vm5610, %v5939, %v5942
        %v5946 = vsel %vm3265, %v5267, %v5536
        %v5949 = vsel %vm5606, %v5537, %v5538
        %v5950 = vsel %vm5610, %v5946, %v5949
        %v5953 = vsel %vm3265, %v5269, %v5539
        %v5954 = vsel %vm5622, %v5265, %v5533
        %v5955 = vsel %vm5624, %v5535, %v5534
        %v5956 = vsel %vm5626, %v5954, %v5955
        %v5958 = vrot.slane %v5956, 2
        %v5959 = vsel %vm5622, %v5267, %v5536
        %v5960 = vsel %vm5624, %v5538, %v5537
        %v5961 = vsel %vm5626, %v5959, %v5960
        %v5963 = vrot.slane %v5961, 2
        %v5964 = vsel %vm5622, %v5269, %v5539
        %v5966 = vrot.slane %v5964, 2
        %v5969 = vsel %vm3265, %v5270, %v5540
        %v5972 = vsel %vm5606, %v5541, %v5542
        %v5973 = vsel %vm5610, %v5969, %v5972
        %v5976 = vsel %vm3265, %v5272, %v5543
        %v5979 = vsel %vm5606, %v5544, %v5545
        %v5980 = vsel %vm5610, %v5976, %v5979
        %v5983 = vsel %vm3265, %v5274, %v5546
        %v5986 = vsel %vm3265, %v5275, %v5547
        %v5989 = vsel %vm5606, %v5548, %v5549
        %v5990 = vsel %vm5610, %v5986, %v5989
        %v5993 = vsel %vm3265, %v5277, %v5550
        %v5996 = vsel %vm5606, %v5551, %v5552
        %v5997 = vsel %vm5610, %v5993, %v5996
        %v6000 = vsel %vm3265, %v5279, %v5553
        %v6001 = vsel %vm5622, %v5275, %v5547
        %v6002 = vsel %vm5624, %v5549, %v5548
        %v6003 = vsel %vm5626, %v6001, %v6002
        %v6005 = vrot.slane %v6003, 2
        %v6006 = vsel %vm5622, %v5277, %v5550
        %v6007 = vsel %vm5624, %v5552, %v5551
        %v6008 = vsel %vm5626, %v6006, %v6007
        %v6010 = vrot.slane %v6008, 2
        %v6011 = vsel %vm5622, %v5279, %v5553
        %v6013 = vrot.slane %v6011, 2
        %v6016 = vsel %vm3265, %v5280, %v5554
        %v6019 = vsel %vm5606, %v5555, %v5556
        %v6020 = vsel %vm5610, %v6016, %v6019
        %v6023 = vsel %vm3265, %v5282, %v5557
        %v6026 = vsel %vm5606, %v5558, %v5559
        %v6027 = vsel %vm5610, %v6023, %v6026
        %v6030 = vsel %vm3265, %v5284, %v5560
        %v6033 = vsel %vm3265, %v5285, %v5561
        %v6036 = vsel %vm5606, %v5562, %v5563
        %v6037 = vsel %vm5610, %v6033, %v6036
        %v6040 = vsel %vm3265, %v5287, %v5564
        %v6043 = vsel %vm5606, %v5565, %v5566
        %v6044 = vsel %vm5610, %v6040, %v6043
        %v6047 = vsel %vm3265, %v5289, %v5567
        %v6048 = vsel %vm5622, %v5285, %v5561
        %v6049 = vsel %vm5624, %v5563, %v5562
        %v6050 = vsel %vm5626, %v6048, %v6049
        %v6052 = vrot.slane %v6050, 2
        %v6053 = vsel %vm5622, %v5287, %v5564
        %v6054 = vsel %vm5624, %v5566, %v5565
        %v6055 = vsel %vm5626, %v6053, %v6054
        %v6057 = vrot.slane %v6055, 2
        %v6058 = vsel %vm5622, %v5289, %v5567
        %v6060 = vrot.slane %v6058, 2
        %v6063 = vsel %vm3265, %v5290, %v5568
        %v6066 = vsel %vm5606, %v5569, %v5570
        %v6067 = vsel %vm5610, %v6063, %v6066
        %v6070 = vsel %vm3265, %v5292, %v5571
        %v6073 = vsel %vm5606, %v5572, %v5573
        %v6074 = vsel %vm5610, %v6070, %v6073
        %v6077 = vsel %vm3265, %v5294, %v5574
        %v6080 = vsel %vm3265, %v5295, %v5575
        %v6083 = vsel %vm5606, %v5576, %v5577
        %v6084 = vsel %vm5610, %v6080, %v6083
        %v6087 = vsel %vm3265, %v5297, %v5578
        %v6090 = vsel %vm5606, %v5579, %v5580
        %v6091 = vsel %vm5610, %v6087, %v6090
        %v6094 = vsel %vm3265, %v5299, %v5581
        %v6095 = vsel %vm5622, %v5295, %v5575
        %v6096 = vsel %vm5624, %v5577, %v5576
        %v6097 = vsel %vm5626, %v6095, %v6096
        %v6099 = vrot.slane %v6097, 2
        %v6100 = vsel %vm5622, %v5297, %v5578
        %v6101 = vsel %vm5624, %v5580, %v5579
        %v6102 = vsel %vm5626, %v6100, %v6101
        %v6104 = vrot.slane %v6102, 2
        %v6105 = vsel %vm5622, %v5299, %v5581
        %v6107 = vrot.slane %v6105, 2
        %v6110 = vsel %vm3265, %v5300, %v5582
        %v6113 = vsel %vm5606, %v5583, %v5584
        %v6114 = vsel %vm5610, %v6110, %v6113
        %v6117 = vsel %vm3265, %v5302, %v5585
        %v6120 = vsel %vm5606, %v5586, %v5587
        %v6121 = vsel %vm5610, %v6117, %v6120
        %v6124 = vsel %vm3265, %v5304, %v5588
        %v6127 = vsel %vm3265, %v5305, %v5589
        %v6130 = vsel %vm5606, %v5590, %v5591
        %v6131 = vsel %vm5610, %v6127, %v6130
        %v6134 = vsel %vm3265, %v5307, %v5592
        %v6137 = vsel %vm5606, %v5593, %v5594
        %v6138 = vsel %vm5610, %v6134, %v6137
        %v6141 = vsel %vm3265, %v5309, %v5595
        %v6142 = vsel %vm5622, %v5305, %v5589
        %v6143 = vsel %vm5624, %v5591, %v5590
        %v6144 = vsel %vm5626, %v6142, %v6143
        %v6146 = vrot.slane %v6144, 2
        %v6147 = vsel %vm5622, %v5307, %v5592
        %v6148 = vsel %vm5624, %v5594, %v5593
        %v6149 = vsel %vm5626, %v6147, %v6148
        %v6151 = vrot.slane %v6149, 2
        %v6152 = vsel %vm5622, %v5309, %v5595
        %v6154 = vrot.slane %v6152, 2
        %v6157 = vsel %vm3265, %v5310, %v5596
        %v6160 = vsel %vm5606, %v5597, %v5598
        %v6161 = vsel %vm5610, %v6157, %v6160
        %v6164 = vsel %vm3265, %v5312, %v5599
        %v6167 = vsel %vm5606, %v5600, %v5601
        %v6168 = vsel %vm5610, %v6164, %v6167
        %v6171 = vsel %vm3265, %v5314, %v5602
        %v6172 = vld [vmem:[#allocation6] sm:$0xf]
        %v6173 = vld [vmem:[#allocation6 + $0x4] sm:$0xf]
        %v6174 = vld [vmem:[#allocation6 + $0x8] sm:$0xf]
        %v6175 = vld [vmem:[#allocation6 + $0xc] sm:$0xf]
        %v6176 = vld [vmem:[#allocation6 + $0x10] sm:$0xf]
        %v6177 = vld [vmem:[#allocation6 + $0x14] sm:$0xf]
        %v6178 = vld [vmem:[#allocation6 + $0x18] sm:$0xf]
        %v6179 = vld [vmem:[#allocation6 + $0x1c] sm:$0xf]
        %v6180 = vld [vmem:[#allocation6 + $0x20] sm:$0xf]
        %v6181 = vld [vmem:[#allocation6 + $0x24] sm:$0xf]
        %v6182 = vld [vmem:[#allocation6 + $0x28] sm:$0xf]
        %v6183 = vld [vmem:[#allocation6 + $0x2c] sm:$0xf]
        %v6184 = vld [vmem:[#allocation6 + $0x30] sm:$0xf]
        %v6185 = vld [vmem:[#allocation6 + $0x34] sm:$0xf]
        %v6186 = vld [vmem:[#allocation6 + $0x38] sm:$0xf]
        %v6187 = vld [vmem:[#allocation6 + $0x3c] sm:$0xf]
        %v6188 = vld [vmem:[#allocation6 + $0x40] sm:$0xf]
        %v6189 = vld [vmem:[#allocation6 + $0x44] sm:$0xf]
        %v6190 = vld [vmem:[#allocation6 + $0x48] sm:$0xf]
        %v6191 = vld [vmem:[#allocation6 + $0x4c] sm:$0xf]
        %v6192 = vld [vmem:[#allocation6 + $0x50] sm:$0xf]
        %v6193 = vld [vmem:[#allocation6 + $0x54] sm:$0xf]
        %v6194 = vld [vmem:[#allocation6 + $0x58] sm:$0xf]
        %v6195 = vld [vmem:[#allocation6 + $0x5c] sm:$0xf]
        %v6196 = vld [vmem:[#allocation6 + $0x60] sm:$0xf]
        %v6197 = vld [vmem:[#allocation6 + $0x64] sm:$0xf]
        %v6198 = vld [vmem:[#allocation6 + $0x68] sm:$0xf]
        %v6199 = vld [vmem:[#allocation6 + $0x6c] sm:$0xf]
        %v6200 = vld [vmem:[#allocation6 + $0x70] sm:$0xf]
        %v6201 = vld [vmem:[#allocation6 + $0x74] sm:$0xf]
        %v6202 = vld [vmem:[#allocation6 + $0x78] sm:$0xf]
        %v6203 = vld [vmem:[#allocation6 + $0x7c] sm:$0xf]
        %v6204 = vld [vmem:[#allocation6 + $0x80] sm:$0xf]
        %v6205 = vld [vmem:[#allocation6 + $0x84] sm:$0xf]
        %v6206 = vld [vmem:[#allocation6 + $0x88] sm:$0xf]
        %v6207 = vld [vmem:[#allocation6 + $0x8c] sm:$0xf]
        %v6208 = vld [vmem:[#allocation6 + $0x90] sm:$0xf]
        %v6209 = vld [vmem:[#allocation6 + $0x94] sm:$0xf]
        %v6210 = vld [vmem:[#allocation6 + $0x98] sm:$0xf]
        %v6211 = vld [vmem:[#allocation6 + $0x9c] sm:$0xf]
        %v6212 = vld [vmem:[#allocation6 + $0xa0] sm:$0xf]
        %v6213 = vld [vmem:[#allocation6 + $0xa4] sm:$0xf]
        %v6214 = vld [vmem:[#allocation6 + $0xa8] sm:$0xf]
        %v6215 = vld [vmem:[#allocation6 + $0xac] sm:$0xf]
        %v6216 = vld [vmem:[#allocation6 + $0xb0] sm:$0xf]
        %v6217 = vld [vmem:[#allocation6 + $0xb4] sm:$0xf]
        %v6218 = vld [vmem:[#allocation6 + $0xb8] sm:$0xf]
        %v6219 = vld [vmem:[#allocation6 + $0xbc] sm:$0xf]
        %v6220 = vld [vmem:[#allocation6 + $0xc0] sm:$0xf]
        %v6221 = vld [vmem:[#allocation6 + $0xc4] sm:$0xf]
        %v6222 = vld [vmem:[#allocation6 + $0xc8] sm:$0xf]
        %v6223 = vld [vmem:[#allocation6 + $0xcc] sm:$0xf]
        %v6224 = vld [vmem:[#allocation6 + $0xd0] sm:$0xf]
        %v6225 = vld [vmem:[#allocation6 + $0xd4] sm:$0xf]
        %v6226 = vld [vmem:[#allocation6 + $0xd8] sm:$0xf]
        %v6227 = vld [vmem:[#allocation6 + $0xdc] sm:$0xf]
        %v6228 = vld [vmem:[#allocation6 + $0xe0] sm:$0xf]
        %v6229 = vld [vmem:[#allocation6 + $0xe4] sm:$0xf]
        %v6230 = vld [vmem:[#allocation6 + $0xe8] sm:$0xf]
        %v6231 = vld [vmem:[#allocation6 + $0xec] sm:$0xf]
        %v6232 = vld [vmem:[#allocation6 + $0xf0] sm:$0xf]
        %v6233 = vld [vmem:[#allocation6 + $0xf4] sm:$0xf]
        %v6234 = vld [vmem:[#allocation6 + $0xf8] sm:$0xf]
        %v6235 = vld [vmem:[#allocation6 + $0xfc] sm:$0xf]
        %v6236 = vld [vmem:[#allocation6 + $0x100] sm:$0xf]
        %v6237 = vld [vmem:[#allocation6 + $0x104] sm:$0xf]
        %v6238 = vld [vmem:[#allocation6 + $0x108] sm:$0xf]
        %v6239 = vld [vmem:[#allocation6 + $0x10c] sm:$0xf]
        %v6240 = vld [vmem:[#allocation6 + $0x110] sm:$0xf]
        %v6241 = vld [vmem:[#allocation6 + $0x114] sm:$0xf]
        %v6242 = vld [vmem:[#allocation6 + $0x118] sm:$0xf]
        %v6243 = vld [vmem:[#allocation6 + $0x11c] sm:$0xf]
        %v6244 = vld [vmem:[#allocation6 + $0x120] sm:$0xf]
        %v6245 = vld [vmem:[#allocation6 + $0x124] sm:$0xf]
        %v6246 = vld [vmem:[#allocation6 + $0x128] sm:$0xf]
        %v6247 = vld [vmem:[#allocation6 + $0x12c] sm:$0xf]
        %v6248 = vld [vmem:[#allocation6 + $0x130] sm:$0xf]
        %v6249 = vld [vmem:[#allocation6 + $0x134] sm:$0xf]
        %v6250 = vld [vmem:[#allocation6 + $0x138] sm:$0xf]
        %v6251 = vld [vmem:[#allocation6 + $0x13c] sm:$0xf]
        %v6252 = vld [vmem:[#allocation6 + $0x140] sm:$0xf]
        %v6253 = vld [vmem:[#allocation6 + $0x144] sm:$0xf]
        %v6254 = vld [vmem:[#allocation6 + $0x148] sm:$0xf]
        %v6255 = vld [vmem:[#allocation6 + $0x14c] sm:$0xf]
        %v6256 = vld [vmem:[#allocation6 + $0x150] sm:$0xf]
        %v6257 = vld [vmem:[#allocation6 + $0x154] sm:$0xf]
        %v6258 = vld [vmem:[#allocation6 + $0x158] sm:$0xf]
        %v6259 = vld [vmem:[#allocation6 + $0x15c] sm:$0xf]
        %v6260 = vld [vmem:[#allocation6 + $0x160] sm:$0xf]
        %v6261 = vld [vmem:[#allocation6 + $0x164] sm:$0xf]
        %v6262 = vld [vmem:[#allocation6 + $0x168] sm:$0xf]
        %v6263 = vld [vmem:[#allocation6 + $0x16c] sm:$0xf]
        %v6264 = vld [vmem:[#allocation6 + $0x170] sm:$0xf]
        %v6265 = vld [vmem:[#allocation6 + $0x174] sm:$0xf]
        %v6266 = vld [vmem:[#allocation6 + $0x178] sm:$0xf]
        %v6267 = vld [vmem:[#allocation6 + $0x17c] sm:$0xf]
        %v6268 = vld [vmem:[#allocation6 + $0x180] sm:$0xf]
        %v6269 = vld [vmem:[#allocation6 + $0x184] sm:$0xf]
        %v6270 = vld [vmem:[#allocation6 + $0x188] sm:$0xf]
        %v6271 = vld [vmem:[#allocation6 + $0x18c] sm:$0xf]
        %v6272 = vld [vmem:[#allocation6 + $0x190] sm:$0xf]
        %v6273 = vld [vmem:[#allocation6 + $0x194] sm:$0xf]
        %v6274 = vld [vmem:[#allocation6 + $0x198] sm:$0xf]
        %v6275 = vld [vmem:[#allocation6 + $0x19c] sm:$0xf]
        %v6276 = vld [vmem:[#allocation6 + $0x1a0] sm:$0xf]
        %v6277 = vld [vmem:[#allocation6 + $0x1a4] sm:$0xf]
        %v6278 = vld [vmem:[#allocation6 + $0x1a8] sm:$0xf]
        %v6279 = vld [vmem:[#allocation6 + $0x1ac] sm:$0xf]
        %v6280 = vld [vmem:[#allocation6 + $0x1b0] sm:$0xf]
        %v6281 = vld [vmem:[#allocation6 + $0x1b4] sm:$0xf]
        %v6282 = vld [vmem:[#allocation6 + $0x1b8] sm:$0xf]
        %v6283 = vld [vmem:[#allocation6 + $0x1bc] sm:$0xf]
        %v6284 = vld [vmem:[#allocation6 + $0x1c0] sm:$0xf]
        %v6285 = vld [vmem:[#allocation6 + $0x1c4] sm:$0xf]
        %v6286 = vld [vmem:[#allocation6 + $0x1c8] sm:$0xf]
        %v6287 = vld [vmem:[#allocation6 + $0x1cc] sm:$0xf]
        %v6288 = vld [vmem:[#allocation6 + $0x1d0] sm:$0xf]
        %v6289 = vld [vmem:[#allocation6 + $0x1d4] sm:$0xf]
        %v6290 = vld [vmem:[#allocation6 + $0x1d8] sm:$0xf]
        %v6291 = vld [vmem:[#allocation6 + $0x1dc] sm:$0xf]
        %v6292 = vld [vmem:[#allocation6 + $0x1e0] sm:$0xf]
        %v6293 = vld [vmem:[#allocation6 + $0x1e4] sm:$0xf]
        %v6294 = vld [vmem:[#allocation6 + $0x1e8] sm:$0xf]
        %v6295 = vld [vmem:[#allocation6 + $0x1ec] sm:$0xf]
        %v6296 = vld [vmem:[#allocation6 + $0x1f0] sm:$0xf]
        %v6297 = vld [vmem:[#allocation6 + $0x1f4] sm:$0xf]
        %v6298 = vld [vmem:[#allocation6 + $0x1f8] sm:$0xf]
        %v6299 = vld [vmem:[#allocation6 + $0x1fc] sm:$0xf]
        %v6300 = vld [vmem:[#allocation6 + $0x200] sm:$0xf]
        %v6301 = vld [vmem:[#allocation6 + $0x204] sm:$0xf]
        %v6302 = vld [vmem:[#allocation6 + $0x208] sm:$0xf]
        %v6303 = vld [vmem:[#allocation6 + $0x20c] sm:$0xf]
        %v6304 = vld [vmem:[#allocation6 + $0x210] sm:$0xf]
        %v6305 = vld [vmem:[#allocation6 + $0x214] sm:$0xf]
        %v6306 = vld [vmem:[#allocation6 + $0x218] sm:$0xf]
        %v6307 = vld [vmem:[#allocation6 + $0x21c] sm:$0xf]
        %v6308 = vld [vmem:[#allocation6 + $0x220] sm:$0xf]
        %v6309 = vld [vmem:[#allocation6 + $0x224] sm:$0xf]
        %v6310 = vld [vmem:[#allocation6 + $0x228] sm:$0xf]
        %v6311 = vld [vmem:[#allocation6 + $0x22c] sm:$0xf]
        %v6312 = vld [vmem:[#allocation6 + $0x230] sm:$0xf]
        %v6313 = vld [vmem:[#allocation6 + $0x234] sm:$0xf]
        %v6314 = vld [vmem:[#allocation6 + $0x238] sm:$0xf]
        %v6315 = vld [vmem:[#allocation6 + $0x23c] sm:$0xf]
        %v6316 = vld [vmem:[%s4] sm:$0x1]
        %v6318 = vperm.slane %v6316, 0
        %6320 = vst [vmem:[#allocation1] ss:$4 sm:$0xff] %v5611
        %s6322 = scalar_lea.vmem [#allocation1], 1
        %6323 = vst [vmem:[%s6322] ss:$4 sm:$0xff] %v5629
        %s6324 = scalar_lea.vmem [#allocation1], 2
        %6325 = vst [vmem:[%s6324] ss:$4 sm:$0xff] %v5644
        %s6326 = scalar_lea.vmem [#allocation1], 3
        %6327 = vst [vmem:[%s6326] ss:$4 sm:$0xff] %v5661
        %s6328 = scalar_lea.vmem [#allocation1], 32
        %6329 = vst [vmem:[%s6328] ss:$4 sm:$0xff] %v5618
        %s6331 = scalar_lea.vmem [#allocation1], 33
        %6332 = vst [vmem:[%s6331] ss:$4 sm:$0xff] %v5634
        %s6333 = scalar_lea.vmem [#allocation1], 34
        %6334 = vst [vmem:[%s6333] ss:$4 sm:$0xff] %v5651
        %s6335 = scalar_lea.vmem [#allocation1], 35
        %6336 = vst [vmem:[%s6335] ss:$4 sm:$0xff] %v5668
        %v6337 = vld.sshfl [vmem:[#allocation1] sm:$0xff pattern:$0x73625140]
        %v6338 = vld.sshfl [vmem:[#allocation1 + $0x8] sm:$0xff pattern:$0x73625140]
        %v6339 = vld.sshfl [vmem:[#allocation1 + $0x10] sm:$0xff pattern:$0x73625140]
        %v6340 = vld.sshfl [vmem:[#allocation1 + $0x18] sm:$0xff pattern:$0x73625140]
        %v6341 = vld.sshfl [vmem:[#allocation1 + $0x20] sm:$0xff pattern:$0x73625140]
        %v6342 = vld.sshfl [vmem:[#allocation1 + $0x28] sm:$0xff pattern:$0x73625140]
        %v6343 = vld.sshfl [vmem:[#allocation1 + $0x30] sm:$0xff pattern:$0x73625140]
        %v6344 = vld.sshfl [vmem:[#allocation1 + $0x38] sm:$0xff pattern:$0x73625140]
        %6345 = vst [vmem:[#allocation1] ss:$4 sm:$0xff] %v5621
        %6347 = vst [vmem:[%s6322] ss:$4 sm:$0xff] %v5637
        %6348 = vst [vmem:[%s6324] ss:$4 sm:$0xff] %v5654
        %6349 = vst [vmem:[%s6326] ss:$4 sm:$0xff] %v5671
        %6351 = vst [vmem:[%s6328] ss:$4 sm:$0xff] %v5676
        %6352 = vst [vmem:[%s6331] ss:$4 sm:$0xff] %v5691
        %6353 = vst [vmem:[%s6333] ss:$4 sm:$0xff] %v5708
        %6355 = vst [vmem:[%s6335] ss:$4 sm:$0xff] %v5723
        %v6356 = vld.sshfl [vmem:[#allocation1] sm:$0xff pattern:$0x73625140]
        %v6357 = vld.sshfl [vmem:[#allocation1 + $0x20] sm:$0xff pattern:$0x73625140]
        %v6358 = vld.sshfl [vmem:[#allocation1 + $0x28] sm:$0xff pattern:$0x73625140]
        %v6359 = vld.sshfl [vmem:[#allocation1 + $0x30] sm:$0xff pattern:$0x73625140]
        %v6360 = vld.sshfl [vmem:[#allocation1 + $0x38] sm:$0xff pattern:$0x73625140]
        %6362 = vst [vmem:[#allocation1] ss:$4 sm:$0xff] %v5681
        %6363 = vst [vmem:[%s6322] ss:$4 sm:$0xff] %v5698
        %6364 = vst [vmem:[%s6324] ss:$4 sm:$0xff] %v5715
        %6366 = vst [vmem:[%s6326] ss:$4 sm:$0xff] %v5728
        %6368 = vst [vmem:[%s6328] ss:$4 sm:$0xff] %v5684
        %6369 = vst [vmem:[%s6331] ss:$4 sm:$0xff] %v5701
        %6370 = vst [vmem:[%s6333] ss:$4 sm:$0xff] %v5718
        %6372 = vst [vmem:[%s6335] ss:$4 sm:$0xff] %v5731
        %v6373 = vld.sshfl [vmem:[#allocation1] sm:$0xff pattern:$0x73625140]
        %v6374 = vld.sshfl [vmem:[#allocation1 + $0x8] sm:$0xff pattern:$0x73625140]
        %v6375 = vld.sshfl [vmem:[#allocation1 + $0x10] sm:$0xff pattern:$0x73625140]
        %v6376 = vld.sshfl [vmem:[#allocation1 + $0x18] sm:$0xff pattern:$0x73625140]
        %v6377 = vld.sshfl [vmem:[#allocation1 + $0x20] sm:$0xff pattern:$0x73625140]
        %6378 = vst [vmem:[#allocation1] ss:$4 sm:$0xff] %v5738
        %6379 = vst [vmem:[%s6322] ss:$4 sm:$0xff] %v5755
        %6381 = vst [vmem:[%s6324] ss:$4 sm:$0xff] %v5770
        %6382 = vst [vmem:[%s6326] ss:$4 sm:$0xff] %v5785
        %6383 = vst [vmem:[%s6328] ss:$4 sm:$0xff] %v5745
        %6384 = vst [vmem:[%s6331] ss:$4 sm:$0xff] %v5762
        %6386 = vst [vmem:[%s6333] ss:$4 sm:$0xff] %v5775
        %6387 = vst [vmem:[%s6335] ss:$4 sm:$0xff] %v5792
        %v6388 = vld.sshfl [vmem:[#allocation1] sm:$0xff pattern:$0x73625140]
        %v6389 = vld.sshfl [vmem:[#allocation1 + $0x8] sm:$0xff pattern:$0x73625140]
        %v6390 = vld.sshfl [vmem:[#allocation1 + $0x10] sm:$0xff pattern:$0x73625140]
        %v6391 = vld.sshfl [vmem:[#allocation1 + $0x18] sm:$0xff pattern:$0x73625140]
        %v6392 = vld.sshfl [vmem:[#allocation1 + $0x20] sm:$0xff pattern:$0x73625140]
        %v6393 = vld.sshfl [vmem:[#allocation1 + $0x28] sm:$0xff pattern:$0x73625140]
        %v6394 = vld.sshfl [vmem:[#allocation1 + $0x30] sm:$0xff pattern:$0x73625140]
        %v6395 = vld.sshfl [vmem:[#allocation1 + $0x38] sm:$0xff pattern:$0x73625140]
        %6396 = vst [vmem:[#allocation1] ss:$4 sm:$0xff] %v5748
        %6397 = vst [vmem:[%s6322] ss:$4 sm:$0xff] %v5765
        %6399 = vst [vmem:[%s6324] ss:$4 sm:$0xff] %v5778
        %6400 = vst [vmem:[%s6326] ss:$4 sm:$0xff] %v5795
        %6401 = vst [vmem:[%s6328] ss:$4 sm:$0xff] %v5802
        %6403 = vst [vmem:[%s6331] ss:$4 sm:$0xff] %v5817
        %6404 = vst [vmem:[%s6333] ss:$4 sm:$0xff] %v5832
        %6405 = vst [vmem:[%s6335] ss:$4 sm:$0xff] %v5849
        %v6406 = vld.sshfl [vmem:[#allocation1] sm:$0xff pattern:$0x73625140]
        %v6407 = vld.sshfl [vmem:[#allocation1 + $0x20] sm:$0xff pattern:$0x73625140]
        %v6408 = vld.sshfl [vmem:[#allocation1 + $0x28] sm:$0xff pattern:$0x73625140]
        %v6409 = vld.sshfl [vmem:[#allocation1 + $0x30] sm:$0xff pattern:$0x73625140]
        %v6410 = vld.sshfl [vmem:[#allocation1 + $0x38] sm:$0xff pattern:$0x73625140]
        %6411 = vst [vmem:[#allocation1] ss:$4 sm:$0xff] %v5809
        %6413 = vst [vmem:[%s6322] ss:$4 sm:$0xff] %v5822
        %6414 = vst [vmem:[%s6324] ss:$4 sm:$0xff] %v5839
        %6415 = vst [vmem:[%s6326] ss:$4 sm:$0xff] %v5856
        %6416 = vst [vmem:[%s6328] ss:$4 sm:$0xff] %v5812
        %6418 = vst [vmem:[%s6331] ss:$4 sm:$0xff] %v5825
        %6419 = vst [vmem:[%s6333] ss:$4 sm:$0xff] %v5842
        %6420 = vst [vmem:[%s6335] ss:$4 sm:$0xff] %v5859
        %v6421 = vld.sshfl [vmem:[#allocation1] sm:$0xff pattern:$0x73625140]
        %v6422 = vld.sshfl [vmem:[#allocation1 + $0x8] sm:$0xff pattern:$0x73625140]
        %v6423 = vld.sshfl [vmem:[#allocation1 + $0x10] sm:$0xff pattern:$0x73625140]
        %v6424 = vld.sshfl [vmem:[#allocation1 + $0x18] sm:$0xff pattern:$0x73625140]
        %v6425 = vld.sshfl [vmem:[#allocation1 + $0x20] sm:$0xff pattern:$0x73625140]
        %6427 = vst [vmem:[#allocation1] ss:$4 sm:$0xff] %v5864
        %6428 = vst [vmem:[%s6322] ss:$4 sm:$0xff] %v5879
        %6429 = vst [vmem:[%s6324] ss:$4 sm:$0xff] %v5896
        %6431 = vst [vmem:[%s6326] ss:$4 sm:$0xff] %v5911
        %6433 = vst [vmem:[%s6328] ss:$4 sm:$0xff] %v5869
        %6434 = vst [vmem:[%s6331] ss:$4 sm:$0xff] %v5886
        %6435 = vst [vmem:[%s6333] ss:$4 sm:$0xff] %v5903
        %6437 = vst [vmem:[%s6335] ss:$4 sm:$0xff] %v5916
        %v6438 = vld.sshfl [vmem:[#allocation1] sm:$0xff pattern:$0x73625140]
        %v6439 = vld.sshfl [vmem:[#allocation1 + $0x8] sm:$0xff pattern:$0x73625140]
        %v6440 = vld.sshfl [vmem:[#allocation1 + $0x10] sm:$0xff pattern:$0x73625140]
        %v6441 = vld.sshfl [vmem:[#allocation1 + $0x18] sm:$0xff pattern:$0x73625140]
        %v6442 = vld.sshfl [vmem:[#allocation1 + $0x20] sm:$0xff pattern:$0x73625140]
        %v6443 = vld.sshfl [vmem:[#allocation1 + $0x28] sm:$0xff pattern:$0x73625140]
        %v6444 = vld.sshfl [vmem:[#allocation1 + $0x30] sm:$0xff pattern:$0x73625140]
        %v6445 = vld.sshfl [vmem:[#allocation1 + $0x38] sm:$0xff pattern:$0x73625140]
        %6447 = vst [vmem:[#allocation1] ss:$4 sm:$0xff] %v5872
        %6448 = vst [vmem:[%s6322] ss:$4 sm:$0xff] %v5889
        %6449 = vst [vmem:[%s6324] ss:$4 sm:$0xff] %v5906
        %6451 = vst [vmem:[%s6326] ss:$4 sm:$0xff] %v5919
        %6452 = vst [vmem:[%s6328] ss:$4 sm:$0xff] %v5926
        %6453 = vst [vmem:[%s6331] ss:$4 sm:$0xff] %v5943
        %6455 = vst [vmem:[%s6333] ss:$4 sm:$0xff] %v5958
        %6456 = vst [vmem:[%s6335] ss:$4 sm:$0xff] %v5973
        %v6457 = vld.sshfl [vmem:[#allocation1] sm:$0xff pattern:$0x73625140]
        %v6458 = vld.sshfl [vmem:[#allocation1 + $0x20] sm:$0xff pattern:$0x73625140]
        %v6459 = vld.sshfl [vmem:[#allocation1 + $0x28] sm:$0xff pattern:$0x73625140]
        %v6460 = vld.sshfl [vmem:[#allocation1 + $0x30] sm:$0xff pattern:$0x73625140]
        %v6461 = vld.sshfl [vmem:[#allocation1 + $0x38] sm:$0xff pattern:$0x73625140]
        %6462 = vst [vmem:[#allocation1] ss:$4 sm:$0xff] %v5933
        %6463 = vst [vmem:[%s6322] ss:$4 sm:$0xff] %v5950
        %6465 = vst [vmem:[%s6324] ss:$4 sm:$0xff] %v5963
        %6466 = vst [vmem:[%s6326] ss:$4 sm:$0xff] %v5980
        %6467 = vst [vmem:[%s6328] ss:$4 sm:$0xff] %v5936
        %6468 = vst [vmem:[%s6331] ss:$4 sm:$0xff] %v5953
        %6470 = vst [vmem:[%s6333] ss:$4 sm:$0xff] %v5966
        %6471 = vst [vmem:[%s6335] ss:$4 sm:$0xff] %v5983
        %v6472 = vld.sshfl [vmem:[#allocation1] sm:$0xff pattern:$0x73625140]
        %v6473 = vld.sshfl [vmem:[#allocation1 + $0x8] sm:$0xff pattern:$0x73625140]
        %v6474 = vld.sshfl [vmem:[#allocation1 + $0x10] sm:$0xff pattern:$0x73625140]
        %v6475 = vld.sshfl [vmem:[#allocation1 + $0x18] sm:$0xff pattern:$0x73625140]
        %v6476 = vld.sshfl [vmem:[#allocation1 + $0x20] sm:$0xff pattern:$0x73625140]
        %6477 = vst [vmem:[#allocation1] ss:$4 sm:$0xff] %v5990
        %6479 = vst [vmem:[%s6322] ss:$4 sm:$0xff] %v6005
        %6480 = vst [vmem:[%s6324] ss:$4 sm:$0xff] %v6020
        %6481 = vst [vmem:[%s6326] ss:$4 sm:$0xff] %v6037
        %6482 = vst [vmem:[%s6328] ss:$4 sm:$0xff] %v5997
        %6484 = vst [vmem:[%s6331] ss:$4 sm:$0xff] %v6010
        %6485 = vst [vmem:[%s6333] ss:$4 sm:$0xff] %v6027
        %6486 = vst [vmem:[%s6335] ss:$4 sm:$0xff] %v6044
        %v6487 = vld.sshfl [vmem:[#allocation1] sm:$0xff pattern:$0x73625140]
        %v6488 = vld.sshfl [vmem:[#allocation1 + $0x8] sm:$0xff pattern:$0x73625140]
        %v6489 = vld.sshfl [vmem:[#allocation1 + $0x10] sm:$0xff pattern:$0x73625140]
        %v6490 = vld.sshfl [vmem:[#allocation1 + $0x18] sm:$0xff pattern:$0x73625140]
        %v6491 = vld.sshfl [vmem:[#allocation1 + $0x20] sm:$0xff pattern:$0x73625140]
        %v6492 = vld.sshfl [vmem:[#allocation1 + $0x28] sm:$0xff pattern:$0x73625140]
        %v6493 = vld.sshfl [vmem:[#allocation1 + $0x30] sm:$0xff pattern:$0x73625140]
        %v6494 = vld.sshfl [vmem:[#allocation1 + $0x38] sm:$0xff pattern:$0x73625140]
        %6495 = vst [vmem:[#allocation1] ss:$4 sm:$0xff] %v6000
        %6497 = vst [vmem:[%s6322] ss:$4 sm:$0xff] %v6013
        %6498 = vst [vmem:[%s6324] ss:$4 sm:$0xff] %v6030
        %6499 = vst [vmem:[%s6326] ss:$4 sm:$0xff] %v6047
        %6501 = vst [vmem:[%s6328] ss:$4 sm:$0xff] %v6052
        %6502 = vst [vmem:[%s6331] ss:$4 sm:$0xff] %v6067
        %6503 = vst [vmem:[%s6333] ss:$4 sm:$0xff] %v6084
        %6505 = vst [vmem:[%s6335] ss:$4 sm:$0xff] %v6099
        %v6506 = vld.sshfl [vmem:[#allocation1] sm:$0xff pattern:$0x73625140]
        %v6507 = vld.sshfl [vmem:[#allocation1 + $0x20] sm:$0xff pattern:$0x73625140]
        %v6508 = vld.sshfl [vmem:[#allocation1 + $0x28] sm:$0xff pattern:$0x73625140]
        %v6509 = vld.sshfl [vmem:[#allocation1 + $0x30] sm:$0xff pattern:$0x73625140]
        %v6510 = vld.sshfl [vmem:[#allocation1 + $0x38] sm:$0xff pattern:$0x73625140]
        %6512 = vst [vmem:[#allocation1] ss:$4 sm:$0xff] %v6057
        %6513 = vst [vmem:[%s6322] ss:$4 sm:$0xff] %v6074
        %6514 = vst [vmem:[%s6324] ss:$4 sm:$0xff] %v6091
        %6516 = vst [vmem:[%s6326] ss:$4 sm:$0xff] %v6104
        %6518 = vst [vmem:[%s6328] ss:$4 sm:$0xff] %v6060
        %6519 = vst [vmem:[%s6331] ss:$4 sm:$0xff] %v6077
        %6520 = vst [vmem:[%s6333] ss:$4 sm:$0xff] %v6094
        %6522 = vst [vmem:[%s6335] ss:$4 sm:$0xff] %v6107
        %v6523 = vld.sshfl [vmem:[#allocation1] sm:$0xff pattern:$0x73625140]
        %v6524 = vld.sshfl [vmem:[#allocation1 + $0x8] sm:$0xff pattern:$0x73625140]
        %v6525 = vld.sshfl [vmem:[#allocation1 + $0x10] sm:$0xff pattern:$0x73625140]
        %v6526 = vld.sshfl [vmem:[#allocation1 + $0x18] sm:$0xff pattern:$0x73625140]
        %v6527 = vld.sshfl [vmem:[#allocation1 + $0x20] sm:$0xff pattern:$0x73625140]
        %6528 = vst [vmem:[#allocation1] ss:$4 sm:$0xff] %v6114
        %6529 = vst [vmem:[%s6322] ss:$4 sm:$0xff] %v6131
        %6531 = vst [vmem:[%s6324] ss:$4 sm:$0xff] %v6146
        %6532 = vst [vmem:[%s6326] ss:$4 sm:$0xff] %v6161
        %6533 = vst [vmem:[%s6328] ss:$4 sm:$0xff] %v6121
        %6534 = vst [vmem:[%s6331] ss:$4 sm:$0xff] %v6138
        %6536 = vst [vmem:[%s6333] ss:$4 sm:$0xff] %v6151
        %6537 = vst [vmem:[%s6335] ss:$4 sm:$0xff] %v6168
        %v6538 = vld.sshfl [vmem:[#allocation1] sm:$0xff pattern:$0x73625140]
        %v6539 = vld.sshfl [vmem:[#allocation1 + $0x8] sm:$0xff pattern:$0x73625140]
        %v6540 = vld.sshfl [vmem:[#allocation1 + $0x10] sm:$0xff pattern:$0x73625140]
        %v6541 = vld.sshfl [vmem:[#allocation1 + $0x18] sm:$0xff pattern:$0x73625140]
        %v6542 = vld.sshfl [vmem:[#allocation1 + $0x20] sm:$0xff pattern:$0x73625140]
        %v6543 = vld.sshfl [vmem:[#allocation1 + $0x28] sm:$0xff pattern:$0x73625140]
        %v6544 = vld.sshfl [vmem:[#allocation1 + $0x30] sm:$0xff pattern:$0x73625140]
        %v6545 = vld.sshfl [vmem:[#allocation1 + $0x38] sm:$0xff pattern:$0x73625140]
        %6546 = vst [vmem:[#allocation1] ss:$4 sm:$0xff] %v6124
        %6547 = vst [vmem:[%s6322] ss:$4 sm:$0xff] %v6141
        %6549 = vst [vmem:[%s6324] ss:$4 sm:$0xff] %v6154
        %6550 = vst [vmem:[%s6326] ss:$4 sm:$0xff] %v6171
        %v6551 = vld.sshfl [vmem:[#allocation1] sm:$0xff pattern:$0x73625140]
        %v6777 = vunpack.c.l.b16 %v6172
        %v6778 = vunpack.c.l.b16 %v6173
        %v6779 = vunpack.c.l.b16 %v6174
        %v6780 = vunpack.c.l.b16 %v6175
        %v6781 = vunpack.c.l.b16 %v6176
        %v6782 = vunpack.c.l.b16 %v6177
        %v6783 = vunpack.c.l.b16 %v6178
        %v6784 = vunpack.c.l.b16 %v6179
        %v6785 = vunpack.c.l.b16 %v6180
        %v6786 = vunpack.c.l.b16 %v6181
        %v6787 = vunpack.c.l.b16 %v6182
        %v6788 = vunpack.c.l.b16 %v6183
        %v6789 = vunpack.c.l.b16 %v6184
        %v6790 = vunpack.c.l.b16 %v6185
        %v6791 = vunpack.c.l.b16 %v6186
        %v6792 = vunpack.c.l.b16 %v6187
        %v6793 = vunpack.c.l.b16 %v6188
        %v6794 = vunpack.c.l.b16 %v6189
        %v6795 = vunpack.c.l.b16 %v6190
        %v6796 = vunpack.c.l.b16 %v6191
        %v6797 = vunpack.c.l.b16 %v6192
        %v6798 = vunpack.c.l.b16 %v6193
        %v6799 = vunpack.c.l.b16 %v6194
        %v6800 = vunpack.c.l.b16 %v6195
        %v6801 = vunpack.c.l.b16 %v6196
        %v6802 = vunpack.c.l.b16 %v6197
        %v6803 = vunpack.c.l.b16 %v6198
        %v6804 = vunpack.c.l.b16 %v6199
        %v6805 = vunpack.c.l.b16 %v6200
        %v6806 = vunpack.c.l.b16 %v6201
        %v6807 = vunpack.c.l.b16 %v6202
        %v6808 = vunpack.c.l.b16 %v6203
        %v6809 = vunpack.c.l.b16 %v6204
        %v6810 = vunpack.c.l.b16 %v6205
        %v6811 = vunpack.c.l.b16 %v6206
        %v6812 = vunpack.c.l.b16 %v6207
        %v6813 = vunpack.c.l.b16 %v6208
        %v6814 = vunpack.c.l.b16 %v6209
        %v6815 = vunpack.c.l.b16 %v6210
        %v6816 = vunpack.c.l.b16 %v6211
        %v6817 = vunpack.c.l.b16 %v6212
        %v6818 = vunpack.c.l.b16 %v6213
        %v6819 = vunpack.c.l.b16 %v6214
        %v6820 = vunpack.c.l.b16 %v6215
        %v6821 = vunpack.c.l.b16 %v6216
        %v6822 = vunpack.c.l.b16 %v6217
        %v6823 = vunpack.c.l.b16 %v6218
        %v6824 = vunpack.c.l.b16 %v6219
        %v6825 = vunpack.c.l.b16 %v6220
        %v6826 = vunpack.c.l.b16 %v6221
        %v6827 = vunpack.c.l.b16 %v6222
        %v6828 = vunpack.c.l.b16 %v6223
        %v6829 = vunpack.c.l.b16 %v6224
        %v6830 = vunpack.c.l.b16 %v6225
        %v6831 = vunpack.c.l.b16 %v6226
        %v6832 = vunpack.c.l.b16 %v6227
        %v6833 = vunpack.c.l.b16 %v6228
        %v6834 = vunpack.c.l.b16 %v6229
        %v6835 = vunpack.c.l.b16 %v6230
        %v6836 = vunpack.c.l.b16 %v6231
        %v6837 = vunpack.c.l.b16 %v6232
        %v6838 = vunpack.c.l.b16 %v6233
        %v6839 = vunpack.c.l.b16 %v6234
        %v6840 = vunpack.c.l.b16 %v6235
        %v6841 = vunpack.c.l.b16 %v6236
        %v6842 = vunpack.c.l.b16 %v6237
        %v6843 = vunpack.c.l.b16 %v6238
        %v6844 = vunpack.c.l.b16 %v6239
        %v6845 = vunpack.c.l.b16 %v6240
        %v6846 = vunpack.c.l.b16 %v6241
        %v6847 = vunpack.c.l.b16 %v6242
        %v6848 = vunpack.c.l.b16 %v6243
        %v6849 = vunpack.c.l.b16 %v6244
        %v6850 = vunpack.c.l.b16 %v6245
        %v6851 = vunpack.c.l.b16 %v6246
        %v6852 = vunpack.c.l.b16 %v6247
        %v6853 = vunpack.c.l.b16 %v6248
        %v6854 = vunpack.c.l.b16 %v6249
        %v6855 = vunpack.c.l.b16 %v6250
        %v6856 = vunpack.c.l.b16 %v6251
        %v6857 = vunpack.c.l.b16 %v6252
        %v6858 = vunpack.c.l.b16 %v6253
        %v6859 = vunpack.c.l.b16 %v6254
        %v6860 = vunpack.c.l.b16 %v6255
        %v6861 = vunpack.c.l.b16 %v6256
        %v6862 = vunpack.c.l.b16 %v6257
        %v6863 = vunpack.c.l.b16 %v6258
        %v6864 = vunpack.c.l.b16 %v6259
        %v6865 = vunpack.c.l.b16 %v6260
        %v6866 = vunpack.c.l.b16 %v6261
        %v6867 = vunpack.c.l.b16 %v6262
        %v6868 = vunpack.c.l.b16 %v6263
        %v6869 = vunpack.c.l.b16 %v6264
        %v6870 = vunpack.c.l.b16 %v6265
        %v6871 = vunpack.c.l.b16 %v6266
        %v6872 = vunpack.c.l.b16 %v6267
        %v6873 = vunpack.c.l.b16 %v6268
        %v6874 = vunpack.c.l.b16 %v6269
        %v6875 = vunpack.c.l.b16 %v6270
        %v6876 = vunpack.c.l.b16 %v6271
        %v6877 = vunpack.c.l.b16 %v6272
        %v6878 = vunpack.c.l.b16 %v6273
        %v6879 = vunpack.c.l.b16 %v6274
        %v6880 = vunpack.c.l.b16 %v6275
        %v6881 = vunpack.c.l.b16 %v6276
        %v6882 = vunpack.c.l.b16 %v6277
        %v6883 = vunpack.c.l.b16 %v6278
        %v6884 = vunpack.c.l.b16 %v6279
        %v6885 = vunpack.c.l.b16 %v6280
        %v6886 = vunpack.c.l.b16 %v6281
        %v6887 = vunpack.c.l.b16 %v6282
        %v6888 = vunpack.c.l.b16 %v6283
        %v6889 = vunpack.c.l.b16 %v6284
        %v6890 = vunpack.c.l.b16 %v6285
        %v6891 = vunpack.c.l.b16 %v6286
        %v6892 = vunpack.c.l.b16 %v6287
        %v6893 = vunpack.c.l.b16 %v6288
        %v6894 = vunpack.c.l.b16 %v6289
        %v6895 = vunpack.c.l.b16 %v6290
        %v6896 = vunpack.c.l.b16 %v6291
        %v6897 = vunpack.c.l.b16 %v6292
        %v6898 = vunpack.c.l.b16 %v6293
        %v6899 = vunpack.c.l.b16 %v6294
        %v6900 = vunpack.c.l.b16 %v6295
        %v6901 = vunpack.c.l.b16 %v6296
        %v6902 = vunpack.c.l.b16 %v6297
        %v6903 = vunpack.c.l.b16 %v6298
        %v6904 = vunpack.c.l.b16 %v6299
        %v6905 = vunpack.c.l.b16 %v6300
        %v6906 = vunpack.c.l.b16 %v6301
        %v6907 = vunpack.c.l.b16 %v6302
        %v6908 = vunpack.c.l.b16 %v6303
        %v6909 = vunpack.c.l.b16 %v6304
        %v6910 = vunpack.c.l.b16 %v6305
        %v6911 = vunpack.c.l.b16 %v6306
        %v6912 = vunpack.c.l.b16 %v6307
        %v6913 = vunpack.c.l.b16 %v6308
        %v6914 = vunpack.c.l.b16 %v6309
        %v6915 = vunpack.c.l.b16 %v6310
        %v6916 = vunpack.c.l.b16 %v6311
        %v6917 = vunpack.c.l.b16 %v6312
        %v6918 = vunpack.c.l.b16 %v6313
        %v6919 = vunpack.c.l.b16 %v6314
        %v6920 = vunpack.c.l.b16 %v6315
        %v6921 = vpack.c.b16 %v6778, %v6777
        %v6922 = vpack.c.b16 %v6780, %v6779
        %v6923 = vpack.c.b16 %v6782, %v6781
        %v6924 = vpack.c.b16 %v6784, %v6783
        %v6925 = vpack.c.b16 %v6786, %v6785
        %v6926 = vpack.c.b16 %v6788, %v6787
        %v6927 = vpack.c.b16 %v6790, %v6789
        %v6928 = vpack.c.b16 %v6792, %v6791
        %v6929 = vpack.c.b16 %v6794, %v6793
        %v6930 = vpack.c.b16 %v6796, %v6795
        %v6931 = vpack.c.b16 %v6798, %v6797
        %v6932 = vpack.c.b16 %v6800, %v6799
        %v6933 = vpack.c.b16 %v6802, %v6801
        %v6934 = vpack.c.b16 %v6804, %v6803
        %v6935 = vpack.c.b16 %v6806, %v6805
        %v6936 = vpack.c.b16 %v6808, %v6807
        %v6937 = vpack.c.b16 %v6810, %v6809
        %v6938 = vpack.c.b16 %v6812, %v6811
        %v6939 = vpack.c.b16 %v6814, %v6813
        %v6940 = vpack.c.b16 %v6816, %v6815
        %v6941 = vpack.c.b16 %v6818, %v6817
        %v6942 = vpack.c.b16 %v6820, %v6819
        %v6943 = vpack.c.b16 %v6822, %v6821
        %v6944 = vpack.c.b16 %v6824, %v6823
        %v6945 = vpack.c.b16 %v6826, %v6825
        %v6946 = vpack.c.b16 %v6828, %v6827
        %v6947 = vpack.c.b16 %v6830, %v6829
        %v6948 = vpack.c.b16 %v6832, %v6831
        %v6949 = vpack.c.b16 %v6834, %v6833
        %v6950 = vpack.c.b16 %v6836, %v6835
        %v6951 = vpack.c.b16 %v6838, %v6837
        %v6952 = vpack.c.b16 %v6840, %v6839
        %v6953 = vpack.c.b16 %v6842, %v6841
        %v6954 = vpack.c.b16 %v6844, %v6843
        %v6955 = vpack.c.b16 %v6846, %v6845
        %v6956 = vpack.c.b16 %v6848, %v6847
        %v6957 = vpack.c.b16 %v6850, %v6849
        %v6958 = vpack.c.b16 %v6852, %v6851
        %v6959 = vpack.c.b16 %v6854, %v6853
        %v6960 = vpack.c.b16 %v6856, %v6855
        %v6961 = vpack.c.b16 %v6858, %v6857
        %v6962 = vpack.c.b16 %v6860, %v6859
        %v6963 = vpack.c.b16 %v6862, %v6861
        %v6964 = vpack.c.b16 %v6864, %v6863
        %v6965 = vpack.c.b16 %v6866, %v6865
        %v6966 = vpack.c.b16 %v6868, %v6867
        %v6967 = vpack.c.b16 %v6870, %v6869
        %v6968 = vpack.c.b16 %v6872, %v6871
        %v6969 = vpack.c.b16 %v6874, %v6873
        %v6970 = vpack.c.b16 %v6876, %v6875
        %v6971 = vpack.c.b16 %v6878, %v6877
        %v6972 = vpack.c.b16 %v6880, %v6879
        %v6973 = vpack.c.b16 %v6882, %v6881
        %v6974 = vpack.c.b16 %v6884, %v6883
        %v6975 = vpack.c.b16 %v6886, %v6885
        %v6976 = vpack.c.b16 %v6888, %v6887
        %v6977 = vpack.c.b16 %v6890, %v6889
        %v6978 = vpack.c.b16 %v6892, %v6891
        %v6979 = vpack.c.b16 %v6894, %v6893
        %v6980 = vpack.c.b16 %v6896, %v6895
        %v6981 = vpack.c.b16 %v6898, %v6897
        %v6982 = vpack.c.b16 %v6900, %v6899
        %v6983 = vpack.c.b16 %v6902, %v6901
        %v6984 = vpack.c.b16 %v6904, %v6903
        %v6985 = vpack.c.b16 %v6906, %v6905
        %v6986 = vpack.c.b16 %v6908, %v6907
        %v6987 = vpack.c.b16 %v6910, %v6909
        %v6988 = vpack.c.b16 %v6912, %v6911
        %v6989 = vpack.c.b16 %v6914, %v6913
        %v6990 = vpack.c.b16 %v6916, %v6915
        %v6991 = vpack.c.b16 %v6918, %v6917
        %v6992 = vpack.c.b16 %v6920, %v6919
        %7065 = vmatpush.bf16.msra.mxu0 %v6928
        %7066 = vmatpush.bf16.msra.mxu0 %v6927
        %7067 = vmatpush.bf16.msra.mxu0 %v6926
        %7068 = vmatpush.bf16.msra.mxu0 %v6925
        %7069 = vmatpush.bf16.msra.mxu0 %v6924
        %7070 = vmatpush.bf16.msra.mxu0 %v6923
        %7071 = vmatpush.bf16.msra.mxu0 %v6922
        %7072 = vmatpush.bf16.msra.mxu0 %v6921
        %7073 = vmatmul.bf16.gmra.mxu0 %v6337
        %v7074 = vpop.f32.mrf.mxu0
        %v7075 = vadd.f32 %v6318, %v7074
        %v7076 = vpop.f32.mrf.mxu0
        %v7077 = vadd.f32 %v6318, %v7076
        %7078 = vmatmul.bf16.gmra.mxu0 %v6357
        %v7079 = vpop.f32.mrf.mxu0
        %v7080 = vadd.f32 %v6318, %v7079
        %v7081 = vpop.f32.mrf.mxu0
        %v7082 = vadd.f32 %v6318, %v7081
        %7083 = vmatmul.bf16.gmra.mxu0 %v6388
        %v7084 = vpop.f32.mrf.mxu0
        %v7085 = vadd.f32 %v6318, %v7084
        %v7086 = vpop.f32.mrf.mxu0
        %v7087 = vadd.f32 %v6318, %v7086
        %7088 = vmatmul.bf16.gmra.mxu0 %v6407
        %v7089 = vpop.f32.mrf.mxu0
        %v7090 = vadd.f32 %v6318, %v7089
        %v7091 = vpop.f32.mrf.mxu0
        %v7092 = vadd.f32 %v6318, %v7091
        %7093 = vmatmul.bf16.gmra.mxu0 %v6438
        %v7094 = vpop.f32.mrf.mxu0
        %v7095 = vadd.f32 %v6318, %v7094
        %v7096 = vpop.f32.mrf.mxu0
        %v7097 = vadd.f32 %v6318, %v7096
        %7098 = vmatmul.bf16.gmra.mxu0 %v6458
        %v7099 = vpop.f32.mrf.mxu0
        %v7100 = vadd.f32 %v6318, %v7099
        %v7101 = vpop.f32.mrf.mxu0
        %v7102 = vadd.f32 %v6318, %v7101
        %7103 = vmatmul.bf16.gmra.mxu0 %v6487
        %v7104 = vpop.f32.mrf.mxu0
        %v7105 = vadd.f32 %v6318, %v7104
        %v7106 = vpop.f32.mrf.mxu0
        %v7107 = vadd.f32 %v6318, %v7106
        %7108 = vmatmul.bf16.gmra.mxu0 %v6507
        %v7109 = vpop.f32.mrf.mxu0
        %v7110 = vadd.f32 %v6318, %v7109
        %v7111 = vpop.f32.mrf.mxu0
        %v7112 = vadd.f32 %v6318, %v7111
        %7113 = vmatmul.bf16.gmra.mxu0 %v6538
        %v7114 = vpop.f32.mrf.mxu0
        %v7115 = vadd.f32 %v6318, %v7114
        %v7116 = vpop.f32.mrf.mxu0
        %v7117 = vadd.f32 %v6318, %v7116
        %7118 = vdwg.mxu0
        %7119 = vmatpush.bf16.msra.mxu0 %v6936
        %7120 = vmatpush.bf16.msra.mxu0 %v6935
        %7121 = vmatpush.bf16.msra.mxu0 %v6934
        %7122 = vmatpush.bf16.msra.mxu0 %v6933
        %7123 = vmatpush.bf16.msra.mxu0 %v6932
        %7124 = vmatpush.bf16.msra.mxu0 %v6931
        %7125 = vmatpush.bf16.msra.mxu0 %v6930
        %7126 = vmatpush.bf16.msra.mxu0 %v6929
        %7127 = vmatmul.bf16.gmra.mxu0 %v6338
        %v7128 = vpop.f32.mrf.mxu0
        %v7129 = vadd.f32 %v7075, %v7128
        %v7130 = vpop.f32.mrf.mxu0
        %v7131 = vadd.f32 %v7077, %v7130
        %7132 = vmatmul.bf16.gmra.mxu0 %v6358
        %v7133 = vpop.f32.mrf.mxu0
        %v7134 = vadd.f32 %v7080, %v7133
        %v7135 = vpop.f32.mrf.mxu0
        %v7136 = vadd.f32 %v7082, %v7135
        %7137 = vmatmul.bf16.gmra.mxu0 %v6389
        %v7138 = vpop.f32.mrf.mxu0
        %v7139 = vadd.f32 %v7085, %v7138
        %v7140 = vpop.f32.mrf.mxu0
        %v7141 = vadd.f32 %v7087, %v7140
        %7142 = vmatmul.bf16.gmra.mxu0 %v6408
        %v7143 = vpop.f32.mrf.mxu0
        %v7144 = vadd.f32 %v7090, %v7143
        %v7145 = vpop.f32.mrf.mxu0
        %v7146 = vadd.f32 %v7092, %v7145
        %7147 = vmatmul.bf16.gmra.mxu0 %v6439
        %v7148 = vpop.f32.mrf.mxu0
        %v7149 = vadd.f32 %v7095, %v7148
        %v7150 = vpop.f32.mrf.mxu0
        %v7151 = vadd.f32 %v7097, %v7150
        %7152 = vmatmul.bf16.gmra.mxu0 %v6459
        %v7153 = vpop.f32.mrf.mxu0
        %v7154 = vadd.f32 %v7100, %v7153
        %v7155 = vpop.f32.mrf.mxu0
        %v7156 = vadd.f32 %v7102, %v7155
        %7157 = vmatmul.bf16.gmra.mxu0 %v6488
        %v7158 = vpop.f32.mrf.mxu0
        %v7159 = vadd.f32 %v7105, %v7158
        %v7160 = vpop.f32.mrf.mxu0
        %v7161 = vadd.f32 %v7107, %v7160
        %7162 = vmatmul.bf16.gmra.mxu0 %v6508
        %v7163 = vpop.f32.mrf.mxu0
        %v7164 = vadd.f32 %v7110, %v7163
        %v7165 = vpop.f32.mrf.mxu0
        %v7166 = vadd.f32 %v7112, %v7165
        %7167 = vmatmul.bf16.gmra.mxu0 %v6539
        %v7168 = vpop.f32.mrf.mxu0
        %v7169 = vadd.f32 %v7115, %v7168
        %v7170 = vpop.f32.mrf.mxu0
        %v7171 = vadd.f32 %v7117, %v7170
        %7172 = vdwg.mxu0
        %7173 = vmatpush.bf16.msra.mxu0 %v6944
        %7174 = vmatpush.bf16.msra.mxu0 %v6943
        %7175 = vmatpush.bf16.msra.mxu0 %v6942
        %7176 = vmatpush.bf16.msra.mxu0 %v6941
        %7177 = vmatpush.bf16.msra.mxu0 %v6940
        %7178 = vmatpush.bf16.msra.mxu0 %v6939
        %7179 = vmatpush.bf16.msra.mxu0 %v6938
        %7180 = vmatpush.bf16.msra.mxu0 %v6937
        %7181 = vmatmul.bf16.gmra.mxu0 %v6339
        %v7182 = vpop.f32.mrf.mxu0
        %v7183 = vadd.f32 %v7129, %v7182
        %v7184 = vpop.f32.mrf.mxu0
        %v7185 = vadd.f32 %v7131, %v7184
        %7186 = vmatmul.bf16.gmra.mxu0 %v6359
        %v7187 = vpop.f32.mrf.mxu0
        %v7188 = vadd.f32 %v7134, %v7187
        %v7189 = vpop.f32.mrf.mxu0
        %v7190 = vadd.f32 %v7136, %v7189
        %7191 = vmatmul.bf16.gmra.mxu0 %v6390
        %v7192 = vpop.f32.mrf.mxu0
        %v7193 = vadd.f32 %v7139, %v7192
        %v7194 = vpop.f32.mrf.mxu0
        %v7195 = vadd.f32 %v7141, %v7194
        %7196 = vmatmul.bf16.gmra.mxu0 %v6409
        %v7197 = vpop.f32.mrf.mxu0
        %v7198 = vadd.f32 %v7144, %v7197
        %v7199 = vpop.f32.mrf.mxu0
        %v7200 = vadd.f32 %v7146, %v7199
        %7201 = vmatmul.bf16.gmra.mxu0 %v6440
        %v7202 = vpop.f32.mrf.mxu0
        %v7203 = vadd.f32 %v7149, %v7202
        %v7204 = vpop.f32.mrf.mxu0
        %v7205 = vadd.f32 %v7151, %v7204
        %7206 = vmatmul.bf16.gmra.mxu0 %v6460
        %v7207 = vpop.f32.mrf.mxu0
        %v7208 = vadd.f32 %v7154, %v7207
        %v7209 = vpop.f32.mrf.mxu0
        %v7210 = vadd.f32 %v7156, %v7209
        %7211 = vmatmul.bf16.gmra.mxu0 %v6489
        %v7212 = vpop.f32.mrf.mxu0
        %v7213 = vadd.f32 %v7159, %v7212
        %v7214 = vpop.f32.mrf.mxu0
        %v7215 = vadd.f32 %v7161, %v7214
        %7216 = vmatmul.bf16.gmra.mxu0 %v6509
        %v7217 = vpop.f32.mrf.mxu0
        %v7218 = vadd.f32 %v7164, %v7217
        %v7219 = vpop.f32.mrf.mxu0
        %v7220 = vadd.f32 %v7166, %v7219
        %7221 = vmatmul.bf16.gmra.mxu0 %v6540
        %v7222 = vpop.f32.mrf.mxu0
        %v7223 = vadd.f32 %v7169, %v7222
        %v7224 = vpop.f32.mrf.mxu0
        %v7225 = vadd.f32 %v7171, %v7224
        %7226 = vdwg.mxu0
        %7227 = vmatpush.bf16.msra.mxu0 %v6952
        %7228 = vmatpush.bf16.msra.mxu0 %v6951
        %7229 = vmatpush.bf16.msra.mxu0 %v6950
        %7230 = vmatpush.bf16.msra.mxu0 %v6949
        %7231 = vmatpush.bf16.msra.mxu0 %v6948
        %7232 = vmatpush.bf16.msra.mxu0 %v6947
        %7233 = vmatpush.bf16.msra.mxu0 %v6946
        %7234 = vmatpush.bf16.msra.mxu0 %v6945
        %7235 = vmatmul.bf16.gmra.mxu0 %v6340
        %v7236 = vpop.f32.mrf.mxu0
        %v7237 = vadd.f32 %v7183, %v7236
        %v7238 = vpop.f32.mrf.mxu0
        %v7239 = vadd.f32 %v7185, %v7238
        %7240 = vmatmul.bf16.gmra.mxu0 %v6360
        %v7241 = vpop.f32.mrf.mxu0
        %v7242 = vadd.f32 %v7188, %v7241
        %v7243 = vpop.f32.mrf.mxu0
        %v7244 = vadd.f32 %v7190, %v7243
        %7245 = vmatmul.bf16.gmra.mxu0 %v6391
        %v7246 = vpop.f32.mrf.mxu0
        %v7247 = vadd.f32 %v7193, %v7246
        %v7248 = vpop.f32.mrf.mxu0
        %v7249 = vadd.f32 %v7195, %v7248
        %7250 = vmatmul.bf16.gmra.mxu0 %v6410
        %v7251 = vpop.f32.mrf.mxu0
        %v7252 = vadd.f32 %v7198, %v7251
        %v7253 = vpop.f32.mrf.mxu0
        %v7254 = vadd.f32 %v7200, %v7253
        %7255 = vmatmul.bf16.gmra.mxu0 %v6441
        %v7256 = vpop.f32.mrf.mxu0
        %v7257 = vadd.f32 %v7203, %v7256
        %v7258 = vpop.f32.mrf.mxu0
        %v7259 = vadd.f32 %v7205, %v7258
        %7260 = vmatmul.bf16.gmra.mxu0 %v6461
        %v7261 = vpop.f32.mrf.mxu0
        %v7262 = vadd.f32 %v7208, %v7261
        %v7263 = vpop.f32.mrf.mxu0
        %v7264 = vadd.f32 %v7210, %v7263
        %7265 = vmatmul.bf16.gmra.mxu0 %v6490
        %v7266 = vpop.f32.mrf.mxu0
        %v7267 = vadd.f32 %v7213, %v7266
        %v7268 = vpop.f32.mrf.mxu0
        %v7269 = vadd.f32 %v7215, %v7268
        %7270 = vmatmul.bf16.gmra.mxu0 %v6510
        %v7271 = vpop.f32.mrf.mxu0
        %v7272 = vadd.f32 %v7218, %v7271
        %v7273 = vpop.f32.mrf.mxu0
        %v7274 = vadd.f32 %v7220, %v7273
        %7275 = vmatmul.bf16.gmra.mxu0 %v6541
        %v7276 = vpop.f32.mrf.mxu0
        %v7277 = vadd.f32 %v7223, %v7276
        %v7278 = vpop.f32.mrf.mxu0
        %v7279 = vadd.f32 %v7225, %v7278
        %7280 = vdwg.mxu0
        %7281 = vmatpush.bf16.msra.mxu0 %v6960
        %7282 = vmatpush.bf16.msra.mxu0 %v6959
        %7283 = vmatpush.bf16.msra.mxu0 %v6958
        %7284 = vmatpush.bf16.msra.mxu0 %v6957
        %7285 = vmatpush.bf16.msra.mxu0 %v6956
        %7286 = vmatpush.bf16.msra.mxu0 %v6955
        %7287 = vmatpush.bf16.msra.mxu0 %v6954
        %7288 = vmatpush.bf16.msra.mxu0 %v6953
        %7289 = vmatmul.bf16.gmra.mxu0 %v6341
        %v7290 = vpop.f32.mrf.mxu0
        %v7291 = vadd.f32 %v7237, %v7290
        %v7292 = vpop.f32.mrf.mxu0
        %v7293 = vadd.f32 %v7239, %v7292
        %7294 = vmatmul.bf16.gmra.mxu0 %v6373
        %v7295 = vpop.f32.mrf.mxu0
        %v7296 = vadd.f32 %v7242, %v7295
        %v7297 = vpop.f32.mrf.mxu0
        %v7298 = vadd.f32 %v7244, %v7297
        %7299 = vmatmul.bf16.gmra.mxu0 %v6392
        %v7300 = vpop.f32.mrf.mxu0
        %v7301 = vadd.f32 %v7247, %v7300
        %v7302 = vpop.f32.mrf.mxu0
        %v7303 = vadd.f32 %v7249, %v7302
        %7304 = vmatmul.bf16.gmra.mxu0 %v6421
        %v7305 = vpop.f32.mrf.mxu0
        %v7306 = vadd.f32 %v7252, %v7305
        %v7307 = vpop.f32.mrf.mxu0
        %v7308 = vadd.f32 %v7254, %v7307
        %7309 = vmatmul.bf16.gmra.mxu0 %v6442
        %v7310 = vpop.f32.mrf.mxu0
        %v7311 = vadd.f32 %v7257, %v7310
        %v7312 = vpop.f32.mrf.mxu0
        %v7313 = vadd.f32 %v7259, %v7312
        %7314 = vmatmul.bf16.gmra.mxu0 %v6472
        %v7315 = vpop.f32.mrf.mxu0
        %v7316 = vadd.f32 %v7262, %v7315
        %v7317 = vpop.f32.mrf.mxu0
        %v7318 = vadd.f32 %v7264, %v7317
        %7319 = vmatmul.bf16.gmra.mxu0 %v6491
        %v7320 = vpop.f32.mrf.mxu0
        %v7321 = vadd.f32 %v7267, %v7320
        %v7322 = vpop.f32.mrf.mxu0
        %v7323 = vadd.f32 %v7269, %v7322
        %7324 = vmatmul.bf16.gmra.mxu0 %v6523
        %v7325 = vpop.f32.mrf.mxu0
        %v7326 = vadd.f32 %v7272, %v7325
        %v7327 = vpop.f32.mrf.mxu0
        %v7328 = vadd.f32 %v7274, %v7327
        %7329 = vmatmul.bf16.gmra.mxu0 %v6542
        %v7330 = vpop.f32.mrf.mxu0
        %v7331 = vadd.f32 %v7277, %v7330
        %v7332 = vpop.f32.mrf.mxu0
        %v7333 = vadd.f32 %v7279, %v7332
        %7334 = vdwg.mxu0
        %7335 = vmatpush.bf16.msra.mxu0 %v6968
        %7336 = vmatpush.bf16.msra.mxu0 %v6967
        %7337 = vmatpush.bf16.msra.mxu0 %v6966
        %7338 = vmatpush.bf16.msra.mxu0 %v6965
        %7339 = vmatpush.bf16.msra.mxu0 %v6964
        %7340 = vmatpush.bf16.msra.mxu0 %v6963
        %7341 = vmatpush.bf16.msra.mxu0 %v6962
        %7342 = vmatpush.bf16.msra.mxu0 %v6961
        %7343 = vmatmul.bf16.gmra.mxu0 %v6342
        %v7344 = vpop.f32.mrf.mxu0
        %v7345 = vadd.f32 %v7291, %v7344
        %v7346 = vpop.f32.mrf.mxu0
        %v7347 = vadd.f32 %v7293, %v7346
        %7348 = vmatmul.bf16.gmra.mxu0 %v6374
        %v7349 = vpop.f32.mrf.mxu0
        %v7350 = vadd.f32 %v7296, %v7349
        %v7351 = vpop.f32.mrf.mxu0
        %v7352 = vadd.f32 %v7298, %v7351
        %7353 = vmatmul.bf16.gmra.mxu0 %v6393
        %v7354 = vpop.f32.mrf.mxu0
        %v7355 = vadd.f32 %v7301, %v7354
        %v7356 = vpop.f32.mrf.mxu0
        %v7357 = vadd.f32 %v7303, %v7356
        %7358 = vmatmul.bf16.gmra.mxu0 %v6422
        %v7359 = vpop.f32.mrf.mxu0
        %v7360 = vadd.f32 %v7306, %v7359
        %v7361 = vpop.f32.mrf.mxu0
        %v7362 = vadd.f32 %v7308, %v7361
        %7363 = vmatmul.bf16.gmra.mxu0 %v6443
        %v7364 = vpop.f32.mrf.mxu0
        %v7365 = vadd.f32 %v7311, %v7364
        %v7366 = vpop.f32.mrf.mxu0
        %v7367 = vadd.f32 %v7313, %v7366
        %7368 = vmatmul.bf16.gmra.mxu0 %v6473
        %v7369 = vpop.f32.mrf.mxu0
        %v7370 = vadd.f32 %v7316, %v7369
        %v7371 = vpop.f32.mrf.mxu0
        %v7372 = vadd.f32 %v7318, %v7371
        %7373 = vmatmul.bf16.gmra.mxu0 %v6492
        %v7374 = vpop.f32.mrf.mxu0
        %v7375 = vadd.f32 %v7321, %v7374
        %v7376 = vpop.f32.mrf.mxu0
        %v7377 = vadd.f32 %v7323, %v7376
        %7378 = vmatmul.bf16.gmra.mxu0 %v6524
        %v7379 = vpop.f32.mrf.mxu0
        %v7380 = vadd.f32 %v7326, %v7379
        %v7381 = vpop.f32.mrf.mxu0
        %v7382 = vadd.f32 %v7328, %v7381
        %7383 = vmatmul.bf16.gmra.mxu0 %v6543
        %v7384 = vpop.f32.mrf.mxu0
        %v7385 = vadd.f32 %v7331, %v7384
        %v7386 = vpop.f32.mrf.mxu0
        %v7387 = vadd.f32 %v7333, %v7386
        %7388 = vdwg.mxu0
        %7389 = vmatpush.bf16.msra.mxu0 %v6976
        %7390 = vmatpush.bf16.msra.mxu0 %v6975
        %7391 = vmatpush.bf16.msra.mxu0 %v6974
        %7392 = vmatpush.bf16.msra.mxu0 %v6973
        %7393 = vmatpush.bf16.msra.mxu0 %v6972
        %7394 = vmatpush.bf16.msra.mxu0 %v6971
        %7395 = vmatpush.bf16.msra.mxu0 %v6970
        %7396 = vmatpush.bf16.msra.mxu0 %v6969
        %7397 = vmatmul.bf16.gmra.mxu0 %v6343
        %v7398 = vpop.f32.mrf.mxu0
        %v7399 = vadd.f32 %v7345, %v7398
        %v7400 = vpop.f32.mrf.mxu0
        %v7401 = vadd.f32 %v7347, %v7400
        %7402 = vmatmul.bf16.gmra.mxu0 %v6375
        %v7403 = vpop.f32.mrf.mxu0
        %v7404 = vadd.f32 %v7350, %v7403
        %v7405 = vpop.f32.mrf.mxu0
        %v7406 = vadd.f32 %v7352, %v7405
        %7407 = vmatmul.bf16.gmra.mxu0 %v6394
        %v7408 = vpop.f32.mrf.mxu0
        %v7409 = vadd.f32 %v7355, %v7408
        %v7410 = vpop.f32.mrf.mxu0
        %v7411 = vadd.f32 %v7357, %v7410
        %7412 = vmatmul.bf16.gmra.mxu0 %v6423
        %v7413 = vpop.f32.mrf.mxu0
        %v7414 = vadd.f32 %v7360, %v7413
        %v7415 = vpop.f32.mrf.mxu0
        %v7416 = vadd.f32 %v7362, %v7415
        %7417 = vmatmul.bf16.gmra.mxu0 %v6444
        %v7418 = vpop.f32.mrf.mxu0
        %v7419 = vadd.f32 %v7365, %v7418
        %v7420 = vpop.f32.mrf.mxu0
        %v7421 = vadd.f32 %v7367, %v7420
        %7422 = vmatmul.bf16.gmra.mxu0 %v6474
        %v7423 = vpop.f32.mrf.mxu0
        %v7424 = vadd.f32 %v7370, %v7423
        %v7425 = vpop.f32.mrf.mxu0
        %v7426 = vadd.f32 %v7372, %v7425
        %7427 = vmatmul.bf16.gmra.mxu0 %v6493
        %v7428 = vpop.f32.mrf.mxu0
        %v7429 = vadd.f32 %v7375, %v7428
        %v7430 = vpop.f32.mrf.mxu0
        %v7431 = vadd.f32 %v7377, %v7430
        %7432 = vmatmul.bf16.gmra.mxu0 %v6525
        %v7433 = vpop.f32.mrf.mxu0
        %v7434 = vadd.f32 %v7380, %v7433
        %v7435 = vpop.f32.mrf.mxu0
        %v7436 = vadd.f32 %v7382, %v7435
        %7437 = vmatmul.bf16.gmra.mxu0 %v6544
        %v7438 = vpop.f32.mrf.mxu0
        %v7439 = vadd.f32 %v7385, %v7438
        %v7440 = vpop.f32.mrf.mxu0
        %v7441 = vadd.f32 %v7387, %v7440
        %7442 = vdwg.mxu0
        %7443 = vmatpush.bf16.msra.mxu0 %v6984
        %7444 = vmatpush.bf16.msra.mxu0 %v6983
        %7445 = vmatpush.bf16.msra.mxu0 %v6982
        %7446 = vmatpush.bf16.msra.mxu0 %v6981
        %7447 = vmatpush.bf16.msra.mxu0 %v6980
        %7448 = vmatpush.bf16.msra.mxu0 %v6979
        %7449 = vmatpush.bf16.msra.mxu0 %v6978
        %7450 = vmatpush.bf16.msra.mxu0 %v6977
        %7451 = vmatmul.bf16.gmra.mxu0 %v6344
        %v7452 = vpop.f32.mrf.mxu0
        %v7453 = vadd.f32 %v7399, %v7452
        %v7454 = vpop.f32.mrf.mxu0
        %v7455 = vadd.f32 %v7401, %v7454
        %7456 = vmatmul.bf16.gmra.mxu0 %v6376
        %v7457 = vpop.f32.mrf.mxu0
        %v7458 = vadd.f32 %v7404, %v7457
        %v7459 = vpop.f32.mrf.mxu0
        %v7460 = vadd.f32 %v7406, %v7459
        %7461 = vmatmul.bf16.gmra.mxu0 %v6395
        %v7462 = vpop.f32.mrf.mxu0
        %v7463 = vadd.f32 %v7409, %v7462
        %v7464 = vpop.f32.mrf.mxu0
        %v7465 = vadd.f32 %v7411, %v7464
        %7466 = vmatmul.bf16.gmra.mxu0 %v6424
        %v7467 = vpop.f32.mrf.mxu0
        %v7468 = vadd.f32 %v7414, %v7467
        %v7469 = vpop.f32.mrf.mxu0
        %v7470 = vadd.f32 %v7416, %v7469
        %7471 = vmatmul.bf16.gmra.mxu0 %v6445
        %v7472 = vpop.f32.mrf.mxu0
        %v7473 = vadd.f32 %v7419, %v7472
        %v7474 = vpop.f32.mrf.mxu0
        %v7475 = vadd.f32 %v7421, %v7474
        %7476 = vmatmul.bf16.gmra.mxu0 %v6475
        %v7477 = vpop.f32.mrf.mxu0
        %v7478 = vadd.f32 %v7424, %v7477
        %v7479 = vpop.f32.mrf.mxu0
        %v7480 = vadd.f32 %v7426, %v7479
        %7481 = vmatmul.bf16.gmra.mxu0 %v6494
        %v7482 = vpop.f32.mrf.mxu0
        %v7483 = vadd.f32 %v7429, %v7482
        %v7484 = vpop.f32.mrf.mxu0
        %v7485 = vadd.f32 %v7431, %v7484
        %7486 = vmatmul.bf16.gmra.mxu0 %v6526
        %v7487 = vpop.f32.mrf.mxu0
        %v7488 = vadd.f32 %v7434, %v7487
        %v7489 = vpop.f32.mrf.mxu0
        %v7490 = vadd.f32 %v7436, %v7489
        %7491 = vmatmul.bf16.gmra.mxu0 %v6545
        %v7492 = vpop.f32.mrf.mxu0
        %v7493 = vadd.f32 %v7439, %v7492
        %v7494 = vpop.f32.mrf.mxu0
        %v7495 = vadd.f32 %v7441, %v7494
        %7496 = vdwg.mxu0
        %7497 = vmatpush.bf16.msra.mxu0 %v6992
        %7498 = vmatpush.bf16.msra.mxu0 %v6991
        %7499 = vmatpush.bf16.msra.mxu0 %v6990
        %7500 = vmatpush.bf16.msra.mxu0 %v6989
        %7501 = vmatpush.bf16.msra.mxu0 %v6988
        %7502 = vmatpush.bf16.msra.mxu0 %v6987
        %7503 = vmatpush.bf16.msra.mxu0 %v6986
        %7504 = vmatpush.bf16.msra.mxu0 %v6985
        %7505 = vmatmul.bf16.gmra.mxu0 %v6356
        %v7506 = vpop.f32.mrf.mxu0
        %v7507 = vadd.f32 %v7453, %v7506
        %v7508 = vpop.f32.mrf.mxu0
        %v7509 = vadd.f32 %v7455, %v7508
        %7510 = vmatmul.bf16.gmra.mxu0 %v6377
        %v7511 = vpop.f32.mrf.mxu0
        %v7512 = vadd.f32 %v7458, %v7511
        %v7513 = vpop.f32.mrf.mxu0
        %v7514 = vadd.f32 %v7460, %v7513
        %7515 = vmatmul.bf16.gmra.mxu0 %v6406
        %v7516 = vpop.f32.mrf.mxu0
        %v7517 = vadd.f32 %v7463, %v7516
        %v7518 = vpop.f32.mrf.mxu0
        %v7519 = vadd.f32 %v7465, %v7518
        %7520 = vmatmul.bf16.gmra.mxu0 %v6425
        %v7521 = vpop.f32.mrf.mxu0
        %v7522 = vadd.f32 %v7468, %v7521
        %v7523 = vpop.f32.mrf.mxu0
        %v7524 = vadd.f32 %v7470, %v7523
        %7525 = vmatmul.bf16.gmra.mxu0 %v6457
        %v7526 = vpop.f32.mrf.mxu0
        %v7527 = vadd.f32 %v7473, %v7526
        %v7528 = vpop.f32.mrf.mxu0
        %v7529 = vadd.f32 %v7475, %v7528
        %7530 = vmatmul.bf16.gmra.mxu0 %v6476
        %v7531 = vpop.f32.mrf.mxu0
        %v7532 = vadd.f32 %v7478, %v7531
        %v7533 = vpop.f32.mrf.mxu0
        %v7534 = vadd.f32 %v7480, %v7533
        %7535 = vmatmul.bf16.gmra.mxu0 %v6506
        %v7536 = vpop.f32.mrf.mxu0
        %v7537 = vadd.f32 %v7483, %v7536
        %v7538 = vpop.f32.mrf.mxu0
        %v7539 = vadd.f32 %v7485, %v7538
        %7540 = vmatmul.bf16.gmra.mxu0 %v6527
        %v7541 = vpop.f32.mrf.mxu0
        %v7542 = vadd.f32 %v7488, %v7541
        %v7543 = vpop.f32.mrf.mxu0
        %v7544 = vadd.f32 %v7490, %v7543
        %7545 = vmatmul.bf16.gmra.mxu0 %v6551
        %v7546 = vpop.f32.mrf.mxu0
        %v7547 = vadd.f32 %v7493, %v7546
        %v7548 = vpop.f32.mrf.mxu0
        %v7549 = vadd.f32 %v7495, %v7548
        %7550 = vdwg.mxu0
        %v7551 = vmax.f32 %v7507, 0.0
        %v7552 = vmax.f32 %v7509, 0.0
        %v7553 = vmax.f32 %v7512, 0.0
        %v7554 = vmax.f32 %v7514, 0.0
        %v7555 = vmax.f32 %v7517, 0.0
        %v7556 = vmax.f32 %v7519, 0.0
        %v7557 = vmax.f32 %v7522, 0.0
        %v7558 = vmax.f32 %v7524, 0.0
        %v7559 = vmax.f32 %v7527, 0.0
        %v7560 = vmax.f32 %v7529, 0.0
        %v7561 = vmax.f32 %v7532, 0.0
        %v7562 = vmax.f32 %v7534, 0.0
        %v7563 = vmax.f32 %v7537, 0.0
        %v7564 = vmax.f32 %v7539, 0.0
        %v7565 = vmax.f32 %v7542, 0.0
        %v7566 = vmax.f32 %v7544, 0.0
        %v7567 = vmax.f32 %v7547, 0.0
        %v7568 = vmax.f32 %v7549, 0.0
        %v7587 = vrot.slane %v7551, 4
        %v7588 = vrot.slane %v7552, 4
        %v7589 = vrot.slane %v7553, 4
        %v7590 = vrot.slane %v7554, 4
        %v7591 = vrot.slane %v7555, 4
        %v7592 = vrot.slane %v7556, 4
        %v7593 = vrot.slane %v7557, 4
        %v7594 = vrot.slane %v7558, 4
        %v7595 = vrot.slane %v7559, 4
        %v7596 = vrot.slane %v7560, 4
        %v7597 = vrot.slane %v7561, 4
        %v7598 = vrot.slane %v7562, 4
        %v7599 = vrot.slane %v7563, 4
        %v7600 = vrot.slane %v7564, 4
        %v7601 = vrot.slane %v7565, 4
        %v7602 = vrot.slane %v7566, 4
        %v7603 = vrot.slane %v7567, 4
        %v7604 = vrot.slane %v7568, 4
        %7605 = vst [vmem:[#allocation1] ss:$2 sm:$0xff] %v7551
        %s7606 = scalar_lea.vmem [#allocation1], 1
        %7607 = vst [vmem:[%s7606] ss:$2 sm:$0xff] %v7587
        %s7608 = scalar_lea.vmem [#allocation1], 16
        %7609 = vst [vmem:[%s7608] ss:$2 sm:$0xff] %v7552
        %v7610 = vld.sshfl [vmem:[#allocation1] sm:$0xff pattern:$0x75316420]
        %v7611 = vld.sshfl [vmem:[#allocation1 + $0x10] sm:$0xff pattern:$0x75316420]
        %s7612 = scalar_lea.vmem [#allocation1], 32
        %7613 = vst [vmem:[%s7612] ss:$2 sm:$0xff] %v7588
        %s7614 = scalar_lea.vmem [#allocation1], 33
        %7615 = vst [vmem:[%s7614] ss:$2 sm:$0xff] %v7553
        %s7616 = scalar_lea.vmem [#allocation1], 48
        %7617 = vst [vmem:[%s7616] ss:$2 sm:$0xff] %v7589
        %v7618 = vld.sshfl [vmem:[#allocation1 + $0x20] sm:$0xff pattern:$0x75316420]
        %v7619 = vld.sshfl [vmem:[#allocation1 + $0x30] sm:$0xff pattern:$0x75316420]
        %7620 = vst [vmem:[#allocation1] ss:$2 sm:$0xff] %v7554
        %7621 = vst [vmem:[%s7606] ss:$2 sm:$0xff] %v7590
        %7622 = vst [vmem:[%s7608] ss:$2 sm:$0xff] %v7555
        %v7623 = vld.sshfl [vmem:[#allocation1] sm:$0xff pattern:$0x75316420]
        %v7624 = vld.sshfl [vmem:[#allocation1 + $0x10] sm:$0xff pattern:$0x75316420]
        %7625 = vst [vmem:[%s7612] ss:$2 sm:$0xff] %v7591
        %7626 = vst [vmem:[%s7614] ss:$2 sm:$0xff] %v7556
        %7627 = vst [vmem:[%s7616] ss:$2 sm:$0xff] %v7592
        %v7628 = vld.sshfl [vmem:[#allocation1 + $0x20] sm:$0xff pattern:$0x75316420]
        %v7629 = vld.sshfl [vmem:[#allocation1 + $0x30] sm:$0xff pattern:$0x75316420]
        %7630 = vst [vmem:[#allocation1] ss:$2 sm:$0xff] %v7557
        %7631 = vst [vmem:[%s7606] ss:$2 sm:$0xff] %v7593
        %7632 = vst [vmem:[%s7608] ss:$2 sm:$0xff] %v7558
        %v7633 = vld.sshfl [vmem:[#allocation1] sm:$0xff pattern:$0x75316420]
        %v7634 = vld.sshfl [vmem:[#allocation1 + $0x10] sm:$0xff pattern:$0x75316420]
        %7635 = vst [vmem:[%s7612] ss:$2 sm:$0xff] %v7594
        %7636 = vst [vmem:[%s7614] ss:$2 sm:$0xff] %v7559
        %7637 = vst [vmem:[%s7616] ss:$2 sm:$0xff] %v7595
        %v7638 = vld.sshfl [vmem:[#allocation1 + $0x20] sm:$0xff pattern:$0x75316420]
        %v7639 = vld.sshfl [vmem:[#allocation1 + $0x30] sm:$0xff pattern:$0x75316420]
        %7640 = vst [vmem:[#allocation1] ss:$2 sm:$0xff] %v7560
        %7641 = vst [vmem:[%s7606] ss:$2 sm:$0xff] %v7596
        %7642 = vst [vmem:[%s7608] ss:$2 sm:$0xff] %v7561
        %v7643 = vld.sshfl [vmem:[#allocation1] sm:$0xff pattern:$0x75316420]
        %v7644 = vld.sshfl [vmem:[#allocation1 + $0x10] sm:$0xff pattern:$0x75316420]
        %7645 = vst [vmem:[%s7612] ss:$2 sm:$0xff] %v7597
        %7646 = vst [vmem:[%s7614] ss:$2 sm:$0xff] %v7562
        %7647 = vst [vmem:[%s7616] ss:$2 sm:$0xff] %v7598
        %v7648 = vld.sshfl [vmem:[#allocation1 + $0x20] sm:$0xff pattern:$0x75316420]
        %v7649 = vld.sshfl [vmem:[#allocation1 + $0x30] sm:$0xff pattern:$0x75316420]
        %7650 = vst [vmem:[#allocation1] ss:$2 sm:$0xff] %v7563
        %7651 = vst [vmem:[%s7606] ss:$2 sm:$0xff] %v7599
        %7652 = vst [vmem:[%s7608] ss:$2 sm:$0xff] %v7564
        %v7653 = vld.sshfl [vmem:[#allocation1] sm:$0xff pattern:$0x75316420]
        %v7654 = vld.sshfl [vmem:[#allocation1 + $0x10] sm:$0xff pattern:$0x75316420]
        %7655 = vst [vmem:[%s7612] ss:$2 sm:$0xff] %v7600
        %7656 = vst [vmem:[%s7614] ss:$2 sm:$0xff] %v7565
        %7657 = vst [vmem:[%s7616] ss:$2 sm:$0xff] %v7601
        %v7658 = vld.sshfl [vmem:[#allocation1 + $0x20] sm:$0xff pattern:$0x75316420]
        %v7659 = vld.sshfl [vmem:[#allocation1 + $0x30] sm:$0xff pattern:$0x75316420]
        %7660 = vst [vmem:[#allocation1] ss:$2 sm:$0xff] %v7566
        %7661 = vst [vmem:[%s7606] ss:$2 sm:$0xff] %v7602
        %7662 = vst [vmem:[%s7608] ss:$2 sm:$0xff] %v7567
        %v7663 = vld.sshfl [vmem:[#allocation1] sm:$0xff pattern:$0x75316420]
        %v7664 = vld.sshfl [vmem:[#allocation1 + $0x10] sm:$0xff pattern:$0x75316420]
        %7665 = vst [vmem:[%s7612] ss:$2 sm:$0xff] %v7603
        %7666 = vst [vmem:[%s7614] ss:$2 sm:$0xff] %v7568
        %7667 = vst [vmem:[%s7616] ss:$2 sm:$0xff] %v7604
        %v7668 = vld.sshfl [vmem:[#allocation1 + $0x20] sm:$0xff pattern:$0x75316420]
        %v7669 = vld.sshfl [vmem:[#allocation1 + $0x30] sm:$0xff pattern:$0x75316420]
        %v7694 = vpack.c.bf16 %v7610, %v7610
        %v7695 = vpack.c.bf16 %v7611, %v7611
        %v7696 = vpack.c.bf16 %v7618, %v7618
        %v7697 = vpack.c.bf16 %v7619, %v7619
        %v7698 = vpack.c.bf16 %v7623, %v7623
        %v7699 = vpack.c.bf16 %v7624, %v7624
        %v7700 = vpack.c.bf16 %v7628, %v7628
        %v7701 = vpack.c.bf16 %v7629, %v7629
        %v7702 = vpack.c.bf16 %v7633, %v7633
        %v7703 = vpack.c.bf16 %v7634, %v7634
        %v7704 = vpack.c.bf16 %v7638, %v7638
        %v7705 = vpack.c.bf16 %v7639, %v7639
        %v7706 = vpack.c.bf16 %v7643, %v7643
        %v7707 = vpack.c.bf16 %v7644, %v7644
        %v7708 = vpack.c.bf16 %v7648, %v7648
        %v7709 = vpack.c.bf16 %v7649, %v7649
        %v7710 = vpack.c.bf16 %v7653, %v7653
        %v7711 = vpack.c.bf16 %v7654, %v7654
        %v7712 = vpack.c.bf16 %v7658, %v7658
        %v7713 = vpack.c.bf16 %v7659, %v7659
        %v7714 = vpack.c.bf16 %v7663, %v7663
        %v7715 = vpack.c.bf16 %v7664, %v7664
        %v7716 = vpack.c.bf16 %v7668, %v7668
        %v7717 = vpack.c.bf16 %v7669, %v7669
        %7718 = vst [vmem:[#allocation5] sm:$0xf] %v7694
        %7719 = vst [vmem:[#allocation5 + $0x4] sm:$0x3] %v7695
        %7720 = vst [vmem:[#allocation5 + $0x8] sm:$0xf] %v7696
        %7721 = vst [vmem:[#allocation5 + $0xc] sm:$0x3] %v7697
        %7722 = vst [vmem:[#allocation5 + $0x10] sm:$0xf] %v7698
        %7723 = vst [vmem:[#allocation5 + $0x14] sm:$0x3] %v7699
        %7724 = vst [vmem:[#allocation5 + $0x18] sm:$0xf] %v7700
        %7725 = vst [vmem:[#allocation5 + $0x1c] sm:$0x3] %v7701
        %7726 = vst [vmem:[#allocation5 + $0x20] sm:$0xf] %v7702
        %7727 = vst [vmem:[#allocation5 + $0x24] sm:$0x3] %v7703
        %7728 = vst [vmem:[#allocation5 + $0x28] sm:$0xf] %v7704
        %7729 = vst [vmem:[#allocation5 + $0x2c] sm:$0x3] %v7705
        %7730 = vst [vmem:[#allocation5 + $0x30] sm:$0xf] %v7706
        %7731 = vst [vmem:[#allocation5 + $0x34] sm:$0x3] %v7707
        %7732 = vst [vmem:[#allocation5 + $0x38] sm:$0xf] %v7708
        %7733 = vst [vmem:[#allocation5 + $0x3c] sm:$0x3] %v7709
        %7734 = vst [vmem:[#allocation5 + $0x40] sm:$0xf] %v7710
        %7735 = vst [vmem:[#allocation5 + $0x44] sm:$0x3] %v7711
        %7736 = vst [vmem:[#allocation5 + $0x48] sm:$0xf] %v7712
        %7737 = vst [vmem:[#allocation5 + $0x4c] sm:$0x3] %v7713
        %7738 = vst [vmem:[#allocation5 + $0x50] sm:$0xf] %v7714
        %7739 = vst [vmem:[#allocation5 + $0x54] sm:$0x3] %v7715
        %7740 = vst [vmem:[#allocation5 + $0x58] sm:$0xf] %v7716
        %7741 = vst [vmem:[#allocation5 + $0x5c] sm:$0x3] %v7717
        %v7742 = vld [vmem:[#allocation5] sm:$0xf]
        %v7743 = vld [vmem:[#allocation5 + $0x4] sm:$0x3]
        %v7744 = vld [vmem:[#allocation5 + $0x8] sm:$0xf]
        %v7745 = vld [vmem:[#allocation5 + $0xc] sm:$0x3]
        %v7746 = vld [vmem:[#allocation5 + $0x10] sm:$0xf]
        %v7747 = vld [vmem:[#allocation5 + $0x14] sm:$0x3]
        %v7748 = vld [vmem:[#allocation5 + $0x18] sm:$0xf]
        %v7749 = vld [vmem:[#allocation5 + $0x1c] sm:$0x3]
        %v7750 = vld [vmem:[#allocation5 + $0x20] sm:$0xf]
        %v7751 = vld [vmem:[#allocation5 + $0x24] sm:$0x3]
        %v7752 = vld [vmem:[#allocation5 + $0x28] sm:$0xf]
        %v7753 = vld [vmem:[#allocation5 + $0x2c] sm:$0x3]
        %v7754 = vld [vmem:[#allocation5 + $0x30] sm:$0xf]
        %v7755 = vld [vmem:[#allocation5 + $0x34] sm:$0x3]
        %v7756 = vld [vmem:[#allocation5 + $0x38] sm:$0xf]
        %v7757 = vld [vmem:[#allocation5 + $0x3c] sm:$0x3]
        %v7758 = vld [vmem:[#allocation5 + $0x40] sm:$0xf]
        %v7759 = vld [vmem:[#allocation5 + $0x44] sm:$0x3]
        %v7760 = vld [vmem:[#allocation5 + $0x48] sm:$0xf]
        %v7761 = vld [vmem:[#allocation5 + $0x4c] sm:$0x3]
        %v7762 = vld [vmem:[#allocation5 + $0x50] sm:$0xf]
        %v7763 = vld [vmem:[#allocation5 + $0x54] sm:$0x3]
        %v7764 = vld [vmem:[#allocation5 + $0x58] sm:$0xf]
        %v7765 = vld [vmem:[#allocation5 + $0x5c] sm:$0x3]
        %v7790 = vrot.slane %v7742, 2
        %v7791 = vrot.slane %v7743, 2
        %v7792 = vrot.slane %v7744, 2
        %v7793 = vrot.slane %v7745, 2
        %v7794 = vrot.slane %v7746, 2
        %v7795 = vrot.slane %v7747, 2
        %v7796 = vrot.slane %v7748, 2
        %v7797 = vrot.slane %v7749, 2
        %v7798 = vrot.slane %v7750, 2
        %v7799 = vrot.slane %v7751, 2
        %v7800 = vrot.slane %v7752, 2
        %v7801 = vrot.slane %v7753, 2
        %v7802 = vrot.slane %v7754, 2
        %v7803 = vrot.slane %v7755, 2
        %v7804 = vrot.slane %v7756, 2
        %v7805 = vrot.slane %v7757, 2
        %v7806 = vrot.slane %v7758, 2
        %v7807 = vrot.slane %v7759, 2
        %v7808 = vrot.slane %v7760, 2
        %v7809 = vrot.slane %v7761, 2
        %v7810 = vrot.slane %v7762, 2
        %v7811 = vrot.slane %v7763, 2
        %v7812 = vrot.slane %v7764, 2
        %v7813 = vrot.slane %v7765, 2
        %v7816 = vsel %vm3265, %v7742, %v7790
        %v7817 = vsel %vm5622, %v7742, %v7790
        %v7819 = vrot.slane %v7817, 2
        %v7822 = vsel %vm3265, %v7743, %v7791
        %v7825 = vsel %vm3265, %v7744, %v7792
        %v7826 = vsel %vm5622, %v7744, %v7792
        %v7828 = vrot.slane %v7826, 2
        %v7831 = vsel %vm3265, %v7745, %v7793
        %v7834 = vsel %vm3265, %v7746, %v7794
        %v7835 = vsel %vm5622, %v7746, %v7794
        %v7837 = vrot.slane %v7835, 2
        %v7840 = vsel %vm3265, %v7747, %v7795
        %v7843 = vsel %vm3265, %v7748, %v7796
        %v7844 = vsel %vm5622, %v7748, %v7796
        %v7846 = vrot.slane %v7844, 2
        %v7849 = vsel %vm3265, %v7749, %v7797
        %v7852 = vsel %vm3265, %v7750, %v7798
        %v7853 = vsel %vm5622, %v7750, %v7798
        %v7855 = vrot.slane %v7853, 2
        %v7858 = vsel %vm3265, %v7751, %v7799
        %v7861 = vsel %vm3265, %v7752, %v7800
        %v7862 = vsel %vm5622, %v7752, %v7800
        %v7864 = vrot.slane %v7862, 2
        %v7867 = vsel %vm3265, %v7753, %v7801
        %v7870 = vsel %vm3265, %v7754, %v7802
        %v7871 = vsel %vm5622, %v7754, %v7802
        %v7873 = vrot.slane %v7871, 2
        %v7876 = vsel %vm3265, %v7755, %v7803
        %v7879 = vsel %vm3265, %v7756, %v7804
        %v7880 = vsel %vm5622, %v7756, %v7804
        %v7882 = vrot.slane %v7880, 2
        %v7885 = vsel %vm3265, %v7757, %v7805
        %v7888 = vsel %vm3265, %v7758, %v7806
        %v7889 = vsel %vm5622, %v7758, %v7806
        %v7891 = vrot.slane %v7889, 2
        %v7894 = vsel %vm3265, %v7759, %v7807
        %v7897 = vsel %vm3265, %v7760, %v7808
        %v7898 = vsel %vm5622, %v7760, %v7808
        %v7900 = vrot.slane %v7898, 2
        %v7903 = vsel %vm3265, %v7761, %v7809
        %v7906 = vsel %vm3265, %v7762, %v7810
        %v7907 = vsel %vm5622, %v7762, %v7810
        %v7909 = vrot.slane %v7907, 2
        %v7912 = vsel %vm3265, %v7763, %v7811
        %v7915 = vsel %vm3265, %v7764, %v7812
        %v7916 = vsel %vm5622, %v7764, %v7812
        %v7918 = vrot.slane %v7916, 2
        %v7921 = vsel %vm3265, %v7765, %v7813
        %v7958 = vunpack.c.l.bf16 %v7816
        %v7959 = vunpack.c.l.bf16 %v7819
        %v7960 = vunpack.c.l.bf16 %v7822
        %v7961 = vunpack.c.l.bf16 %v7825
        %v7962 = vunpack.c.l.bf16 %v7828
        %v7963 = vunpack.c.l.bf16 %v7831
        %v7964 = vunpack.c.l.bf16 %v7834
        %v7965 = vunpack.c.l.bf16 %v7837
        %v7966 = vunpack.c.l.bf16 %v7840
        %v7967 = vunpack.c.l.bf16 %v7843
        %v7968 = vunpack.c.l.bf16 %v7846
        %v7969 = vunpack.c.l.bf16 %v7849
        %v7970 = vunpack.c.l.bf16 %v7852
        %v7971 = vunpack.c.l.bf16 %v7855
        %v7972 = vunpack.c.l.bf16 %v7858
        %v7973 = vunpack.c.l.bf16 %v7861
        %v7974 = vunpack.c.l.bf16 %v7864
        %v7975 = vunpack.c.l.bf16 %v7867
        %v7976 = vunpack.c.l.bf16 %v7870
        %v7977 = vunpack.c.l.bf16 %v7873
        %v7978 = vunpack.c.l.bf16 %v7876
        %v7979 = vunpack.c.l.bf16 %v7879
        %v7980 = vunpack.c.l.bf16 %v7882
        %v7981 = vunpack.c.l.bf16 %v7885
        %v7982 = vunpack.c.l.bf16 %v7888
        %v7983 = vunpack.c.l.bf16 %v7891
        %v7984 = vunpack.c.l.bf16 %v7894
        %v7985 = vunpack.c.l.bf16 %v7897
        %v7986 = vunpack.c.l.bf16 %v7900
        %v7987 = vunpack.c.l.bf16 %v7903
        %v7988 = vunpack.c.l.bf16 %v7906
        %v7989 = vunpack.c.l.bf16 %v7909
        %v7990 = vunpack.c.l.bf16 %v7912
        %v7991 = vunpack.c.l.bf16 %v7915
        %v7992 = vunpack.c.l.bf16 %v7918
        %v7993 = vunpack.c.l.bf16 %v7921
        %8030 = vst [vmem:[#allocation1] ss:$2 sm:$0xff] %v7958
        %s8031 = scalar_lea.vmem [#allocation1], 1
        %8032 = vst [vmem:[%s8031] ss:$2 sm:$0xff] %v7959
        %s8033 = scalar_lea.vmem [#allocation1], 16
        %8034 = vst [vmem:[%s8033] ss:$2 sm:$0xff] %v7960
        %s8035 = scalar_lea.vmem [#allocation1], 17
        %8036 = vst [vmem:[%s8035] ss:$2 sm:$0xff] %v7961
        %s8037 = scalar_lea.vmem [#allocation1], 32
        %8038 = vst [vmem:[%s8037] ss:$2 sm:$0xff] %v7962
        %s8039 = scalar_lea.vmem [#allocation1], 33
        %8040 = vst [vmem:[%s8039] ss:$2 sm:$0xff] %v7963
        %s8041 = scalar_lea.vmem [#allocation1], 48
        %8042 = vst [vmem:[%s8041] ss:$2 sm:$0xff] %v7964
        %s8043 = scalar_lea.vmem [#allocation1], 49
        %8044 = vst [vmem:[%s8043] ss:$2 sm:$0xff] %v7965
        %v8045 = vld.sshfl [vmem:[#allocation1] sm:$0xff pattern:$0x75316420]
        %v8046 = vld.sshfl [vmem:[#allocation1 + $0x10] sm:$0xff pattern:$0x75316420]
        %v8047 = vld.sshfl [vmem:[#allocation1 + $0x20] sm:$0xff pattern:$0x75316420]
        %v8048 = vld.sshfl [vmem:[#allocation1 + $0x30] sm:$0xff pattern:$0x75316420]
        %8049 = vst [vmem:[#allocation1] ss:$2 sm:$0xff] %v7966
        %8050 = vst [vmem:[%s8031] ss:$2 sm:$0xff] %v7967
        %8051 = vst [vmem:[%s8033] ss:$2 sm:$0xff] %v7968
        %8052 = vst [vmem:[%s8035] ss:$2 sm:$0xff] %v7969
        %8053 = vst [vmem:[%s8037] ss:$2 sm:$0xff] %v7970
        %8054 = vst [vmem:[%s8039] ss:$2 sm:$0xff] %v7971
        %8055 = vst [vmem:[%s8041] ss:$2 sm:$0xff] %v7972
        %8056 = vst [vmem:[%s8043] ss:$2 sm:$0xff] %v7973
        %v8057 = vld.sshfl [vmem:[#allocation1] sm:$0xff pattern:$0x75316420]
        %v8058 = vld.sshfl [vmem:[#allocation1 + $0x10] sm:$0xff pattern:$0x75316420]
        %v8059 = vld.sshfl [vmem:[#allocation1 + $0x20] sm:$0xff pattern:$0x75316420]
        %v8060 = vld.sshfl [vmem:[#allocation1 + $0x30] sm:$0xff pattern:$0x75316420]
        %8061 = vst [vmem:[#allocation1] ss:$2 sm:$0xff] %v7974
        %8062 = vst [vmem:[%s8031] ss:$2 sm:$0xff] %v7975
        %8063 = vst [vmem:[%s8033] ss:$2 sm:$0xff] %v7976
        %8064 = vst [vmem:[%s8035] ss:$2 sm:$0xff] %v7977
        %8065 = vst [vmem:[%s8037] ss:$2 sm:$0xff] %v7978
        %8066 = vst [vmem:[%s8039] ss:$2 sm:$0xff] %v7979
        %8067 = vst [vmem:[%s8041] ss:$2 sm:$0xff] %v7980
        %8068 = vst [vmem:[%s8043] ss:$2 sm:$0xff] %v7981
        %v8069 = vld.sshfl [vmem:[#allocation1] sm:$0xff pattern:$0x75316420]
        %v8070 = vld.sshfl [vmem:[#allocation1 + $0x10] sm:$0xff pattern:$0x75316420]
        %v8071 = vld.sshfl [vmem:[#allocation1 + $0x20] sm:$0xff pattern:$0x75316420]
        %v8072 = vld.sshfl [vmem:[#allocation1 + $0x30] sm:$0xff pattern:$0x75316420]
        %8073 = vst [vmem:[#allocation1] ss:$2 sm:$0xff] %v7982
        %8074 = vst [vmem:[%s8031] ss:$2 sm:$0xff] %v7983
        %8075 = vst [vmem:[%s8033] ss:$2 sm:$0xff] %v7984
        %8076 = vst [vmem:[%s8035] ss:$2 sm:$0xff] %v7985
        %8077 = vst [vmem:[%s8037] ss:$2 sm:$0xff] %v7986
        %8078 = vst [vmem:[%s8039] ss:$2 sm:$0xff] %v7987
        %8079 = vst [vmem:[%s8041] ss:$2 sm:$0xff] %v7988
        %8080 = vst [vmem:[%s8043] ss:$2 sm:$0xff] %v7989
        %v8081 = vld.sshfl [vmem:[#allocation1] sm:$0xff pattern:$0x75316420]
        %v8082 = vld.sshfl [vmem:[#allocation1 + $0x10] sm:$0xff pattern:$0x75316420]
        %v8083 = vld.sshfl [vmem:[#allocation1 + $0x20] sm:$0xff pattern:$0x75316420]
        %v8084 = vld.sshfl [vmem:[#allocation1 + $0x30] sm:$0xff pattern:$0x75316420]
        %8085 = vst [vmem:[#allocation1] ss:$2 sm:$0xff] %v7990
        %8086 = vst [vmem:[%s8031] ss:$2 sm:$0xff] %v7991
        %8087 = vst [vmem:[%s8033] ss:$2 sm:$0xff] %v7992
        %8088 = vst [vmem:[%s8035] ss:$2 sm:$0xff] %v7993
        %v8089 = vld.sshfl [vmem:[#allocation1] sm:$0xff pattern:$0x75316420]
        %v8090 = vld.sshfl [vmem:[#allocation1 + $0x10] sm:$0xff pattern:$0x75316420]
        %v8109 = vadd.f32 %v8045, %v8046
        %v8110 = vadd.f32 %v8109, %v8047
        %v8111 = vadd.f32 %v8110, %v8048
        %v8112 = vadd.f32 %v8111, %v8057
        %v8113 = vadd.f32 %v8112, %v8058
        %v8114 = vadd.f32 %v8113, %v8059
        %v8115 = vadd.f32 %v8114, %v8060
        %v8116 = vadd.f32 %v8115, %v8069
        %v8117 = vadd.f32 %v8116, %v8070
        %v8118 = vadd.f32 %v8117, %v8071
        %v8119 = vadd.f32 %v8118, %v8072
        %v8120 = vadd.f32 %v8119, %v8081
        %v8121 = vadd.f32 %v8120, %v8082
        %v8122 = vadd.f32 %v8121, %v8083
        %v8123 = vadd.f32 %v8122, %v8084
        %v8124 = vadd.f32 %v8123, %v8089
        %v8125 = vadd.f32 %v8124, %v8090
        %v8126 = vrot.slane %v8125, 4
        %v8127 = vadd.f32 %v8125, %v8126
        %v8128 = vrot.slane %v8127, 2
        %v8129 = vadd.f32 %v8127, %v8128
        %v8130 = vrot.slane %v8129, 1
        %v8131 = vadd.f32 %v8129, %v8130
        %v8132 = vrcp.pop 144.0
        %v8133 = vmul.f32 144.0, %v8132
        %v8134 = vsub.f32 1.0, %v8133
        %v8135 = vmul.f32 %v8132, %v8134
        %v8136 = vadd.f32 %v8132, %v8135
        %vm8137 = vweird.f32 %v8132
        %v8138 = vsel %vm8137, %v8132, %v8136
        %v8139 = vmul.f32 %v8131, %v8138
        %v8140 = vpack.c.bf16 %v8139, %v8139
        %v8141 = vld [vmem:[%s5] sm:$0xf]
        %v8142 = vld [vmem:[%s5 + $0x4] sm:$0xf]
        %v8143 = vld [vmem:[%s5 + $0x8] sm:$0xf]
        %v8144 = vld [vmem:[%s5 + $0xc] sm:$0xf]
        %v8145 = vld [vmem:[%s5 + $0x10] sm:$0xf]
        %v8146 = vld [vmem:[%s5 + $0x14] sm:$0xf]
        %v8147 = vld [vmem:[%s5 + $0x18] sm:$0xf]
        %v8148 = vld [vmem:[%s5 + $0x1c] sm:$0xf]
        %v8149 = vld [vmem:[%s5 + $0x20] sm:$0xf]
        %v8150 = vld [vmem:[%s5 + $0x24] sm:$0xf]
        %v8151 = vld [vmem:[%s5 + $0x28] sm:$0xf]
        %v8152 = vld [vmem:[%s5 + $0x2c] sm:$0xf]
        %v8153 = vld [vmem:[%s5 + $0x30] sm:$0xf]
        %v8154 = vld [vmem:[%s5 + $0x34] sm:$0xf]
        %v8155 = vld [vmem:[%s5 + $0x38] sm:$0xf]
        %v8156 = vld [vmem:[%s5 + $0x3c] sm:$0xf]
        %v8157 = vld [vmem:[%s6] sm:$0x1]
        %v8174 = vunpack.c.l.b16 %v8141
        %v8175 = vunpack.c.l.b16 %v8142
        %v8176 = vunpack.c.l.b16 %v8143
        %v8177 = vunpack.c.l.b16 %v8144
        %v8178 = vunpack.c.l.b16 %v8145
        %v8179 = vunpack.c.l.b16 %v8146
        %v8180 = vunpack.c.l.b16 %v8147
        %v8181 = vunpack.c.l.b16 %v8148
        %v8182 = vunpack.c.l.b16 %v8149
        %v8183 = vunpack.c.l.b16 %v8150
        %v8184 = vunpack.c.l.b16 %v8151
        %v8185 = vunpack.c.l.b16 %v8152
        %v8186 = vunpack.c.l.b16 %v8153
        %v8187 = vunpack.c.l.b16 %v8154
        %v8188 = vunpack.c.l.b16 %v8155
        %v8189 = vunpack.c.l.b16 %v8156
        %v8190 = vpack.c.b16 %v8175, %v8174
        %v8191 = vpack.c.b16 %v8177, %v8176
        %v8192 = vpack.c.b16 %v8179, %v8178
        %v8193 = vpack.c.b16 %v8181, %v8180
        %v8194 = vpack.c.b16 %v8183, %v8182
        %v8195 = vpack.c.b16 %v8185, %v8184
        %v8196 = vpack.c.b16 %v8187, %v8186
        %v8197 = vpack.c.b16 %v8189, %v8188
        %8206 = vmatpush.bf16.msra.mxu0 %v8197
        %8207 = vmatpush.bf16.msra.mxu0 %v8196
        %8208 = vmatpush.bf16.msra.mxu0 %v8195
        %8209 = vmatpush.bf16.msra.mxu0 %v8194
        %8210 = vmatpush.bf16.msra.mxu0 %v8193
        %8211 = vmatpush.bf16.msra.mxu0 %v8192
        %8212 = vmatpush.bf16.msra.mxu0 %v8191
        %8213 = vmatpush.bf16.msra.mxu0 %v8190
        %8214 = vmatmul.bf16.gmra.mxu0 %v8140
        %v8215 = vpop.f32.mrf.mxu0
        %v8216 = vadd.f32 %v8157, %v8215
        %v8217 = vpop.f32.mrf.mxu0
        %8218 = vdwg.mxu0
        %v8219 = vsel %vm2728, %v8216, -inf
        %8220 = vmax.xlane.f32.xlu0 %v8219
        %v8221 = vpop.xlane.xlu0 %8220
        %v8222 = vsub.f32 %v8216, %v8221
        %v8223 = vmul.f32 %v8222, 1.442695
        %v8224 = vpow.pop %v8223
        %v8225 = vsel %vm2728, %v8224, 0.0
        %8226 = vadd.xlane.f32.xlu0 %v8225
        %v8227 = vpop.xlane.xlu0 %8226
        %v8228 = vlog2.pop %v8227
        %v8229 = vmul.f32 %v8228, 0.6931472
        %v8230 = vsub.f32 %v8222, %v8229
        %8231 = vst [vmem:[%s287] sm:$0x1] %v8230
        %s8232 = sand.u32 %s182, 1
        %s8233 = scalar_lea.sflag [#allocation8], %s8232
        %s8234 = sand.u32 %s182, 1
        %s8235 = scalar_lea.vmem [#allocation9], %s8234
        // Predicated region
        $region53: #{simnet_forward.1} parent=47 // pred_check
          %p8236 = pneg %p192
        $region54: #{simnet_forward.1} parent=47 // pred_check_branch
          %8238 = sbr.rel (%p8236) target = $region56
        $region55: #{simnet_forward.1} parent=47 // pred_region
          %8240 = vsyncadd %s8233, 0
          %s8241 = scalar_lea.hbm %s7, %s22
          %s8243 = sshll.u32 %s8235, 4
          %s8244 = int_to_ptr.vmem [resolvable:$true] %s8243
          %s8245 = sshll.u32 %s8241, 4
          %s8246 = int_to_ptr.hbm [resolvable:$true] %s8245
          %8248 = dma.vmem_to_hbm [thread:$0]  %s8244, 16, %s8246, %s8233
        $region56: #{simnet_forward.1} parent=47 // pred_fallthru
          _
      $region48: #{simnet_forward.1} parent=5 // pred_fallthru
        _
      %p8249 = scmp.le.s32.totalorder 2, %s17
      // Predicated region
      $region57: #{simnet_forward.1} parent=5 // pred_check
        %p8250 = pneg %p8249
      $region58: #{simnet_forward.1} parent=5 // pred_check_branch
        %8252 = sbr.rel (%p8250) target = $region60
      $region59: #{simnet_forward.1} parent=5 // pred_region
        %s8253 = ssub.s32 %s17, 2
        // Predicated region
        $region61: #{simnet_forward.1} parent=59 // pred_check
          %p8254 = pneg %p198
        $region62: #{simnet_forward.1} parent=59 // pred_check_branch
          %8256 = sbr.rel (%p8254) target = $region64
        $region63: #{simnet_forward.1} parent=59 // pred_region
          %s8257 = sand.u32 %s183, 1
          %s8258 = scalar_lea.sflag [#allocation8], %s8257
          %s8259 = sand.u32 %s183, 1
          %s8260 = scalar_lea.vmem [#allocation9], %s8259
          %8262 = dma.done %s8258, 16
        $region64: #{simnet_forward.1} parent=59 // pred_fallthru
          _
      $region60: #{simnet_forward.1} parent=5 // pred_fallthru
        _
    $region6: #{simnet_forward.1} parent=1 // loop_footer
      %s21 = sadd.s32 1, %s17
    $region7: #{simnet_forward.1} parent=1 // loop_footer_branch
      %16 = sbr.rel target = $region3
    $region8: #{simnet_forward.1} parent=1 // loop_exit
      _
    %8263 = vsyncpa [#allocation7], 1
    %s8264 = scalar_lea.sflag [#allocation7], 1
    %8265 = vsyncpa %s8264, 1
    %8266 = vsyncpa [#allocation8], 1
    %s8267 = scalar_lea.sflag [#allocation8], 1
    %8268 = vsyncpa %s8267, 1

</llo_original>
